<compile_context>
chip_gen: v5e
topology: v5e:2x2
jax: 0.10.0
libtpu: 0.0.40
codegen_flags: <defaults>
</compile_context>

<pallas_src>
import math
from functools import partial

import jax
import jax.numpy as jnp
from jax.experimental import pallas as pl
from jax.experimental.pallas import tpu as pltpu


# ----------------------------------------------------------------------------
# Generation-aware VMEM budget / tile sizing
# ----------------------------------------------------------------------------

def _vmem_capacity_bytes():
    try:
        return int(pltpu.get_tpu_info().vmem_capacity_bytes)
    except Exception:
        return 64 * 1024 * 1024          # conservative (v7x-sized) fallback


_VMEM_CAP = _vmem_capacity_bytes()
_VMEM_LIMIT = min(int(_VMEM_CAP * 0.6), 48 * 1024 * 1024)   # ~38 MiB on v7x, 48 MiB on v5e/v6e
_MAX_COL_TILE = 512 if _VMEM_LIMIT >= 40 * 1024 * 1024 else 256


def _cparams(*sem):
    return pltpu.CompilerParams(dimension_semantics=sem,
                                vmem_limit_bytes=_VMEM_LIMIT)


def _pick_col_tile(k_dim, max_tile):
    """Lane tile: multiple of 128 dividing k_dim, or the full dim."""
    if k_dim <= max_tile:
        return k_dim
    for t in (512, 256, 128):
        if t <= max_tile and k_dim % t == 0:
            return t
    return k_dim


# ----------------------------------------------------------------------------
# Single-buffered grid-invariant weights (probe pl.Buffered(1) support once)
# ----------------------------------------------------------------------------

def _probe_single_buffer():
    try:
        def _k(x_ref, w_ref, o_ref):
            o_ref[...] = x_ref[...] + w_ref[...]

        fn = pl.pallas_call(
            _k, grid=(2,),
            in_specs=[pl.BlockSpec((8, 128), lambda i: (i, 0)),
                      pl.BlockSpec((8, 128), lambda i: (0, 0),
                                   pipeline_mode=pl.Buffered(1))],
            out_specs=pl.BlockSpec((8, 128), lambda i: (i, 0)),
            out_shape=jax.ShapeDtypeStruct((16, 128), jnp.float32),
        )
        jax.jit(fn).lower(jax.ShapeDtypeStruct((16, 128), jnp.float32),
                          jax.ShapeDtypeStruct((8, 128), jnp.float32)).compile()
        return True
    except Exception:
        return False


_SINGLE_BUFFER_OK = _probe_single_buffer()


def _invariant_spec(block_shape, index_map):
    """BlockSpec for grid-invariant operands (weights/biases): 1 VMEM buffer."""
    if _SINGLE_BUFFER_OK:
        return pl.BlockSpec(block_shape, index_map, pipeline_mode=pl.Buffered(1))
    return pl.BlockSpec(block_shape, index_map)


# ----------------------------------------------------------------------------
# Pairwise squared distances: ||q||^2 + ||k||^2 - 2 q.k   -> (B, K, K)
#   queries row-major (B,K,3), keys lane-dense (B,3,K), norms precomputed.
# ----------------------------------------------------------------------------

def _pdist_kernel(xq_ref, xk_ref, sqq_ref, sqk_ref, o_ref):
    xq = xq_ref[0]                                   # (TQ, 3) f32
    xk = xk_ref[0]                                   # (3, K)  f32 (lane-dense)
    # contraction of length 3 -> three VPU broadcast-FMAs, not a degenerate MXU op
    g = (xq[:, 0:1] * xk[0:1, :] + xq[:, 1:2] * xk[1:2, :]
         + xq[:, 2:3] * xk[2:3, :])                  # (TQ, K)
    o_ref[0] = sqq_ref[0] + sqk_ref[0] - 2.0 * g


def pairwise_sqdist(xyz, xyz_cm):
    B, K, _ = xyz.shape
    tq = _pick_col_tile(K, _MAX_COL_TILE)
    sq = jnp.sum(xyz * xyz, axis=-1)                 # (B, K)  hoisted once
    sqq = sq[:, :, None]                             # (B, K, 1)
    sqk = sq[:, None, :]                             # (B, 1, K)
    return pl.pallas_call(
        _pdist_kernel,
        grid=(B, K // tq),
        in_specs=[pl.BlockSpec((1, tq, 3), lambda b, i: (b, i, 0)),
                  pl.BlockSpec((1, 3, K), lambda b, i: (b, 0, 0)),
                  pl.BlockSpec((1, tq, 1), lambda b, i: (b, i, 0)),
                  pl.BlockSpec((1, 1, K), lambda b, i: (b, 0, 0))],
        out_specs=pl.BlockSpec((1, tq, K), lambda b, i: (b, i, 0)),
        out_shape=jax.ShapeDtypeStruct((B, K, K), jnp.float32),
        compiler_params=_cparams("parallel", "parallel"),
    )(xyz, xyz_cm, sqq, sqk)


# ----------------------------------------------------------------------------
# SAPP: shared MLP 3->32->64->128 + neighborhood max (channel-major)
#   rel4: (B, 3, fr, K) f32  ->  (B, 128, K) bf16
# ----------------------------------------------------------------------------

def _sapp_kernel(rel_ref, w1_ref, b1_ref, w2_ref, b2_ref, w3_ref, b3_ref,
                 o_ref, acc_ref, *, g):
    j = pl.program_id(2)

    @pl.when(j == 0)
    def _():
        acc_ref[...] = jnp.full(acc_ref.shape, -jnp.inf, acc_ref.dtype)

    w1 = w1_ref[...]                                  # (32, 3)   f32 (VPU path)
    b1 = b1_ref[...]                                  # (32, 1)   f32
    w2 = w2_ref[...]                                  # (64, 32)  bf16
    b2 = b2_ref[...]                                  # (64, 1)   f32
    w3 = w3_ref[...]                                  # (128, 64) bf16
    b3 = b3_ref[...]                                  # (128, 1)  f32

    x = rel_ref[0]                                    # (3, g, TK) f32
    acc = acc_ref[...]
    for jj in range(g):                               # static unroll over the group
        xj = x[:, jj, :]                              # (3, TK)
        # layer 1 (3 -> 32): three VPU broadcast-FMAs (no degenerate matmul)
        h = (w1[:, 0:1] * xj[0:1, :] + w1[:, 1:2] * xj[1:2, :]
             + w1[:, 2:3] * xj[2:3, :] + b1)          # (32, TK) f32
        h = jnp.maximum(h, 0.0).astype(jnp.bfloat16)
        h = jnp.dot(w2, h, preferred_element_type=jnp.float32) + b2   # (64, TK)
        h = jnp.maximum(h, 0.0).astype(jnp.bfloat16)
        h = jnp.dot(w3, h, preferred_element_type=jnp.float32) + b3   # (128, TK)
        h = jnp.maximum(h, 0.0)
        acc = jnp.maximum(acc, h)
    acc_ref[...] = acc

    @pl.when(j == pl.num_programs(2) - 1)
    def _():
        o_ref[0] = acc_ref[...].astype(o_ref.dtype)


def sapp_features(rel4, sa_layers):
    B, _, fr, K = rel4.shape
    tk = _pick_col_tile(K, _MAX_COL_TILE)
    g = fr if fr <= 8 else (8 if fr % 8 == 0 else fr)
    nj = fr // g

    (w1, b1), (w2, b2), (w3, b3) = sa_layers
    c1, c2, c3 = w1.shape[1], w2.shape[1], w3.shape[1]

    ins = [rel4,
           w1.T, b1.reshape(-1, 1),
           w2.T.astype(jnp.bfloat16), b2.reshape(-1, 1),
           w3.T.astype(jnp.bfloat16), b3.reshape(-1, 1)]
    in_specs = [
        pl.BlockSpec((1, 3, g, tk), lambda b, i, j: (b, 0, j, i)),
        _invariant_spec((c1, 3), lambda b, i, j: (0, 0)),
        _invariant_spec((c1, 1), lambda b, i, j: (0, 0)),
        _invariant_spec((c2, c1), lambda b, i, j: (0, 0)),
        _invariant_spec((c2, 1), lambda b, i, j: (0, 0)),
        _invariant_spec((c3, c2), lambda b, i, j: (0, 0)),
        _invariant_spec((c3, 1), lambda b, i, j: (0, 0)),
    ]
    return pl.pallas_call(
        partial(_sapp_kernel, g=g),
        grid=(B, K // tk, nj),
        in_specs=in_specs,
        out_specs=pl.BlockSpec((1, c3, tk), lambda b, i, j: (b, 0, i)),
        out_shape=jax.ShapeDtypeStruct((B, c3, K), jnp.bfloat16),
        scratch_shapes=[pltpu.VMEM((c3, tk), jnp.float32)],
        compiler_params=_cparams("parallel", "parallel", "arbitrary"),
    )(*ins)


# ----------------------------------------------------------------------------
# PointNet: shared MLP (3+128)->256->512->1024->d + global max (channel-major)
#   feat_cm: (B, 128, K) bf16, xyz_cm: (B, 3, K) f32  ->  (B, d) f32
# ----------------------------------------------------------------------------

def _pointnet_kernel(feat_ref, xyz_ref, w1f_ref, w1x_ref, b1_ref,
                     w2_ref, b2_ref, w3_ref, b3_ref, w4_ref, b4_ref,
                     o_ref, acc_ref):
    r = pl.program_id(1)

    @pl.when(r == 0)
    def _():
        acc_ref[...] = jnp.full(acc_ref.shape, -jnp.inf, acc_ref.dtype)

    feat = feat_ref[0]                                # (128, TR) bf16
    xyz = xyz_ref[0]                                  # (3, TR)   f32
    w1x = w1x_ref[...]                                # (256, 3)  f32
    b1 = b1_ref[...]                                  # (256, 1)  f32

    # layer 1: dense 128-contraction MXU matmul + 3 VPU FMAs for the xyz part
    h = jnp.dot(w1f_ref[...], feat, preferred_element_type=jnp.float32)
    h = h + (w1x[:, 0:1] * xyz[0:1, :] + w1x[:, 1:2] * xyz[1:2, :]
             + w1x[:, 2:3] * xyz[2:3, :]) + b1
    h = jnp.maximum(h, 0.0).astype(jnp.bfloat16)
    h = jnp.dot(w2_ref[...], h, preferred_element_type=jnp.float32) + b2_ref[...]
    h = jnp.maximum(h, 0.0).astype(jnp.bfloat16)
    h = jnp.dot(w3_ref[...], h, preferred_element_type=jnp.float32) + b3_ref[...]
    h = jnp.maximum(h, 0.0).astype(jnp.bfloat16)
    h = jnp.dot(w4_ref[...], h, preferred_element_type=jnp.float32) + b4_ref[...]  # (d, TR)

    acc_ref[...] = jnp.maximum(acc_ref[...], jnp.max(h, axis=1, keepdims=True))

    @pl.when(r == pl.num_programs(1) - 1)
    def _():
        o_ref[0] = acc_ref[...]


def pointnet_global_features(feat_cm, xyz_cm, pn_layers):
    B, c_feat, K = feat_cm.shape
    tr = _pick_col_tile(K, _MAX_COL_TILE)
    (w1, b1), (w2, b2), (w3, b3), (w4, b4) = pn_layers
    c1, c2, c3, d = w1.shape[1], w2.shape[1], w3.shape[1], w4.shape[1]

    # split the 131-channel first layer: rows [0:3]=xyz (VPU), rows [3:]=feat (MXU)
    w1x = w1[:3, :].T                                 # (256, 3)   f32
    w1f = w1[3:, :].T.astype(jnp.bfloat16)            # (256, 128) bf16

    ins = [feat_cm, xyz_cm,
           w1f, w1x, b1.reshape(-1, 1),
           w2.T.astype(jnp.bfloat16), b2.reshape(-1, 1),
           w3.T.astype(jnp.bfloat16), b3.reshape(-1, 1),
           w4.T.astype(jnp.bfloat16), b4.reshape(-1, 1)]
    in_specs = [
        pl.BlockSpec((1, c_feat, tr), lambda b, r: (b, 0, r)),
        pl.BlockSpec((1, 3, tr), lambda b, r: (b, 0, r)),
        _invariant_spec((c1, c_feat), lambda b, r: (0, 0)),
        _invariant_spec((c1, 3), lambda b, r: (0, 0)),
        _invariant_spec((c1, 1), lambda b, r: (0, 0)),
        _invariant_spec((c2, c1), lambda b, r: (0, 0)),
        _invariant_spec((c2, 1), lambda b, r: (0, 0)),
        _invariant_spec((c3, c2), lambda b, r: (0, 0)),
        _invariant_spec((c3, 1), lambda b, r: (0, 0)),
        _invariant_spec((d, c3), lambda b, r: (0, 0)),
        _invariant_spec((d, 1), lambda b, r: (0, 0)),
    ]
    out = pl.pallas_call(
        _pointnet_kernel,
        grid=(B, K // tr),
        in_specs=in_specs,
        out_specs=pl.BlockSpec((1, d, 1), lambda b, r: (b, 0, 0)),
        out_shape=jax.ShapeDtypeStruct((B, d, 1), jnp.float32),
        scratch_shapes=[pltpu.VMEM((d, 1), jnp.float32)],
        compiler_params=_cparams("parallel", "arbitrary"),
    )(*ins)
    return out[:, :, 0]                               # (B, d)


# ----------------------------------------------------------------------------
# Fused quantization + decoder MLP + BitEstimator rate (single pallas_call)
# ----------------------------------------------------------------------------

def _decoder_bits_kernel(x_ref, w1_ref, b1_ref, w2_ref, b2_ref, w3_ref, b3_ref,
                         w4_ref, b4_ref, beh_ref, beb_ref, bea_ref,
                         xyz_ref, bits_ref):
    x = x_ref[...]                                    # (B, d) f32 global feature
    q = jnp.round(x)                                  # eval-mode quantization
    # TODO(synk): training-mode additive U(-0.5, 0.5) noise path not implemented.

    # ---- decoder MLP d->256->512->1024->k*3 (row-major, lane-dense output) ----
    h = q.astype(jnp.bfloat16)
    h = jnp.dot(h, w1_ref[...], preferred_element_type=jnp.float32) + b1_ref[...]
    h = jnp.maximum(h, 0.0).astype(jnp.bfloat16)
    h = jnp.dot(h, w2_ref[...], preferred_element_type=jnp.float32) + b2_ref[...]
    h = jnp.maximum(h, 0.0).astype(jnp.bfloat16)
    h = jnp.dot(h, w3_ref[...], preferred_element_type=jnp.float32) + b3_ref[...]
    h = jnp.maximum(h, 0.0).astype(jnp.bfloat16)
    h = jnp.dot(h, w4_ref[...], preferred_element_type=jnp.float32) + b4_ref[...]
    xyz_ref[...] = h

    # ---- BitEstimator: CDF(q+0.5) - CDF(q-0.5), f32, EUP-bound ----
    H = beh_ref[...]                                  # (4, d)
    Bb = beb_ref[...]                                 # (4, d)
    A = bea_ref[...]                                  # (3, d)
    sp_h = [jnp.logaddexp(H[i:i + 1, :], 0.0) for i in range(4)]   # softplus, hoisted
    th_a = [jnp.tanh(A[i:i + 1, :]) for i in range(3)]             # tanh(a), hoisted

    def cdf(v):
        for i in range(3):
            v = v * sp_h[i] + Bb[i:i + 1, :]
            v = v + jnp.tanh(v) * th_a[i]
        v = v * sp_h[3] + Bb[3:4, :]
        return 1.0 / (1.0 + jnp.exp(-v))

    prob = cdf(q + 0.5) - cdf(q - 0.5)
    bits = jnp.clip(-jnp.log(prob + 1e-10) * (1.0 / math.log(2.0)), 0.0, 50.0)
    bits_ref[...] = jnp.sum(bits, axis=(0, 1), keepdims=True)


def decode_and_rate(feat_global, dec_layers, be_params):
    B, d = feat_global.shape
    (w1, b1), (w2, b2), (w3, b3), (w4, b4) = dec_layers
    c4 = w4.shape[1]

    ins = [feat_global,
           w1.astype(jnp.bfloat16), b1.reshape(1, -1),
           w2.astype(jnp.bfloat16), b2.reshape(1, -1),
           w3.astype(jnp.bfloat16), b3.reshape(1, -1),
           w4.astype(jnp.bfloat16), b4.reshape(1, -1),
           be_params["h"], be_params["b"], be_params["a"]]

    def full_spec(arr, invariant):
        nd = arr.ndim
        idx = lambda i, _nd=nd: (0,) * _nd
        return _invariant_spec(arr.shape, idx) if invariant else pl.BlockSpec(arr.shape, idx)

    in_specs = [full_spec(ins[0], False)] + [full_spec(a, True) for a in ins[1:]]

    new_xyz_flat, total_bits = pl.pallas_call(
        _decoder_bits_kernel,
        grid=(1,),
        in_specs=in_specs,
        out_specs=(pl.BlockSpec((B, c4), lambda i: (0, 0)),
                   pl.BlockSpec((1, 1), lambda i: (0, 0))),
        out_shape=(jax.ShapeDtypeStruct((B, c4), jnp.float32),
                   jax.ShapeDtypeStruct((1, 1), jnp.float32)),
        compiler_params=_cparams("arbitrary"),
    )(*ins)
    return new_xyz_flat, total_bits[0, 0]


# ----------------------------------------------------------------------------
# Parameter init (deterministic, torch-default-like)
# ----------------------------------------------------------------------------

def _init_linear(key, cin, cout):
    kw, kb = jax.random.split(key)
    bound = 1.0 / math.sqrt(cin)
    w = jax.random.uniform(kw, (cin, cout), jnp.float32, -bound, bound)
    b = jax.random.uniform(kb, (cout,), jnp.float32, -bound, bound)
    return w, b


def init_params(key, k, d):
    keys = jax.random.split(key, 16)
    ki = iter(keys)
    params = {}
    sa_dims = [3, 32, 64, 128]
    params["sa"] = [_init_linear(next(ki), sa_dims[i], sa_dims[i + 1]) for i in range(3)]
    pn_dims = [3 + 128, 256, 512, 1024, d]
    params["pn"] = [_init_linear(next(ki), pn_dims[i], pn_dims[i + 1]) for i in range(4)]
    dec_dims = [d, 256, 512, 1024, k * 3]
    params["dec"] = [_init_linear(next(ki), dec_dims[i], dec_dims[i + 1]) for i in range(4)]
    kh, kb, ka = jax.random.split(next(ki), 3)
    params["be"] = {
        "h": 0.01 * jax.random.normal(kh, (4, d), jnp.float32),
        "b": 0.01 * jax.random.normal(kb, (4, d), jnp.float32),
        "a": 0.01 * jax.random.normal(ka, (3, d), jnp.float32),
    }
    return params


# ----------------------------------------------------------------------------
# Forward pass
# ----------------------------------------------------------------------------

def forward(params, xyz, *, k, d):
    B, K, _ = xyz.shape
    fr = k // 4                                       # feature_region

    xyz_cm = jnp.transpose(xyz, (0, 2, 1))            # (B, 3, K) lane-dense

    # ---- kNN grouping: Pallas pairwise distances + XLA top-k / gather ----
    # TODO(synk): fused in-kernel top-k selection (to avoid the (B,K,K) HBM
    # round trip) is not implemented; selection and gather stay in XLA.
    dist = pairwise_sqdist(xyz, xyz_cm)                            # (B, K, K)
    _, idx = jax.lax.top_k(-dist, fr)                              # (B, K, fr)
    grouped = jax.vmap(lambda pts, ids: pts[ids])(xyz, idx)        # (B, K, fr, 3)
    rel = grouped - xyz[:, :, None, :]                             # relative coords
    rel4 = jnp.transpose(rel, (0, 3, 2, 1))                        # (B, 3, fr, K)

    # ---- SAPP shared MLP 3->32->64->128 + neighborhood max ----
    feat_cm = sapp_features(rel4, params["sa"])                    # (B, 128, K) bf16

    # ---- PointNet shared MLP 131->256->512->1024->d + global max ----
    feat_global = pointnet_global_features(feat_cm, xyz_cm, params["pn"])   # (B, d)

    # ---- quantize (eval), decode, and estimate rate in one fused call ----
    new_xyz_flat, total_bits = decode_and_rate(feat_global, params["dec"], params["be"])
    new_xyz = new_xyz_flat.reshape(B, -1, 3)                       # (B, k, 3)
    bpp = total_bits / K / B
    return new_xyz, bpp


# ----------------------------------------------------------------------------
# Demo
# ----------------------------------------------------------------------------

if __name__ == "__main__":
    k, d, B = 16, 32, 2
    key = jax.random.PRNGKey(0)
    pkey, xkey = jax.random.split(key)
    params = init_params(pkey, k, d)
    xyz = jax.random.uniform(xkey, (B, k, 3), jnp.float32)         # (B, K=k, 3)

    fwd = jax.jit(partial(forward, k=k, d=d))
    new_xyz, bpp = fwd(params, xyz)
    jax.block_until_ready((new_xyz, bpp))

    assert new_xyz.shape == (B, k, 3)
    assert bpp.shape == ()
    print("KERNEL_OK")
</pallas_src>

<mosaic_0001>
module attributes {stable_mosaic.version = 11 : i64} {
  func.func @_pdist_kernel(%arg0: i32, %arg1: i32, %arg2: memref<1x16x3xf32, #tpu.memory_space<vmem>>, %arg3: memref<1x3x16xf32, #tpu.memory_space<vmem>>, %arg4: memref<1x16x1xf32, #tpu.memory_space<vmem>>, %arg5: memref<1x1x16xf32, #tpu.memory_space<vmem>>, %arg6: memref<1x16x16xf32, #tpu.memory_space<vmem>>) attributes {dimension_semantics = [#tpu.dimension_semantics<parallel>, #tpu.dimension_semantics<parallel>], iteration_bounds = array<i64: 2, 1>, scalar_prefetch = 0 : i64, scratch_operands = 0 : i64, tpu.core_type = #tpu.core_type<tc>, window_params = [{transform_indices = @transform_0, window_bounds = array<i64: 1, 16, 3>}, {transform_indices = @transform_1, window_bounds = array<i64: 1, 3, 16>}, {transform_indices = @transform_2, window_bounds = array<i64: 1, 16, 1>}, {transform_indices = @transform_3, window_bounds = array<i64: 1, 1, 16>}, {transform_indices = @transform_4, window_bounds = array<i64: 1, 16, 16>}]} {
    %c0 = arith.constant 0 : index
    %c0_0 = arith.constant 0 : index
    %c0_1 = arith.constant 0 : index
    %0 = vector.load %arg2[%c0, %c0_0, %c0_1] : memref<1x16x3xf32, #tpu.memory_space<vmem>>, vector<1x16x3xf32>
    %1 = vector.shape_cast %0 : vector<1x16x3xf32> to vector<16x3xf32>
    %c0_2 = arith.constant 0 : index
    %c0_3 = arith.constant 0 : index
    %c0_4 = arith.constant 0 : index
    %2 = vector.load %arg3[%c0_2, %c0_3, %c0_4] : memref<1x3x16xf32, #tpu.memory_space<vmem>>, vector<1x3x16xf32>
    %3 = vector.shape_cast %2 : vector<1x3x16xf32> to vector<3x16xf32>
    %4 = vector.extract_strided_slice %1 {offsets = [0, 0], sizes = [16, 1], strides = [1, 1]} : vector<16x3xf32> to vector<16x1xf32>
    %5 = vector.extract_strided_slice %3 {offsets = [0, 0], sizes = [1, 16], strides = [1, 1]} : vector<3x16xf32> to vector<1x16xf32>
    %6 = vector.broadcast %4 : vector<16x1xf32> to vector<16x16xf32>
    %7 = vector.broadcast %5 : vector<1x16xf32> to vector<16x16xf32>
    %8 = arith.mulf %6, %7 : vector<16x16xf32>
    %9 = vector.extract_strided_slice %1 {offsets = [0, 1], sizes = [16, 1], strides = [1, 1]} : vector<16x3xf32> to vector<16x1xf32>
    %10 = vector.extract_strided_slice %3 {offsets = [1, 0], sizes = [1, 16], strides = [1, 1]} : vector<3x16xf32> to vector<1x16xf32>
    %11 = vector.broadcast %9 : vector<16x1xf32> to vector<16x16xf32>
    %12 = vector.broadcast %10 : vector<1x16xf32> to vector<16x16xf32>
    %13 = arith.mulf %11, %12 : vector<16x16xf32>
    %14 = arith.addf %8, %13 : vector<16x16xf32>
    %15 = vector.extract_strided_slice %1 {offsets = [0, 2], sizes = [16, 1], strides = [1, 1]} : vector<16x3xf32> to vector<16x1xf32>
    %16 = vector.extract_strided_slice %3 {offsets = [2, 0], sizes = [1, 16], strides = [1, 1]} : vector<3x16xf32> to vector<1x16xf32>
    %17 = vector.broadcast %15 : vector<16x1xf32> to vector<16x16xf32>
    %18 = vector.broadcast %16 : vector<1x16xf32> to vector<16x16xf32>
    %19 = arith.mulf %17, %18 : vector<16x16xf32>
    %20 = arith.addf %14, %19 : vector<16x16xf32>
    %c0_5 = arith.constant 0 : index
    %c0_6 = arith.constant 0 : index
    %c0_7 = arith.constant 0 : index
    %21 = vector.load %arg4[%c0_5, %c0_6, %c0_7] : memref<1x16x1xf32, #tpu.memory_space<vmem>>, vector<1x16x1xf32>
    %22 = vector.shape_cast %21 : vector<1x16x1xf32> to vector<16x1xf32>
    %c0_8 = arith.constant 0 : index
    %c0_9 = arith.constant 0 : index
    %c0_10 = arith.constant 0 : index
    %23 = vector.load %arg5[%c0_8, %c0_9, %c0_10] : memref<1x1x16xf32, #tpu.memory_space<vmem>>, vector<1x1x16xf32>
    %24 = vector.shape_cast %23 : vector<1x1x16xf32> to vector<1x16xf32>
    %25 = vector.broadcast %22 : vector<16x1xf32> to vector<16x16xf32>
    %26 = vector.broadcast %24 : vector<1x16xf32> to vector<16x16xf32>
    %27 = arith.addf %25, %26 : vector<16x16xf32>
    %cst = arith.constant 2.000000e+00 : f32
    %28 = vector.broadcast %cst : f32 to vector<16x16xf32>
    %29 = arith.mulf %28, %20 : vector<16x16xf32>
    %30 = arith.subf %27, %29 : vector<16x16xf32>
    %c0_11 = arith.constant 0 : index
    %c0_12 = arith.constant 0 : index
    %c0_13 = arith.constant 0 : index
    %31 = vector.load %arg6[%c0_11, %c0_12, %c0_13] : memref<1x16x16xf32, #tpu.memory_space<vmem>>, vector<1x16x16xf32>
    %32 = vector.shape_cast %31 : vector<1x16x16xf32> to vector<16x16xf32>
    %33 = vector.shape_cast %30 : vector<16x16xf32> to vector<1x16x16xf32>
    tpu.vector_store %arg6[%c0_11, %c0_12, %c0_13], %33 {strides = array<i32>} : memref<1x16x16xf32, #tpu.memory_space<vmem>>, vector<1x16x16xf32>,
    return
  }
  func.func @transform_0(%arg0: i32, %arg1: i32) -> (i32, i32, i32) {
    %c0_i32 = arith.constant 0 : i32
    %c0_i32_0 = arith.constant 0 : i32
    return %arg0, %arg1, %c0_i32 : i32, i32, i32
  }
  func.func @transform_1(%arg0: i32, %arg1: i32) -> (i32, i32, i32) {
    %c0_i32 = arith.constant 0 : i32
    %c0_i32_0 = arith.constant 0 : i32
    %c0_i32_1 = arith.constant 0 : i32
    return %arg0, %c0_i32, %c0_i32_0 : i32, i32, i32
  }
  func.func @transform_2(%arg0: i32, %arg1: i32) -> (i32, i32, i32) {
    %c0_i32 = arith.constant 0 : i32
    %c0_i32_0 = arith.constant 0 : i32
    return %arg0, %arg1, %c0_i32 : i32, i32, i32
  }
  func.func @transform_3(%arg0: i32, %arg1: i32) -> (i32, i32, i32) {
    %c0_i32 = arith.constant 0 : i32
    %c0_i32_0 = arith.constant 0 : i32
    %c0_i32_1 = arith.constant 0 : i32
    return %arg0, %c0_i32, %c0_i32_0 : i32, i32, i32
  }
  func.func @transform_4(%arg0: i32, %arg1: i32) -> (i32, i32, i32) {
    %c0_i32 = arith.constant 0 : i32
    %c0_i32_0 = arith.constant 0 : i32
    return %arg0, %arg1, %c0_i32 : i32, i32, i32
  }
}

module attributes {stable_mosaic.version = 11 : i64} {
  func.func @_sapp_kernel(%arg0: i32, %arg1: i32, %arg2: i32, %arg3: memref<1x3x4x16xf32, #tpu.memory_space<vmem>>, %arg4: memref<32x3xf32, #tpu.memory_space<vmem>>, %arg5: memref<32x1xf32, #tpu.memory_space<vmem>>, %arg6: memref<64x32xbf16, #tpu.memory_space<vmem>>, %arg7: memref<64x1xf32, #tpu.memory_space<vmem>>, %arg8: memref<128x64xbf16, #tpu.memory_space<vmem>>, %arg9: memref<128x1xf32, #tpu.memory_space<vmem>>, %arg10: memref<1x128x16xbf16, #tpu.memory_space<vmem>>, %arg11: memref<128x16xf32, #tpu.memory_space<vmem>>) attributes {dimension_semantics = [#tpu.dimension_semantics<parallel>, #tpu.dimension_semantics<parallel>, #tpu.dimension_semantics<arbitrary>], iteration_bounds = array<i64: 2, 1, 1>, scalar_prefetch = 0 : i64, scratch_operands = 1 : i64, tpu.core_type = #tpu.core_type<tc>, window_params = [{transform_indices = @transform_0, window_bounds = array<i64: 1, 3, 4, 16>}, {pipeline_mode = #tpu.pipeline_mode<synchronous>, transform_indices = @transform_1, window_bounds = array<i64: 32, 3>}, {pipeline_mode = #tpu.pipeline_mode<synchronous>, transform_indices = @transform_2, window_bounds = array<i64: 32, 1>}, {pipeline_mode = #tpu.pipeline_mode<synchronous>, transform_indices = @transform_3, window_bounds = array<i64: 64, 32>}, {pipeline_mode = #tpu.pipeline_mode<synchronous>, transform_indices = @transform_4, window_bounds = array<i64: 64, 1>}, {pipeline_mode = #tpu.pipeline_mode<synchronous>, transform_indices = @transform_5, window_bounds = array<i64: 128, 64>}, {pipeline_mode = #tpu.pipeline_mode<synchronous>, transform_indices = @transform_6, window_bounds = array<i64: 128, 1>}, {transform_indices = @transform_7, window_bounds = array<i64: 1, 128, 16>}]} {
    %c0_i32 = arith.constant 0 : i32
    %0 = arith.cmpi eq, %arg2, %c0_i32 : i32
    %1 = arith.extui %0 : i1 to i32
    %c0_i32_0 = arith.constant 0 : i32
    %2 = arith.cmpi ne, %1, %c0_i32_0 : i32
    scf.if %2 {
      %cst_41 = arith.constant 0xFF800000 : f32
      %160 = vector.broadcast %cst_41 : f32 to vector<128x16xf32>
      %c0_42 = arith.constant 0 : index
      %c0_43 = arith.constant 0 : index
      %161 = vector.load %arg11[%c0_42, %c0_43] : memref<128x16xf32, #tpu.memory_space<vmem>>, vector<128x16xf32>
      tpu.vector_store %arg11[%c0_42, %c0_43], %160 {strides = array<i32>} : memref<128x16xf32, #tpu.memory_space<vmem>>, vector<128x16xf32>,
    } else {
    }
    %c0 = arith.constant 0 : index
    %c0_1 = arith.constant 0 : index
    %3 = vector.load %arg4[%c0, %c0_1] : memref<32x3xf32, #tpu.memory_space<vmem>>, vector<32x3xf32>
    %c0_2 = arith.constant 0 : index
    %c0_3 = arith.constant 0 : index
    %4 = vector.load %arg5[%c0_2, %c0_3] : memref<32x1xf32, #tpu.memory_space<vmem>>, vector<32x1xf32>
    %c0_4 = arith.constant 0 : index
    %c0_5 = arith.constant 0 : index
    %5 = vector.load %arg6[%c0_4, %c0_5] : memref<64x32xbf16, #tpu.memory_space<vmem>>, vector<64x32xbf16>
    %c0_6 = arith.constant 0 : index
    %c0_7 = arith.constant 0 : index
    %6 = vector.load %arg7[%c0_6, %c0_7] : memref<64x1xf32, #tpu.memory_space<vmem>>, vector<64x1xf32>
    %c0_8 = arith.constant 0 : index
    %c0_9 = arith.constant 0 : index
    %7 = vector.load %arg8[%c0_8, %c0_9] : memref<128x64xbf16, #tpu.memory_space<vmem>>, vector<128x64xbf16>
    %c0_10 = arith.constant 0 : index
    %c0_11 = arith.constant 0 : index
    %8 = vector.load %arg9[%c0_10, %c0_11] : memref<128x1xf32, #tpu.memory_space<vmem>>, vector<128x1xf32>
    %c0_12 = arith.constant 0 : index
    %c0_13 = arith.constant 0 : index
    %c0_14 = arith.constant 0 : index
    %c0_15 = arith.constant 0 : index
    %9 = vector.load %arg3[%c0_12, %c0_13, %c0_14, %c0_15] : memref<1x3x4x16xf32, #tpu.memory_space<vmem>>, vector<1x3x4x16xf32>
    %10 = vector.shape_cast %9 : vector<1x3x4x16xf32> to vector<3x4x16xf32>
    %c0_16 = arith.constant 0 : index
    %c0_17 = arith.constant 0 : index
    %11 = vector.load %arg11[%c0_16, %c0_17] : memref<128x16xf32, #tpu.memory_space<vmem>>, vector<128x16xf32>
    %12 = vector.extract_strided_slice %10 {offsets = [0, 0, 0], sizes = [3, 1, 16], strides = [1, 1, 1]} : vector<3x4x16xf32> to vector<3x1x16xf32>
    %13 = vector.shape_cast %12 : vector<3x1x16xf32> to vector<3x16xf32>
    %14 = vector.extract_strided_slice %3 {offsets = [0, 0], sizes = [32, 1], strides = [1, 1]} : vector<32x3xf32> to vector<32x1xf32>
    %15 = vector.extract_strided_slice %13 {offsets = [0, 0], sizes = [1, 16], strides = [1, 1]} : vector<3x16xf32> to vector<1x16xf32>
    %16 = vector.broadcast %14 : vector<32x1xf32> to vector<32x16xf32>
    %17 = vector.broadcast %15 : vector<1x16xf32> to vector<32x16xf32>
    %18 = arith.mulf %16, %17 : vector<32x16xf32>
    %19 = vector.extract_strided_slice %3 {offsets = [0, 1], sizes = [32, 1], strides = [1, 1]} : vector<32x3xf32> to vector<32x1xf32>
    %20 = vector.extract_strided_slice %13 {offsets = [1, 0], sizes = [1, 16], strides = [1, 1]} : vector<3x16xf32> to vector<1x16xf32>
    %21 = vector.broadcast %19 : vector<32x1xf32> to vector<32x16xf32>
    %22 = vector.broadcast %20 : vector<1x16xf32> to vector<32x16xf32>
    %23 = arith.mulf %21, %22 : vector<32x16xf32>
    %24 = arith.addf %18, %23 : vector<32x16xf32>
    %25 = vector.extract_strided_slice %3 {offsets = [0, 2], sizes = [32, 1], strides = [1, 1]} : vector<32x3xf32> to vector<32x1xf32>
    %26 = vector.extract_strided_slice %13 {offsets = [2, 0], sizes = [1, 16], strides = [1, 1]} : vector<3x16xf32> to vector<1x16xf32>
    %27 = vector.broadcast %25 : vector<32x1xf32> to vector<32x16xf32>
    %28 = vector.broadcast %26 : vector<1x16xf32> to vector<32x16xf32>
    %29 = arith.mulf %27, %28 : vector<32x16xf32>
    %30 = arith.addf %24, %29 : vector<32x16xf32>
    %31 = vector.broadcast %4 : vector<32x1xf32> to vector<32x16xf32>
    %32 = arith.addf %30, %31 : vector<32x16xf32>
    %cst = arith.constant 0.000000e+00 : f32
    %33 = vector.broadcast %cst : f32 to vector<32x16xf32>
    %34 = arith.maximumf %32, %33 : vector<32x16xf32>
    %35 = arith.truncf %34 : vector<32x16xf32> to vector<32x16xbf16>
    %cst_18 = arith.constant dense<0.000000e+00> : vector<64x16xf32>
    %36 = tpu.matmul %5, %35, %cst_18 {dimension_numbers = #tpu.dot_dimension_numbers<[1], [0], [0], [1], [0, 0, 1, 1], [], []>} : vector<64x32xbf16>, vector<32x16xbf16>, vector<64x16xf32> -> vector<64x16xf32>
    %37 = vector.broadcast %6 : vector<64x1xf32> to vector<64x16xf32>
    %38 = arith.addf %36, %37 : vector<64x16xf32>
    %cst_19 = arith.constant 0.000000e+00 : f32
    %39 = vector.broadcast %cst_19 : f32 to vector<64x16xf32>
    %40 = arith.maximumf %38, %39 : vector<64x16xf32>
    %41 = arith.truncf %40 : vector<64x16xf32> to vector<64x16xbf16>
    %cst_20 = arith.constant dense<0.000000e+00> : vector<128x16xf32>
    %42 = tpu.matmul %7, %41, %cst_20 {dimension_numbers = #tpu.dot_dimension_numbers<[1], [0], [0], [1], [0, 0, 1, 1], [], []>} : vector<128x64xbf16>, vector<64x16xbf16>, vector<128x16xf32> -> vector<128x16xf32>
    %43 = vector.broadcast %8 : vector<128x1xf32> to vector<128x16xf32>
    %44 = arith.addf %42, %43 : vector<128x16xf32>
    %cst_21 = arith.constant 0.000000e+00 : f32
    %45 = vector.broadcast %cst_21 : f32 to vector<128x16xf32>
    %46 = arith.maximumf %44, %45 : vector<128x16xf32>
    %47 = arith.maximumf %11, %46 : vector<128x16xf32>
    %48 = vector.extract_strided_slice %10 {offsets = [0, 1, 0], sizes = [3, 1, 16], strides = [1, 1, 1]} : vector<3x4x16xf32> to vector<3x1x16xf32>
    %49 = vector.shape_cast %48 : vector<3x1x16xf32> to vector<3x16xf32>
    %50 = vector.extract_strided_slice %3 {offsets = [0, 0], sizes = [32, 1], strides = [1, 1]} : vector<32x3xf32> to vector<32x1xf32>
    %51 = vector.extract_strided_slice %49 {offsets = [0, 0], sizes = [1, 16], strides = [1, 1]} : vector<3x16xf32> to vector<1x16xf32>
    %52 = vector.broadcast %50 : vector<32x1xf32> to vector<32x16xf32>
    %53 = vector.broadcast %51 : vector<1x16xf32> to vector<32x16xf32>
    %54 = arith.mulf %52, %53 : vector<32x16xf32>
    %55 = vector.extract_strided_slice %3 {offsets = [0, 1], sizes = [32, 1], strides = [1, 1]} : vector<32x3xf32> to vector<32x1xf32>
    %56 = vector.extract_strided_slice %49 {offsets = [1, 0], sizes = [1, 16], strides = [1, 1]} : vector<3x16xf32> to vector<1x16xf32>
    %57 = vector.broadcast %55 : vector<32x1xf32> to vector<32x16xf32>
    %58 = vector.broadcast %56 : vector<1x16xf32> to vector<32x16xf32>
    %59 = arith.mulf %57, %58 : vector<32x16xf32>
    %60 = arith.addf %54, %59 : vector<32x16xf32>
    %61 = vector.extract_strided_slice %3 {offsets = [0, 2], sizes = [32, 1], strides = [1, 1]} : vector<32x3xf32> to vector<32x1xf32>
    %62 = vector.extract_strided_slice %49 {offsets = [2, 0], sizes = [1, 16], strides = [1, 1]} : vector<3x16xf32> to vector<1x16xf32>
    %63 = vector.broadcast %61 : vector<32x1xf32> to vector<32x16xf32>
    %64 = vector.broadcast %62 : vector<1x16xf32> to vector<32x16xf32>
    %65 = arith.mulf %63, %64 : vector<32x16xf32>
    %66 = arith.addf %60, %65 : vector<32x16xf32>
    %67 = vector.broadcast %4 : vector<32x1xf32> to vector<32x16xf32>
    %68 = arith.addf %66, %67 : vector<32x16xf32>
    %cst_22 = arith.constant 0.000000e+00 : f32
    %69 = vector.broadcast %cst_22 : f32 to vector<32x16xf32>
    %70 = arith.maximumf %68, %69 : vector<32x16xf32>
    %71 = arith.truncf %70 : vector<32x16xf32> to vector<32x16xbf16>
    %cst_23 = arith.constant dense<0.000000e+00> : vector<64x16xf32>
    %72 = tpu.matmul %5, %71, %cst_23 {dimension_numbers = #tpu.dot_dimension_numbers<[1], [0], [0], [1], [0, 0, 1, 1], [], []>} : vector<64x32xbf16>, vector<32x16xbf16>, vector<64x16xf32> -> vector<64x16xf32>
    %73 = vector.broadcast %6 : vector<64x1xf32> to vector<64x16xf32>
    %74 = arith.addf %72, %73 : vector<64x16xf32>
    %cst_24 = arith.constant 0.000000e+00 : f32
    %75 = vector.broadcast %cst_24 : f32 to vector<64x16xf32>
    %76 = arith.maximumf %74, %75 : vector<64x16xf32>
    %77 = arith.truncf %76 : vector<64x16xf32> to vector<64x16xbf16>
    %cst_25 = arith.constant dense<0.000000e+00> : vector<128x16xf32>
    %78 = tpu.matmul %7, %77, %cst_25 {dimension_numbers = #tpu.dot_dimension_numbers<[1], [0], [0], [1], [0, 0, 1, 1], [], []>} : vector<128x64xbf16>, vector<64x16xbf16>, vector<128x16xf32> -> vector<128x16xf32>
    %79 = vector.broadcast %8 : vector<128x1xf32> to vector<128x16xf32>
    %80 = arith.addf %78, %79 : vector<128x16xf32>
    %cst_26 = arith.constant 0.000000e+00 : f32
    %81 = vector.broadcast %cst_26 : f32 to vector<128x16xf32>
    %82 = arith.maximumf %80, %81 : vector<128x16xf32>
    %83 = arith.maximumf %47, %82 : vector<128x16xf32>
    %84 = vector.extract_strided_slice %10 {offsets = [0, 2, 0], sizes = [3, 1, 16], strides = [1, 1, 1]} : vector<3x4x16xf32> to vector<3x1x16xf32>
    %85 = vector.shape_cast %84 : vector<3x1x16xf32> to vector<3x16xf32>
    %86 = vector.extract_strided_slice %3 {offsets = [0, 0], sizes = [32, 1], strides = [1, 1]} : vector<32x3xf32> to vector<32x1xf32>
    %87 = vector.extract_strided_slice %85 {offsets = [0, 0], sizes = [1, 16], strides = [1, 1]} : vector<3x16xf32> to vector<1x16xf32>
    %88 = vector.broadcast %86 : vector<32x1xf32> to vector<32x16xf32>
    %89 = vector.broadcast %87 : vector<1x16xf32> to vector<32x16xf32>
    %90 = arith.mulf %88, %89 : vector<32x16xf32>
    %91 = vector.extract_strided_slice %3 {offsets = [0, 1], sizes = [32, 1], strides = [1, 1]} : vector<32x3xf32> to vector<32x1xf32>
    %92 = vector.extract_strided_slice %85 {offsets = [1, 0], sizes = [1, 16], strides = [1, 1]} : vector<3x16xf32> to vector<1x16xf32>
    %93 = vector.broadcast %91 : vector<32x1xf32> to vector<32x16xf32>
    %94 = vector.broadcast %92 : vector<1x16xf32> to vector<32x16xf32>
    %95 = arith.mulf %93, %94 : vector<32x16xf32>
    %96 = arith.addf %90, %95 : vector<32x16xf32>
    %97 = vector.extract_strided_slice %3 {offsets = [0, 2], sizes = [32, 1], strides = [1, 1]} : vector<32x3xf32> to vector<32x1xf32>
    %98 = vector.extract_strided_slice %85 {offsets = [2, 0], sizes = [1, 16], strides = [1, 1]} : vector<3x16xf32> to vector<1x16xf32>
    %99 = vector.broadcast %97 : vector<32x1xf32> to vector<32x16xf32>
    %100 = vector.broadcast %98 : vector<1x16xf32> to vector<32x16xf32>
    %101 = arith.mulf %99, %100 : vector<32x16xf32>
    %102 = arith.addf %96, %101 : vector<32x16xf32>
    %103 = vector.broadcast %4 : vector<32x1xf32> to vector<32x16xf32>
    %104 = arith.addf %102, %103 : vector<32x16xf32>
    %cst_27 = arith.constant 0.000000e+00 : f32
    %105 = vector.broadcast %cst_27 : f32 to vector<32x16xf32>
    %106 = arith.maximumf %104, %105 : vector<32x16xf32>
    %107 = arith.truncf %106 : vector<32x16xf32> to vector<32x16xbf16>
    %cst_28 = arith.constant dense<0.000000e+00> : vector<64x16xf32>
    %108 = tpu.matmul %5, %107, %cst_28 {dimension_numbers = #tpu.dot_dimension_numbers<[1], [0], [0], [1], [0, 0, 1, 1], [], []>} : vector<64x32xbf16>, vector<32x16xbf16>, vector<64x16xf32> -> vector<64x16xf32>
    %109 = vector.broadcast %6 : vector<64x1xf32> to vector<64x16xf32>
    %110 = arith.addf %108, %109 : vector<64x16xf32>
    %cst_29 = arith.constant 0.000000e+00 : f32
    %111 = vector.broadcast %cst_29 : f32 to vector<64x16xf32>
    %112 = arith.maximumf %110, %111 : vector<64x16xf32>
    %113 = arith.truncf %112 : vector<64x16xf32> to vector<64x16xbf16>
    %cst_30 = arith.constant dense<0.000000e+00> : vector<128x16xf32>
    %114 = tpu.matmul %7, %113, %cst_30 {dimension_numbers = #tpu.dot_dimension_numbers<[1], [0], [0], [1], [0, 0, 1, 1], [], []>} : vector<128x64xbf16>, vector<64x16xbf16>, vector<128x16xf32> -> vector<128x16xf32>
    %115 = vector.broadcast %8 : vector<128x1xf32> to vector<128x16xf32>
    %116 = arith.addf %114, %115 : vector<128x16xf32>
    %cst_31 = arith.constant 0.000000e+00 : f32
    %117 = vector.broadcast %cst_31 : f32 to vector<128x16xf32>
    %118 = arith.maximumf %116, %117 : vector<128x16xf32>
    %119 = arith.maximumf %83, %118 : vector<128x16xf32>
    %120 = vector.extract_strided_slice %10 {offsets = [0, 3, 0], sizes = [3, 1, 16], strides = [1, 1, 1]} : vector<3x4x16xf32> to vector<3x1x16xf32>
    %121 = vector.shape_cast %120 : vector<3x1x16xf32> to vector<3x16xf32>
    %122 = vector.extract_strided_slice %3 {offsets = [0, 0], sizes = [32, 1], strides = [1, 1]} : vector<32x3xf32> to vector<32x1xf32>
    %123 = vector.extract_strided_slice %121 {offsets = [0, 0], sizes = [1, 16], strides = [1, 1]} : vector<3x16xf32> to vector<1x16xf32>
    %124 = vector.broadcast %122 : vector<32x1xf32> to vector<32x16xf32>
    %125 = vector.broadcast %123 : vector<1x16xf32> to vector<32x16xf32>
    %126 = arith.mulf %124, %125 : vector<32x16xf32>
    %127 = vector.extract_strided_slice %3 {offsets = [0, 1], sizes = [32, 1], strides = [1, 1]} : vector<32x3xf32> to vector<32x1xf32>
    %128 = vector.extract_strided_slice %121 {offsets = [1, 0], sizes = [1, 16], strides = [1, 1]} : vector<3x16xf32> to vector<1x16xf32>
    %129 = vector.broadcast %127 : vector<32x1xf32> to vector<32x16xf32>
    %130 = vector.broadcast %128 : vector<1x16xf32> to vector<32x16xf32>
    %131 = arith.mulf %129, %130 : vector<32x16xf32>
    %132 = arith.addf %126, %131 : vector<32x16xf32>
    %133 = vector.extract_strided_slice %3 {offsets = [0, 2], sizes = [32, 1], strides = [1, 1]} : vector<32x3xf32> to vector<32x1xf32>
    %134 = vector.extract_strided_slice %121 {offsets = [2, 0], sizes = [1, 16], strides = [1, 1]} : vector<3x16xf32> to vector<1x16xf32>
    %135 = vector.broadcast %133 : vector<32x1xf32> to vector<32x16xf32>
    %136 = vector.broadcast %134 : vector<1x16xf32> to vector<32x16xf32>
    %137 = arith.mulf %135, %136 : vector<32x16xf32>
    %138 = arith.addf %132, %137 : vector<32x16xf32>
    %139 = vector.broadcast %4 : vector<32x1xf32> to vector<32x16xf32>
    %140 = arith.addf %138, %139 : vector<32x16xf32>
    %cst_32 = arith.constant 0.000000e+00 : f32
    %141 = vector.broadcast %cst_32 : f32 to vector<32x16xf32>
    %142 = arith.maximumf %140, %141 : vector<32x16xf32>
    %143 = arith.truncf %142 : vector<32x16xf32> to vector<32x16xbf16>
    %cst_33 = arith.constant dense<0.000000e+00> : vector<64x16xf32>
    %144 = tpu.matmul %5, %143, %cst_33 {dimension_numbers = #tpu.dot_dimension_numbers<[1], [0], [0], [1], [0, 0, 1, 1], [], []>} : vector<64x32xbf16>, vector<32x16xbf16>, vector<64x16xf32> -> vector<64x16xf32>
    %145 = vector.broadcast %6 : vector<64x1xf32> to vector<64x16xf32>
    %146 = arith.addf %144, %145 : vector<64x16xf32>
    %cst_34 = arith.constant 0.000000e+00 : f32
    %147 = vector.broadcast %cst_34 : f32 to vector<64x16xf32>
    %148 = arith.maximumf %146, %147 : vector<64x16xf32>
    %149 = arith.truncf %148 : vector<64x16xf32> to vector<64x16xbf16>
    %cst_35 = arith.constant dense<0.000000e+00> : vector<128x16xf32>
    %150 = tpu.matmul %7, %149, %cst_35 {dimension_numbers = #tpu.dot_dimension_numbers<[1], [0], [0], [1], [0, 0, 1, 1], [], []>} : vector<128x64xbf16>, vector<64x16xbf16>, vector<128x16xf32> -> vector<128x16xf32>
    %151 = vector.broadcast %8 : vector<128x1xf32> to vector<128x16xf32>
    %152 = arith.addf %150, %151 : vector<128x16xf32>
    %cst_36 = arith.constant 0.000000e+00 : f32
    %153 = vector.broadcast %cst_36 : f32 to vector<128x16xf32>
    %154 = arith.maximumf %152, %153 : vector<128x16xf32>
    %155 = arith.maximumf %119, %154 : vector<128x16xf32>
    %c0_37 = arith.constant 0 : index
    %c0_38 = arith.constant 0 : index
    %156 = vector.load %arg11[%c0_37, %c0_38] : memref<128x16xf32, #tpu.memory_space<vmem>>, vector<128x16xf32>
    tpu.vector_store %arg11[%c0_37, %c0_38], %155 {strides = array<i32>} : memref<128x16xf32, #tpu.memory_space<vmem>>, vector<128x16xf32>,
    %c0_i32_39 = arith.constant 0 : i32
    %157 = arith.cmpi eq, %arg2, %c0_i32_39 : i32
    %158 = arith.extui %157 : i1 to i32
    %c0_i32_40 = arith.constant 0 : i32
    %159 = arith.cmpi ne, %158, %c0_i32_40 : i32
    scf.if %159 {
      %c0_41 = arith.constant 0 : index
      %c0_42 = arith.constant 0 : index
      %160 = vector.load %arg11[%c0_41, %c0_42] : memref<128x16xf32, #tpu.memory_space<vmem>>, vector<128x16xf32>
      %161 = arith.truncf %160 : vector<128x16xf32> to vector<128x16xbf16>
      %c0_43 = arith.constant 0 : index
      %c0_44 = arith.constant 0 : index
      %c0_45 = arith.constant 0 : index
      %162 = vector.load %arg10[%c0_43, %c0_44, %c0_45] : memref<1x128x16xbf16, #tpu.memory_space<vmem>>, vector<1x128x16xbf16>
      %163 = vector.shape_cast %162 : vector<1x128x16xbf16> to vector<128x16xbf16>
      %164 = vector.shape_cast %161 : vector<128x16xbf16> to vector<1x128x16xbf16>
      tpu.vector_store %arg10[%c0_43, %c0_44, %c0_45], %164 {strides = array<i32>} : memref<1x128x16xbf16, #tpu.memory_space<vmem>>, vector<1x128x16xbf16>,
    } else {
    }
    return
  }
  func.func @transform_0(%arg0: i32, %arg1: i32, %arg2: i32) -> (i32, i32, i32, i32) {
    %c0_i32 = arith.constant 0 : i32
    %c0_i32_0 = arith.constant 0 : i32
    return %arg0, %c0_i32, %arg2, %arg1 : i32, i32, i32, i32
  }
  func.func @transform_1(%arg0: i32, %arg1: i32, %arg2: i32) -> (i32, i32) {
    %c0_i32 = arith.constant 0 : i32
    %c0_i32_0 = arith.constant 0 : i32
    %c0_i32_1 = arith.constant 0 : i32
    return %c0_i32, %c0_i32_0 : i32, i32
  }
  func.func @transform_2(%arg0: i32, %arg1: i32, %arg2: i32) -> (i32, i32) {
    %c0_i32 = arith.constant 0 : i32
    %c0_i32_0 = arith.constant 0 : i32
    %c0_i32_1 = arith.constant 0 : i32
    return %c0_i32, %c0_i32_0 : i32, i32
  }
  func.func @transform_3(%arg0: i32, %arg1: i32, %arg2: i32) -> (i32, i32) {
    %c0_i32 = arith.constant 0 : i32
    %c0_i32_0 = arith.constant 0 : i32
    %c0_i32_1 = arith.constant 0 : i32
    return %c0_i32, %c0_i32_0 : i32, i32
  }
  func.func @transform_4(%arg0: i32, %arg1: i32, %arg2: i32) -> (i32, i32) {
    %c0_i32 = arith.constant 0 : i32
    %c0_i32_0 = arith.constant 0 : i32
    %c0_i32_1 = arith.constant 0 : i32
    return %c0_i32, %c0_i32_0 : i32, i32
  }
  func.func @transform_5(%arg0: i32, %arg1: i32, %arg2: i32) -> (i32, i32) {
    %c0_i32 = arith.constant 0 : i32
    %c0_i32_0 = arith.constant 0 : i32
    %c0_i32_1 = arith.constant 0 : i32
    return %c0_i32, %c0_i32_0 : i32, i32
  }
  func.func @transform_6(%arg0: i32, %arg1: i32, %arg2: i32) -> (i32, i32) {
    %c0_i32 = arith.constant 0 : i32
    %c0_i32_0 = arith.constant 0 : i32
    %c0_i32_1 = arith.constant 0 : i32
    return %c0_i32, %c0_i32_0 : i32, i32
  }
  func.func @transform_7(%arg0: i32, %arg1: i32, %arg2: i32) -> (i32, i32, i32) {
    %c0_i32 = arith.constant 0 : i32
    %c0_i32_0 = arith.constant 0 : i32
    return %arg0, %c0_i32, %arg1 : i32, i32, i32
  }
}

module attributes {stable_mosaic.version = 11 : i64} {
  func.func @_pointnet_kernel(%arg0: i32, %arg1: i32, %arg2: memref<1x128x16xbf16, #tpu.memory_space<vmem>>, %arg3: memref<1x3x16xf32, #tpu.memory_space<vmem>>, %arg4: memref<256x128xbf16, #tpu.memory_space<vmem>>, %arg5: memref<256x3xf32, #tpu.memory_space<vmem>>, %arg6: memref<256x1xf32, #tpu.memory_space<vmem>>, %arg7: memref<512x256xbf16, #tpu.memory_space<vmem>>, %arg8: memref<512x1xf32, #tpu.memory_space<vmem>>, %arg9: memref<1024x512xbf16, #tpu.memory_space<vmem>>, %arg10: memref<1024x1xf32, #tpu.memory_space<vmem>>, %arg11: memref<32x1024xbf16, #tpu.memory_space<vmem>>, %arg12: memref<32x1xf32, #tpu.memory_space<vmem>>, %arg13: memref<1x32x1xf32, #tpu.memory_space<vmem>>, %arg14: memref<32x1xf32, #tpu.memory_space<vmem>>) attributes {dimension_semantics = [#tpu.dimension_semantics<parallel>, #tpu.dimension_semantics<arbitrary>], iteration_bounds = array<i64: 2, 1>, scalar_prefetch = 0 : i64, scratch_operands = 1 : i64, tpu.core_type = #tpu.core_type<tc>, window_params = [{transform_indices = @transform_0, window_bounds = array<i64: 1, 128, 16>}, {transform_indices = @transform_1, window_bounds = array<i64: 1, 3, 16>}, {pipeline_mode = #tpu.pipeline_mode<synchronous>, transform_indices = @transform_2, window_bounds = array<i64: 256, 128>}, {pipeline_mode = #tpu.pipeline_mode<synchronous>, transform_indices = @transform_3, window_bounds = array<i64: 256, 3>}, {pipeline_mode = #tpu.pipeline_mode<synchronous>, transform_indices = @transform_4, window_bounds = array<i64: 256, 1>}, {pipeline_mode = #tpu.pipeline_mode<synchronous>, transform_indices = @transform_5, window_bounds = array<i64: 512, 256>}, {pipeline_mode = #tpu.pipeline_mode<synchronous>, transform_indices = @transform_6, window_bounds = array<i64: 512, 1>}, {pipeline_mode = #tpu.pipeline_mode<synchronous>, transform_indices = @transform_7, window_bounds = array<i64: 1024, 512>}, {pipeline_mode = #tpu.pipeline_mode<synchronous>, transform_indices = @transform_8, window_bounds = array<i64: 1024, 1>}, {pipeline_mode = #tpu.pipeline_mode<synchronous>, transform_indices = @transform_9, window_bounds = array<i64: 32, 1024>}, {pipeline_mode = #tpu.pipeline_mode<synchronous>, transform_indices = @transform_10, window_bounds = array<i64: 32, 1>}, {transform_indices = @transform_11, window_bounds = array<i64: 1, 32, 1>}]} {
    %c0_i32 = arith.constant 0 : i32
    %0 = arith.cmpi eq, %arg1, %c0_i32 : i32
    %1 = arith.extui %0 : i1 to i32
    %c0_i32_0 = arith.constant 0 : i32
    %2 = arith.cmpi ne, %1, %c0_i32_0 : i32
    scf.if %2 {
      %cst_37 = arith.constant 0xFF800000 : f32
      %63 = vector.broadcast %cst_37 : f32 to vector<32x1xf32>
      %c0_38 = arith.constant 0 : index
      %c0_39 = arith.constant 0 : index
      %64 = vector.load %arg14[%c0_38, %c0_39] : memref<32x1xf32, #tpu.memory_space<vmem>>, vector<32x1xf32>
      tpu.vector_store %arg14[%c0_38, %c0_39], %63 {strides = array<i32>} : memref<32x1xf32, #tpu.memory_space<vmem>>, vector<32x1xf32>,
    } else {
    }
    %c0 = arith.constant 0 : index
    %c0_1 = arith.constant 0 : index
    %c0_2 = arith.constant 0 : index
    %3 = vector.load %arg2[%c0, %c0_1, %c0_2] : memref<1x128x16xbf16, #tpu.memory_space<vmem>>, vector<1x128x16xbf16>
    %4 = vector.shape_cast %3 : vector<1x128x16xbf16> to vector<128x16xbf16>
    %c0_3 = arith.constant 0 : index
    %c0_4 = arith.constant 0 : index
    %c0_5 = arith.constant 0 : index
    %5 = vector.load %arg3[%c0_3, %c0_4, %c0_5] : memref<1x3x16xf32, #tpu.memory_space<vmem>>, vector<1x3x16xf32>
    %6 = vector.shape_cast %5 : vector<1x3x16xf32> to vector<3x16xf32>
    %c0_6 = arith.constant 0 : index
    %c0_7 = arith.constant 0 : index
    %7 = vector.load %arg5[%c0_6, %c0_7] : memref<256x3xf32, #tpu.memory_space<vmem>>, vector<256x3xf32>
    %c0_8 = arith.constant 0 : index
    %c0_9 = arith.constant 0 : index
    %8 = vector.load %arg6[%c0_8, %c0_9] : memref<256x1xf32, #tpu.memory_space<vmem>>, vector<256x1xf32>
    %c0_10 = arith.constant 0 : index
    %c0_11 = arith.constant 0 : index
    %9 = vector.load %arg4[%c0_10, %c0_11] : memref<256x128xbf16, #tpu.memory_space<vmem>>, vector<256x128xbf16>
    %cst = arith.constant dense<0.000000e+00> : vector<256x16xf32>
    %10 = tpu.matmul %9, %4, %cst {dimension_numbers = #tpu.dot_dimension_numbers<[1], [0], [0], [1], [0, 0, 1, 1], [], []>} : vector<256x128xbf16>, vector<128x16xbf16>, vector<256x16xf32> -> vector<256x16xf32>
    %11 = vector.extract_strided_slice %7 {offsets = [0, 0], sizes = [256, 1], strides = [1, 1]} : vector<256x3xf32> to vector<256x1xf32>
    %12 = vector.extract_strided_slice %6 {offsets = [0, 0], sizes = [1, 16], strides = [1, 1]} : vector<3x16xf32> to vector<1x16xf32>
    %13 = vector.broadcast %11 : vector<256x1xf32> to vector<256x16xf32>
    %14 = vector.broadcast %12 : vector<1x16xf32> to vector<256x16xf32>
    %15 = arith.mulf %13, %14 : vector<256x16xf32>
    %16 = vector.extract_strided_slice %7 {offsets = [0, 1], sizes = [256, 1], strides = [1, 1]} : vector<256x3xf32> to vector<256x1xf32>
    %17 = vector.extract_strided_slice %6 {offsets = [1, 0], sizes = [1, 16], strides = [1, 1]} : vector<3x16xf32> to vector<1x16xf32>
    %18 = vector.broadcast %16 : vector<256x1xf32> to vector<256x16xf32>
    %19 = vector.broadcast %17 : vector<1x16xf32> to vector<256x16xf32>
    %20 = arith.mulf %18, %19 : vector<256x16xf32>
    %21 = arith.addf %15, %20 : vector<256x16xf32>
    %22 = vector.extract_strided_slice %7 {offsets = [0, 2], sizes = [256, 1], strides = [1, 1]} : vector<256x3xf32> to vector<256x1xf32>
    %23 = vector.extract_strided_slice %6 {offsets = [2, 0], sizes = [1, 16], strides = [1, 1]} : vector<3x16xf32> to vector<1x16xf32>
    %24 = vector.broadcast %22 : vector<256x1xf32> to vector<256x16xf32>
    %25 = vector.broadcast %23 : vector<1x16xf32> to vector<256x16xf32>
    %26 = arith.mulf %24, %25 : vector<256x16xf32>
    %27 = arith.addf %21, %26 : vector<256x16xf32>
    %28 = arith.addf %10, %27 : vector<256x16xf32>
    %29 = vector.broadcast %8 : vector<256x1xf32> to vector<256x16xf32>
    %30 = arith.addf %28, %29 : vector<256x16xf32>
    %cst_12 = arith.constant 0.000000e+00 : f32
    %31 = vector.broadcast %cst_12 : f32 to vector<256x16xf32>
    %32 = arith.maximumf %30, %31 : vector<256x16xf32>
    %33 = arith.truncf %32 : vector<256x16xf32> to vector<256x16xbf16>
    %c0_13 = arith.constant 0 : index
    %c0_14 = arith.constant 0 : index
    %34 = vector.load %arg7[%c0_13, %c0_14] : memref<512x256xbf16, #tpu.memory_space<vmem>>, vector<512x256xbf16>
    %cst_15 = arith.constant dense<0.000000e+00> : vector<512x16xf32>
    %35 = tpu.matmul %34, %33, %cst_15 {dimension_numbers = #tpu.dot_dimension_numbers<[1], [0], [0], [1], [0, 0, 1, 1], [], []>} : vector<512x256xbf16>, vector<256x16xbf16>, vector<512x16xf32> -> vector<512x16xf32>
    %c0_16 = arith.constant 0 : index
    %c0_17 = arith.constant 0 : index
    %36 = vector.load %arg8[%c0_16, %c0_17] : memref<512x1xf32, #tpu.memory_space<vmem>>, vector<512x1xf32>
    %37 = vector.broadcast %36 : vector<512x1xf32> to vector<512x16xf32>
    %38 = arith.addf %35, %37 : vector<512x16xf32>
    %cst_18 = arith.constant 0.000000e+00 : f32
    %39 = vector.broadcast %cst_18 : f32 to vector<512x16xf32>
    %40 = arith.maximumf %38, %39 : vector<512x16xf32>
    %41 = arith.truncf %40 : vector<512x16xf32> to vector<512x16xbf16>
    %c0_19 = arith.constant 0 : index
    %c0_20 = arith.constant 0 : index
    %42 = vector.load %arg9[%c0_19, %c0_20] : memref<1024x512xbf16, #tpu.memory_space<vmem>>, vector<1024x512xbf16>
    %cst_21 = arith.constant dense<0.000000e+00> : vector<1024x16xf32>
    %43 = tpu.matmul %42, %41, %cst_21 {dimension_numbers = #tpu.dot_dimension_numbers<[1], [0], [0], [1], [0, 0, 1, 1], [], []>} : vector<1024x512xbf16>, vector<512x16xbf16>, vector<1024x16xf32> -> vector<1024x16xf32>
    %c0_22 = arith.constant 0 : index
    %c0_23 = arith.constant 0 : index
    %44 = vector.load %arg10[%c0_22, %c0_23] : memref<1024x1xf32, #tpu.memory_space<vmem>>, vector<1024x1xf32>
    %45 = vector.broadcast %44 : vector<1024x1xf32> to vector<1024x16xf32>
    %46 = arith.addf %43, %45 : vector<1024x16xf32>
    %cst_24 = arith.constant 0.000000e+00 : f32
    %47 = vector.broadcast %cst_24 : f32 to vector<1024x16xf32>
    %48 = arith.maximumf %46, %47 : vector<1024x16xf32>
    %49 = arith.truncf %48 : vector<1024x16xf32> to vector<1024x16xbf16>
    %c0_25 = arith.constant 0 : index
    %c0_26 = arith.constant 0 : index
    %50 = vector.load %arg11[%c0_25, %c0_26] : memref<32x1024xbf16, #tpu.memory_space<vmem>>, vector<32x1024xbf16>
    %cst_27 = arith.constant dense<0.000000e+00> : vector<32x16xf32>
    %51 = tpu.matmul %50, %49, %cst_27 {dimension_numbers = #tpu.dot_dimension_numbers<[1], [0], [0], [1], [0, 0, 1, 1], [], []>} : vector<32x1024xbf16>, vector<1024x16xbf16>, vector<32x16xf32> -> vector<32x16xf32>
    %c0_28 = arith.constant 0 : index
    %c0_29 = arith.constant 0 : index
    %52 = vector.load %arg12[%c0_28, %c0_29] : memref<32x1xf32, #tpu.memory_space<vmem>>, vector<32x1xf32>
    %53 = vector.broadcast %52 : vector<32x1xf32> to vector<32x16xf32>
    %54 = arith.addf %51, %53 : vector<32x16xf32>
    %c0_30 = arith.constant 0 : index
    %c0_31 = arith.constant 0 : index
    %55 = vector.load %arg14[%c0_30, %c0_31] : memref<32x1xf32, #tpu.memory_space<vmem>>, vector<32x1xf32>
    %cst_32 = arith.constant dense<0xFF800000> : vector<32xf32>
    %56 = vector.multi_reduction <maximumf>, %54, %cst_32 [1] : vector<32x16xf32> to vector<32xf32>
    %57 = vector.shape_cast %56 : vector<32xf32> to vector<32x1xf32>
    %58 = arith.maximumf %55, %57 : vector<32x1xf32>
    %c0_33 = arith.constant 0 : index
    %c0_34 = arith.constant 0 : index
    %59 = vector.load %arg14[%c0_33, %c0_34] : memref<32x1xf32, #tpu.memory_space<vmem>>, vector<32x1xf32>
    tpu.vector_store %arg14[%c0_33, %c0_34], %58 {strides = array<i32>} : memref<32x1xf32, #tpu.memory_space<vmem>>, vector<32x1xf32>,
    %c0_i32_35 = arith.constant 0 : i32
    %60 = arith.cmpi eq, %arg1, %c0_i32_35 : i32
    %61 = arith.extui %60 : i1 to i32
    %c0_i32_36 = arith.constant 0 : i32
    %62 = arith.cmpi ne, %61, %c0_i32_36 : i32
    scf.if %62 {
      %c0_37 = arith.constant 0 : index
      %c0_38 = arith.constant 0 : index
      %63 = vector.load %arg14[%c0_37, %c0_38] : memref<32x1xf32, #tpu.memory_space<vmem>>, vector<32x1xf32>
      %c0_39 = arith.constant 0 : index
      %c0_40 = arith.constant 0 : index
      %c0_41 = arith.constant 0 : index
      %64 = vector.load %arg13[%c0_39, %c0_40, %c0_41] : memref<1x32x1xf32, #tpu.memory_space<vmem>>, vector<1x32x1xf32>
      %65 = vector.shape_cast %64 : vector<1x32x1xf32> to vector<32x1xf32>
      %66 = vector.shape_cast %63 : vector<32x1xf32> to vector<1x32x1xf32>
      tpu.vector_store %arg13[%c0_39, %c0_40, %c0_41], %66 {strides = array<i32>} : memref<1x32x1xf32, #tpu.memory_space<vmem>>, vector<1x32x1xf32>,
    } else {
    }
    return
  }
  func.func @transform_0(%arg0: i32, %arg1: i32) -> (i32, i32, i32) {
    %c0_i32 = arith.constant 0 : i32
    %c0_i32_0 = arith.constant 0 : i32
    return %arg0, %c0_i32, %arg1 : i32, i32, i32
  }
  func.func @transform_1(%arg0: i32, %arg1: i32) -> (i32, i32, i32) {
    %c0_i32 = arith.constant 0 : i32
    %c0_i32_0 = arith.constant 0 : i32
    return %arg0, %c0_i32, %arg1 : i32, i32, i32
  }
  func.func @transform_2(%arg0: i32, %arg1: i32) -> (i32, i32) {
    %c0_i32 = arith.constant 0 : i32
    %c0_i32_0 = arith.constant 0 : i32
    %c0_i32_1 = arith.constant 0 : i32
    return %c0_i32, %c0_i32_0 : i32, i32
  }
  func.func @transform_3(%arg0: i32, %arg1: i32) -> (i32, i32) {
    %c0_i32 = arith.constant 0 : i32
    %c0_i32_0 = arith.constant 0 : i32
    %c0_i32_1 = arith.constant 0 : i32
    return %c0_i32, %c0_i32_0 : i32, i32
  }
  func.func @transform_4(%arg0: i32, %arg1: i32) -> (i32, i32) {
    %c0_i32 = arith.constant 0 : i32
    %c0_i32_0 = arith.constant 0 : i32
    %c0_i32_1 = arith.constant 0 : i32
    return %c0_i32, %c0_i32_0 : i32, i32
  }
  func.func @transform_5(%arg0: i32, %arg1: i32) -> (i32, i32) {
    %c0_i32 = arith.constant 0 : i32
    %c0_i32_0 = arith.constant 0 : i32
    %c0_i32_1 = arith.constant 0 : i32
    return %c0_i32, %c0_i32_0 : i32, i32
  }
  func.func @transform_6(%arg0: i32, %arg1: i32) -> (i32, i32) {
    %c0_i32 = arith.constant 0 : i32
    %c0_i32_0 = arith.constant 0 : i32
    %c0_i32_1 = arith.constant 0 : i32
    return %c0_i32, %c0_i32_0 : i32, i32
  }
  func.func @transform_7(%arg0: i32, %arg1: i32) -> (i32, i32) {
    %c0_i32 = arith.constant 0 : i32
    %c0_i32_0 = arith.constant 0 : i32
    %c0_i32_1 = arith.constant 0 : i32
    return %c0_i32, %c0_i32_0 : i32, i32
  }
  func.func @transform_8(%arg0: i32, %arg1: i32) -> (i32, i32) {
    %c0_i32 = arith.constant 0 : i32
    %c0_i32_0 = arith.constant 0 : i32
    %c0_i32_1 = arith.constant 0 : i32
    return %c0_i32, %c0_i32_0 : i32, i32
  }
  func.func @transform_9(%arg0: i32, %arg1: i32) -> (i32, i32) {
    %c0_i32 = arith.constant 0 : i32
    %c0_i32_0 = arith.constant 0 : i32
    %c0_i32_1 = arith.constant 0 : i32
    return %c0_i32, %c0_i32_0 : i32, i32
  }
  func.func @transform_10(%arg0: i32, %arg1: i32) -> (i32, i32) {
    %c0_i32 = arith.constant 0 : i32
    %c0_i32_0 = arith.constant 0 : i32
    %c0_i32_1 = arith.constant 0 : i32
    return %c0_i32, %c0_i32_0 : i32, i32
  }
  func.func @transform_11(%arg0: i32, %arg1: i32) -> (i32, i32, i32) {
    %c0_i32 = arith.constant 0 : i32
    %c0_i32_0 = arith.constant 0 : i32
    %c0_i32_1 = arith.constant 0 : i32
    return %arg0, %c0_i32, %c0_i32_0 : i32, i32, i32
  }
}

module attributes {stable_mosaic.version = 11 : i64} {
  func.func @_decoder_bits_kernel(%arg0: i32, %arg1: memref<2x32xf32, #tpu.memory_space<vmem>>, %arg2: memref<32x256xbf16, #tpu.memory_space<vmem>>, %arg3: memref<1x256xf32, #tpu.memory_space<vmem>>, %arg4: memref<256x512xbf16, #tpu.memory_space<vmem>>, %arg5: memref<1x512xf32, #tpu.memory_space<vmem>>, %arg6: memref<512x1024xbf16, #tpu.memory_space<vmem>>, %arg7: memref<1x1024xf32, #tpu.memory_space<vmem>>, %arg8: memref<1024x48xbf16, #tpu.memory_space<vmem>>, %arg9: memref<1x48xf32, #tpu.memory_space<vmem>>, %arg10: memref<4x32xf32, #tpu.memory_space<vmem>>, %arg11: memref<4x32xf32, #tpu.memory_space<vmem>>, %arg12: memref<3x32xf32, #tpu.memory_space<vmem>>, %arg13: memref<2x48xf32, #tpu.memory_space<vmem>>, %arg14: memref<1x1xf32, #tpu.memory_space<vmem>>) attributes {dimension_semantics = [#tpu.dimension_semantics<arbitrary>], iteration_bounds = array<i64: 1>, scalar_prefetch = 0 : i64, scratch_operands = 0 : i64, tpu.core_type = #tpu.core_type<tc>, window_params = [{pipeline_mode = #tpu.pipeline_mode<synchronous>, transform_indices = @transform_0, window_bounds = array<i64: 2, 32>}, {pipeline_mode = #tpu.pipeline_mode<synchronous>, transform_indices = @transform_1, window_bounds = array<i64: 32, 256>}, {pipeline_mode = #tpu.pipeline_mode<synchronous>, transform_indices = @transform_2, window_bounds = array<i64: 1, 256>}, {pipeline_mode = #tpu.pipeline_mode<synchronous>, transform_indices = @transform_3, window_bounds = array<i64: 256, 512>}, {pipeline_mode = #tpu.pipeline_mode<synchronous>, transform_indices = @transform_4, window_bounds = array<i64: 1, 512>}, {pipeline_mode = #tpu.pipeline_mode<synchronous>, transform_indices = @transform_5, window_bounds = array<i64: 512, 1024>}, {pipeline_mode = #tpu.pipeline_mode<synchronous>, transform_indices = @transform_6, window_bounds = array<i64: 1, 1024>}, {pipeline_mode = #tpu.pipeline_mode<synchronous>, transform_indices = @transform_7, window_bounds = array<i64: 1024, 48>}, {pipeline_mode = #tpu.pipeline_mode<synchronous>, transform_indices = @transform_8, window_bounds = array<i64: 1, 48>}, {pipeline_mode = #tpu.pipeline_mode<synchronous>, transform_indices = @transform_9, window_bounds = array<i64: 4, 32>}, {pipeline_mode = #tpu.pipeline_mode<synchronous>, transform_indices = @transform_10, window_bounds = array<i64: 4, 32>}, {pipeline_mode = #tpu.pipeline_mode<synchronous>, transform_indices = @transform_11, window_bounds = array<i64: 3, 32>}, {pipeline_mode = #tpu.pipeline_mode<synchronous>, transform_indices = @transform_12, window_bounds = array<i64: 2, 48>}, {pipeline_mode = #tpu.pipeline_mode<synchronous>, transform_indices = @transform_13, window_bounds = array<i64: 1, 1>}]} {
    %c0 = arith.constant 0 : index
    %c0_0 = arith.constant 0 : index
    %0 = vector.load %arg1[%c0, %c0_0] : memref<2x32xf32, #tpu.memory_space<vmem>>, vector<2x32xf32>
    %1 = math.roundeven %0 : vector<2x32xf32>
    %2 = arith.truncf %1 : vector<2x32xf32> to vector<2x32xbf16>
    %c0_1 = arith.constant 0 : index
    %c0_2 = arith.constant 0 : index
    %3 = vector.load %arg2[%c0_1, %c0_2] : memref<32x256xbf16, #tpu.memory_space<vmem>>, vector<32x256xbf16>
    %cst = arith.constant dense<0.000000e+00> : vector<2x256xf32>
    %4 = tpu.matmul %2, %3, %cst {dimension_numbers = #tpu.dot_dimension_numbers<[1], [0], [0], [1], [0, 0, 1, 1], [], []>} : vector<2x32xbf16>, vector<32x256xbf16>, vector<2x256xf32> -> vector<2x256xf32>
    %c0_3 = arith.constant 0 : index
    %c0_4 = arith.constant 0 : index
    %5 = vector.load %arg3[%c0_3, %c0_4] : memref<1x256xf32, #tpu.memory_space<vmem>>, vector<1x256xf32>
    %6 = vector.broadcast %5 : vector<1x256xf32> to vector<2x256xf32>
    %7 = arith.addf %4, %6 : vector<2x256xf32>
    %cst_5 = arith.constant 0.000000e+00 : f32
    %8 = vector.broadcast %cst_5 : f32 to vector<2x256xf32>
    %9 = arith.maximumf %7, %8 : vector<2x256xf32>
    %10 = arith.truncf %9 : vector<2x256xf32> to vector<2x256xbf16>
    %c0_6 = arith.constant 0 : index
    %c0_7 = arith.constant 0 : index
    %11 = vector.load %arg4[%c0_6, %c0_7] : memref<256x512xbf16, #tpu.memory_space<vmem>>, vector<256x512xbf16>
    %cst_8 = arith.constant dense<0.000000e+00> : vector<2x512xf32>
    %12 = tpu.matmul %10, %11, %cst_8 {dimension_numbers = #tpu.dot_dimension_numbers<[1], [0], [0], [1], [0, 0, 1, 1], [], []>} : vector<2x256xbf16>, vector<256x512xbf16>, vector<2x512xf32> -> vector<2x512xf32>
    %c0_9 = arith.constant 0 : index
    %c0_10 = arith.constant 0 : index
    %13 = vector.load %arg5[%c0_9, %c0_10] : memref<1x512xf32, #tpu.memory_space<vmem>>, vector<1x512xf32>
    %14 = vector.broadcast %13 : vector<1x512xf32> to vector<2x512xf32>
    %15 = arith.addf %12, %14 : vector<2x512xf32>
    %cst_11 = arith.constant 0.000000e+00 : f32
    %16 = vector.broadcast %cst_11 : f32 to vector<2x512xf32>
    %17 = arith.maximumf %15, %16 : vector<2x512xf32>
    %18 = arith.truncf %17 : vector<2x512xf32> to vector<2x512xbf16>
    %c0_12 = arith.constant 0 : index
    %c0_13 = arith.constant 0 : index
    %19 = vector.load %arg6[%c0_12, %c0_13] : memref<512x1024xbf16, #tpu.memory_space<vmem>>, vector<512x1024xbf16>
    %cst_14 = arith.constant dense<0.000000e+00> : vector<2x1024xf32>
    %20 = tpu.matmul %18, %19, %cst_14 {dimension_numbers = #tpu.dot_dimension_numbers<[1], [0], [0], [1], [0, 0, 1, 1], [], []>} : vector<2x512xbf16>, vector<512x1024xbf16>, vector<2x1024xf32> -> vector<2x1024xf32>
    %c0_15 = arith.constant 0 : index
    %c0_16 = arith.constant 0 : index
    %21 = vector.load %arg7[%c0_15, %c0_16] : memref<1x1024xf32, #tpu.memory_space<vmem>>, vector<1x1024xf32>
    %22 = vector.broadcast %21 : vector<1x1024xf32> to vector<2x1024xf32>
    %23 = arith.addf %20, %22 : vector<2x1024xf32>
    %cst_17 = arith.constant 0.000000e+00 : f32
    %24 = vector.broadcast %cst_17 : f32 to vector<2x1024xf32>
    %25 = arith.maximumf %23, %24 : vector<2x1024xf32>
    %26 = arith.truncf %25 : vector<2x1024xf32> to vector<2x1024xbf16>
    %c0_18 = arith.constant 0 : index
    %c0_19 = arith.constant 0 : index
    %27 = vector.load %arg8[%c0_18, %c0_19] : memref<1024x48xbf16, #tpu.memory_space<vmem>>, vector<1024x48xbf16>
    %cst_20 = arith.constant dense<0.000000e+00> : vector<2x48xf32>
    %28 = tpu.matmul %26, %27, %cst_20 {dimension_numbers = #tpu.dot_dimension_numbers<[1], [0], [0], [1], [0, 0, 1, 1], [], []>} : vector<2x1024xbf16>, vector<1024x48xbf16>, vector<2x48xf32> -> vector<2x48xf32>
    %c0_21 = arith.constant 0 : index
    %c0_22 = arith.constant 0 : index
    %29 = vector.load %arg9[%c0_21, %c0_22] : memref<1x48xf32, #tpu.memory_space<vmem>>, vector<1x48xf32>
    %30 = vector.broadcast %29 : vector<1x48xf32> to vector<2x48xf32>
    %31 = arith.addf %28, %30 : vector<2x48xf32>
    %c0_23 = arith.constant 0 : index
    %c0_24 = arith.constant 0 : index
    %32 = vector.load %arg13[%c0_23, %c0_24] : memref<2x48xf32, #tpu.memory_space<vmem>>, vector<2x48xf32>
    tpu.vector_store %arg13[%c0_23, %c0_24], %31 {strides = array<i32>} : memref<2x48xf32, #tpu.memory_space<vmem>>, vector<2x48xf32>,
    %c0_25 = arith.constant 0 : index
    %c0_26 = arith.constant 0 : index
    %33 = vector.load %arg10[%c0_25, %c0_26] : memref<4x32xf32, #tpu.memory_space<vmem>>, vector<4x32xf32>
    %c0_27 = arith.constant 0 : index
    %c0_28 = arith.constant 0 : index
    %34 = vector.load %arg11[%c0_27, %c0_28] : memref<4x32xf32, #tpu.memory_space<vmem>>, vector<4x32xf32>
    %c0_29 = arith.constant 0 : index
    %c0_30 = arith.constant 0 : index
    %35 = vector.load %arg12[%c0_29, %c0_30] : memref<3x32xf32, #tpu.memory_space<vmem>>, vector<3x32xf32>
    %36 = vector.extract_strided_slice %33 {offsets = [0, 0], sizes = [1, 32], strides = [1, 1]} : vector<4x32xf32> to vector<1x32xf32>
    %cst_31 = arith.constant 0.000000e+00 : f32
    %37 = vector.broadcast %cst_31 : f32 to vector<1x32xf32>
    %38 = arith.maximumf %36, %37 : vector<1x32xf32>
    %39 = vector.broadcast %cst_31 : f32 to vector<1x32xf32>
    %40 = arith.subf %36, %39 : vector<1x32xf32>
    %41 = arith.cmpf one, %40, %40 : vector<1x32xf32>
    %42 = vector.broadcast %cst_31 : f32 to vector<1x32xf32>
    %43 = arith.addf %36, %42 : vector<1x32xf32>
    %44 = math.absf %40 : vector<1x32xf32>
    %cst_32 = arith.constant 0.000000e+00 : f32
    %45 = vector.broadcast %cst_32 : f32 to vector<1x32xf32>
    %46 = arith.subf %45, %44 : vector<1x32xf32>
    %47 = math.exp %46 : vector<1x32xf32>
    %48 = math.log1p %47 : vector<1x32xf32>
    %49 = arith.addf %38, %48 : vector<1x32xf32>
    %50 = arith.select %41, %43, %49 : vector<1x32xi1>, vector<1x32xf32>
    %51 = vector.extract_strided_slice %33 {offsets = [1, 0], sizes = [1, 32], strides = [1, 1]} : vector<4x32xf32> to vector<1x32xf32>
    %cst_33 = arith.constant 0.000000e+00 : f32
    %52 = vector.broadcast %cst_33 : f32 to vector<1x32xf32>
    %53 = arith.maximumf %51, %52 : vector<1x32xf32>
    %54 = vector.broadcast %cst_33 : f32 to vector<1x32xf32>
    %55 = arith.subf %51, %54 : vector<1x32xf32>
    %56 = arith.cmpf one, %55, %55 : vector<1x32xf32>
    %57 = vector.broadcast %cst_33 : f32 to vector<1x32xf32>
    %58 = arith.addf %51, %57 : vector<1x32xf32>
    %59 = math.absf %55 : vector<1x32xf32>
    %cst_34 = arith.constant 0.000000e+00 : f32
    %60 = vector.broadcast %cst_34 : f32 to vector<1x32xf32>
    %61 = arith.subf %60, %59 : vector<1x32xf32>
    %62 = math.exp %61 : vector<1x32xf32>
    %63 = math.log1p %62 : vector<1x32xf32>
    %64 = arith.addf %53, %63 : vector<1x32xf32>
    %65 = arith.select %56, %58, %64 : vector<1x32xi1>, vector<1x32xf32>
    %66 = vector.extract_strided_slice %33 {offsets = [2, 0], sizes = [1, 32], strides = [1, 1]} : vector<4x32xf32> to vector<1x32xf32>
    %cst_35 = arith.constant 0.000000e+00 : f32
    %67 = vector.broadcast %cst_35 : f32 to vector<1x32xf32>
    %68 = arith.maximumf %66, %67 : vector<1x32xf32>
    %69 = vector.broadcast %cst_35 : f32 to vector<1x32xf32>
    %70 = arith.subf %66, %69 : vector<1x32xf32>
    %71 = arith.cmpf one, %70, %70 : vector<1x32xf32>
    %72 = vector.broadcast %cst_35 : f32 to vector<1x32xf32>
    %73 = arith.addf %66, %72 : vector<1x32xf32>
    %74 = math.absf %70 : vector<1x32xf32>
    %cst_36 = arith.constant 0.000000e+00 : f32
    %75 = vector.broadcast %cst_36 : f32 to vector<1x32xf32>
    %76 = arith.subf %75, %74 : vector<1x32xf32>
    %77 = math.exp %76 : vector<1x32xf32>
    %78 = math.log1p %77 : vector<1x32xf32>
    %79 = arith.addf %68, %78 : vector<1x32xf32>
    %80 = arith.select %71, %73, %79 : vector<1x32xi1>, vector<1x32xf32>
    %81 = vector.extract_strided_slice %33 {offsets = [3, 0], sizes = [1, 32], strides = [1, 1]} : vector<4x32xf32> to vector<1x32xf32>
    %cst_37 = arith.constant 0.000000e+00 : f32
    %82 = vector.broadcast %cst_37 : f32 to vector<1x32xf32>
    %83 = arith.maximumf %81, %82 : vector<1x32xf32>
    %84 = vector.broadcast %cst_37 : f32 to vector<1x32xf32>
    %85 = arith.subf %81, %84 : vector<1x32xf32>
    %86 = arith.cmpf one, %85, %85 : vector<1x32xf32>
    %87 = vector.broadcast %cst_37 : f32 to vector<1x32xf32>
    %88 = arith.addf %81, %87 : vector<1x32xf32>
    %89 = math.absf %85 : vector<1x32xf32>
    %cst_38 = arith.constant 0.000000e+00 : f32
    %90 = vector.broadcast %cst_38 : f32 to vector<1x32xf32>
    %91 = arith.subf %90, %89 : vector<1x32xf32>
    %92 = math.exp %91 : vector<1x32xf32>
    %93 = math.log1p %92 : vector<1x32xf32>
    %94 = arith.addf %83, %93 : vector<1x32xf32>
    %95 = arith.select %86, %88, %94 : vector<1x32xi1>, vector<1x32xf32>
    %96 = vector.extract_strided_slice %35 {offsets = [0, 0], sizes = [1, 32], strides = [1, 1]} : vector<3x32xf32> to vector<1x32xf32>
    %97 = math.tanh %96 : vector<1x32xf32>
    %98 = vector.extract_strided_slice %35 {offsets = [1, 0], sizes = [1, 32], strides = [1, 1]} : vector<3x32xf32> to vector<1x32xf32>
    %99 = math.tanh %98 : vector<1x32xf32>
    %100 = vector.extract_strided_slice %35 {offsets = [2, 0], sizes = [1, 32], strides = [1, 1]} : vector<3x32xf32> to vector<1x32xf32>
    %101 = math.tanh %100 : vector<1x32xf32>
    %cst_39 = arith.constant 5.000000e-01 : f32
    %102 = vector.broadcast %cst_39 : f32 to vector<2x32xf32>
    %103 = arith.addf %1, %102 : vector<2x32xf32>
    %104 = vector.broadcast %50 : vector<1x32xf32> to vector<2x32xf32>
    %105 = arith.mulf %103, %104 : vector<2x32xf32>
    %106 = vector.extract_strided_slice %34 {offsets = [0, 0], sizes = [1, 32], strides = [1, 1]} : vector<4x32xf32> to vector<1x32xf32>
    %107 = vector.broadcast %106 : vector<1x32xf32> to vector<2x32xf32>
    %108 = arith.addf %105, %107 : vector<2x32xf32>
    %109 = math.tanh %108 : vector<2x32xf32>
    %110 = vector.broadcast %97 : vector<1x32xf32> to vector<2x32xf32>
    %111 = arith.mulf %109, %110 : vector<2x32xf32>
    %112 = arith.addf %108, %111 : vector<2x32xf32>
    %113 = vector.broadcast %65 : vector<1x32xf32> to vector<2x32xf32>
    %114 = arith.mulf %112, %113 : vector<2x32xf32>
    %115 = vector.extract_strided_slice %34 {offsets = [1, 0], sizes = [1, 32], strides = [1, 1]} : vector<4x32xf32> to vector<1x32xf32>
    %116 = vector.broadcast %115 : vector<1x32xf32> to vector<2x32xf32>
    %117 = arith.addf %114, %116 : vector<2x32xf32>
    %118 = math.tanh %117 : vector<2x32xf32>
    %119 = vector.broadcast %99 : vector<1x32xf32> to vector<2x32xf32>
    %120 = arith.mulf %118, %119 : vector<2x32xf32>
    %121 = arith.addf %117, %120 : vector<2x32xf32>
    %122 = vector.broadcast %80 : vector<1x32xf32> to vector<2x32xf32>
    %123 = arith.mulf %121, %122 : vector<2x32xf32>
    %124 = vector.extract_strided_slice %34 {offsets = [2, 0], sizes = [1, 32], strides = [1, 1]} : vector<4x32xf32> to vector<1x32xf32>
    %125 = vector.broadcast %124 : vector<1x32xf32> to vector<2x32xf32>
    %126 = arith.addf %123, %125 : vector<2x32xf32>
    %127 = math.tanh %126 : vector<2x32xf32>
    %128 = vector.broadcast %101 : vector<1x32xf32> to vector<2x32xf32>
    %129 = arith.mulf %127, %128 : vector<2x32xf32>
    %130 = arith.addf %126, %129 : vector<2x32xf32>
    %131 = vector.broadcast %95 : vector<1x32xf32> to vector<2x32xf32>
    %132 = arith.mulf %130, %131 : vector<2x32xf32>
    %133 = vector.extract_strided_slice %34 {offsets = [3, 0], sizes = [1, 32], strides = [1, 1]} : vector<4x32xf32> to vector<1x32xf32>
    %134 = vector.broadcast %133 : vector<1x32xf32> to vector<2x32xf32>
    %135 = arith.addf %132, %134 : vector<2x32xf32>
    %cst_40 = arith.constant 0.000000e+00 : f32
    %136 = vector.broadcast %cst_40 : f32 to vector<2x32xf32>
    %137 = arith.subf %136, %135 : vector<2x32xf32>
    %138 = math.exp %137 : vector<2x32xf32>
    %cst_41 = arith.constant 1.000000e+00 : f32
    %139 = vector.broadcast %cst_41 : f32 to vector<2x32xf32>
    %140 = arith.addf %139, %138 : vector<2x32xf32>
    %cst_42 = arith.constant 1.000000e+00 : f32
    %141 = vector.broadcast %cst_42 : f32 to vector<2x32xf32>
    %142 = arith.divf %141, %140 : vector<2x32xf32>
    %cst_43 = arith.constant 5.000000e-01 : f32
    %143 = vector.broadcast %cst_43 : f32 to vector<2x32xf32>
    %144 = arith.subf %1, %143 : vector<2x32xf32>
    %145 = vector.broadcast %50 : vector<1x32xf32> to vector<2x32xf32>
    %146 = arith.mulf %144, %145 : vector<2x32xf32>
    %147 = vector.extract_strided_slice %34 {offsets = [0, 0], sizes = [1, 32], strides = [1, 1]} : vector<4x32xf32> to vector<1x32xf32>
    %148 = vector.broadcast %147 : vector<1x32xf32> to vector<2x32xf32>
    %149 = arith.addf %146, %148 : vector<2x32xf32>
    %150 = math.tanh %149 : vector<2x32xf32>
    %151 = vector.broadcast %97 : vector<1x32xf32> to vector<2x32xf32>
    %152 = arith.mulf %150, %151 : vector<2x32xf32>
    %153 = arith.addf %149, %152 : vector<2x32xf32>
    %154 = vector.broadcast %65 : vector<1x32xf32> to vector<2x32xf32>
    %155 = arith.mulf %153, %154 : vector<2x32xf32>
    %156 = vector.extract_strided_slice %34 {offsets = [1, 0], sizes = [1, 32], strides = [1, 1]} : vector<4x32xf32> to vector<1x32xf32>
    %157 = vector.broadcast %156 : vector<1x32xf32> to vector<2x32xf32>
    %158 = arith.addf %155, %157 : vector<2x32xf32>
    %159 = math.tanh %158 : vector<2x32xf32>
    %160 = vector.broadcast %99 : vector<1x32xf32> to vector<2x32xf32>
    %161 = arith.mulf %159, %160 : vector<2x32xf32>
    %162 = arith.addf %158, %161 : vector<2x32xf32>
    %163 = vector.broadcast %80 : vector<1x32xf32> to vector<2x32xf32>
    %164 = arith.mulf %162, %163 : vector<2x32xf32>
    %165 = vector.extract_strided_slice %34 {offsets = [2, 0], sizes = [1, 32], strides = [1, 1]} : vector<4x32xf32> to vector<1x32xf32>
    %166 = vector.broadcast %165 : vector<1x32xf32> to vector<2x32xf32>
    %167 = arith.addf %164, %166 : vector<2x32xf32>
    %168 = math.tanh %167 : vector<2x32xf32>
    %169 = vector.broadcast %101 : vector<1x32xf32> to vector<2x32xf32>
    %170 = arith.mulf %168, %169 : vector<2x32xf32>
    %171 = arith.addf %167, %170 : vector<2x32xf32>
    %172 = vector.broadcast %95 : vector<1x32xf32> to vector<2x32xf32>
    %173 = arith.mulf %171, %172 : vector<2x32xf32>
    %174 = vector.extract_strided_slice %34 {offsets = [3, 0], sizes = [1, 32], strides = [1, 1]} : vector<4x32xf32> to vector<1x32xf32>
    %175 = vector.broadcast %174 : vector<1x32xf32> to vector<2x32xf32>
    %176 = arith.addf %173, %175 : vector<2x32xf32>
    %cst_44 = arith.constant 0.000000e+00 : f32
    %177 = vector.broadcast %cst_44 : f32 to vector<2x32xf32>
    %178 = arith.subf %177, %176 : vector<2x32xf32>
    %179 = math.exp %178 : vector<2x32xf32>
    %cst_45 = arith.constant 1.000000e+00 : f32
    %180 = vector.broadcast %cst_45 : f32 to vector<2x32xf32>
    %181 = arith.addf %180, %179 : vector<2x32xf32>
    %cst_46 = arith.constant 1.000000e+00 : f32
    %182 = vector.broadcast %cst_46 : f32 to vector<2x32xf32>
    %183 = arith.divf %182, %181 : vector<2x32xf32>
    %184 = arith.subf %142, %183 : vector<2x32xf32>
    %cst_47 = arith.constant 1.000000e-10 : f32
    %185 = vector.broadcast %cst_47 : f32 to vector<2x32xf32>
    %186 = arith.addf %184, %185 : vector<2x32xf32>
    %187 = math.log %186 : vector<2x32xf32>
    %cst_48 = arith.constant 0.000000e+00 : f32
    %188 = vector.broadcast %cst_48 : f32 to vector<2x32xf32>
    %189 = arith.subf %188, %187 : vector<2x32xf32>
    %cst_49 = arith.constant 1.44269502 : f32
    %190 = vector.broadcast %cst_49 : f32 to vector<2x32xf32>
    %191 = arith.mulf %189, %190 : vector<2x32xf32>
    %cst_50 = arith.constant 0.000000e+00 : f32
    %cst_51 = arith.constant 5.000000e+01 : f32
    %192 = vector.broadcast %cst_50 : f32 to vector<2x32xf32>
    %193 = arith.maximumf %192, %191 : vector<2x32xf32>
    %194 = vector.broadcast %cst_51 : f32 to vector<2x32xf32>
    %195 = arith.minimumf %194, %193 : vector<2x32xf32>
    %196 = vector.shape_cast %195 : vector<2x32xf32> to vector<1x2x32xf32>
    %cst_52 = arith.constant dense<0.000000e+00> : vector<1xf32>
    %197 = vector.multi_reduction <add>, %196, %cst_52 [1, 2] : vector<1x2x32xf32> to vector<1xf32>
    %198 = vector.shape_cast %197 : vector<1xf32> to vector<1x1x1xf32>
    %199 = vector.extract %198[0, 0, 0] : f32 from vector<1x1x1xf32>
    %200 = vector.broadcast %199 : f32 to vector<1x1xf32>
    %c0_53 = arith.constant 0 : index
    %c0_54 = arith.constant 0 : index
    %201 = vector.load %arg14[%c0_53, %c0_54] : memref<1x1xf32, #tpu.memory_space<vmem>>, vector<1x1xf32>
    tpu.vector_store %arg14[%c0_53, %c0_54], %200 {strides = array<i32>} : memref<1x1xf32, #tpu.memory_space<vmem>>, vector<1x1xf32>,
    return
  }
  func.func @transform_0(%arg0: i32) -> (i32, i32) {
    %c0_i32 = arith.constant 0 : i32
    %c0_i32_0 = arith.constant 0 : i32
    %c0_i32_1 = arith.constant 0 : i32
    return %c0_i32, %c0_i32_0 : i32, i32
  }
  func.func @transform_1(%arg0: i32) -> (i32, i32) {
    %c0_i32 = arith.constant 0 : i32
    %c0_i32_0 = arith.constant 0 : i32
    %c0_i32_1 = arith.constant 0 : i32
    return %c0_i32, %c0_i32_0 : i32, i32
  }
  func.func @transform_2(%arg0: i32) -> (i32, i32) {
    %c0_i32 = arith.constant 0 : i32
    %c0_i32_0 = arith.constant 0 : i32
    %c0_i32_1 = arith.constant 0 : i32
    return %c0_i32, %c0_i32_0 : i32, i32
  }
  func.func @transform_3(%arg0: i32) -> (i32, i32) {
    %c0_i32 = arith.constant 0 : i32
    %c0_i32_0 = arith.constant 0 : i32
    %c0_i32_1 = arith.constant 0 : i32
    return %c0_i32, %c0_i32_0 : i32, i32
  }
  func.func @transform_4(%arg0: i32) -> (i32, i32) {
    %c0_i32 = arith.constant 0 : i32
    %c0_i32_0 = arith.constant 0 : i32
    %c0_i32_1 = arith.constant 0 : i32
    return %c0_i32, %c0_i32_0 : i32, i32
  }
  func.func @transform_5(%arg0: i32) -> (i32, i32) {
    %c0_i32 = arith.constant 0 : i32
    %c0_i32_0 = arith.constant 0 : i32
    %c0_i32_1 = arith.constant 0 : i32
    return %c0_i32, %c0_i32_0 : i32, i32
  }
  func.func @transform_6(%arg0: i32) -> (i32, i32) {
    %c0_i32 = arith.constant 0 : i32
    %c0_i32_0 = arith.constant 0 : i32
    %c0_i32_1 = arith.constant 0 : i32
    return %c0_i32, %c0_i32_0 : i32, i32
  }
  func.func @transform_7(%arg0: i32) -> (i32, i32) {
    %c0_i32 = arith.constant 0 : i32
    %c0_i32_0 = arith.constant 0 : i32
    %c0_i32_1 = arith.constant 0 : i32
    return %c0_i32, %c0_i32_0 : i32, i32
  }
  func.func @transform_8(%arg0: i32) -> (i32, i32) {
    %c0_i32 = arith.constant 0 : i32
    %c0_i32_0 = arith.constant 0 : i32
    %c0_i32_1 = arith.constant 0 : i32
    return %c0_i32, %c0_i32_0 : i32, i32
  }
  func.func @transform_9(%arg0: i32) -> (i32, i32) {
    %c0_i32 = arith.constant 0 : i32
    %c0_i32_0 = arith.constant 0 : i32
    %c0_i32_1 = arith.constant 0 : i32
    return %c0_i32, %c0_i32_0 : i32, i32
  }
  func.func @transform_10(%arg0: i32) -> (i32, i32) {
    %c0_i32 = arith.constant 0 : i32
    %c0_i32_0 = arith.constant 0 : i32
    %c0_i32_1 = arith.constant 0 : i32
    return %c0_i32, %c0_i32_0 : i32, i32
  }
  func.func @transform_11(%arg0: i32) -> (i32, i32) {
    %c0_i32 = arith.constant 0 : i32
    %c0_i32_0 = arith.constant 0 : i32
    %c0_i32_1 = arith.constant 0 : i32
    return %c0_i32, %c0_i32_0 : i32, i32
  }
  func.func @transform_12(%arg0: i32) -> (i32, i32) {
    %c0_i32 = arith.constant 0 : i32
    %c0_i32_0 = arith.constant 0 : i32
    %c0_i32_1 = arith.constant 0 : i32
    return %c0_i32, %c0_i32_0 : i32, i32
  }
  func.func @transform_13(%arg0: i32) -> (i32, i32) {
    %c0_i32 = arith.constant 0 : i32
    %c0_i32_0 = arith.constant 0 : i32
    %c0_i32_1 = arith.constant 0 : i32
    return %c0_i32, %c0_i32_0 : i32, i32
  }
}

</mosaic_0001>

<llo_original>
// kernel: neg.1
$region0: #{neg.1}
  #allocation0 [shape = 's32[1]{0}', space=sflag, size = 0x4, scoped, tag = 'scoped memory for neg.1']
  %s0 = inlined_call_operand.vmem [shape: f32[2,16,16], index: 0, kind: input, shape index: {}]
  %s1 = inlined_call_operand.vmem [shape: f32[2,16,16], index: 1, kind: output, shape index: {}]
  %v2 = vld [vmem:[%s0] sm:$0xff]
  %3 = xla_tuple %v2
  %4 = xla_tuple %3
  %v5 = vxor.u32 %v2, 2147483648
  %6 = xla_tuple %v5
  %7 = vst [vmem:[%s1] sm:$0xff] %v5
  %s8 = scalar_lea.vmem %s0, 16
  %v9 = vld [vmem:[%s8] sm:$0xff]
  %10 = xla_tuple %v9
  %11 = xla_tuple %10
  %v12 = vxor.u32 %v9, 2147483648
  %13 = xla_tuple %v12
  %s14 = scalar_lea.vmem %s1, 16
  %15 = vst [vmem:[%s14] sm:$0xff] %v12
  %s16 = scalar_lea.vmem %s0, 8
  %v17 = vld [vmem:[%s16] sm:$0xff]
  %18 = xla_tuple %v17
  %19 = xla_tuple %18
  %v20 = vxor.u32 %v17, 2147483648
  %21 = xla_tuple %v20
  %s22 = scalar_lea.vmem %s1, 8
  %23 = vst [vmem:[%s22] sm:$0xff] %v20
  %s24 = scalar_lea.vmem %s0, 24
  %v25 = vld [vmem:[%s24] sm:$0xff]
  %26 = xla_tuple %v25
  %27 = xla_tuple %26
  %v28 = vxor.u32 %v25, 2147483648
  %29 = xla_tuple %v28
  %s30 = scalar_lea.vmem %s1, 24
  %31 = vst [vmem:[%s30] sm:$0xff] %v28

// kernel: forward.4
$region0: #{forward.4}
  #allocation0 [shape = 'u32[]', space=smem, size = 0x4, offset = 0x4, fixed_abs, tag = 'smem constant byte address 0x4 - core index']
  #allocation1 [shape = 'u32[72,128]{1,0:T(1,128)}', space=vmem, size = 0x9000, scoped, tag = 'internal scratch']
  %s0 = inlined_call_operand.vmem [shape: f32[2,16,3], index: 0, kind: input, shape index: {}]
  %s1 = inlined_call_operand.vmem [shape: f32[2,3,16], index: 1, kind: input, shape index: {}]
  %s2 = inlined_call_operand.vmem [shape: f32[2,16,1], index: 2, kind: input, shape index: {}]
  %s3 = inlined_call_operand.vmem [shape: f32[2,1,16], index: 3, kind: input, shape index: {}]
  %s4 = inlined_call_operand.vmem [shape: f32[2,16,16], index: 4, kind: output, shape index: {}]
  %s5 = sld [smem:[#allocation0]]
  $region49: #{forward.4} parent=0
    _
  %s7 = ssub.s32 1, %s5
  %s8 = scalar_select 0, %s7, %s5
  loop: start=0, step=1, limit=4
  $region2: #{forward.4} parent=0 // loop_pre_header
    _
  $region3: #{forward.4} parent=0 // loop_header
    %s10 = sphi 0, %s14
    %p11 = scmp.ge.s32.totalorder %s10, 4
    %s17 = sphi 0, %s29
    %s18 = sphi 0, %s25
    %s19 = sphi 0, %s17
    %s20 = sphi 0, %s18
    %s21 = sphi 0, %s19
    %s22 = sphi 0, %s20
    %s34 = sphi 0, %s36
    %s37 = sphi 0, %s34
    %s38 = sphi 0, %s37
    %s54 = sphi 0, %s38
    %s60 = sphi 0, %s62
    %s63 = sphi 0, %s60
    %s64 = sphi 0, %s63
    %s80 = sphi 0, %s64
    %s88 = sphi 0, %s90
    %s91 = sphi 0, %s88
    %s92 = sphi 0, %s91
    %s108 = sphi 0, %s92
    %s114 = sphi 0, %s116
    %s117 = sphi 0, %s114
    %s118 = sphi 0, %s117
    %s134 = sphi 0, %s118
    %s142 = sphi 0, %s144
    %s145 = sphi 0, %s142
    %s146 = sphi 0, %s145
    %s162 = sphi 0, %s146
  $region4: #{forward.4} parent=0 // loop_header_branch
    %13 = sbr.rel (%p11) target = $region8
  $region5: #{forward.4} parent=0 // loop_body
    %s15 = ssub.s32 %s10, 1
    %s16 = ssub.s32 %s10, 2
    %s23 = sadd.s32 1, %s18
    %p24 = scmp.ge.s32.totalorder %s23, 1
    %s25 = scalar_select %p24, 0, %s23
    %s26 = sadd.s32 1, %s17
    %s27 = scalar_select %p24, %s26, %s17
    %p28 = scmp.ge.s32.totalorder %s27, 2
    %s29 = scalar_select %p28, 0, %s27
    %s30 = ssub.s32 %s17, %s29
    %s31 = ssub.s32 %s18, %s25
    %s32 = sor.u32 %s30, %s31
    %p33 = scmp.eq.s32.totalorder %s32, 0
    %s35 = sadd.s32 %s34, 1
    %s36 = scalar_select %p33, %s34, %s35
    %p39 = pneg %p33
    %p40 = scmp.eq.s32.totalorder %s10, 1
    %p41 = por %p39, %p40
    %p42 = scmp.ne.s32.totalorder %s34, %s37
    %p43 = scmp.eq.s32.totalorder %s10, 0
    %p44 = por %p42, %p43
    %p45 = scmp.ne.s32.totalorder %s34, %s37
    %p46 = scmp.eq.s32.totalorder %s15, 1
    %p47 = por %p45, %p46
    %p48 = scmp.ne.s32.totalorder %s37, %s38
    %p49 = scmp.eq.s32.totalorder %s15, 0
    %p50 = por %p48, %p49
    %p51 = scmp.ne.s32.totalorder %s37, %s38
    %p52 = scmp.eq.s32.totalorder %s16, 1
    %p53 = por %p51, %p52
    %p55 = scmp.ne.s32.totalorder %s38, %s54
    %p56 = scmp.eq.s32.totalorder %s16, 0
    %p57 = por %p55, %p56
    %s58 = ssub.s32 %s17, %s29
    %p59 = scmp.eq.s32.totalorder %s58, 0
    %s61 = sadd.s32 %s60, 1
    %s62 = scalar_select %p59, %s60, %s61
    %p65 = pneg %p59
    %p66 = scmp.eq.s32.totalorder %s10, 1
    %p67 = por %p65, %p66
    %p68 = scmp.ne.s32.totalorder %s60, %s63
    %p69 = scmp.eq.s32.totalorder %s10, 0
    %p70 = por %p68, %p69
    %p71 = scmp.ne.s32.totalorder %s60, %s63
    %p72 = scmp.eq.s32.totalorder %s15, 1
    %p73 = por %p71, %p72
    %p74 = scmp.ne.s32.totalorder %s63, %s64
    %p75 = scmp.eq.s32.totalorder %s15, 0
    %p76 = por %p74, %p75
    %p77 = scmp.ne.s32.totalorder %s63, %s64
    %p78 = scmp.eq.s32.totalorder %s16, 1
    %p79 = por %p77, %p78
    %p81 = scmp.ne.s32.totalorder %s64, %s80
    %p82 = scmp.eq.s32.totalorder %s16, 0
    %p83 = por %p81, %p82
    %s84 = ssub.s32 %s17, %s29
    %s85 = ssub.s32 %s18, %s25
    %s86 = sor.u32 %s84, %s85
    %p87 = scmp.eq.s32.totalorder %s86, 0
    %s89 = sadd.s32 %s88, 1
    %s90 = scalar_select %p87, %s88, %s89
    %p93 = pneg %p87
    %p94 = scmp.eq.s32.totalorder %s10, 1
    %p95 = por %p93, %p94
    %p96 = scmp.ne.s32.totalorder %s88, %s91
    %p97 = scmp.eq.s32.totalorder %s10, 0
    %p98 = por %p96, %p97
    %p99 = scmp.ne.s32.totalorder %s88, %s91
    %p100 = scmp.eq.s32.totalorder %s15, 1
    %p101 = por %p99, %p100
    %p102 = scmp.ne.s32.totalorder %s91, %s92
    %p103 = scmp.eq.s32.totalorder %s15, 0
    %p104 = por %p102, %p103
    %p105 = scmp.ne.s32.totalorder %s91, %s92
    %p106 = scmp.eq.s32.totalorder %s16, 1
    %p107 = por %p105, %p106
    %p109 = scmp.ne.s32.totalorder %s92, %s108
    %p110 = scmp.eq.s32.totalorder %s16, 0
    %p111 = por %p109, %p110
    %s112 = ssub.s32 %s17, %s29
    %p113 = scmp.eq.s32.totalorder %s112, 0
    %s115 = sadd.s32 %s114, 1
    %s116 = scalar_select %p113, %s114, %s115
    %p119 = pneg %p113
    %p120 = scmp.eq.s32.totalorder %s10, 1
    %p121 = por %p119, %p120
    %p122 = scmp.ne.s32.totalorder %s114, %s117
    %p123 = scmp.eq.s32.totalorder %s10, 0
    %p124 = por %p122, %p123
    %p125 = scmp.ne.s32.totalorder %s114, %s117
    %p126 = scmp.eq.s32.totalorder %s15, 1
    %p127 = por %p125, %p126
    %p128 = scmp.ne.s32.totalorder %s117, %s118
    %p129 = scmp.eq.s32.totalorder %s15, 0
    %p130 = por %p128, %p129
    %p131 = scmp.ne.s32.totalorder %s117, %s118
    %p132 = scmp.eq.s32.totalorder %s16, 1
    %p133 = por %p131, %p132
    %p135 = scmp.ne.s32.totalorder %s118, %s134
    %p136 = scmp.eq.s32.totalorder %s16, 0
    %p137 = por %p135, %p136
    %s138 = ssub.s32 %s17, %s29
    %s139 = ssub.s32 %s18, %s25
    %s140 = sor.u32 %s138, %s139
    %p141 = scmp.eq.s32.totalorder %s140, 0
    %s143 = sadd.s32 %s142, 1
    %s144 = scalar_select %p141, %s142, %s143
    %p147 = pneg %p141
    %p148 = scmp.eq.s32.totalorder %s10, 1
    %p149 = por %p147, %p148
    %p150 = scmp.ne.s32.totalorder %s142, %s145
    %p151 = scmp.eq.s32.totalorder %s10, 0
    %p152 = por %p150, %p151
    %p153 = scmp.ne.s32.totalorder %s142, %s145
    %p154 = scmp.eq.s32.totalorder %s15, 1
    %p155 = por %p153, %p154
    %p156 = scmp.ne.s32.totalorder %s145, %s146
    %p157 = scmp.eq.s32.totalorder %s15, 0
    %p158 = por %p156, %p157
    %p159 = scmp.ne.s32.totalorder %s145, %s146
    %p160 = scmp.eq.s32.totalorder %s16, 1
    %p161 = por %p159, %p160
    %p163 = scmp.ne.s32.totalorder %s146, %s162
    %p164 = scmp.eq.s32.totalorder %s16, 0
    %p165 = por %p163, %p164
    %p166 = scmp.le.s32.totalorder 1, %s10
    %p167 = scmp.lt.s32.totalorder %s10, 3
    %p168 = pnand %p166, %p167
    %p169 = pneg %p168
    // Predicated region
    $region9: #{forward.4} parent=5 // pred_check
      _
    $region10: #{forward.4} parent=5 // pred_check_branch
      %171 = sbr.rel (%p168) target = $region12
    $region11: #{forward.4} parent=5 // pred_region
      %s172 = ssub.s32 %s10, 1
    $region12: #{forward.4} parent=5 // pred_fallthru
      _
    %p173 = scmp.lt.s32.totalorder %s10, 2
    // Predicated region
    $region13: #{forward.4} parent=5 // pred_check
      %p174 = pneg %p173
    $region14: #{forward.4} parent=5 // pred_check_branch
      %176 = sbr.rel (%p174) target = $region16
    $region15: #{forward.4} parent=5 // pred_region
      // Predicated region
      $region17: #{forward.4} parent=15 // pred_check
        %p177 = pneg %p44
      $region18: #{forward.4} parent=15 // pred_check_branch
        %179 = sbr.rel (%p177) target = $region20
      $region19: #{forward.4} parent=15 // pred_region
        %s180 = smul.u32 2, %s18
        %p181 = scmp.lt.s32.totalorder %s17, 1
        %s182 = scalar_select %p181, %s17, 1
        %p183 = scmp.lt.s32.totalorder %s180, 1
        %s184 = scalar_select %p183, %s180, 1
        %s185 = smul.addr %s182, 2
        %s186 = sadd.s32 %s184, %s185
        %s187 = smul.addr %s186, 8
        %s188 = scalar_lea.vmem %s0, %s187
        %s189 = smul.u32 2, %s18
      $region20: #{forward.4} parent=15 // pred_fallthru
        _
      // Predicated region
      $region21: #{forward.4} parent=15 // pred_check
        %p190 = pneg %p70
      $region22: #{forward.4} parent=15 // pred_check_branch
        %192 = sbr.rel (%p190) target = $region24
      $region23: #{forward.4} parent=15 // pred_region
        %p193 = scmp.lt.s32.totalorder %s17, 1
        %s194 = scalar_select %p193, %s17, 1
        %s195 = smul.addr %s194, 4
        %s196 = scalar_lea.vmem %s1, %s195
      $region24: #{forward.4} parent=15 // pred_fallthru
        _
      // Predicated region
      $region25: #{forward.4} parent=15 // pred_check
        %p197 = pneg %p98
      $region26: #{forward.4} parent=15 // pred_check_branch
        %199 = sbr.rel (%p197) target = $region28
      $region27: #{forward.4} parent=15 // pred_region
        %s200 = smul.u32 2, %s18
        %p201 = scmp.lt.s32.totalorder %s17, 1
        %s202 = scalar_select %p201, %s17, 1
        %p203 = scmp.lt.s32.totalorder %s200, 1
        %s204 = scalar_select %p203, %s200, 1
        %s205 = smul.addr %s202, 2
        %s206 = sadd.s32 %s204, %s205
        %s207 = smul.addr %s206, 8
        %s208 = scalar_lea.vmem %s2, %s207
        %s209 = smul.u32 2, %s18
      $region28: #{forward.4} parent=15 // pred_fallthru
        _
      // Predicated region
      $region29: #{forward.4} parent=15 // pred_check
        %p210 = pneg %p124
      $region30: #{forward.4} parent=15 // pred_check_branch
        %212 = sbr.rel (%p210) target = $region32
      $region31: #{forward.4} parent=15 // pred_region
        %p213 = scmp.lt.s32.totalorder %s17, 1
        %s214 = scalar_select %p213, %s17, 1
        %s215 = scalar_lea.vmem %s3, %s214
      $region32: #{forward.4} parent=15 // pred_fallthru
        _
    $region16: #{forward.4} parent=5 // pred_fallthru
      _
    %p216 = scmp.le.s32.totalorder 1, %s10
    %p217 = scmp.lt.s32.totalorder %s10, 3
    %p218 = pnand %p216, %p217
    %p219 = pneg %p218
    // Predicated region
    $region33: #{forward.4} parent=5 // pred_check
      _
    $region34: #{forward.4} parent=5 // pred_check_branch
      %221 = sbr.rel (%p218) target = $region36
    $region35: #{forward.4} parent=5 // pred_region
      %s222 = ssub.s32 %s10, 1
      %s223 = smul.u32 2, %s20
      %p224 = scmp.lt.s32.totalorder %s19, 1
      %s225 = scalar_select %p224, %s19, 1
      %p226 = scmp.lt.s32.totalorder %s223, 1
      %s227 = scalar_select %p226, %s223, 1
      %s228 = smul.addr %s225, 2
      %s229 = sadd.s32 %s227, %s228
      %s230 = smul.addr %s229, 8
      %s231 = scalar_lea.vmem %s0, %s230
      %p232 = pneg %p50
      %p233 = pneg %p47
      %p234 = scmp.lt.s32.totalorder %s19, 1
      %s235 = scalar_select %p234, %s19, 1
      %s236 = smul.addr %s235, 4
      %s237 = scalar_lea.vmem %s1, %s236
      %p238 = pneg %p76
      %p239 = pneg %p73
      %s240 = smul.u32 2, %s20
      %p241 = scmp.lt.s32.totalorder %s19, 1
      %s242 = scalar_select %p241, %s19, 1
      %p243 = scmp.lt.s32.totalorder %s240, 1
      %s244 = scalar_select %p243, %s240, 1
      %s245 = smul.addr %s242, 2
      %s246 = sadd.s32 %s244, %s245
      %s247 = smul.addr %s246, 8
      %s248 = scalar_lea.vmem %s2, %s247
      %p249 = pneg %p104
      %p250 = pneg %p101
      %p251 = scmp.lt.s32.totalorder %s19, 1
      %s252 = scalar_select %p251, %s19, 1
      %s253 = scalar_lea.vmem %s3, %s252
      %p254 = pneg %p130
      %p255 = pneg %p127
      %p256 = pneg %p158
      %p257 = pneg %p155
      %s258 = smul.u32 2, %s20
      %p259 = scmp.lt.s32.totalorder %s19, 1
      %s260 = scalar_select %p259, %s19, 1
      %p261 = scmp.lt.s32.totalorder %s258, 1
      %s262 = scalar_select %p261, %s258, 1
      %s263 = smul.addr %s260, 2
      %s264 = sadd.s32 %s262, %s263
      %s265 = smul.addr %s264, 8
      %s266 = scalar_lea.vmem %s4, %s265
      %s267 = smul.u32 2, %s20
      %p268 = scmp.lt.s32.totalorder %s19, 1
      %s269 = scalar_select %p268, %s19, 1
      %p270 = scmp.lt.s32.totalorder %s267, 1
      %s271 = scalar_select %p270, %s267, 1
      %s272 = smul.addr %s269, 2
      %s273 = sadd.s32 %s271, %s272
      %s274 = smul.addr %s273, 8
      %s275 = scalar_lea.vmem %s0, %s274
      %s276 = smul.u32 2, %s20
      %p277 = scmp.lt.s32.totalorder %s19, 1
      %s278 = scalar_select %p277, %s19, 1
      %s279 = smul.addr %s278, 4
      %s280 = scalar_lea.vmem %s1, %s279
      %s281 = smul.u32 2, %s20
      %p282 = scmp.lt.s32.totalorder %s19, 1
      %s283 = scalar_select %p282, %s19, 1
      %p284 = scmp.lt.s32.totalorder %s281, 1
      %s285 = scalar_select %p284, %s281, 1
      %s286 = smul.addr %s283, 2
      %s287 = sadd.s32 %s285, %s286
      %s288 = smul.addr %s287, 8
      %s289 = scalar_lea.vmem %s2, %s288
      %s290 = smul.u32 2, %s20
      %p291 = scmp.lt.s32.totalorder %s19, 1
      %s292 = scalar_select %p291, %s19, 1
      %s293 = scalar_lea.vmem %s3, %s292
      %s294 = smul.u32 2, %s20
      %p295 = scmp.lt.s32.totalorder %s19, 1
      %s296 = scalar_select %p295, %s19, 1
      %p297 = scmp.lt.s32.totalorder %s294, 1
      %s298 = scalar_select %p297, %s294, 1
      %s299 = smul.addr %s296, 2
      %s300 = sadd.s32 %s298, %s299
      %s301 = smul.addr %s300, 8
      %s302 = scalar_lea.vmem %s4, %s301
      %s303 = smul.u32 2, %s20
      %v304 = vld [vmem:[%s275] sm:$0xff]
      %v305 = vld [vmem:[%s275 + $0x8] sm:$0xff]
      %v306 = vld [vmem:[%s280] sm:$0x7]
      %308 = vset.pattern.permute.xlu0 0
      %309 = vperm.xlu0 %308, %v304
      %v310 = vpop.permute.xlu0 %309
      %313 = vset.pattern.permute.xlu0 0
      %314 = vperm.xlu0 %313, %v305
      %v315 = vpop.permute.xlu0 %314
      %v317 = vperm.slane %v306, 0
      %v318 = vmul.f32 %v310, %v317
      %v319 = vmul.f32 %v315, %v317
      %320 = vset.pattern.permute.xlu0 1
      %321 = vperm.xlu0 %320, %v304
      %v322 = vpop.permute.xlu0 %321
      %324 = vset.pattern.permute.xlu0 1
      %325 = vperm.xlu0 %324, %v305
      %v326 = vpop.permute.xlu0 %325
      %v328 = vperm.slane %v306, 1
      %v329 = vmul.f32 %v322, %v328
      %v330 = vmul.f32 %v326, %v328
      %v331 = vadd.f32 %v318, %v329
      %v332 = vadd.f32 %v319, %v330
      %333 = vset.pattern.permute.xlu0 2
      %334 = vperm.xlu0 %333, %v304
      %v335 = vpop.permute.xlu0 %334
      %337 = vset.pattern.permute.xlu0 2
      %338 = vperm.xlu0 %337, %v305
      %v339 = vpop.permute.xlu0 %338
      %v341 = vperm.slane %v306, 2
      %v342 = vmul.f32 %v335, %v341
      %v343 = vmul.f32 %v339, %v341
      %v344 = vadd.f32 %v331, %v342
      %v345 = vadd.f32 %v332, %v343
      %v346 = vld [vmem:[%s289] sm:$0xff]
      %v347 = vld [vmem:[%s289 + $0x8] sm:$0xff]
      %v348 = vld [vmem:[%s293] sm:$0x1]
      %350 = vset.pattern.permute.xlu0 0
      %351 = vperm.xlu0 %350, %v346
      %v352 = vpop.permute.xlu0 %351
      %355 = vset.pattern.permute.xlu0 0
      %356 = vperm.xlu0 %355, %v347
      %v357 = vpop.permute.xlu0 %356
      %v360 = vperm.slane %v348, 0
      %v362 = vadd.f32 %v352, %v360
      %v363 = vadd.f32 %v357, %v360
      %v364 = vmul.f32 %v344, 2.0
      %v365 = vmul.f32 %v345, 2.0
      %v366 = vsub.f32 %v362, %v364
      %v367 = vsub.f32 %v363, %v365
      %vm368 = vcmask 130048
      %369 = vst.msk [vmem:[%s302] sm:$0xff] %vm368, %v366
      %370 = vst.msk [vmem:[%s302 + $0x8] sm:$0xff] %vm368, %v367
      %s371 = smul.u32 2, %s20
      %p372 = scmp.lt.s32.totalorder %s19, 1
      %s373 = scalar_select %p372, %s19, 1
      %p374 = scmp.lt.s32.totalorder %s371, 1
      %s375 = scalar_select %p374, %s371, 1
      %s376 = smul.addr %s373, 2
      %s377 = sadd.s32 %s375, %s376
      %s378 = smul.addr %s377, 8
      %s379 = scalar_lea.vmem %s4, %s378
      // Predicated region
      $region37: #{forward.4} parent=35 // pred_check
        %p380 = pneg %p155
      $region38: #{forward.4} parent=35 // pred_check_branch
        %382 = sbr.rel (%p380) target = $region40
      $region39: #{forward.4} parent=35 // pred_region
        %s383 = smul.u32 2, %s20
      $region40: #{forward.4} parent=35 // pred_fallthru
        _
    $region36: #{forward.4} parent=5 // pred_fallthru
      _
    %p384 = scmp.le.s32.totalorder 2, %s10
    // Predicated region
    $region41: #{forward.4} parent=5 // pred_check
      %p385 = pneg %p384
    $region42: #{forward.4} parent=5 // pred_check_branch
      %387 = sbr.rel (%p385) target = $region44
    $region43: #{forward.4} parent=5 // pred_region
      %s388 = ssub.s32 %s10, 2
      // Predicated region
      $region45: #{forward.4} parent=43 // pred_check
        %p389 = pneg %p161
      $region46: #{forward.4} parent=43 // pred_check_branch
        %391 = sbr.rel (%p389) target = $region48
      $region47: #{forward.4} parent=43 // pred_region
        %s392 = smul.u32 2, %s22
        %p393 = scmp.lt.s32.totalorder %s21, 1
        %s394 = scalar_select %p393, %s21, 1
        %p395 = scmp.lt.s32.totalorder %s392, 1
        %s396 = scalar_select %p395, %s392, 1
        %s397 = smul.addr %s394, 2
        %s398 = sadd.s32 %s396, %s397
        %s399 = smul.addr %s398, 8
        %s400 = scalar_lea.vmem %s4, %s399
      $region48: #{forward.4} parent=43 // pred_fallthru
        _
    $region44: #{forward.4} parent=5 // pred_fallthru
      _
  $region6: #{forward.4} parent=0 // loop_footer
    %s14 = sadd.s32 1, %s10
  $region7: #{forward.4} parent=0 // loop_footer_branch
    %9 = sbr.rel target = $region3
  $region8: #{forward.4} parent=0 // loop_exit
    _

// kernel: forward.5
$region0: #{forward.5}
  #allocation0 [shape = 'u32[]', space=smem, size = 0x4, offset = 0x4, fixed_abs, tag = 'smem constant byte address 0x4 - core index']
  #allocation1 [shape = 'u32[72,128]{1,0:T(1,128)}', space=vmem, size = 0x9000, scoped, tag = 'internal scratch']
  #allocation2 [shape = 'f32[128,16]{1,0:T(8,128)}', space=vmem, size = 0x10000, scoped, tag = 'scratch operand']
  %s0 = inlined_call_operand.vmem [shape: f32[2,3,4,16], index: 0, kind: input, shape index: {}]
  %s1 = inlined_call_operand.vmem [shape: f32[32,3], index: 1, kind: input, shape index: {}]
  %s2 = inlined_call_operand.vmem [shape: f32[32,1], index: 2, kind: input, shape index: {}]
  %s3 = inlined_call_operand.vmem [shape: bf16[64,32], index: 3, kind: input, shape index: {}]
  %s4 = inlined_call_operand.vmem [shape: f32[64,1], index: 4, kind: input, shape index: {}]
  %s5 = inlined_call_operand.vmem [shape: bf16[128,64], index: 5, kind: input, shape index: {}]
  %s6 = inlined_call_operand.vmem [shape: f32[128,1], index: 6, kind: input, shape index: {}]
  %s7 = inlined_call_operand.vmem [shape: bf16[2,128,16], index: 7, kind: output, shape index: {}]
  %s8 = sld [smem:[#allocation0]]
  $region69: #{forward.5} parent=0
    _
  %s10 = ssub.s32 1, %s8
  %s11 = scalar_select 0, %s10, %s8
  loop: start=0, step=1, limit=4
  $region2: #{forward.5} parent=0 // loop_pre_header
    _
  $region3: #{forward.5} parent=0 // loop_header
    %s13 = sphi 0, %s17
    %p14 = scmp.ge.s32.totalorder %s13, 4
    %s20 = sphi 0, %s39
    %s21 = sphi 0, %s35
    %s22 = sphi 0, %s31
    %s23 = sphi 0, %s20
    %s24 = sphi 0, %s21
    %s25 = sphi 0, %s22
    %s26 = sphi 0, %s23
    %s27 = sphi 0, %s24
    %s28 = sphi 0, %s25
    %s46 = sphi 0, %s48
    %s49 = sphi 0, %s46
    %s50 = sphi 0, %s49
    %s66 = sphi 0, %s50
    %s70 = sphi 0, %s70
    %s72 = sphi 0, %s70
    %s73 = sphi 0, %s72
    %s87 = sphi 0, %s73
    %s91 = sphi 0, %s91
    %s93 = sphi 0, %s91
    %s94 = sphi 0, %s93
    %s108 = sphi 0, %s94
    %s112 = sphi 0, %s112
    %s114 = sphi 0, %s112
    %s115 = sphi 0, %s114
    %s129 = sphi 0, %s115
    %s133 = sphi 0, %s133
    %s135 = sphi 0, %s133
    %s136 = sphi 0, %s135
    %s150 = sphi 0, %s136
    %s154 = sphi 0, %s154
    %s156 = sphi 0, %s154
    %s157 = sphi 0, %s156
    %s171 = sphi 0, %s157
    %s175 = sphi 0, %s175
    %s177 = sphi 0, %s175
    %s178 = sphi 0, %s177
    %s192 = sphi 0, %s178
    %s200 = sphi 0, %s202
    %s203 = sphi 0, %s200
    %s204 = sphi 0, %s203
    %s220 = sphi 0, %s204
  $region4: #{forward.5} parent=0 // loop_header_branch
    %16 = sbr.rel (%p14) target = $region8
  $region5: #{forward.5} parent=0 // loop_body
    %s18 = ssub.s32 %s13, 1
    %s19 = ssub.s32 %s13, 2
    %s29 = sadd.s32 1, %s22
    %p30 = scmp.ge.s32.totalorder %s29, 1
    %s31 = scalar_select %p30, 0, %s29
    %s32 = sadd.s32 1, %s21
    %s33 = scalar_select %p30, %s32, %s21
    %p34 = scmp.ge.s32.totalorder %s33, 1
    %s35 = scalar_select %p34, 0, %s33
    %s36 = sadd.s32 1, %s20
    %s37 = scalar_select %p34, %s36, %s20
    %p38 = scmp.ge.s32.totalorder %s37, 2
    %s39 = scalar_select %p38, 0, %s37
    %s40 = ssub.s32 %s20, %s39
    %s41 = ssub.s32 %s22, %s31
    %s42 = sor.u32 %s40, %s41
    %s43 = ssub.s32 %s21, %s35
    %s44 = sor.u32 %s42, %s43
    %p45 = scmp.eq.s32.totalorder %s44, 0
    %s47 = sadd.s32 %s46, 1
    %s48 = scalar_select %p45, %s46, %s47
    %p51 = pneg %p45
    %p52 = scmp.eq.s32.totalorder %s13, 1
    %p53 = por %p51, %p52
    %p54 = scmp.ne.s32.totalorder %s46, %s49
    %p55 = scmp.eq.s32.totalorder %s13, 0
    %p56 = por %p54, %p55
    %p57 = scmp.ne.s32.totalorder %s46, %s49
    %p58 = scmp.eq.s32.totalorder %s18, 1
    %p59 = por %p57, %p58
    %p60 = scmp.ne.s32.totalorder %s49, %s50
    %p61 = scmp.eq.s32.totalorder %s18, 0
    %p62 = por %p60, %p61
    %p63 = scmp.ne.s32.totalorder %s49, %s50
    %p64 = scmp.eq.s32.totalorder %s19, 1
    %p65 = por %p63, %p64
    %p67 = scmp.ne.s32.totalorder %s50, %s66
    %p68 = scmp.eq.s32.totalorder %s19, 0
    %p69 = por %p67, %p68
    %s71 = sadd.s32 %s70, 1
    %p74 = scmp.eq.s32.totalorder %s13, 1
    %p75 = scmp.ne.s32.totalorder %s70, %s72
    %p76 = scmp.eq.s32.totalorder %s13, 0
    %p77 = por %p75, %p76
    %p78 = scmp.ne.s32.totalorder %s70, %s72
    %p79 = scmp.eq.s32.totalorder %s18, 1
    %p80 = por %p78, %p79
    %p81 = scmp.ne.s32.totalorder %s72, %s73
    %p82 = scmp.eq.s32.totalorder %s18, 0
    %p83 = por %p81, %p82
    %p84 = scmp.ne.s32.totalorder %s72, %s73
    %p85 = scmp.eq.s32.totalorder %s19, 1
    %p86 = por %p84, %p85
    %p88 = scmp.ne.s32.totalorder %s73, %s87
    %p89 = scmp.eq.s32.totalorder %s19, 0
    %p90 = por %p88, %p89
    %s92 = sadd.s32 %s91, 1
    %p95 = scmp.eq.s32.totalorder %s13, 1
    %p96 = scmp.ne.s32.totalorder %s91, %s93
    %p97 = scmp.eq.s32.totalorder %s13, 0
    %p98 = por %p96, %p97
    %p99 = scmp.ne.s32.totalorder %s91, %s93
    %p100 = scmp.eq.s32.totalorder %s18, 1
    %p101 = por %p99, %p100
    %p102 = scmp.ne.s32.totalorder %s93, %s94
    %p103 = scmp.eq.s32.totalorder %s18, 0
    %p104 = por %p102, %p103
    %p105 = scmp.ne.s32.totalorder %s93, %s94
    %p106 = scmp.eq.s32.totalorder %s19, 1
    %p107 = por %p105, %p106
    %p109 = scmp.ne.s32.totalorder %s94, %s108
    %p110 = scmp.eq.s32.totalorder %s19, 0
    %p111 = por %p109, %p110
    %s113 = sadd.s32 %s112, 1
    %p116 = scmp.eq.s32.totalorder %s13, 1
    %p117 = scmp.ne.s32.totalorder %s112, %s114
    %p118 = scmp.eq.s32.totalorder %s13, 0
    %p119 = por %p117, %p118
    %p120 = scmp.ne.s32.totalorder %s112, %s114
    %p121 = scmp.eq.s32.totalorder %s18, 1
    %p122 = por %p120, %p121
    %p123 = scmp.ne.s32.totalorder %s114, %s115
    %p124 = scmp.eq.s32.totalorder %s18, 0
    %p125 = por %p123, %p124
    %p126 = scmp.ne.s32.totalorder %s114, %s115
    %p127 = scmp.eq.s32.totalorder %s19, 1
    %p128 = por %p126, %p127
    %p130 = scmp.ne.s32.totalorder %s115, %s129
    %p131 = scmp.eq.s32.totalorder %s19, 0
    %p132 = por %p130, %p131
    %s134 = sadd.s32 %s133, 1
    %p137 = scmp.eq.s32.totalorder %s13, 1
    %p138 = scmp.ne.s32.totalorder %s133, %s135
    %p139 = scmp.eq.s32.totalorder %s13, 0
    %p140 = por %p138, %p139
    %p141 = scmp.ne.s32.totalorder %s133, %s135
    %p142 = scmp.eq.s32.totalorder %s18, 1
    %p143 = por %p141, %p142
    %p144 = scmp.ne.s32.totalorder %s135, %s136
    %p145 = scmp.eq.s32.totalorder %s18, 0
    %p146 = por %p144, %p145
    %p147 = scmp.ne.s32.totalorder %s135, %s136
    %p148 = scmp.eq.s32.totalorder %s19, 1
    %p149 = por %p147, %p148
    %p151 = scmp.ne.s32.totalorder %s136, %s150
    %p152 = scmp.eq.s32.totalorder %s19, 0
    %p153 = por %p151, %p152
    %s155 = sadd.s32 %s154, 1
    %p158 = scmp.eq.s32.totalorder %s13, 1
    %p159 = scmp.ne.s32.totalorder %s154, %s156
    %p160 = scmp.eq.s32.totalorder %s13, 0
    %p161 = por %p159, %p160
    %p162 = scmp.ne.s32.totalorder %s154, %s156
    %p163 = scmp.eq.s32.totalorder %s18, 1
    %p164 = por %p162, %p163
    %p165 = scmp.ne.s32.totalorder %s156, %s157
    %p166 = scmp.eq.s32.totalorder %s18, 0
    %p167 = por %p165, %p166
    %p168 = scmp.ne.s32.totalorder %s156, %s157
    %p169 = scmp.eq.s32.totalorder %s19, 1
    %p170 = por %p168, %p169
    %p172 = scmp.ne.s32.totalorder %s157, %s171
    %p173 = scmp.eq.s32.totalorder %s19, 0
    %p174 = por %p172, %p173
    %s176 = sadd.s32 %s175, 1
    %p179 = scmp.eq.s32.totalorder %s13, 1
    %p180 = scmp.ne.s32.totalorder %s175, %s177
    %p181 = scmp.eq.s32.totalorder %s13, 0
    %p182 = por %p180, %p181
    %p183 = scmp.ne.s32.totalorder %s175, %s177
    %p184 = scmp.eq.s32.totalorder %s18, 1
    %p185 = por %p183, %p184
    %p186 = scmp.ne.s32.totalorder %s177, %s178
    %p187 = scmp.eq.s32.totalorder %s18, 0
    %p188 = por %p186, %p187
    %p189 = scmp.ne.s32.totalorder %s177, %s178
    %p190 = scmp.eq.s32.totalorder %s19, 1
    %p191 = por %p189, %p190
    %p193 = scmp.ne.s32.totalorder %s178, %s192
    %p194 = scmp.eq.s32.totalorder %s19, 0
    %p195 = por %p193, %p194
    %s196 = ssub.s32 %s20, %s39
    %s197 = ssub.s32 %s21, %s35
    %s198 = sor.u32 %s196, %s197
    %p199 = scmp.eq.s32.totalorder %s198, 0
    %s201 = sadd.s32 %s200, 1
    %s202 = scalar_select %p199, %s200, %s201
    %p205 = pneg %p199
    %p206 = scmp.eq.s32.totalorder %s13, 1
    %p207 = por %p205, %p206
    %p208 = scmp.ne.s32.totalorder %s200, %s203
    %p209 = scmp.eq.s32.totalorder %s13, 0
    %p210 = por %p208, %p209
    %p211 = scmp.ne.s32.totalorder %s200, %s203
    %p212 = scmp.eq.s32.totalorder %s18, 1
    %p213 = por %p211, %p212
    %p214 = scmp.ne.s32.totalorder %s203, %s204
    %p215 = scmp.eq.s32.totalorder %s18, 0
    %p216 = por %p214, %p215
    %p217 = scmp.ne.s32.totalorder %s203, %s204
    %p218 = scmp.eq.s32.totalorder %s19, 1
    %p219 = por %p217, %p218
    %p221 = scmp.ne.s32.totalorder %s204, %s220
    %p222 = scmp.eq.s32.totalorder %s19, 0
    %p223 = por %p221, %p222
    %p224 = scmp.le.s32.totalorder 1, %s13
    %p225 = scmp.lt.s32.totalorder %s13, 3
    %p226 = pnand %p224, %p225
    %p227 = pneg %p226
    // Predicated region
    $region9: #{forward.5} parent=5 // pred_check
      _
    $region10: #{forward.5} parent=5 // pred_check_branch
      %229 = sbr.rel (%p226) target = $region12
    $region11: #{forward.5} parent=5 // pred_region
      %s230 = ssub.s32 %s13, 1
      // Predicated region
      $region13: #{forward.5} parent=11 // pred_check
        %p231 = pneg %p83
      $region14: #{forward.5} parent=11 // pred_check_branch
        %233 = sbr.rel (%p231) target = $region16
      $region15: #{forward.5} parent=11 // pred_region
        _
      $region16: #{forward.5} parent=11 // pred_fallthru
        _
      // Predicated region
      $region17: #{forward.5} parent=11 // pred_check
        %p234 = pneg %p104
      $region18: #{forward.5} parent=11 // pred_check_branch
        %236 = sbr.rel (%p234) target = $region20
      $region19: #{forward.5} parent=11 // pred_region
        _
      $region20: #{forward.5} parent=11 // pred_fallthru
        _
      // Predicated region
      $region21: #{forward.5} parent=11 // pred_check
        %p237 = pneg %p125
      $region22: #{forward.5} parent=11 // pred_check_branch
        %239 = sbr.rel (%p237) target = $region24
      $region23: #{forward.5} parent=11 // pred_region
        _
      $region24: #{forward.5} parent=11 // pred_fallthru
        _
      // Predicated region
      $region25: #{forward.5} parent=11 // pred_check
        %p240 = pneg %p146
      $region26: #{forward.5} parent=11 // pred_check_branch
        %242 = sbr.rel (%p240) target = $region28
      $region27: #{forward.5} parent=11 // pred_region
        _
      $region28: #{forward.5} parent=11 // pred_fallthru
        _
      // Predicated region
      $region29: #{forward.5} parent=11 // pred_check
        %p243 = pneg %p167
      $region30: #{forward.5} parent=11 // pred_check_branch
        %245 = sbr.rel (%p243) target = $region32
      $region31: #{forward.5} parent=11 // pred_region
        _
      $region32: #{forward.5} parent=11 // pred_fallthru
        _
      // Predicated region
      $region33: #{forward.5} parent=11 // pred_check
        %p246 = pneg %p188
      $region34: #{forward.5} parent=11 // pred_check_branch
        %248 = sbr.rel (%p246) target = $region36
      $region35: #{forward.5} parent=11 // pred_region
        _
      $region36: #{forward.5} parent=11 // pred_fallthru
        _
    $region12: #{forward.5} parent=5 // pred_fallthru
      _
    %p249 = scmp.lt.s32.totalorder %s13, 2
    // Predicated region
    $region37: #{forward.5} parent=5 // pred_check
      %p250 = pneg %p249
    $region38: #{forward.5} parent=5 // pred_check_branch
      %252 = sbr.rel (%p250) target = $region40
    $region39: #{forward.5} parent=5 // pred_region
      // Predicated region
      $region41: #{forward.5} parent=39 // pred_check
        %p253 = pneg %p56
      $region42: #{forward.5} parent=39 // pred_check_branch
        %255 = sbr.rel (%p253) target = $region44
      $region43: #{forward.5} parent=39 // pred_region
        %p256 = scmp.lt.s32.totalorder %s20, 1
        %s257 = scalar_select %p256, %s20, 1
        %p258 = scmp.lt.s32.totalorder %s22, 0
        %s259 = scalar_select %p258, %s22, 0
        %p260 = scmp.lt.s32.totalorder %s21, 0
        %s261 = scalar_select %p260, %s21, 0
        %s262 = sadd.s32 %s261, %s259
        %s263 = smul.addr %s257, 3
        %s264 = sadd.s32 %s262, %s263
        %s265 = smul.addr %s264, 4
        %s266 = scalar_lea.vmem %s0, %s265
      $region44: #{forward.5} parent=39 // pred_fallthru
        _
    $region40: #{forward.5} parent=5 // pred_fallthru
      _
    %p267 = scmp.le.s32.totalorder 1, %s13
    %p268 = scmp.lt.s32.totalorder %s13, 3
    %p269 = pnand %p267, %p268
    %p270 = pneg %p269
    // Predicated region
    $region45: #{forward.5} parent=5 // pred_check
      _
    $region46: #{forward.5} parent=5 // pred_check_branch
      %272 = sbr.rel (%p269) target = $region48
    $region47: #{forward.5} parent=5 // pred_region
      %s273 = ssub.s32 %s13, 1
      %p274 = scmp.lt.s32.totalorder %s23, 1
      %s275 = scalar_select %p274, %s23, 1
      %p276 = scmp.lt.s32.totalorder %s25, 0
      %s277 = scalar_select %p276, %s25, 0
      %p278 = scmp.lt.s32.totalorder %s24, 0
      %s279 = scalar_select %p278, %s24, 0
      %s280 = sadd.s32 %s279, %s277
      %s281 = smul.addr %s275, 3
      %s282 = sadd.s32 %s280, %s281
      %s283 = smul.addr %s282, 4
      %s284 = scalar_lea.vmem %s0, %s283
      %p285 = pneg %p62
      %p286 = pneg %p59
      %p287 = pneg %p83
      %p288 = pneg %p80
      %p289 = pneg %p104
      %p290 = pneg %p101
      %p291 = pneg %p125
      %p292 = pneg %p122
      %p293 = pneg %p146
      %p294 = pneg %p143
      %p295 = pneg %p167
      %p296 = pneg %p164
      %p297 = pneg %p188
      %p298 = pneg %p185
      %p299 = pneg %p216
      %p300 = pneg %p213
      %p301 = scmp.lt.s32.totalorder %s23, 1
      %s302 = scalar_select %p301, %s23, 1
      %p303 = scmp.lt.s32.totalorder %s24, 0
      %s304 = scalar_select %p303, %s24, 0
      %s305 = smul.addr %s302, 16
      %s306 = sadd.s32 %s304, %s305
      %s307 = smul.addr %s306, 4
      %s308 = scalar_lea.vmem %s7, %s307
      %p309 = scmp.lt.s32.totalorder %s23, 1
      %s310 = scalar_select %p309, %s23, 1
      %p311 = scmp.lt.s32.totalorder %s25, 0
      %s312 = scalar_select %p311, %s25, 0
      %p313 = scmp.lt.s32.totalorder %s24, 0
      %s314 = scalar_select %p313, %s24, 0
      %s315 = sadd.s32 %s314, %s312
      %s316 = smul.addr %s310, 3
      %s317 = sadd.s32 %s315, %s316
      %s318 = smul.addr %s317, 4
      %s319 = scalar_lea.vmem %s0, %s318
      %p320 = scmp.lt.s32.totalorder %s23, 1
      %s321 = scalar_select %p320, %s23, 1
      %p322 = scmp.lt.s32.totalorder %s24, 0
      %s323 = scalar_select %p322, %s24, 0
      %s324 = smul.addr %s321, 16
      %s325 = sadd.s32 %s323, %s324
      %s326 = smul.addr %s325, 4
      %s327 = scalar_lea.vmem %s7, %s326
      %p329 = scmp.eq.s32.totalorder %s25, 0
      // Predicated region
      $region49: #{forward.5} parent=47 // pred_check
        %p330 = pneg %p329
      $region50: #{forward.5} parent=47 // pred_check_branch
        %332 = sbr.rel (%p330) target = $region52
      $region51: #{forward.5} parent=47 // pred_region
        %vm333 = vcmask 130048
        %334 = vst.msk [vmem:[#allocation2] sm:$0xff] %vm333, -inf
        %335 = vst.msk [vmem:[#allocation2 + $0x8] sm:$0xff] %vm333, -inf
        %336 = vst.msk [vmem:[#allocation2 + $0x10] sm:$0xff] %vm333, -inf
        %337 = vst.msk [vmem:[#allocation2 + $0x18] sm:$0xff] %vm333, -inf
        %338 = vst.msk [vmem:[#allocation2 + $0x20] sm:$0xff] %vm333, -inf
        %339 = vst.msk [vmem:[#allocation2 + $0x28] sm:$0xff] %vm333, -inf
        %340 = vst.msk [vmem:[#allocation2 + $0x30] sm:$0xff] %vm333, -inf
        %341 = vst.msk [vmem:[#allocation2 + $0x38] sm:$0xff] %vm333, -inf
        %342 = vst.msk [vmem:[#allocation2 + $0x40] sm:$0xff] %vm333, -inf
        %343 = vst.msk [vmem:[#allocation2 + $0x48] sm:$0xff] %vm333, -inf
        %344 = vst.msk [vmem:[#allocation2 + $0x50] sm:$0xff] %vm333, -inf
        %345 = vst.msk [vmem:[#allocation2 + $0x58] sm:$0xff] %vm333, -inf
        %346 = vst.msk [vmem:[#allocation2 + $0x60] sm:$0xff] %vm333, -inf
        %347 = vst.msk [vmem:[#allocation2 + $0x68] sm:$0xff] %vm333, -inf
        %348 = vst.msk [vmem:[#allocation2 + $0x70] sm:$0xff] %vm333, -inf
        %349 = vst.msk [vmem:[#allocation2 + $0x78] sm:$0xff] %vm333, -inf
      $region52: #{forward.5} parent=47 // pred_fallthru
        _
      %v350 = vld [vmem:[%s1] sm:$0xff]
      %v351 = vld [vmem:[%s1 + $0x8] sm:$0xff]
      %v352 = vld [vmem:[%s1 + $0x10] sm:$0xff]
      %v353 = vld [vmem:[%s1 + $0x18] sm:$0xff]
      %v354 = vld [vmem:[%s2] sm:$0xff]
      %v355 = vld [vmem:[%s2 + $0x8] sm:$0xff]
      %v356 = vld [vmem:[%s2 + $0x10] sm:$0xff]
      %v357 = vld [vmem:[%s2 + $0x18] sm:$0xff]
      %v358 = vld [vmem:[%s3] sm:$0xf]
      %v359 = vld [vmem:[%s3 + $0x4] sm:$0xf]
      %v360 = vld [vmem:[%s3 + $0x8] sm:$0xf]
      %v361 = vld [vmem:[%s3 + $0xc] sm:$0xf]
      %v362 = vld [vmem:[%s3 + $0x10] sm:$0xf]
      %v363 = vld [vmem:[%s3 + $0x14] sm:$0xf]
      %v364 = vld [vmem:[%s3 + $0x18] sm:$0xf]
      %v365 = vld [vmem:[%s3 + $0x1c] sm:$0xf]
      %v366 = vld [vmem:[%s4] sm:$0xff]
      %v367 = vld [vmem:[%s4 + $0x8] sm:$0xff]
      %v368 = vld [vmem:[%s4 + $0x10] sm:$0xff]
      %v369 = vld [vmem:[%s4 + $0x18] sm:$0xff]
      %v370 = vld [vmem:[%s4 + $0x20] sm:$0xff]
      %v371 = vld [vmem:[%s4 + $0x28] sm:$0xff]
      %v372 = vld [vmem:[%s4 + $0x30] sm:$0xff]
      %v373 = vld [vmem:[%s4 + $0x38] sm:$0xff]
      %v374 = vld [vmem:[%s5] sm:$0xf]
      %v375 = vld [vmem:[%s5 + $0x4] sm:$0xf]
      %v376 = vld [vmem:[%s5 + $0x8] sm:$0xf]
      %v377 = vld [vmem:[%s5 + $0xc] sm:$0xf]
      %v378 = vld [vmem:[%s5 + $0x10] sm:$0xf]
      %v379 = vld [vmem:[%s5 + $0x14] sm:$0xf]
      %v380 = vld [vmem:[%s5 + $0x18] sm:$0xf]
      %v381 = vld [vmem:[%s5 + $0x1c] sm:$0xf]
      %v382 = vld [vmem:[%s5 + $0x20] sm:$0xf]
      %v383 = vld [vmem:[%s5 + $0x24] sm:$0xf]
      %v384 = vld [vmem:[%s5 + $0x28] sm:$0xf]
      %v385 = vld [vmem:[%s5 + $0x2c] sm:$0xf]
      %v386 = vld [vmem:[%s5 + $0x30] sm:$0xf]
      %v387 = vld [vmem:[%s5 + $0x34] sm:$0xf]
      %v388 = vld [vmem:[%s5 + $0x38] sm:$0xf]
      %v389 = vld [vmem:[%s5 + $0x3c] sm:$0xf]
      %v390 = vld [vmem:[%s6] sm:$0xff]
      %v391 = vld [vmem:[%s6 + $0x8] sm:$0xff]
      %v392 = vld [vmem:[%s6 + $0x10] sm:$0xff]
      %v393 = vld [vmem:[%s6 + $0x18] sm:$0xff]
      %v394 = vld [vmem:[%s6 + $0x20] sm:$0xff]
      %v395 = vld [vmem:[%s6 + $0x28] sm:$0xff]
      %v396 = vld [vmem:[%s6 + $0x30] sm:$0xff]
      %v397 = vld [vmem:[%s6 + $0x38] sm:$0xff]
      %v398 = vld [vmem:[%s6 + $0x40] sm:$0xff]
      %v399 = vld [vmem:[%s6 + $0x48] sm:$0xff]
      %v400 = vld [vmem:[%s6 + $0x50] sm:$0xff]
      %v401 = vld [vmem:[%s6 + $0x58] sm:$0xff]
      %v402 = vld [vmem:[%s6 + $0x60] sm:$0xff]
      %v403 = vld [vmem:[%s6 + $0x68] sm:$0xff]
      %v404 = vld [vmem:[%s6 + $0x70] sm:$0xff]
      %v405 = vld [vmem:[%s6 + $0x78] sm:$0xff]
      %v406 = vld [vmem:[%s319] sm:$0xf]
      %v407 = vld [vmem:[%s319 + $0x4] sm:$0xf]
      %v408 = vld [vmem:[%s319 + $0x8] sm:$0xf]
      %v409 = vld [vmem:[#allocation2] sm:$0xff]
      %v410 = vld [vmem:[#allocation2 + $0x8] sm:$0xff]
      %v411 = vld [vmem:[#allocation2 + $0x10] sm:$0xff]
      %v412 = vld [vmem:[#allocation2 + $0x18] sm:$0xff]
      %v413 = vld [vmem:[#allocation2 + $0x20] sm:$0xff]
      %v414 = vld [vmem:[#allocation2 + $0x28] sm:$0xff]
      %v415 = vld [vmem:[#allocation2 + $0x30] sm:$0xff]
      %v416 = vld [vmem:[#allocation2 + $0x38] sm:$0xff]
      %v417 = vld [vmem:[#allocation2 + $0x40] sm:$0xff]
      %v418 = vld [vmem:[#allocation2 + $0x48] sm:$0xff]
      %v419 = vld [vmem:[#allocation2 + $0x50] sm:$0xff]
      %v420 = vld [vmem:[#allocation2 + $0x58] sm:$0xff]
      %v421 = vld [vmem:[#allocation2 + $0x60] sm:$0xff]
      %v422 = vld [vmem:[#allocation2 + $0x68] sm:$0xff]
      %v423 = vld [vmem:[#allocation2 + $0x70] sm:$0xff]
      %v424 = vld [vmem:[#allocation2 + $0x78] sm:$0xff]
      %426 = vset.pattern.permute.xlu0 0
      %427 = vperm.xlu0 %426, %v350
      %v428 = vpop.permute.xlu0 %427
      %431 = vset.pattern.permute.xlu0 0
      %432 = vperm.xlu0 %431, %v351
      %v433 = vpop.permute.xlu0 %432
      %436 = vset.pattern.permute.xlu0 0
      %437 = vperm.xlu0 %436, %v352
      %v438 = vpop.permute.xlu0 %437
      %441 = vset.pattern.permute.xlu0 0
      %442 = vperm.xlu0 %441, %v353
      %v443 = vpop.permute.xlu0 %442
      %v445 = vperm.slane %v406, 0
      %v446 = vmul.f32 %v428, %v445
      %v447 = vmul.f32 %v433, %v445
      %v448 = vmul.f32 %v438, %v445
      %v449 = vmul.f32 %v443, %v445
      %450 = vset.pattern.permute.xlu0 1
      %451 = vperm.xlu0 %450, %v350
      %v452 = vpop.permute.xlu0 %451
      %454 = vset.pattern.permute.xlu0 1
      %455 = vperm.xlu0 %454, %v351
      %v456 = vpop.permute.xlu0 %455
      %458 = vset.pattern.permute.xlu0 1
      %459 = vperm.xlu0 %458, %v352
      %v460 = vpop.permute.xlu0 %459
      %462 = vset.pattern.permute.xlu0 1
      %463 = vperm.xlu0 %462, %v353
      %v464 = vpop.permute.xlu0 %463
      %v466 = vperm.slane %v407, 0
      %v467 = vmul.f32 %v452, %v466
      %v468 = vmul.f32 %v456, %v466
      %v469 = vmul.f32 %v460, %v466
      %v470 = vmul.f32 %v464, %v466
      %v471 = vadd.f32 %v446, %v467
      %v472 = vadd.f32 %v447, %v468
      %v473 = vadd.f32 %v448, %v469
      %v474 = vadd.f32 %v449, %v470
      %475 = vset.pattern.permute.xlu0 2
      %476 = vperm.xlu0 %475, %v350
      %v477 = vpop.permute.xlu0 %476
      %479 = vset.pattern.permute.xlu0 2
      %480 = vperm.xlu0 %479, %v351
      %v481 = vpop.permute.xlu0 %480
      %483 = vset.pattern.permute.xlu0 2
      %484 = vperm.xlu0 %483, %v352
      %v485 = vpop.permute.xlu0 %484
      %487 = vset.pattern.permute.xlu0 2
      %488 = vperm.xlu0 %487, %v353
      %v489 = vpop.permute.xlu0 %488
      %v491 = vperm.slane %v408, 0
      %v492 = vmul.f32 %v477, %v491
      %v493 = vmul.f32 %v481, %v491
      %v494 = vmul.f32 %v485, %v491
      %v495 = vmul.f32 %v489, %v491
      %v496 = vadd.f32 %v471, %v492
      %v497 = vadd.f32 %v472, %v493
      %v498 = vadd.f32 %v473, %v494
      %v499 = vadd.f32 %v474, %v495
      %501 = vset.pattern.permute.xlu0 0
      %502 = vperm.xlu0 %501, %v354
      %v503 = vpop.permute.xlu0 %502
      %506 = vset.pattern.permute.xlu0 0
      %507 = vperm.xlu0 %506, %v355
      %v508 = vpop.permute.xlu0 %507
      %511 = vset.pattern.permute.xlu0 0
      %512 = vperm.xlu0 %511, %v356
      %v513 = vpop.permute.xlu0 %512
      %516 = vset.pattern.permute.xlu0 0
      %517 = vperm.xlu0 %516, %v357
      %v518 = vpop.permute.xlu0 %517
      %v520 = vadd.f32 %v496, %v503
      %v521 = vadd.f32 %v497, %v508
      %v522 = vadd.f32 %v498, %v513
      %v523 = vadd.f32 %v499, %v518
      %v524 = vmax.f32 %v520, 0.0
      %v525 = vmax.f32 %v521, 0.0
      %v526 = vmax.f32 %v522, 0.0
      %v527 = vmax.f32 %v523, 0.0
      %v528 = vpack.c.bf16 %v525, %v524
      %v529 = vpack.c.bf16 %v527, %v526
      %531 = vset.pattern.permute.xlu0 0
      %532 = vperm.xlu0 %531, %v366
      %v533 = vpop.permute.xlu0 %532
      %536 = vset.pattern.permute.xlu0 0
      %537 = vperm.xlu0 %536, %v367
      %v538 = vpop.permute.xlu0 %537
      %541 = vset.pattern.permute.xlu0 0
      %542 = vperm.xlu0 %541, %v368
      %v543 = vpop.permute.xlu0 %542
      %546 = vset.pattern.permute.xlu0 0
      %547 = vperm.xlu0 %546, %v369
      %v548 = vpop.permute.xlu0 %547
      %551 = vset.pattern.permute.xlu0 0
      %552 = vperm.xlu0 %551, %v370
      %v553 = vpop.permute.xlu0 %552
      %556 = vset.pattern.permute.xlu0 0
      %557 = vperm.xlu0 %556, %v371
      %v558 = vpop.permute.xlu0 %557
      %561 = vset.pattern.permute.xlu0 0
      %562 = vperm.xlu0 %561, %v372
      %v563 = vpop.permute.xlu0 %562
      %566 = vset.pattern.permute.xlu0 0
      %567 = vperm.xlu0 %566, %v373
      %v568 = vpop.permute.xlu0 %567
      %v578 = vunpack.c.l.b16 %v358
      %v579 = vunpack.c.l.b16 %v359
      %v580 = vunpack.c.l.b16 %v360
      %v581 = vunpack.c.l.b16 %v361
      %v582 = vunpack.c.l.b16 %v362
      %v583 = vunpack.c.l.b16 %v363
      %v584 = vunpack.c.l.b16 %v364
      %v585 = vunpack.c.l.b16 %v365
      %v586 = vpack.c.b16 %v579, %v578
      %v587 = vpack.c.b16 %v581, %v580
      %v588 = vpack.c.b16 %v583, %v582
      %v589 = vpack.c.b16 %v585, %v584
      %vm590 = vcmask 261120
      %v592 = vsel %vm590, %v586, 0
      %v595 = vsel %vm590, %v587, 0
      %v598 = vsel %vm590, %v588, 0
      %v601 = vsel %vm590, %v589, 0
      %603 = vmatpush.bf16.msra.mxu0 0
      %604 = vmatpush.bf16.msra.mxu0 0
      %605 = vmatpush.bf16.msra.mxu0 0
      %606 = vmatpush.bf16.msra.mxu0 0
      %607 = vmatpush.bf16.msra.mxu0 0
      %608 = vmatpush.bf16.msra.mxu0 0
      %609 = vmatpush.bf16.msra.mxu0 %v529
      %610 = vmatpush.bf16.msra.mxu0 %v528
      %611 = vmatmul.bf16.gmra.mxu0 %v592
      %v612 = vpop.f32.mrf.mxu0
      %v613 = vadd.f32 %v533, %v612
      %v614 = vpop.f32.mrf.mxu0
      %v615 = vadd.f32 %v538, %v614
      %616 = vmatmul.bf16.gmra.mxu0 %v595
      %v617 = vpop.f32.mrf.mxu0
      %v618 = vadd.f32 %v543, %v617
      %v619 = vpop.f32.mrf.mxu0
      %v620 = vadd.f32 %v548, %v619
      %621 = vmatmul.bf16.gmra.mxu0 %v598
      %v622 = vpop.f32.mrf.mxu0
      %v623 = vadd.f32 %v553, %v622
      %v624 = vpop.f32.mrf.mxu0
      %v625 = vadd.f32 %v558, %v624
      %626 = vmatmul.bf16.gmra.mxu0 %v601
      %v627 = vpop.f32.mrf.mxu0
      %v628 = vadd.f32 %v563, %v627
      %v629 = vpop.f32.mrf.mxu0
      %v630 = vadd.f32 %v568, %v629
      %631 = vdwg.mxu0
      %v632 = vmax.f32 %v613, 0.0
      %v633 = vmax.f32 %v615, 0.0
      %v634 = vmax.f32 %v618, 0.0
      %v635 = vmax.f32 %v620, 0.0
      %v636 = vmax.f32 %v623, 0.0
      %v637 = vmax.f32 %v625, 0.0
      %v638 = vmax.f32 %v628, 0.0
      %v639 = vmax.f32 %v630, 0.0
      %v640 = vpack.c.bf16 %v633, %v632
      %v641 = vpack.c.bf16 %v635, %v634
      %v642 = vpack.c.bf16 %v637, %v636
      %v643 = vpack.c.bf16 %v639, %v638
      %645 = vset.pattern.permute.xlu0 0
      %646 = vperm.xlu0 %645, %v390
      %v647 = vpop.permute.xlu0 %646
      %650 = vset.pattern.permute.xlu0 0
      %651 = vperm.xlu0 %650, %v391
      %v652 = vpop.permute.xlu0 %651
      %655 = vset.pattern.permute.xlu0 0
      %656 = vperm.xlu0 %655, %v392
      %v657 = vpop.permute.xlu0 %656
      %660 = vset.pattern.permute.xlu0 0
      %661 = vperm.xlu0 %660, %v393
      %v662 = vpop.permute.xlu0 %661
      %665 = vset.pattern.permute.xlu0 0
      %666 = vperm.xlu0 %665, %v394
      %v667 = vpop.permute.xlu0 %666
      %670 = vset.pattern.permute.xlu0 0
      %671 = vperm.xlu0 %670, %v395
      %v672 = vpop.permute.xlu0 %671
      %675 = vset.pattern.permute.xlu0 0
      %676 = vperm.xlu0 %675, %v396
      %v677 = vpop.permute.xlu0 %676
      %680 = vset.pattern.permute.xlu0 0
      %681 = vperm.xlu0 %680, %v397
      %v682 = vpop.permute.xlu0 %681
      %685 = vset.pattern.permute.xlu0 0
      %686 = vperm.xlu0 %685, %v398
      %v687 = vpop.permute.xlu0 %686
      %690 = vset.pattern.permute.xlu0 0
      %691 = vperm.xlu0 %690, %v399
      %v692 = vpop.permute.xlu0 %691
      %695 = vset.pattern.permute.xlu0 0
      %696 = vperm.xlu0 %695, %v400
      %v697 = vpop.permute.xlu0 %696
      %700 = vset.pattern.permute.xlu0 0
      %701 = vperm.xlu0 %700, %v401
      %v702 = vpop.permute.xlu0 %701
      %705 = vset.pattern.permute.xlu0 0
      %706 = vperm.xlu0 %705, %v402
      %v707 = vpop.permute.xlu0 %706
      %710 = vset.pattern.permute.xlu0 0
      %711 = vperm.xlu0 %710, %v403
      %v712 = vpop.permute.xlu0 %711
      %715 = vset.pattern.permute.xlu0 0
      %716 = vperm.xlu0 %715, %v404
      %v717 = vpop.permute.xlu0 %716
      %720 = vset.pattern.permute.xlu0 0
      %721 = vperm.xlu0 %720, %v405
      %v722 = vpop.permute.xlu0 %721
      %v740 = vunpack.c.l.b16 %v374
      %v741 = vunpack.c.l.b16 %v375
      %v742 = vunpack.c.l.b16 %v376
      %v743 = vunpack.c.l.b16 %v377
      %v744 = vunpack.c.l.b16 %v378
      %v745 = vunpack.c.l.b16 %v379
      %v746 = vunpack.c.l.b16 %v380
      %v747 = vunpack.c.l.b16 %v381
      %v748 = vunpack.c.l.b16 %v382
      %v749 = vunpack.c.l.b16 %v383
      %v750 = vunpack.c.l.b16 %v384
      %v751 = vunpack.c.l.b16 %v385
      %v752 = vunpack.c.l.b16 %v386
      %v753 = vunpack.c.l.b16 %v387
      %v754 = vunpack.c.l.b16 %v388
      %v755 = vunpack.c.l.b16 %v389
      %v756 = vpack.c.b16 %v741, %v740
      %v757 = vpack.c.b16 %v743, %v742
      %v758 = vpack.c.b16 %v745, %v744
      %v759 = vpack.c.b16 %v747, %v746
      %v760 = vpack.c.b16 %v749, %v748
      %v761 = vpack.c.b16 %v751, %v750
      %v762 = vpack.c.b16 %v753, %v752
      %v763 = vpack.c.b16 %v755, %v754
      %vm764 = vcmask 523264
      %v766 = vsel %vm764, %v756, 0
      %v769 = vsel %vm764, %v757, 0
      %v772 = vsel %vm764, %v758, 0
      %v775 = vsel %vm764, %v759, 0
      %v778 = vsel %vm764, %v760, 0
      %v781 = vsel %vm764, %v761, 0
      %v784 = vsel %vm764, %v762, 0
      %v787 = vsel %vm764, %v763, 0
      %789 = vmatpush.bf16.msra.mxu0 0
      %790 = vmatpush.bf16.msra.mxu0 0
      %791 = vmatpush.bf16.msra.mxu0 0
      %792 = vmatpush.bf16.msra.mxu0 0
      %793 = vmatpush.bf16.msra.mxu0 %v643
      %794 = vmatpush.bf16.msra.mxu0 %v642
      %795 = vmatpush.bf16.msra.mxu0 %v641
      %796 = vmatpush.bf16.msra.mxu0 %v640
      %797 = vmatmul.bf16.gmra.mxu0 %v766
      %v798 = vpop.f32.mrf.mxu0
      %v799 = vadd.f32 %v647, %v798
      %v800 = vpop.f32.mrf.mxu0
      %v801 = vadd.f32 %v652, %v800
      %802 = vmatmul.bf16.gmra.mxu0 %v769
      %v803 = vpop.f32.mrf.mxu0
      %v804 = vadd.f32 %v657, %v803
      %v805 = vpop.f32.mrf.mxu0
      %v806 = vadd.f32 %v662, %v805
      %807 = vmatmul.bf16.gmra.mxu0 %v772
      %v808 = vpop.f32.mrf.mxu0
      %v809 = vadd.f32 %v667, %v808
      %v810 = vpop.f32.mrf.mxu0
      %v811 = vadd.f32 %v672, %v810
      %812 = vmatmul.bf16.gmra.mxu0 %v775
      %v813 = vpop.f32.mrf.mxu0
      %v814 = vadd.f32 %v677, %v813
      %v815 = vpop.f32.mrf.mxu0
      %v816 = vadd.f32 %v682, %v815
      %817 = vmatmul.bf16.gmra.mxu0 %v778
      %v818 = vpop.f32.mrf.mxu0
      %v819 = vadd.f32 %v687, %v818
      %v820 = vpop.f32.mrf.mxu0
      %v821 = vadd.f32 %v692, %v820
      %822 = vmatmul.bf16.gmra.mxu0 %v781
      %v823 = vpop.f32.mrf.mxu0
      %v824 = vadd.f32 %v697, %v823
      %v825 = vpop.f32.mrf.mxu0
      %v826 = vadd.f32 %v702, %v825
      %827 = vmatmul.bf16.gmra.mxu0 %v784
      %v828 = vpop.f32.mrf.mxu0
      %v829 = vadd.f32 %v707, %v828
      %v830 = vpop.f32.mrf.mxu0
      %v831 = vadd.f32 %v712, %v830
      %832 = vmatmul.bf16.gmra.mxu0 %v787
      %v833 = vpop.f32.mrf.mxu0
      %v834 = vadd.f32 %v717, %v833
      %v835 = vpop.f32.mrf.mxu0
      %v836 = vadd.f32 %v722, %v835
      %837 = vdwg.mxu0
      %v838 = vmax.f32 %v799, 0.0
      %v839 = vmax.f32 %v801, 0.0
      %v840 = vmax.f32 %v804, 0.0
      %v841 = vmax.f32 %v806, 0.0
      %v842 = vmax.f32 %v809, 0.0
      %v843 = vmax.f32 %v811, 0.0
      %v844 = vmax.f32 %v814, 0.0
      %v845 = vmax.f32 %v816, 0.0
      %v846 = vmax.f32 %v819, 0.0
      %v847 = vmax.f32 %v821, 0.0
      %v848 = vmax.f32 %v824, 0.0
      %v849 = vmax.f32 %v826, 0.0
      %v850 = vmax.f32 %v829, 0.0
      %v851 = vmax.f32 %v831, 0.0
      %v852 = vmax.f32 %v834, 0.0
      %v853 = vmax.f32 %v836, 0.0
      %v854 = vmax.f32 %v409, %v838
      %v855 = vmax.f32 %v410, %v839
      %v856 = vmax.f32 %v411, %v840
      %v857 = vmax.f32 %v412, %v841
      %v858 = vmax.f32 %v413, %v842
      %v859 = vmax.f32 %v414, %v843
      %v860 = vmax.f32 %v415, %v844
      %v861 = vmax.f32 %v416, %v845
      %v862 = vmax.f32 %v417, %v846
      %v863 = vmax.f32 %v418, %v847
      %v864 = vmax.f32 %v419, %v848
      %v865 = vmax.f32 %v420, %v849
      %v866 = vmax.f32 %v421, %v850
      %v867 = vmax.f32 %v422, %v851
      %v868 = vmax.f32 %v423, %v852
      %v869 = vmax.f32 %v424, %v853
      %v870 = vperm.slane %v406, 1
      %v871 = vmul.f32 %v428, %v870
      %v872 = vmul.f32 %v433, %v870
      %v873 = vmul.f32 %v438, %v870
      %v874 = vmul.f32 %v443, %v870
      %v875 = vperm.slane %v407, 1
      %v876 = vmul.f32 %v452, %v875
      %v877 = vmul.f32 %v456, %v875
      %v878 = vmul.f32 %v460, %v875
      %v879 = vmul.f32 %v464, %v875
      %v880 = vadd.f32 %v871, %v876
      %v881 = vadd.f32 %v872, %v877
      %v882 = vadd.f32 %v873, %v878
      %v883 = vadd.f32 %v874, %v879
      %v884 = vperm.slane %v408, 1
      %v885 = vmul.f32 %v477, %v884
      %v886 = vmul.f32 %v481, %v884
      %v887 = vmul.f32 %v485, %v884
      %v888 = vmul.f32 %v489, %v884
      %v889 = vadd.f32 %v880, %v885
      %v890 = vadd.f32 %v881, %v886
      %v891 = vadd.f32 %v882, %v887
      %v892 = vadd.f32 %v883, %v888
      %v893 = vadd.f32 %v889, %v503
      %v894 = vadd.f32 %v890, %v508
      %v895 = vadd.f32 %v891, %v513
      %v896 = vadd.f32 %v892, %v518
      %v897 = vmax.f32 %v893, 0.0
      %v898 = vmax.f32 %v894, 0.0
      %v899 = vmax.f32 %v895, 0.0
      %v900 = vmax.f32 %v896, 0.0
      %v901 = vpack.c.bf16 %v898, %v897
      %v902 = vpack.c.bf16 %v900, %v899
      %903 = vmatpush.bf16.msra.mxu0 0
      %904 = vmatpush.bf16.msra.mxu0 0
      %905 = vmatpush.bf16.msra.mxu0 0
      %906 = vmatpush.bf16.msra.mxu0 0
      %907 = vmatpush.bf16.msra.mxu0 0
      %908 = vmatpush.bf16.msra.mxu0 0
      %909 = vmatpush.bf16.msra.mxu0 %v902
      %910 = vmatpush.bf16.msra.mxu0 %v901
      %911 = vmatmul.bf16.gmra.mxu0 %v592
      %v912 = vpop.f32.mrf.mxu0
      %v913 = vadd.f32 %v533, %v912
      %v914 = vpop.f32.mrf.mxu0
      %v915 = vadd.f32 %v538, %v914
      %916 = vmatmul.bf16.gmra.mxu0 %v595
      %v917 = vpop.f32.mrf.mxu0
      %v918 = vadd.f32 %v543, %v917
      %v919 = vpop.f32.mrf.mxu0
      %v920 = vadd.f32 %v548, %v919
      %921 = vmatmul.bf16.gmra.mxu0 %v598
      %v922 = vpop.f32.mrf.mxu0
      %v923 = vadd.f32 %v553, %v922
      %v924 = vpop.f32.mrf.mxu0
      %v925 = vadd.f32 %v558, %v924
      %926 = vmatmul.bf16.gmra.mxu0 %v601
      %v927 = vpop.f32.mrf.mxu0
      %v928 = vadd.f32 %v563, %v927
      %v929 = vpop.f32.mrf.mxu0
      %v930 = vadd.f32 %v568, %v929
      %931 = vdwg.mxu0
      %v932 = vmax.f32 %v913, 0.0
      %v933 = vmax.f32 %v915, 0.0
      %v934 = vmax.f32 %v918, 0.0
      %v935 = vmax.f32 %v920, 0.0
      %v936 = vmax.f32 %v923, 0.0
      %v937 = vmax.f32 %v925, 0.0
      %v938 = vmax.f32 %v928, 0.0
      %v939 = vmax.f32 %v930, 0.0
      %v940 = vpack.c.bf16 %v933, %v932
      %v941 = vpack.c.bf16 %v935, %v934
      %v942 = vpack.c.bf16 %v937, %v936
      %v943 = vpack.c.bf16 %v939, %v938
      %944 = vmatpush.bf16.msra.mxu0 0
      %945 = vmatpush.bf16.msra.mxu0 0
      %946 = vmatpush.bf16.msra.mxu0 0
      %947 = vmatpush.bf16.msra.mxu0 0
      %948 = vmatpush.bf16.msra.mxu0 %v943
      %949 = vmatpush.bf16.msra.mxu0 %v942
      %950 = vmatpush.bf16.msra.mxu0 %v941
      %951 = vmatpush.bf16.msra.mxu0 %v940
      %952 = vmatmul.bf16.gmra.mxu0 %v766
      %v953 = vpop.f32.mrf.mxu0
      %v954 = vadd.f32 %v647, %v953
      %v955 = vpop.f32.mrf.mxu0
      %v956 = vadd.f32 %v652, %v955
      %957 = vmatmul.bf16.gmra.mxu0 %v769
      %v958 = vpop.f32.mrf.mxu0
      %v959 = vadd.f32 %v657, %v958
      %v960 = vpop.f32.mrf.mxu0
      %v961 = vadd.f32 %v662, %v960
      %962 = vmatmul.bf16.gmra.mxu0 %v772
      %v963 = vpop.f32.mrf.mxu0
      %v964 = vadd.f32 %v667, %v963
      %v965 = vpop.f32.mrf.mxu0
      %v966 = vadd.f32 %v672, %v965
      %967 = vmatmul.bf16.gmra.mxu0 %v775
      %v968 = vpop.f32.mrf.mxu0
      %v969 = vadd.f32 %v677, %v968
      %v970 = vpop.f32.mrf.mxu0
      %v971 = vadd.f32 %v682, %v970
      %972 = vmatmul.bf16.gmra.mxu0 %v778
      %v973 = vpop.f32.mrf.mxu0
      %v974 = vadd.f32 %v687, %v973
      %v975 = vpop.f32.mrf.mxu0
      %v976 = vadd.f32 %v692, %v975
      %977 = vmatmul.bf16.gmra.mxu0 %v781
      %v978 = vpop.f32.mrf.mxu0
      %v979 = vadd.f32 %v697, %v978
      %v980 = vpop.f32.mrf.mxu0
      %v981 = vadd.f32 %v702, %v980
      %982 = vmatmul.bf16.gmra.mxu0 %v784
      %v983 = vpop.f32.mrf.mxu0
      %v984 = vadd.f32 %v707, %v983
      %v985 = vpop.f32.mrf.mxu0
      %v986 = vadd.f32 %v712, %v985
      %987 = vmatmul.bf16.gmra.mxu0 %v787
      %v988 = vpop.f32.mrf.mxu0
      %v989 = vadd.f32 %v717, %v988
      %v990 = vpop.f32.mrf.mxu0
      %v991 = vadd.f32 %v722, %v990
      %992 = vdwg.mxu0
      %v993 = vmax.f32 %v954, 0.0
      %v994 = vmax.f32 %v956, 0.0
      %v995 = vmax.f32 %v959, 0.0
      %v996 = vmax.f32 %v961, 0.0
      %v997 = vmax.f32 %v964, 0.0
      %v998 = vmax.f32 %v966, 0.0
      %v999 = vmax.f32 %v969, 0.0
      %v1000 = vmax.f32 %v971, 0.0
      %v1001 = vmax.f32 %v974, 0.0
      %v1002 = vmax.f32 %v976, 0.0
      %v1003 = vmax.f32 %v979, 0.0
      %v1004 = vmax.f32 %v981, 0.0
      %v1005 = vmax.f32 %v984, 0.0
      %v1006 = vmax.f32 %v986, 0.0
      %v1007 = vmax.f32 %v989, 0.0
      %v1008 = vmax.f32 %v991, 0.0
      %v1009 = vmax.f32 %v854, %v993
      %v1010 = vmax.f32 %v855, %v994
      %v1011 = vmax.f32 %v856, %v995
      %v1012 = vmax.f32 %v857, %v996
      %v1013 = vmax.f32 %v858, %v997
      %v1014 = vmax.f32 %v859, %v998
      %v1015 = vmax.f32 %v860, %v999
      %v1016 = vmax.f32 %v861, %v1000
      %v1017 = vmax.f32 %v862, %v1001
      %v1018 = vmax.f32 %v863, %v1002
      %v1019 = vmax.f32 %v864, %v1003
      %v1020 = vmax.f32 %v865, %v1004
      %v1021 = vmax.f32 %v866, %v1005
      %v1022 = vmax.f32 %v867, %v1006
      %v1023 = vmax.f32 %v868, %v1007
      %v1024 = vmax.f32 %v869, %v1008
      %v1025 = vperm.slane %v406, 2
      %v1026 = vmul.f32 %v428, %v1025
      %v1027 = vmul.f32 %v433, %v1025
      %v1028 = vmul.f32 %v438, %v1025
      %v1029 = vmul.f32 %v443, %v1025
      %v1030 = vperm.slane %v407, 2
      %v1031 = vmul.f32 %v452, %v1030
      %v1032 = vmul.f32 %v456, %v1030
      %v1033 = vmul.f32 %v460, %v1030
      %v1034 = vmul.f32 %v464, %v1030
      %v1035 = vadd.f32 %v1026, %v1031
      %v1036 = vadd.f32 %v1027, %v1032
      %v1037 = vadd.f32 %v1028, %v1033
      %v1038 = vadd.f32 %v1029, %v1034
      %v1039 = vperm.slane %v408, 2
      %v1040 = vmul.f32 %v477, %v1039
      %v1041 = vmul.f32 %v481, %v1039
      %v1042 = vmul.f32 %v485, %v1039
      %v1043 = vmul.f32 %v489, %v1039
      %v1044 = vadd.f32 %v1035, %v1040
      %v1045 = vadd.f32 %v1036, %v1041
      %v1046 = vadd.f32 %v1037, %v1042
      %v1047 = vadd.f32 %v1038, %v1043
      %v1048 = vadd.f32 %v1044, %v503
      %v1049 = vadd.f32 %v1045, %v508
      %v1050 = vadd.f32 %v1046, %v513
      %v1051 = vadd.f32 %v1047, %v518
      %v1052 = vmax.f32 %v1048, 0.0
      %v1053 = vmax.f32 %v1049, 0.0
      %v1054 = vmax.f32 %v1050, 0.0
      %v1055 = vmax.f32 %v1051, 0.0
      %v1056 = vpack.c.bf16 %v1053, %v1052
      %v1057 = vpack.c.bf16 %v1055, %v1054
      %1058 = vmatpush.bf16.msra.mxu0 0
      %1059 = vmatpush.bf16.msra.mxu0 0
      %1060 = vmatpush.bf16.msra.mxu0 0
      %1061 = vmatpush.bf16.msra.mxu0 0
      %1062 = vmatpush.bf16.msra.mxu0 0
      %1063 = vmatpush.bf16.msra.mxu0 0
      %1064 = vmatpush.bf16.msra.mxu0 %v1057
      %1065 = vmatpush.bf16.msra.mxu0 %v1056
      %1066 = vmatmul.bf16.gmra.mxu0 %v592
      %v1067 = vpop.f32.mrf.mxu0
      %v1068 = vadd.f32 %v533, %v1067
      %v1069 = vpop.f32.mrf.mxu0
      %v1070 = vadd.f32 %v538, %v1069
      %1071 = vmatmul.bf16.gmra.mxu0 %v595
      %v1072 = vpop.f32.mrf.mxu0
      %v1073 = vadd.f32 %v543, %v1072
      %v1074 = vpop.f32.mrf.mxu0
      %v1075 = vadd.f32 %v548, %v1074
      %1076 = vmatmul.bf16.gmra.mxu0 %v598
      %v1077 = vpop.f32.mrf.mxu0
      %v1078 = vadd.f32 %v553, %v1077
      %v1079 = vpop.f32.mrf.mxu0
      %v1080 = vadd.f32 %v558, %v1079
      %1081 = vmatmul.bf16.gmra.mxu0 %v601
      %v1082 = vpop.f32.mrf.mxu0
      %v1083 = vadd.f32 %v563, %v1082
      %v1084 = vpop.f32.mrf.mxu0
      %v1085 = vadd.f32 %v568, %v1084
      %1086 = vdwg.mxu0
      %v1087 = vmax.f32 %v1068, 0.0
      %v1088 = vmax.f32 %v1070, 0.0
      %v1089 = vmax.f32 %v1073, 0.0
      %v1090 = vmax.f32 %v1075, 0.0
      %v1091 = vmax.f32 %v1078, 0.0
      %v1092 = vmax.f32 %v1080, 0.0
      %v1093 = vmax.f32 %v1083, 0.0
      %v1094 = vmax.f32 %v1085, 0.0
      %v1095 = vpack.c.bf16 %v1088, %v1087
      %v1096 = vpack.c.bf16 %v1090, %v1089
      %v1097 = vpack.c.bf16 %v1092, %v1091
      %v1098 = vpack.c.bf16 %v1094, %v1093
      %1099 = vmatpush.bf16.msra.mxu0 0
      %1100 = vmatpush.bf16.msra.mxu0 0
      %1101 = vmatpush.bf16.msra.mxu0 0
      %1102 = vmatpush.bf16.msra.mxu0 0
      %1103 = vmatpush.bf16.msra.mxu0 %v1098
      %1104 = vmatpush.bf16.msra.mxu0 %v1097
      %1105 = vmatpush.bf16.msra.mxu0 %v1096
      %1106 = vmatpush.bf16.msra.mxu0 %v1095
      %1107 = vmatmul.bf16.gmra.mxu0 %v766
      %v1108 = vpop.f32.mrf.mxu0
      %v1109 = vadd.f32 %v647, %v1108
      %v1110 = vpop.f32.mrf.mxu0
      %v1111 = vadd.f32 %v652, %v1110
      %1112 = vmatmul.bf16.gmra.mxu0 %v769
      %v1113 = vpop.f32.mrf.mxu0
      %v1114 = vadd.f32 %v657, %v1113
      %v1115 = vpop.f32.mrf.mxu0
      %v1116 = vadd.f32 %v662, %v1115
      %1117 = vmatmul.bf16.gmra.mxu0 %v772
      %v1118 = vpop.f32.mrf.mxu0
      %v1119 = vadd.f32 %v667, %v1118
      %v1120 = vpop.f32.mrf.mxu0
      %v1121 = vadd.f32 %v672, %v1120
      %1122 = vmatmul.bf16.gmra.mxu0 %v775
      %v1123 = vpop.f32.mrf.mxu0
      %v1124 = vadd.f32 %v677, %v1123
      %v1125 = vpop.f32.mrf.mxu0
      %v1126 = vadd.f32 %v682, %v1125
      %1127 = vmatmul.bf16.gmra.mxu0 %v778
      %v1128 = vpop.f32.mrf.mxu0
      %v1129 = vadd.f32 %v687, %v1128
      %v1130 = vpop.f32.mrf.mxu0
      %v1131 = vadd.f32 %v692, %v1130
      %1132 = vmatmul.bf16.gmra.mxu0 %v781
      %v1133 = vpop.f32.mrf.mxu0
      %v1134 = vadd.f32 %v697, %v1133
      %v1135 = vpop.f32.mrf.mxu0
      %v1136 = vadd.f32 %v702, %v1135
      %1137 = vmatmul.bf16.gmra.mxu0 %v784
      %v1138 = vpop.f32.mrf.mxu0
      %v1139 = vadd.f32 %v707, %v1138
      %v1140 = vpop.f32.mrf.mxu0
      %v1141 = vadd.f32 %v712, %v1140
      %1142 = vmatmul.bf16.gmra.mxu0 %v787
      %v1143 = vpop.f32.mrf.mxu0
      %v1144 = vadd.f32 %v717, %v1143
      %v1145 = vpop.f32.mrf.mxu0
      %v1146 = vadd.f32 %v722, %v1145
      %1147 = vdwg.mxu0
      %v1148 = vmax.f32 %v1109, 0.0
      %v1149 = vmax.f32 %v1111, 0.0
      %v1150 = vmax.f32 %v1114, 0.0
      %v1151 = vmax.f32 %v1116, 0.0
      %v1152 = vmax.f32 %v1119, 0.0
      %v1153 = vmax.f32 %v1121, 0.0
      %v1154 = vmax.f32 %v1124, 0.0
      %v1155 = vmax.f32 %v1126, 0.0
      %v1156 = vmax.f32 %v1129, 0.0
      %v1157 = vmax.f32 %v1131, 0.0
      %v1158 = vmax.f32 %v1134, 0.0
      %v1159 = vmax.f32 %v1136, 0.0
      %v1160 = vmax.f32 %v1139, 0.0
      %v1161 = vmax.f32 %v1141, 0.0
      %v1162 = vmax.f32 %v1144, 0.0
      %v1163 = vmax.f32 %v1146, 0.0
      %v1164 = vmax.f32 %v1009, %v1148
      %v1165 = vmax.f32 %v1010, %v1149
      %v1166 = vmax.f32 %v1011, %v1150
      %v1167 = vmax.f32 %v1012, %v1151
      %v1168 = vmax.f32 %v1013, %v1152
      %v1169 = vmax.f32 %v1014, %v1153
      %v1170 = vmax.f32 %v1015, %v1154
      %v1171 = vmax.f32 %v1016, %v1155
      %v1172 = vmax.f32 %v1017, %v1156
      %v1173 = vmax.f32 %v1018, %v1157
      %v1174 = vmax.f32 %v1019, %v1158
      %v1175 = vmax.f32 %v1020, %v1159
      %v1176 = vmax.f32 %v1021, %v1160
      %v1177 = vmax.f32 %v1022, %v1161
      %v1178 = vmax.f32 %v1023, %v1162
      %v1179 = vmax.f32 %v1024, %v1163
      %v1180 = vperm.slane %v406, 3
      %v1181 = vmul.f32 %v428, %v1180
      %v1182 = vmul.f32 %v433, %v1180
      %v1183 = vmul.f32 %v438, %v1180
      %v1184 = vmul.f32 %v443, %v1180
      %v1185 = vperm.slane %v407, 3
      %v1186 = vmul.f32 %v452, %v1185
      %v1187 = vmul.f32 %v456, %v1185
      %v1188 = vmul.f32 %v460, %v1185
      %v1189 = vmul.f32 %v464, %v1185
      %v1190 = vadd.f32 %v1181, %v1186
      %v1191 = vadd.f32 %v1182, %v1187
      %v1192 = vadd.f32 %v1183, %v1188
      %v1193 = vadd.f32 %v1184, %v1189
      %v1194 = vperm.slane %v408, 3
      %v1195 = vmul.f32 %v477, %v1194
      %v1196 = vmul.f32 %v481, %v1194
      %v1197 = vmul.f32 %v485, %v1194
      %v1198 = vmul.f32 %v489, %v1194
      %v1199 = vadd.f32 %v1190, %v1195
      %v1200 = vadd.f32 %v1191, %v1196
      %v1201 = vadd.f32 %v1192, %v1197
      %v1202 = vadd.f32 %v1193, %v1198
      %v1203 = vadd.f32 %v1199, %v503
      %v1204 = vadd.f32 %v1200, %v508
      %v1205 = vadd.f32 %v1201, %v513
      %v1206 = vadd.f32 %v1202, %v518
      %v1207 = vmax.f32 %v1203, 0.0
      %v1208 = vmax.f32 %v1204, 0.0
      %v1209 = vmax.f32 %v1205, 0.0
      %v1210 = vmax.f32 %v1206, 0.0
      %v1211 = vpack.c.bf16 %v1208, %v1207
      %v1212 = vpack.c.bf16 %v1210, %v1209
      %1213 = vmatpush.bf16.msra.mxu0 0
      %1214 = vmatpush.bf16.msra.mxu0 0
      %1215 = vmatpush.bf16.msra.mxu0 0
      %1216 = vmatpush.bf16.msra.mxu0 0
      %1217 = vmatpush.bf16.msra.mxu0 0
      %1218 = vmatpush.bf16.msra.mxu0 0
      %1219 = vmatpush.bf16.msra.mxu0 %v1212
      %1220 = vmatpush.bf16.msra.mxu0 %v1211
      %1221 = vmatmul.bf16.gmra.mxu0 %v592
      %v1222 = vpop.f32.mrf.mxu0
      %v1223 = vadd.f32 %v533, %v1222
      %v1224 = vpop.f32.mrf.mxu0
      %v1225 = vadd.f32 %v538, %v1224
      %1226 = vmatmul.bf16.gmra.mxu0 %v595
      %v1227 = vpop.f32.mrf.mxu0
      %v1228 = vadd.f32 %v543, %v1227
      %v1229 = vpop.f32.mrf.mxu0
      %v1230 = vadd.f32 %v548, %v1229
      %1231 = vmatmul.bf16.gmra.mxu0 %v598
      %v1232 = vpop.f32.mrf.mxu0
      %v1233 = vadd.f32 %v553, %v1232
      %v1234 = vpop.f32.mrf.mxu0
      %v1235 = vadd.f32 %v558, %v1234
      %1236 = vmatmul.bf16.gmra.mxu0 %v601
      %v1237 = vpop.f32.mrf.mxu0
      %v1238 = vadd.f32 %v563, %v1237
      %v1239 = vpop.f32.mrf.mxu0
      %v1240 = vadd.f32 %v568, %v1239
      %1241 = vdwg.mxu0
      %v1242 = vmax.f32 %v1223, 0.0
      %v1243 = vmax.f32 %v1225, 0.0
      %v1244 = vmax.f32 %v1228, 0.0
      %v1245 = vmax.f32 %v1230, 0.0
      %v1246 = vmax.f32 %v1233, 0.0
      %v1247 = vmax.f32 %v1235, 0.0
      %v1248 = vmax.f32 %v1238, 0.0
      %v1249 = vmax.f32 %v1240, 0.0
      %v1250 = vpack.c.bf16 %v1243, %v1242
      %v1251 = vpack.c.bf16 %v1245, %v1244
      %v1252 = vpack.c.bf16 %v1247, %v1246
      %v1253 = vpack.c.bf16 %v1249, %v1248
      %1254 = vmatpush.bf16.msra.mxu0 0
      %1255 = vmatpush.bf16.msra.mxu0 0
      %1256 = vmatpush.bf16.msra.mxu0 0
      %1257 = vmatpush.bf16.msra.mxu0 0
      %1258 = vmatpush.bf16.msra.mxu0 %v1253
      %1259 = vmatpush.bf16.msra.mxu0 %v1252
      %1260 = vmatpush.bf16.msra.mxu0 %v1251
      %1261 = vmatpush.bf16.msra.mxu0 %v1250
      %1262 = vmatmul.bf16.gmra.mxu0 %v766
      %v1263 = vpop.f32.mrf.mxu0
      %v1264 = vadd.f32 %v647, %v1263
      %v1265 = vpop.f32.mrf.mxu0
      %v1266 = vadd.f32 %v652, %v1265
      %1267 = vmatmul.bf16.gmra.mxu0 %v769
      %v1268 = vpop.f32.mrf.mxu0
      %v1269 = vadd.f32 %v657, %v1268
      %v1270 = vpop.f32.mrf.mxu0
      %v1271 = vadd.f32 %v662, %v1270
      %1272 = vmatmul.bf16.gmra.mxu0 %v772
      %v1273 = vpop.f32.mrf.mxu0
      %v1274 = vadd.f32 %v667, %v1273
      %v1275 = vpop.f32.mrf.mxu0
      %v1276 = vadd.f32 %v672, %v1275
      %1277 = vmatmul.bf16.gmra.mxu0 %v775
      %v1278 = vpop.f32.mrf.mxu0
      %v1279 = vadd.f32 %v677, %v1278
      %v1280 = vpop.f32.mrf.mxu0
      %v1281 = vadd.f32 %v682, %v1280
      %1282 = vmatmul.bf16.gmra.mxu0 %v778
      %v1283 = vpop.f32.mrf.mxu0
      %v1284 = vadd.f32 %v687, %v1283
      %v1285 = vpop.f32.mrf.mxu0
      %v1286 = vadd.f32 %v692, %v1285
      %1287 = vmatmul.bf16.gmra.mxu0 %v781
      %v1288 = vpop.f32.mrf.mxu0
      %v1289 = vadd.f32 %v697, %v1288
      %v1290 = vpop.f32.mrf.mxu0
      %v1291 = vadd.f32 %v702, %v1290
      %1292 = vmatmul.bf16.gmra.mxu0 %v784
      %v1293 = vpop.f32.mrf.mxu0
      %v1294 = vadd.f32 %v707, %v1293
      %v1295 = vpop.f32.mrf.mxu0
      %v1296 = vadd.f32 %v712, %v1295
      %1297 = vmatmul.bf16.gmra.mxu0 %v787
      %v1298 = vpop.f32.mrf.mxu0
      %v1299 = vadd.f32 %v717, %v1298
      %v1300 = vpop.f32.mrf.mxu0
      %v1301 = vadd.f32 %v722, %v1300
      %1302 = vdwg.mxu0
      %v1303 = vmax.f32 %v1264, 0.0
      %v1304 = vmax.f32 %v1266, 0.0
      %v1305 = vmax.f32 %v1269, 0.0
      %v1306 = vmax.f32 %v1271, 0.0
      %v1307 = vmax.f32 %v1274, 0.0
      %v1308 = vmax.f32 %v1276, 0.0
      %v1309 = vmax.f32 %v1279, 0.0
      %v1310 = vmax.f32 %v1281, 0.0
      %v1311 = vmax.f32 %v1284, 0.0
      %v1312 = vmax.f32 %v1286, 0.0
      %v1313 = vmax.f32 %v1289, 0.0
      %v1314 = vmax.f32 %v1291, 0.0
      %v1315 = vmax.f32 %v1294, 0.0
      %v1316 = vmax.f32 %v1296, 0.0
      %v1317 = vmax.f32 %v1299, 0.0
      %v1318 = vmax.f32 %v1301, 0.0
      %v1319 = vmax.f32 %v1164, %v1303
      %v1320 = vmax.f32 %v1165, %v1304
      %v1321 = vmax.f32 %v1166, %v1305
      %v1322 = vmax.f32 %v1167, %v1306
      %v1323 = vmax.f32 %v1168, %v1307
      %v1324 = vmax.f32 %v1169, %v1308
      %v1325 = vmax.f32 %v1170, %v1309
      %v1326 = vmax.f32 %v1171, %v1310
      %v1327 = vmax.f32 %v1172, %v1311
      %v1328 = vmax.f32 %v1173, %v1312
      %v1329 = vmax.f32 %v1174, %v1313
      %v1330 = vmax.f32 %v1175, %v1314
      %v1331 = vmax.f32 %v1176, %v1315
      %v1332 = vmax.f32 %v1177, %v1316
      %v1333 = vmax.f32 %v1178, %v1317
      %v1334 = vmax.f32 %v1179, %v1318
      %vm1335 = vcmask 130048
      %1336 = vst.msk [vmem:[#allocation2] sm:$0xff] %vm1335, %v1319
      %1337 = vst.msk [vmem:[#allocation2 + $0x8] sm:$0xff] %vm1335, %v1320
      %1338 = vst.msk [vmem:[#allocation2 + $0x10] sm:$0xff] %vm1335, %v1321
      %1339 = vst.msk [vmem:[#allocation2 + $0x18] sm:$0xff] %vm1335, %v1322
      %1340 = vst.msk [vmem:[#allocation2 + $0x20] sm:$0xff] %vm1335, %v1323
      %1341 = vst.msk [vmem:[#allocation2 + $0x28] sm:$0xff] %vm1335, %v1324
      %1342 = vst.msk [vmem:[#allocation2 + $0x30] sm:$0xff] %vm1335, %v1325
      %1343 = vst.msk [vmem:[#allocation2 + $0x38] sm:$0xff] %vm1335, %v1326
      %1344 = vst.msk [vmem:[#allocation2 + $0x40] sm:$0xff] %vm1335, %v1327
      %1345 = vst.msk [vmem:[#allocation2 + $0x48] sm:$0xff] %vm1335, %v1328
      %1346 = vst.msk [vmem:[#allocation2 + $0x50] sm:$0xff] %vm1335, %v1329
      %1347 = vst.msk [vmem:[#allocation2 + $0x58] sm:$0xff] %vm1335, %v1330
      %1348 = vst.msk [vmem:[#allocation2 + $0x60] sm:$0xff] %vm1335, %v1331
      %1349 = vst.msk [vmem:[#allocation2 + $0x68] sm:$0xff] %vm1335, %v1332
      %1350 = vst.msk [vmem:[#allocation2 + $0x70] sm:$0xff] %vm1335, %v1333
      %1351 = vst.msk [vmem:[#allocation2 + $0x78] sm:$0xff] %vm1335, %v1334
      // Predicated region
      $region53: #{forward.5} parent=47 // pred_check
        %p1352 = pneg %p329
      $region54: #{forward.5} parent=47 // pred_check_branch
        %1354 = sbr.rel (%p1352) target = $region56
      $region55: #{forward.5} parent=47 // pred_region
        %v1355 = vld [vmem:[#allocation2] sm:$0xff]
        %v1356 = vld [vmem:[#allocation2 + $0x8] sm:$0xff]
        %v1357 = vld [vmem:[#allocation2 + $0x10] sm:$0xff]
        %v1358 = vld [vmem:[#allocation2 + $0x18] sm:$0xff]
        %v1359 = vld [vmem:[#allocation2 + $0x20] sm:$0xff]
        %v1360 = vld [vmem:[#allocation2 + $0x28] sm:$0xff]
        %v1361 = vld [vmem:[#allocation2 + $0x30] sm:$0xff]
        %v1362 = vld [vmem:[#allocation2 + $0x38] sm:$0xff]
        %v1363 = vld [vmem:[#allocation2 + $0x40] sm:$0xff]
        %v1364 = vld [vmem:[#allocation2 + $0x48] sm:$0xff]
        %v1365 = vld [vmem:[#allocation2 + $0x50] sm:$0xff]
        %v1366 = vld [vmem:[#allocation2 + $0x58] sm:$0xff]
        %v1367 = vld [vmem:[#allocation2 + $0x60] sm:$0xff]
        %v1368 = vld [vmem:[#allocation2 + $0x68] sm:$0xff]
        %v1369 = vld [vmem:[#allocation2 + $0x70] sm:$0xff]
        %v1370 = vld [vmem:[#allocation2 + $0x78] sm:$0xff]
        %v1371 = vpack.c.bf16 %v1355, %v1355
        %v1372 = vpack.c.bf16 %v1356, %v1356
        %v1373 = vpack.c.bf16 %v1357, %v1357
        %v1374 = vpack.c.bf16 %v1358, %v1358
        %v1375 = vpack.c.bf16 %v1359, %v1359
        %v1376 = vpack.c.bf16 %v1360, %v1360
        %v1377 = vpack.c.bf16 %v1361, %v1361
        %v1378 = vpack.c.bf16 %v1362, %v1362
        %v1379 = vpack.c.bf16 %v1363, %v1363
        %v1380 = vpack.c.bf16 %v1364, %v1364
        %v1381 = vpack.c.bf16 %v1365, %v1365
        %v1382 = vpack.c.bf16 %v1366, %v1366
        %v1383 = vpack.c.bf16 %v1367, %v1367
        %v1384 = vpack.c.bf16 %v1368, %v1368
        %v1385 = vpack.c.bf16 %v1369, %v1369
        %v1386 = vpack.c.bf16 %v1370, %v1370
        %vm1387 = vcmask 125952
        %1388 = vst.msk [vmem:[%s327] sm:$0xf] %vm1387, %v1371
        %1389 = vst.msk [vmem:[%s327 + $0x4] sm:$0xf] %vm1387, %v1372
        %1390 = vst.msk [vmem:[%s327 + $0x8] sm:$0xf] %vm1387, %v1373
        %1391 = vst.msk [vmem:[%s327 + $0xc] sm:$0xf] %vm1387, %v1374
        %1392 = vst.msk [vmem:[%s327 + $0x10] sm:$0xf] %vm1387, %v1375
        %1393 = vst.msk [vmem:[%s327 + $0x14] sm:$0xf] %vm1387, %v1376
        %1394 = vst.msk [vmem:[%s327 + $0x18] sm:$0xf] %vm1387, %v1377
        %1395 = vst.msk [vmem:[%s327 + $0x1c] sm:$0xf] %vm1387, %v1378
        %1396 = vst.msk [vmem:[%s327 + $0x20] sm:$0xf] %vm1387, %v1379
        %1397 = vst.msk [vmem:[%s327 + $0x24] sm:$0xf] %vm1387, %v1380
        %1398 = vst.msk [vmem:[%s327 + $0x28] sm:$0xf] %vm1387, %v1381
        %1399 = vst.msk [vmem:[%s327 + $0x2c] sm:$0xf] %vm1387, %v1382
        %1400 = vst.msk [vmem:[%s327 + $0x30] sm:$0xf] %vm1387, %v1383
        %1401 = vst.msk [vmem:[%s327 + $0x34] sm:$0xf] %vm1387, %v1384
        %1402 = vst.msk [vmem:[%s327 + $0x38] sm:$0xf] %vm1387, %v1385
        %1403 = vst.msk [vmem:[%s327 + $0x3c] sm:$0xf] %vm1387, %v1386
      $region56: #{forward.5} parent=47 // pred_fallthru
        _
      %p1404 = scmp.lt.s32.totalorder %s23, 1
      %s1405 = scalar_select %p1404, %s23, 1
      %p1406 = scmp.lt.s32.totalorder %s24, 0
      %s1407 = scalar_select %p1406, %s24, 0
      %s1408 = smul.addr %s1405, 16
      %s1409 = sadd.s32 %s1407, %s1408
      %s1410 = smul.addr %s1409, 4
      %s1411 = scalar_lea.vmem %s7, %s1410
      // Predicated region
      $region57: #{forward.5} parent=47 // pred_check
        %p1412 = pneg %p213
      $region58: #{forward.5} parent=47 // pred_check_branch
        %1414 = sbr.rel (%p1412) target = $region60
      $region59: #{forward.5} parent=47 // pred_region
        _
      $region60: #{forward.5} parent=47 // pred_fallthru
        _
    $region48: #{forward.5} parent=5 // pred_fallthru
      _
    %p1415 = scmp.le.s32.totalorder 2, %s13
    // Predicated region
    $region61: #{forward.5} parent=5 // pred_check
      %p1416 = pneg %p1415
    $region62: #{forward.5} parent=5 // pred_check_branch
      %1418 = sbr.rel (%p1416) target = $region64
    $region63: #{forward.5} parent=5 // pred_region
      %s1419 = ssub.s32 %s13, 2
      // Predicated region
      $region65: #{forward.5} parent=63 // pred_check
        %p1420 = pneg %p219
      $region66: #{forward.5} parent=63 // pred_check_branch
        %1422 = sbr.rel (%p1420) target = $region68
      $region67: #{forward.5} parent=63 // pred_region
        %p1423 = scmp.lt.s32.totalorder %s26, 1
        %s1424 = scalar_select %p1423, %s26, 1
        %p1425 = scmp.lt.s32.totalorder %s27, 0
        %s1426 = scalar_select %p1425, %s27, 0
        %s1427 = smul.addr %s1424, 16
        %s1428 = sadd.s32 %s1426, %s1427
        %s1429 = smul.addr %s1428, 4
        %s1430 = scalar_lea.vmem %s7, %s1429
      $region68: #{forward.5} parent=63 // pred_fallthru
        _
    $region64: #{forward.5} parent=5 // pred_fallthru
      _
  $region6: #{forward.5} parent=0 // loop_footer
    %s17 = sadd.s32 1, %s13
  $region7: #{forward.5} parent=0 // loop_footer_branch
    %12 = sbr.rel target = $region3
  $region8: #{forward.5} parent=0 // loop_exit
    _

// kernel: forward.7
$region0: #{forward.7}
  #allocation0 [shape = 'u32[]', space=smem, size = 0x4, offset = 0x4, fixed_abs, tag = 'smem constant byte address 0x4 - core index']
  #allocation1 [shape = 'u32[72,128]{1,0:T(1,128)}', space=vmem, size = 0x9000, scoped, tag = 'internal scratch']
  %s0 = inlined_call_operand.vmem [shape: f32[2,32], index: 0, kind: input, shape index: {}]
  %s1 = inlined_call_operand.vmem [shape: bf16[32,256], index: 1, kind: input, shape index: {}]
  %s2 = inlined_call_operand.vmem [shape: f32[1,256], index: 2, kind: input, shape index: {}]
  %s3 = inlined_call_operand.vmem [shape: bf16[256,512], index: 3, kind: input, shape index: {}]
  %s4 = inlined_call_operand.vmem [shape: f32[1,512], index: 4, kind: input, shape index: {}]
  %s5 = inlined_call_operand.vmem [shape: bf16[512,1024], index: 5, kind: input, shape index: {}]
  %s6 = inlined_call_operand.vmem [shape: f32[1,1024], index: 6, kind: input, shape index: {}]
  %s7 = inlined_call_operand.vmem [shape: bf16[1024,48], index: 7, kind: input, shape index: {}]
  %s8 = inlined_call_operand.vmem [shape: f32[1,48], index: 8, kind: input, shape index: {}]
  %s9 = inlined_call_operand.vmem [shape: f32[4,32], index: 9, kind: input, shape index: {}]
  %s10 = inlined_call_operand.vmem [shape: f32[4,32], index: 10, kind: input, shape index: {}]
  %s11 = inlined_call_operand.vmem [shape: f32[3,32], index: 11, kind: input, shape index: {}]
  %s12 = inlined_call_operand.vmem [shape: f32[2,48], index: 12, kind: output, shape index: {0}]
  %s13 = inlined_call_operand.hbm [shape: f32[1,1], index: 13, kind: output, shape index: {1}]
  %14 = xla_tuple %s12, %s13
  %s15 = sld [smem:[#allocation0]]
  $region66: #{forward.7} parent=0
    _
  %s17 = ssub.s32 1, %s15
  %s18 = scalar_select 0, %s17, %s15
  $region1: #{forward.7} parent=0
    #allocation2 [shape = 'u8[512]{0}', space=vmem, size = 0x400, scoped, tag = 'output window, operand 1, single buffered']
    #allocation3 [shape = 's32[1]{0}', space=sflag, size = 0x4, scoped, tag = 'scoped memory for forward.7']
    %19 = vsyncpa [#allocation3], 0
    // Predicated region
    $region2: #{forward.7} parent=1 // pred_check
      _
    $region3: #{forward.7} parent=1 // pred_check_branch
      %21 = sbr.rel (0) target = $region5
    $region4: #{forward.7} parent=1 // pred_region
      _
    $region5: #{forward.7} parent=1 // pred_fallthru
      _
    // Predicated region
    $region6: #{forward.7} parent=1 // pred_check
      _
    $region7: #{forward.7} parent=1 // pred_check_branch
      %23 = sbr.rel (0) target = $region9
    $region8: #{forward.7} parent=1 // pred_region
      _
    $region9: #{forward.7} parent=1 // pred_fallthru
      _
    // Predicated region
    $region10: #{forward.7} parent=1 // pred_check
      _
    $region11: #{forward.7} parent=1 // pred_check_branch
      %25 = sbr.rel (0) target = $region13
    $region12: #{forward.7} parent=1 // pred_region
      _
    $region13: #{forward.7} parent=1 // pred_fallthru
      _
    // Predicated region
    $region14: #{forward.7} parent=1 // pred_check
      _
    $region15: #{forward.7} parent=1 // pred_check_branch
      %27 = sbr.rel (0) target = $region17
    $region16: #{forward.7} parent=1 // pred_region
      _
    $region17: #{forward.7} parent=1 // pred_fallthru
      _
    // Predicated region
    $region18: #{forward.7} parent=1 // pred_check
      _
    $region19: #{forward.7} parent=1 // pred_check_branch
      %29 = sbr.rel (0) target = $region21
    $region20: #{forward.7} parent=1 // pred_region
      _
    $region21: #{forward.7} parent=1 // pred_fallthru
      _
    // Predicated region
    $region22: #{forward.7} parent=1 // pred_check
      _
    $region23: #{forward.7} parent=1 // pred_check_branch
      %31 = sbr.rel (0) target = $region25
    $region24: #{forward.7} parent=1 // pred_region
      _
    $region25: #{forward.7} parent=1 // pred_fallthru
      _
    // Predicated region
    $region26: #{forward.7} parent=1 // pred_check
      _
    $region27: #{forward.7} parent=1 // pred_check_branch
      %33 = sbr.rel (0) target = $region29
    $region28: #{forward.7} parent=1 // pred_region
      _
    $region29: #{forward.7} parent=1 // pred_fallthru
      _
    // Predicated region
    $region30: #{forward.7} parent=1 // pred_check
      _
    $region31: #{forward.7} parent=1 // pred_check_branch
      %35 = sbr.rel (0) target = $region33
    $region32: #{forward.7} parent=1 // pred_region
      _
    $region33: #{forward.7} parent=1 // pred_fallthru
      _
    // Predicated region
    $region34: #{forward.7} parent=1 // pred_check
      _
    $region35: #{forward.7} parent=1 // pred_check_branch
      %37 = sbr.rel (0) target = $region37
    $region36: #{forward.7} parent=1 // pred_region
      _
    $region37: #{forward.7} parent=1 // pred_fallthru
      _
    // Predicated region
    $region38: #{forward.7} parent=1 // pred_check
      _
    $region39: #{forward.7} parent=1 // pred_check_branch
      %39 = sbr.rel (0) target = $region41
    $region40: #{forward.7} parent=1 // pred_region
      _
    $region41: #{forward.7} parent=1 // pred_fallthru
      _
    // Predicated region
    $region42: #{forward.7} parent=1 // pred_check
      _
    $region43: #{forward.7} parent=1 // pred_check_branch
      %41 = sbr.rel (0) target = $region45
    $region44: #{forward.7} parent=1 // pred_region
      _
    $region45: #{forward.7} parent=1 // pred_fallthru
      _
    // Predicated region
    $region46: #{forward.7} parent=1 // pred_check
      _
    $region47: #{forward.7} parent=1 // pred_check_branch
      %43 = sbr.rel (0) target = $region49
    $region48: #{forward.7} parent=1 // pred_region
      _
    $region49: #{forward.7} parent=1 // pred_fallthru
      _
    %v45 = vld [vmem:[%s0] sm:$0x3]
    %v46 = vround.ne.pseudo %v45
    %v47 = vpack.c.bf16 %v46, %v46
    %v48 = vld [vmem:[%s1] sm:$0xff]
    %v49 = vld [vmem:[%s1 + $0x8] sm:$0xff]
    %v50 = vld [vmem:[%s1 + $0x10] sm:$0xff]
    %v51 = vld [vmem:[%s1 + $0x18] sm:$0xff]
    %v52 = vld [vmem:[%s2] sm:$0x3]
    %v54 = vperm.slane %v52, 0
    %v55 = vperm.slane %v52, 1
    %v62 = vunpack.c.l.b16 %v48
    %v63 = vunpack.c.h.b16 %v48
    %v64 = vunpack.c.l.b16 %v49
    %v65 = vunpack.c.h.b16 %v49
    %v66 = vunpack.c.l.b16 %v50
    %v67 = vunpack.c.h.b16 %v50
    %v68 = vunpack.c.l.b16 %v51
    %v69 = vunpack.c.h.b16 %v51
    %v70 = vpack.c.b16 %v64, %v62
    %v71 = vpack.c.b16 %v65, %v63
    %v72 = vpack.c.b16 %v68, %v66
    %v73 = vpack.c.b16 %v69, %v67
    %vm78 = vcmask 261120
    %v80 = vsel %vm78, %v47, 0
    %82 = vmatpush.bf16.msra.mxu0 0
    %83 = vmatpush.bf16.msra.mxu0 0
    %84 = vmatpush.bf16.msra.mxu0 0
    %85 = vmatpush.bf16.msra.mxu0 0
    %86 = vmatpush.bf16.msra.mxu0 0
    %87 = vmatpush.bf16.msra.mxu0 0
    %88 = vmatpush.bf16.msra.mxu0 %v72
    %89 = vmatpush.bf16.msra.mxu0 %v70
    %90 = vmatmul.bf16.gmra.mxu0 %v80
    %v91 = vpop.f32.mrf.mxu0
    %v92 = vadd.f32 %v54, %v91
    %v93 = vpop.f32.mrf.mxu0
    %94 = vdwg.mxu0
    %95 = vmatpush.bf16.msra.mxu0 0
    %96 = vmatpush.bf16.msra.mxu0 0
    %97 = vmatpush.bf16.msra.mxu0 0
    %98 = vmatpush.bf16.msra.mxu0 0
    %99 = vmatpush.bf16.msra.mxu0 0
    %100 = vmatpush.bf16.msra.mxu0 0
    %101 = vmatpush.bf16.msra.mxu0 %v73
    %102 = vmatpush.bf16.msra.mxu0 %v71
    %103 = vmatmul.bf16.gmra.mxu0 %v80
    %v104 = vpop.f32.mrf.mxu0
    %v105 = vadd.f32 %v55, %v104
    %v106 = vpop.f32.mrf.mxu0
    %107 = vdwg.mxu0
    %v108 = vmax.f32 %v92, 0.0
    %v109 = vmax.f32 %v105, 0.0
    %v110 = vpack.c.bf16 %v108, %v108
    %v111 = vpack.c.bf16 %v109, %v109
    %v112 = vld [vmem:[%s3] sm:$0xff]
    %v113 = vld [vmem:[%s3 + $0x8] sm:$0xff]
    %v114 = vld [vmem:[%s3 + $0x10] sm:$0xff]
    %v115 = vld [vmem:[%s3 + $0x18] sm:$0xff]
    %v116 = vld [vmem:[%s3 + $0x20] sm:$0xff]
    %v117 = vld [vmem:[%s3 + $0x28] sm:$0xff]
    %v118 = vld [vmem:[%s3 + $0x30] sm:$0xff]
    %v119 = vld [vmem:[%s3 + $0x38] sm:$0xff]
    %v120 = vld [vmem:[%s3 + $0x40] sm:$0xff]
    %v121 = vld [vmem:[%s3 + $0x48] sm:$0xff]
    %v122 = vld [vmem:[%s3 + $0x50] sm:$0xff]
    %v123 = vld [vmem:[%s3 + $0x58] sm:$0xff]
    %v124 = vld [vmem:[%s3 + $0x60] sm:$0xff]
    %v125 = vld [vmem:[%s3 + $0x68] sm:$0xff]
    %v126 = vld [vmem:[%s3 + $0x70] sm:$0xff]
    %v127 = vld [vmem:[%s3 + $0x78] sm:$0xff]
    %v128 = vld [vmem:[%s3 + $0x80] sm:$0xff]
    %v129 = vld [vmem:[%s3 + $0x88] sm:$0xff]
    %v130 = vld [vmem:[%s3 + $0x90] sm:$0xff]
    %v131 = vld [vmem:[%s3 + $0x98] sm:$0xff]
    %v132 = vld [vmem:[%s3 + $0xa0] sm:$0xff]
    %v133 = vld [vmem:[%s3 + $0xa8] sm:$0xff]
    %v134 = vld [vmem:[%s3 + $0xb0] sm:$0xff]
    %v135 = vld [vmem:[%s3 + $0xb8] sm:$0xff]
    %v136 = vld [vmem:[%s3 + $0xc0] sm:$0xff]
    %v137 = vld [vmem:[%s3 + $0xc8] sm:$0xff]
    %v138 = vld [vmem:[%s3 + $0xd0] sm:$0xff]
    %v139 = vld [vmem:[%s3 + $0xd8] sm:$0xff]
    %v140 = vld [vmem:[%s3 + $0xe0] sm:$0xff]
    %v141 = vld [vmem:[%s3 + $0xe8] sm:$0xff]
    %v142 = vld [vmem:[%s3 + $0xf0] sm:$0xff]
    %v143 = vld [vmem:[%s3 + $0xf8] sm:$0xff]
    %v144 = vld [vmem:[%s3 + $0x100] sm:$0xff]
    %v145 = vld [vmem:[%s3 + $0x108] sm:$0xff]
    %v146 = vld [vmem:[%s3 + $0x110] sm:$0xff]
    %v147 = vld [vmem:[%s3 + $0x118] sm:$0xff]
    %v148 = vld [vmem:[%s3 + $0x120] sm:$0xff]
    %v149 = vld [vmem:[%s3 + $0x128] sm:$0xff]
    %v150 = vld [vmem:[%s3 + $0x130] sm:$0xff]
    %v151 = vld [vmem:[%s3 + $0x138] sm:$0xff]
    %v152 = vld [vmem:[%s3 + $0x140] sm:$0xff]
    %v153 = vld [vmem:[%s3 + $0x148] sm:$0xff]
    %v154 = vld [vmem:[%s3 + $0x150] sm:$0xff]
    %v155 = vld [vmem:[%s3 + $0x158] sm:$0xff]
    %v156 = vld [vmem:[%s3 + $0x160] sm:$0xff]
    %v157 = vld [vmem:[%s3 + $0x168] sm:$0xff]
    %v158 = vld [vmem:[%s3 + $0x170] sm:$0xff]
    %v159 = vld [vmem:[%s3 + $0x178] sm:$0xff]
    %v160 = vld [vmem:[%s3 + $0x180] sm:$0xff]
    %v161 = vld [vmem:[%s3 + $0x188] sm:$0xff]
    %v162 = vld [vmem:[%s3 + $0x190] sm:$0xff]
    %v163 = vld [vmem:[%s3 + $0x198] sm:$0xff]
    %v164 = vld [vmem:[%s3 + $0x1a0] sm:$0xff]
    %v165 = vld [vmem:[%s3 + $0x1a8] sm:$0xff]
    %v166 = vld [vmem:[%s3 + $0x1b0] sm:$0xff]
    %v167 = vld [vmem:[%s3 + $0x1b8] sm:$0xff]
    %v168 = vld [vmem:[%s3 + $0x1c0] sm:$0xff]
    %v169 = vld [vmem:[%s3 + $0x1c8] sm:$0xff]
    %v170 = vld [vmem:[%s3 + $0x1d0] sm:$0xff]
    %v171 = vld [vmem:[%s3 + $0x1d8] sm:$0xff]
    %v172 = vld [vmem:[%s3 + $0x1e0] sm:$0xff]
    %v173 = vld [vmem:[%s3 + $0x1e8] sm:$0xff]
    %v174 = vld [vmem:[%s3 + $0x1f0] sm:$0xff]
    %v175 = vld [vmem:[%s3 + $0x1f8] sm:$0xff]
    %v176 = vld [vmem:[%s4] sm:$0xf]
    %v178 = vperm.slane %v176, 0
    %v179 = vperm.slane %v176, 1
    %v180 = vperm.slane %v176, 2
    %v181 = vperm.slane %v176, 3
    %v250 = vunpack.c.l.b16 %v112
    %v251 = vunpack.c.h.b16 %v112
    %v252 = vunpack.c.l.b16 %v113
    %v253 = vunpack.c.h.b16 %v113
    %v254 = vunpack.c.l.b16 %v114
    %v255 = vunpack.c.h.b16 %v114
    %v256 = vunpack.c.l.b16 %v115
    %v257 = vunpack.c.h.b16 %v115
    %v258 = vunpack.c.l.b16 %v116
    %v259 = vunpack.c.h.b16 %v116
    %v260 = vunpack.c.l.b16 %v117
    %v261 = vunpack.c.h.b16 %v117
    %v262 = vunpack.c.l.b16 %v118
    %v263 = vunpack.c.h.b16 %v118
    %v264 = vunpack.c.l.b16 %v119
    %v265 = vunpack.c.h.b16 %v119
    %v266 = vunpack.c.l.b16 %v120
    %v267 = vunpack.c.h.b16 %v120
    %v268 = vunpack.c.l.b16 %v121
    %v269 = vunpack.c.h.b16 %v121
    %v270 = vunpack.c.l.b16 %v122
    %v271 = vunpack.c.h.b16 %v122
    %v272 = vunpack.c.l.b16 %v123
    %v273 = vunpack.c.h.b16 %v123
    %v274 = vunpack.c.l.b16 %v124
    %v275 = vunpack.c.h.b16 %v124
    %v276 = vunpack.c.l.b16 %v125
    %v277 = vunpack.c.h.b16 %v125
    %v278 = vunpack.c.l.b16 %v126
    %v279 = vunpack.c.h.b16 %v126
    %v280 = vunpack.c.l.b16 %v127
    %v281 = vunpack.c.h.b16 %v127
    %v282 = vunpack.c.l.b16 %v128
    %v283 = vunpack.c.h.b16 %v128
    %v284 = vunpack.c.l.b16 %v129
    %v285 = vunpack.c.h.b16 %v129
    %v286 = vunpack.c.l.b16 %v130
    %v287 = vunpack.c.h.b16 %v130
    %v288 = vunpack.c.l.b16 %v131
    %v289 = vunpack.c.h.b16 %v131
    %v290 = vunpack.c.l.b16 %v132
    %v291 = vunpack.c.h.b16 %v132
    %v292 = vunpack.c.l.b16 %v133
    %v293 = vunpack.c.h.b16 %v133
    %v294 = vunpack.c.l.b16 %v134
    %v295 = vunpack.c.h.b16 %v134
    %v296 = vunpack.c.l.b16 %v135
    %v297 = vunpack.c.h.b16 %v135
    %v298 = vunpack.c.l.b16 %v136
    %v299 = vunpack.c.h.b16 %v136
    %v300 = vunpack.c.l.b16 %v137
    %v301 = vunpack.c.h.b16 %v137
    %v302 = vunpack.c.l.b16 %v138
    %v303 = vunpack.c.h.b16 %v138
    %v304 = vunpack.c.l.b16 %v139
    %v305 = vunpack.c.h.b16 %v139
    %v306 = vunpack.c.l.b16 %v140
    %v307 = vunpack.c.h.b16 %v140
    %v308 = vunpack.c.l.b16 %v141
    %v309 = vunpack.c.h.b16 %v141
    %v310 = vunpack.c.l.b16 %v142
    %v311 = vunpack.c.h.b16 %v142
    %v312 = vunpack.c.l.b16 %v143
    %v313 = vunpack.c.h.b16 %v143
    %v314 = vunpack.c.l.b16 %v144
    %v315 = vunpack.c.h.b16 %v144
    %v316 = vunpack.c.l.b16 %v145
    %v317 = vunpack.c.h.b16 %v145
    %v318 = vunpack.c.l.b16 %v146
    %v319 = vunpack.c.h.b16 %v146
    %v320 = vunpack.c.l.b16 %v147
    %v321 = vunpack.c.h.b16 %v147
    %v322 = vunpack.c.l.b16 %v148
    %v323 = vunpack.c.h.b16 %v148
    %v324 = vunpack.c.l.b16 %v149
    %v325 = vunpack.c.h.b16 %v149
    %v326 = vunpack.c.l.b16 %v150
    %v327 = vunpack.c.h.b16 %v150
    %v328 = vunpack.c.l.b16 %v151
    %v329 = vunpack.c.h.b16 %v151
    %v330 = vunpack.c.l.b16 %v152
    %v331 = vunpack.c.h.b16 %v152
    %v332 = vunpack.c.l.b16 %v153
    %v333 = vunpack.c.h.b16 %v153
    %v334 = vunpack.c.l.b16 %v154
    %v335 = vunpack.c.h.b16 %v154
    %v336 = vunpack.c.l.b16 %v155
    %v337 = vunpack.c.h.b16 %v155
    %v338 = vunpack.c.l.b16 %v156
    %v339 = vunpack.c.h.b16 %v156
    %v340 = vunpack.c.l.b16 %v157
    %v341 = vunpack.c.h.b16 %v157
    %v342 = vunpack.c.l.b16 %v158
    %v343 = vunpack.c.h.b16 %v158
    %v344 = vunpack.c.l.b16 %v159
    %v345 = vunpack.c.h.b16 %v159
    %v346 = vunpack.c.l.b16 %v160
    %v347 = vunpack.c.h.b16 %v160
    %v348 = vunpack.c.l.b16 %v161
    %v349 = vunpack.c.h.b16 %v161
    %v350 = vunpack.c.l.b16 %v162
    %v351 = vunpack.c.h.b16 %v162
    %v352 = vunpack.c.l.b16 %v163
    %v353 = vunpack.c.h.b16 %v163
    %v354 = vunpack.c.l.b16 %v164
    %v355 = vunpack.c.h.b16 %v164
    %v356 = vunpack.c.l.b16 %v165
    %v357 = vunpack.c.h.b16 %v165
    %v358 = vunpack.c.l.b16 %v166
    %v359 = vunpack.c.h.b16 %v166
    %v360 = vunpack.c.l.b16 %v167
    %v361 = vunpack.c.h.b16 %v167
    %v362 = vunpack.c.l.b16 %v168
    %v363 = vunpack.c.h.b16 %v168
    %v364 = vunpack.c.l.b16 %v169
    %v365 = vunpack.c.h.b16 %v169
    %v366 = vunpack.c.l.b16 %v170
    %v367 = vunpack.c.h.b16 %v170
    %v368 = vunpack.c.l.b16 %v171
    %v369 = vunpack.c.h.b16 %v171
    %v370 = vunpack.c.l.b16 %v172
    %v371 = vunpack.c.h.b16 %v172
    %v372 = vunpack.c.l.b16 %v173
    %v373 = vunpack.c.h.b16 %v173
    %v374 = vunpack.c.l.b16 %v174
    %v375 = vunpack.c.h.b16 %v174
    %v376 = vunpack.c.l.b16 %v175
    %v377 = vunpack.c.h.b16 %v175
    %v378 = vpack.c.b16 %v254, %v250
    %v379 = vpack.c.b16 %v255, %v251
    %v380 = vpack.c.b16 %v256, %v252
    %v381 = vpack.c.b16 %v257, %v253
    %v382 = vpack.c.b16 %v262, %v258
    %v383 = vpack.c.b16 %v263, %v259
    %v384 = vpack.c.b16 %v264, %v260
    %v385 = vpack.c.b16 %v265, %v261
    %v386 = vpack.c.b16 %v270, %v266
    %v387 = vpack.c.b16 %v271, %v267
    %v388 = vpack.c.b16 %v272, %v268
    %v389 = vpack.c.b16 %v273, %v269
    %v390 = vpack.c.b16 %v278, %v274
    %v391 = vpack.c.b16 %v279, %v275
    %v392 = vpack.c.b16 %v280, %v276
    %v393 = vpack.c.b16 %v281, %v277
    %v394 = vpack.c.b16 %v286, %v282
    %v395 = vpack.c.b16 %v287, %v283
    %v396 = vpack.c.b16 %v288, %v284
    %v397 = vpack.c.b16 %v289, %v285
    %v398 = vpack.c.b16 %v294, %v290
    %v399 = vpack.c.b16 %v295, %v291
    %v400 = vpack.c.b16 %v296, %v292
    %v401 = vpack.c.b16 %v297, %v293
    %v402 = vpack.c.b16 %v302, %v298
    %v403 = vpack.c.b16 %v303, %v299
    %v404 = vpack.c.b16 %v304, %v300
    %v405 = vpack.c.b16 %v305, %v301
    %v406 = vpack.c.b16 %v310, %v306
    %v407 = vpack.c.b16 %v311, %v307
    %v408 = vpack.c.b16 %v312, %v308
    %v409 = vpack.c.b16 %v313, %v309
    %v410 = vpack.c.b16 %v318, %v314
    %v411 = vpack.c.b16 %v319, %v315
    %v412 = vpack.c.b16 %v320, %v316
    %v413 = vpack.c.b16 %v321, %v317
    %v414 = vpack.c.b16 %v326, %v322
    %v415 = vpack.c.b16 %v327, %v323
    %v416 = vpack.c.b16 %v328, %v324
    %v417 = vpack.c.b16 %v329, %v325
    %v418 = vpack.c.b16 %v334, %v330
    %v419 = vpack.c.b16 %v335, %v331
    %v420 = vpack.c.b16 %v336, %v332
    %v421 = vpack.c.b16 %v337, %v333
    %v422 = vpack.c.b16 %v342, %v338
    %v423 = vpack.c.b16 %v343, %v339
    %v424 = vpack.c.b16 %v344, %v340
    %v425 = vpack.c.b16 %v345, %v341
    %v426 = vpack.c.b16 %v350, %v346
    %v427 = vpack.c.b16 %v351, %v347
    %v428 = vpack.c.b16 %v352, %v348
    %v429 = vpack.c.b16 %v353, %v349
    %v430 = vpack.c.b16 %v358, %v354
    %v431 = vpack.c.b16 %v359, %v355
    %v432 = vpack.c.b16 %v360, %v356
    %v433 = vpack.c.b16 %v361, %v357
    %v434 = vpack.c.b16 %v366, %v362
    %v435 = vpack.c.b16 %v367, %v363
    %v436 = vpack.c.b16 %v368, %v364
    %v437 = vpack.c.b16 %v369, %v365
    %v438 = vpack.c.b16 %v374, %v370
    %v439 = vpack.c.b16 %v375, %v371
    %v440 = vpack.c.b16 %v376, %v372
    %v441 = vpack.c.b16 %v377, %v373
    %506 = vmatpush.bf16.msra.mxu0 %v406
    %507 = vmatpush.bf16.msra.mxu0 %v402
    %508 = vmatpush.bf16.msra.mxu0 %v398
    %509 = vmatpush.bf16.msra.mxu0 %v394
    %510 = vmatpush.bf16.msra.mxu0 %v390
    %511 = vmatpush.bf16.msra.mxu0 %v386
    %512 = vmatpush.bf16.msra.mxu0 %v382
    %513 = vmatpush.bf16.msra.mxu0 %v378
    %514 = vmatmul.bf16.gmra.mxu0 %v110
    %v515 = vpop.f32.mrf.mxu0
    %v516 = vadd.f32 %v178, %v515
    %v517 = vpop.f32.mrf.mxu0
    %518 = vdwg.mxu0
    %519 = vmatpush.bf16.msra.mxu0 %v438
    %520 = vmatpush.bf16.msra.mxu0 %v434
    %521 = vmatpush.bf16.msra.mxu0 %v430
    %522 = vmatpush.bf16.msra.mxu0 %v426
    %523 = vmatpush.bf16.msra.mxu0 %v422
    %524 = vmatpush.bf16.msra.mxu0 %v418
    %525 = vmatpush.bf16.msra.mxu0 %v414
    %526 = vmatpush.bf16.msra.mxu0 %v410
    %527 = vmatmul.bf16.gmra.mxu0 %v111
    %v528 = vpop.f32.mrf.mxu0
    %v529 = vadd.f32 %v516, %v528
    %v530 = vpop.f32.mrf.mxu0
    %531 = vdwg.mxu0
    %532 = vmatpush.bf16.msra.mxu0 %v407
    %533 = vmatpush.bf16.msra.mxu0 %v403
    %534 = vmatpush.bf16.msra.mxu0 %v399
    %535 = vmatpush.bf16.msra.mxu0 %v395
    %536 = vmatpush.bf16.msra.mxu0 %v391
    %537 = vmatpush.bf16.msra.mxu0 %v387
    %538 = vmatpush.bf16.msra.mxu0 %v383
    %539 = vmatpush.bf16.msra.mxu0 %v379
    %540 = vmatmul.bf16.gmra.mxu0 %v110
    %v541 = vpop.f32.mrf.mxu0
    %v542 = vadd.f32 %v179, %v541
    %v543 = vpop.f32.mrf.mxu0
    %544 = vdwg.mxu0
    %545 = vmatpush.bf16.msra.mxu0 %v439
    %546 = vmatpush.bf16.msra.mxu0 %v435
    %547 = vmatpush.bf16.msra.mxu0 %v431
    %548 = vmatpush.bf16.msra.mxu0 %v427
    %549 = vmatpush.bf16.msra.mxu0 %v423
    %550 = vmatpush.bf16.msra.mxu0 %v419
    %551 = vmatpush.bf16.msra.mxu0 %v415
    %552 = vmatpush.bf16.msra.mxu0 %v411
    %553 = vmatmul.bf16.gmra.mxu0 %v111
    %v554 = vpop.f32.mrf.mxu0
    %v555 = vadd.f32 %v542, %v554
    %v556 = vpop.f32.mrf.mxu0
    %557 = vdwg.mxu0
    %558 = vmatpush.bf16.msra.mxu0 %v408
    %559 = vmatpush.bf16.msra.mxu0 %v404
    %560 = vmatpush.bf16.msra.mxu0 %v400
    %561 = vmatpush.bf16.msra.mxu0 %v396
    %562 = vmatpush.bf16.msra.mxu0 %v392
    %563 = vmatpush.bf16.msra.mxu0 %v388
    %564 = vmatpush.bf16.msra.mxu0 %v384
    %565 = vmatpush.bf16.msra.mxu0 %v380
    %566 = vmatmul.bf16.gmra.mxu0 %v110
    %v567 = vpop.f32.mrf.mxu0
    %v568 = vadd.f32 %v180, %v567
    %v569 = vpop.f32.mrf.mxu0
    %570 = vdwg.mxu0
    %571 = vmatpush.bf16.msra.mxu0 %v440
    %572 = vmatpush.bf16.msra.mxu0 %v436
    %573 = vmatpush.bf16.msra.mxu0 %v432
    %574 = vmatpush.bf16.msra.mxu0 %v428
    %575 = vmatpush.bf16.msra.mxu0 %v424
    %576 = vmatpush.bf16.msra.mxu0 %v420
    %577 = vmatpush.bf16.msra.mxu0 %v416
    %578 = vmatpush.bf16.msra.mxu0 %v412
    %579 = vmatmul.bf16.gmra.mxu0 %v111
    %v580 = vpop.f32.mrf.mxu0
    %v581 = vadd.f32 %v568, %v580
    %v582 = vpop.f32.mrf.mxu0
    %583 = vdwg.mxu0
    %584 = vmatpush.bf16.msra.mxu0 %v409
    %585 = vmatpush.bf16.msra.mxu0 %v405
    %586 = vmatpush.bf16.msra.mxu0 %v401
    %587 = vmatpush.bf16.msra.mxu0 %v397
    %588 = vmatpush.bf16.msra.mxu0 %v393
    %589 = vmatpush.bf16.msra.mxu0 %v389
    %590 = vmatpush.bf16.msra.mxu0 %v385
    %591 = vmatpush.bf16.msra.mxu0 %v381
    %592 = vmatmul.bf16.gmra.mxu0 %v110
    %v593 = vpop.f32.mrf.mxu0
    %v594 = vadd.f32 %v181, %v593
    %v595 = vpop.f32.mrf.mxu0
    %596 = vdwg.mxu0
    %597 = vmatpush.bf16.msra.mxu0 %v441
    %598 = vmatpush.bf16.msra.mxu0 %v437
    %599 = vmatpush.bf16.msra.mxu0 %v433
    %600 = vmatpush.bf16.msra.mxu0 %v429
    %601 = vmatpush.bf16.msra.mxu0 %v425
    %602 = vmatpush.bf16.msra.mxu0 %v421
    %603 = vmatpush.bf16.msra.mxu0 %v417
    %604 = vmatpush.bf16.msra.mxu0 %v413
    %605 = vmatmul.bf16.gmra.mxu0 %v111
    %v606 = vpop.f32.mrf.mxu0
    %v607 = vadd.f32 %v594, %v606
    %v608 = vpop.f32.mrf.mxu0
    %609 = vdwg.mxu0
    %v610 = vmax.f32 %v529, 0.0
    %v611 = vmax.f32 %v555, 0.0
    %v612 = vmax.f32 %v581, 0.0
    %v613 = vmax.f32 %v607, 0.0
    %v614 = vpack.c.bf16 %v610, %v610
    %v615 = vpack.c.bf16 %v611, %v611
    %v616 = vpack.c.bf16 %v612, %v612
    %v617 = vpack.c.bf16 %v613, %v613
    %v618 = vld [vmem:[%s5] sm:$0xff]
    %v619 = vld [vmem:[%s5 + $0x8] sm:$0xff]
    %v620 = vld [vmem:[%s5 + $0x10] sm:$0xff]
    %v621 = vld [vmem:[%s5 + $0x18] sm:$0xff]
    %v622 = vld [vmem:[%s5 + $0x20] sm:$0xff]
    %v623 = vld [vmem:[%s5 + $0x28] sm:$0xff]
    %v624 = vld [vmem:[%s5 + $0x30] sm:$0xff]
    %v625 = vld [vmem:[%s5 + $0x38] sm:$0xff]
    %v626 = vld [vmem:[%s5 + $0x40] sm:$0xff]
    %v627 = vld [vmem:[%s5 + $0x48] sm:$0xff]
    %v628 = vld [vmem:[%s5 + $0x50] sm:$0xff]
    %v629 = vld [vmem:[%s5 + $0x58] sm:$0xff]
    %v630 = vld [vmem:[%s5 + $0x60] sm:$0xff]
    %v631 = vld [vmem:[%s5 + $0x68] sm:$0xff]
    %v632 = vld [vmem:[%s5 + $0x70] sm:$0xff]
    %v633 = vld [vmem:[%s5 + $0x78] sm:$0xff]
    %v634 = vld [vmem:[%s5 + $0x80] sm:$0xff]
    %v635 = vld [vmem:[%s5 + $0x88] sm:$0xff]
    %v636 = vld [vmem:[%s5 + $0x90] sm:$0xff]
    %v637 = vld [vmem:[%s5 + $0x98] sm:$0xff]
    %v638 = vld [vmem:[%s5 + $0xa0] sm:$0xff]
    %v639 = vld [vmem:[%s5 + $0xa8] sm:$0xff]
    %v640 = vld [vmem:[%s5 + $0xb0] sm:$0xff]
    %v641 = vld [vmem:[%s5 + $0xb8] sm:$0xff]
    %v642 = vld [vmem:[%s5 + $0xc0] sm:$0xff]
    %v643 = vld [vmem:[%s5 + $0xc8] sm:$0xff]
    %v644 = vld [vmem:[%s5 + $0xd0] sm:$0xff]
    %v645 = vld [vmem:[%s5 + $0xd8] sm:$0xff]
    %v646 = vld [vmem:[%s5 + $0xe0] sm:$0xff]
    %v647 = vld [vmem:[%s5 + $0xe8] sm:$0xff]
    %v648 = vld [vmem:[%s5 + $0xf0] sm:$0xff]
    %v649 = vld [vmem:[%s5 + $0xf8] sm:$0xff]
    %v650 = vld [vmem:[%s5 + $0x100] sm:$0xff]
    %v651 = vld [vmem:[%s5 + $0x108] sm:$0xff]
    %v652 = vld [vmem:[%s5 + $0x110] sm:$0xff]
    %v653 = vld [vmem:[%s5 + $0x118] sm:$0xff]
    %v654 = vld [vmem:[%s5 + $0x120] sm:$0xff]
    %v655 = vld [vmem:[%s5 + $0x128] sm:$0xff]
    %v656 = vld [vmem:[%s5 + $0x130] sm:$0xff]
    %v657 = vld [vmem:[%s5 + $0x138] sm:$0xff]
    %v658 = vld [vmem:[%s5 + $0x140] sm:$0xff]
    %v659 = vld [vmem:[%s5 + $0x148] sm:$0xff]
    %v660 = vld [vmem:[%s5 + $0x150] sm:$0xff]
    %v661 = vld [vmem:[%s5 + $0x158] sm:$0xff]
    %v662 = vld [vmem:[%s5 + $0x160] sm:$0xff]
    %v663 = vld [vmem:[%s5 + $0x168] sm:$0xff]
    %v664 = vld [vmem:[%s5 + $0x170] sm:$0xff]
    %v665 = vld [vmem:[%s5 + $0x178] sm:$0xff]
    %v666 = vld [vmem:[%s5 + $0x180] sm:$0xff]
    %v667 = vld [vmem:[%s5 + $0x188] sm:$0xff]
    %v668 = vld [vmem:[%s5 + $0x190] sm:$0xff]
    %v669 = vld [vmem:[%s5 + $0x198] sm:$0xff]
    %v670 = vld [vmem:[%s5 + $0x1a0] sm:$0xff]
    %v671 = vld [vmem:[%s5 + $0x1a8] sm:$0xff]
    %v672 = vld [vmem:[%s5 + $0x1b0] sm:$0xff]
    %v673 = vld [vmem:[%s5 + $0x1b8] sm:$0xff]
    %v674 = vld [vmem:[%s5 + $0x1c0] sm:$0xff]
    %v675 = vld [vmem:[%s5 + $0x1c8] sm:$0xff]
    %v676 = vld [vmem:[%s5 + $0x1d0] sm:$0xff]
    %v677 = vld [vmem:[%s5 + $0x1d8] sm:$0xff]
    %v678 = vld [vmem:[%s5 + $0x1e0] sm:$0xff]
    %v679 = vld [vmem:[%s5 + $0x1e8] sm:$0xff]
    %v680 = vld [vmem:[%s5 + $0x1f0] sm:$0xff]
    %v681 = vld [vmem:[%s5 + $0x1f8] sm:$0xff]
    %v682 = vld [vmem:[%s5 + $0x200] sm:$0xff]
    %v683 = vld [vmem:[%s5 + $0x208] sm:$0xff]
    %v684 = vld [vmem:[%s5 + $0x210] sm:$0xff]
    %v685 = vld [vmem:[%s5 + $0x218] sm:$0xff]
    %v686 = vld [vmem:[%s5 + $0x220] sm:$0xff]
    %v687 = vld [vmem:[%s5 + $0x228] sm:$0xff]
    %v688 = vld [vmem:[%s5 + $0x230] sm:$0xff]
    %v689 = vld [vmem:[%s5 + $0x238] sm:$0xff]
    %v690 = vld [vmem:[%s5 + $0x240] sm:$0xff]
    %v691 = vld [vmem:[%s5 + $0x248] sm:$0xff]
    %v692 = vld [vmem:[%s5 + $0x250] sm:$0xff]
    %v693 = vld [vmem:[%s5 + $0x258] sm:$0xff]
    %v694 = vld [vmem:[%s5 + $0x260] sm:$0xff]
    %v695 = vld [vmem:[%s5 + $0x268] sm:$0xff]
    %v696 = vld [vmem:[%s5 + $0x270] sm:$0xff]
    %v697 = vld [vmem:[%s5 + $0x278] sm:$0xff]
    %v698 = vld [vmem:[%s5 + $0x280] sm:$0xff]
    %v699 = vld [vmem:[%s5 + $0x288] sm:$0xff]
    %v700 = vld [vmem:[%s5 + $0x290] sm:$0xff]
    %v701 = vld [vmem:[%s5 + $0x298] sm:$0xff]
    %v702 = vld [vmem:[%s5 + $0x2a0] sm:$0xff]
    %v703 = vld [vmem:[%s5 + $0x2a8] sm:$0xff]
    %v704 = vld [vmem:[%s5 + $0x2b0] sm:$0xff]
    %v705 = vld [vmem:[%s5 + $0x2b8] sm:$0xff]
    %v706 = vld [vmem:[%s5 + $0x2c0] sm:$0xff]
    %v707 = vld [vmem:[%s5 + $0x2c8] sm:$0xff]
    %v708 = vld [vmem:[%s5 + $0x2d0] sm:$0xff]
    %v709 = vld [vmem:[%s5 + $0x2d8] sm:$0xff]
    %v710 = vld [vmem:[%s5 + $0x2e0] sm:$0xff]
    %v711 = vld [vmem:[%s5 + $0x2e8] sm:$0xff]
    %v712 = vld [vmem:[%s5 + $0x2f0] sm:$0xff]
    %v713 = vld [vmem:[%s5 + $0x2f8] sm:$0xff]
    %v714 = vld [vmem:[%s5 + $0x300] sm:$0xff]
    %v715 = vld [vmem:[%s5 + $0x308] sm:$0xff]
    %v716 = vld [vmem:[%s5 + $0x310] sm:$0xff]
    %v717 = vld [vmem:[%s5 + $0x318] sm:$0xff]
    %v718 = vld [vmem:[%s5 + $0x320] sm:$0xff]
    %v719 = vld [vmem:[%s5 + $0x328] sm:$0xff]
    %v720 = vld [vmem:[%s5 + $0x330] sm:$0xff]
    %v721 = vld [vmem:[%s5 + $0x338] sm:$0xff]
    %v722 = vld [vmem:[%s5 + $0x340] sm:$0xff]
    %v723 = vld [vmem:[%s5 + $0x348] sm:$0xff]
    %v724 = vld [vmem:[%s5 + $0x350] sm:$0xff]
    %v725 = vld [vmem:[%s5 + $0x358] sm:$0xff]
    %v726 = vld [vmem:[%s5 + $0x360] sm:$0xff]
    %v727 = vld [vmem:[%s5 + $0x368] sm:$0xff]
    %v728 = vld [vmem:[%s5 + $0x370] sm:$0xff]
    %v729 = vld [vmem:[%s5 + $0x378] sm:$0xff]
    %v730 = vld [vmem:[%s5 + $0x380] sm:$0xff]
    %v731 = vld [vmem:[%s5 + $0x388] sm:$0xff]
    %v732 = vld [vmem:[%s5 + $0x390] sm:$0xff]
    %v733 = vld [vmem:[%s5 + $0x398] sm:$0xff]
    %v734 = vld [vmem:[%s5 + $0x3a0] sm:$0xff]
    %v735 = vld [vmem:[%s5 + $0x3a8] sm:$0xff]
    %v736 = vld [vmem:[%s5 + $0x3b0] sm:$0xff]
    %v737 = vld [vmem:[%s5 + $0x3b8] sm:$0xff]
    %v738 = vld [vmem:[%s5 + $0x3c0] sm:$0xff]
    %v739 = vld [vmem:[%s5 + $0x3c8] sm:$0xff]
    %v740 = vld [vmem:[%s5 + $0x3d0] sm:$0xff]
    %v741 = vld [vmem:[%s5 + $0x3d8] sm:$0xff]
    %v742 = vld [vmem:[%s5 + $0x3e0] sm:$0xff]
    %v743 = vld [vmem:[%s5 + $0x3e8] sm:$0xff]
    %v744 = vld [vmem:[%s5 + $0x3f0] sm:$0xff]
    %v745 = vld [vmem:[%s5 + $0x3f8] sm:$0xff]
    %v746 = vld [vmem:[%s5 + $0x400] sm:$0xff]
    %v747 = vld [vmem:[%s5 + $0x408] sm:$0xff]
    %v748 = vld [vmem:[%s5 + $0x410] sm:$0xff]
    %v749 = vld [vmem:[%s5 + $0x418] sm:$0xff]
    %v750 = vld [vmem:[%s5 + $0x420] sm:$0xff]
    %v751 = vld [vmem:[%s5 + $0x428] sm:$0xff]
    %v752 = vld [vmem:[%s5 + $0x430] sm:$0xff]
    %v753 = vld [vmem:[%s5 + $0x438] sm:$0xff]
    %v754 = vld [vmem:[%s5 + $0x440] sm:$0xff]
    %v755 = vld [vmem:[%s5 + $0x448] sm:$0xff]
    %v756 = vld [vmem:[%s5 + $0x450] sm:$0xff]
    %v757 = vld [vmem:[%s5 + $0x458] sm:$0xff]
    %v758 = vld [vmem:[%s5 + $0x460] sm:$0xff]
    %v759 = vld [vmem:[%s5 + $0x468] sm:$0xff]
    %v760 = vld [vmem:[%s5 + $0x470] sm:$0xff]
    %v761 = vld [vmem:[%s5 + $0x478] sm:$0xff]
    %v762 = vld [vmem:[%s5 + $0x480] sm:$0xff]
    %v763 = vld [vmem:[%s5 + $0x488] sm:$0xff]
    %v764 = vld [vmem:[%s5 + $0x490] sm:$0xff]
    %v765 = vld [vmem:[%s5 + $0x498] sm:$0xff]
    %v766 = vld [vmem:[%s5 + $0x4a0] sm:$0xff]
    %v767 = vld [vmem:[%s5 + $0x4a8] sm:$0xff]
    %v768 = vld [vmem:[%s5 + $0x4b0] sm:$0xff]
    %v769 = vld [vmem:[%s5 + $0x4b8] sm:$0xff]
    %v770 = vld [vmem:[%s5 + $0x4c0] sm:$0xff]
    %v771 = vld [vmem:[%s5 + $0x4c8] sm:$0xff]
    %v772 = vld [vmem:[%s5 + $0x4d0] sm:$0xff]
    %v773 = vld [vmem:[%s5 + $0x4d8] sm:$0xff]
    %v774 = vld [vmem:[%s5 + $0x4e0] sm:$0xff]
    %v775 = vld [vmem:[%s5 + $0x4e8] sm:$0xff]
    %v776 = vld [vmem:[%s5 + $0x4f0] sm:$0xff]
    %v777 = vld [vmem:[%s5 + $0x4f8] sm:$0xff]
    %v778 = vld [vmem:[%s5 + $0x500] sm:$0xff]
    %v779 = vld [vmem:[%s5 + $0x508] sm:$0xff]
    %v780 = vld [vmem:[%s5 + $0x510] sm:$0xff]
    %v781 = vld [vmem:[%s5 + $0x518] sm:$0xff]
    %v782 = vld [vmem:[%s5 + $0x520] sm:$0xff]
    %v783 = vld [vmem:[%s5 + $0x528] sm:$0xff]
    %v784 = vld [vmem:[%s5 + $0x530] sm:$0xff]
    %v785 = vld [vmem:[%s5 + $0x538] sm:$0xff]
    %v786 = vld [vmem:[%s5 + $0x540] sm:$0xff]
    %v787 = vld [vmem:[%s5 + $0x548] sm:$0xff]
    %v788 = vld [vmem:[%s5 + $0x550] sm:$0xff]
    %v789 = vld [vmem:[%s5 + $0x558] sm:$0xff]
    %v790 = vld [vmem:[%s5 + $0x560] sm:$0xff]
    %v791 = vld [vmem:[%s5 + $0x568] sm:$0xff]
    %v792 = vld [vmem:[%s5 + $0x570] sm:$0xff]
    %v793 = vld [vmem:[%s5 + $0x578] sm:$0xff]
    %v794 = vld [vmem:[%s5 + $0x580] sm:$0xff]
    %v795 = vld [vmem:[%s5 + $0x588] sm:$0xff]
    %v796 = vld [vmem:[%s5 + $0x590] sm:$0xff]
    %v797 = vld [vmem:[%s5 + $0x598] sm:$0xff]
    %v798 = vld [vmem:[%s5 + $0x5a0] sm:$0xff]
    %v799 = vld [vmem:[%s5 + $0x5a8] sm:$0xff]
    %v800 = vld [vmem:[%s5 + $0x5b0] sm:$0xff]
    %v801 = vld [vmem:[%s5 + $0x5b8] sm:$0xff]
    %v802 = vld [vmem:[%s5 + $0x5c0] sm:$0xff]
    %v803 = vld [vmem:[%s5 + $0x5c8] sm:$0xff]
    %v804 = vld [vmem:[%s5 + $0x5d0] sm:$0xff]
    %v805 = vld [vmem:[%s5 + $0x5d8] sm:$0xff]
    %v806 = vld [vmem:[%s5 + $0x5e0] sm:$0xff]
    %v807 = vld [vmem:[%s5 + $0x5e8] sm:$0xff]
    %v808 = vld [vmem:[%s5 + $0x5f0] sm:$0xff]
    %v809 = vld [vmem:[%s5 + $0x5f8] sm:$0xff]
    %v810 = vld [vmem:[%s5 + $0x600] sm:$0xff]
    %v811 = vld [vmem:[%s5 + $0x608] sm:$0xff]
    %v812 = vld [vmem:[%s5 + $0x610] sm:$0xff]
    %v813 = vld [vmem:[%s5 + $0x618] sm:$0xff]
    %v814 = vld [vmem:[%s5 + $0x620] sm:$0xff]
    %v815 = vld [vmem:[%s5 + $0x628] sm:$0xff]
    %v816 = vld [vmem:[%s5 + $0x630] sm:$0xff]
    %v817 = vld [vmem:[%s5 + $0x638] sm:$0xff]
    %v818 = vld [vmem:[%s5 + $0x640] sm:$0xff]
    %v819 = vld [vmem:[%s5 + $0x648] sm:$0xff]
    %v820 = vld [vmem:[%s5 + $0x650] sm:$0xff]
    %v821 = vld [vmem:[%s5 + $0x658] sm:$0xff]
    %v822 = vld [vmem:[%s5 + $0x660] sm:$0xff]
    %v823 = vld [vmem:[%s5 + $0x668] sm:$0xff]
    %v824 = vld [vmem:[%s5 + $0x670] sm:$0xff]
    %v825 = vld [vmem:[%s5 + $0x678] sm:$0xff]
    %v826 = vld [vmem:[%s5 + $0x680] sm:$0xff]
    %v827 = vld [vmem:[%s5 + $0x688] sm:$0xff]
    %v828 = vld [vmem:[%s5 + $0x690] sm:$0xff]
    %v829 = vld [vmem:[%s5 + $0x698] sm:$0xff]
    %v830 = vld [vmem:[%s5 + $0x6a0] sm:$0xff]
    %v831 = vld [vmem:[%s5 + $0x6a8] sm:$0xff]
    %v832 = vld [vmem:[%s5 + $0x6b0] sm:$0xff]
    %v833 = vld [vmem:[%s5 + $0x6b8] sm:$0xff]
    %v834 = vld [vmem:[%s5 + $0x6c0] sm:$0xff]
    %v835 = vld [vmem:[%s5 + $0x6c8] sm:$0xff]
    %v836 = vld [vmem:[%s5 + $0x6d0] sm:$0xff]
    %v837 = vld [vmem:[%s5 + $0x6d8] sm:$0xff]
    %v838 = vld [vmem:[%s5 + $0x6e0] sm:$0xff]
    %v839 = vld [vmem:[%s5 + $0x6e8] sm:$0xff]
    %v840 = vld [vmem:[%s5 + $0x6f0] sm:$0xff]
    %v841 = vld [vmem:[%s5 + $0x6f8] sm:$0xff]
    %v842 = vld [vmem:[%s5 + $0x700] sm:$0xff]
    %v843 = vld [vmem:[%s5 + $0x708] sm:$0xff]
    %v844 = vld [vmem:[%s5 + $0x710] sm:$0xff]
    %v845 = vld [vmem:[%s5 + $0x718] sm:$0xff]
    %v846 = vld [vmem:[%s5 + $0x720] sm:$0xff]
    %v847 = vld [vmem:[%s5 + $0x728] sm:$0xff]
    %v848 = vld [vmem:[%s5 + $0x730] sm:$0xff]
    %v849 = vld [vmem:[%s5 + $0x738] sm:$0xff]
    %v850 = vld [vmem:[%s5 + $0x740] sm:$0xff]
    %v851 = vld [vmem:[%s5 + $0x748] sm:$0xff]
    %v852 = vld [vmem:[%s5 + $0x750] sm:$0xff]
    %v853 = vld [vmem:[%s5 + $0x758] sm:$0xff]
    %v854 = vld [vmem:[%s5 + $0x760] sm:$0xff]
    %v855 = vld [vmem:[%s5 + $0x768] sm:$0xff]
    %v856 = vld [vmem:[%s5 + $0x770] sm:$0xff]
    %v857 = vld [vmem:[%s5 + $0x778] sm:$0xff]
    %v858 = vld [vmem:[%s5 + $0x780] sm:$0xff]
    %v859 = vld [vmem:[%s5 + $0x788] sm:$0xff]
    %v860 = vld [vmem:[%s5 + $0x790] sm:$0xff]
    %v861 = vld [vmem:[%s5 + $0x798] sm:$0xff]
    %v862 = vld [vmem:[%s5 + $0x7a0] sm:$0xff]
    %v863 = vld [vmem:[%s5 + $0x7a8] sm:$0xff]
    %v864 = vld [vmem:[%s5 + $0x7b0] sm:$0xff]
    %v865 = vld [vmem:[%s5 + $0x7b8] sm:$0xff]
    %v866 = vld [vmem:[%s5 + $0x7c0] sm:$0xff]
    %v867 = vld [vmem:[%s5 + $0x7c8] sm:$0xff]
    %v868 = vld [vmem:[%s5 + $0x7d0] sm:$0xff]
    %v869 = vld [vmem:[%s5 + $0x7d8] sm:$0xff]
    %v870 = vld [vmem:[%s5 + $0x7e0] sm:$0xff]
    %v871 = vld [vmem:[%s5 + $0x7e8] sm:$0xff]
    %v872 = vld [vmem:[%s5 + $0x7f0] sm:$0xff]
    %v873 = vld [vmem:[%s5 + $0x7f8] sm:$0xff]
    %v874 = vld [vmem:[%s6] sm:$0xff]
    %v876 = vperm.slane %v874, 0
    %v877 = vperm.slane %v874, 1
    %v878 = vperm.slane %v874, 2
    %v879 = vperm.slane %v874, 3
    %v880 = vperm.slane %v874, 4
    %v881 = vperm.slane %v874, 5
    %v882 = vperm.slane %v874, 6
    %v883 = vperm.slane %v874, 7
    %v1148 = vunpack.c.l.b16 %v618
    %v1149 = vunpack.c.h.b16 %v618
    %v1150 = vunpack.c.l.b16 %v619
    %v1151 = vunpack.c.h.b16 %v619
    %v1152 = vunpack.c.l.b16 %v620
    %v1153 = vunpack.c.h.b16 %v620
    %v1154 = vunpack.c.l.b16 %v621
    %v1155 = vunpack.c.h.b16 %v621
    %v1156 = vunpack.c.l.b16 %v622
    %v1157 = vunpack.c.h.b16 %v622
    %v1158 = vunpack.c.l.b16 %v623
    %v1159 = vunpack.c.h.b16 %v623
    %v1160 = vunpack.c.l.b16 %v624
    %v1161 = vunpack.c.h.b16 %v624
    %v1162 = vunpack.c.l.b16 %v625
    %v1163 = vunpack.c.h.b16 %v625
    %v1164 = vunpack.c.l.b16 %v626
    %v1165 = vunpack.c.h.b16 %v626
    %v1166 = vunpack.c.l.b16 %v627
    %v1167 = vunpack.c.h.b16 %v627
    %v1168 = vunpack.c.l.b16 %v628
    %v1169 = vunpack.c.h.b16 %v628
    %v1170 = vunpack.c.l.b16 %v629
    %v1171 = vunpack.c.h.b16 %v629
    %v1172 = vunpack.c.l.b16 %v630
    %v1173 = vunpack.c.h.b16 %v630
    %v1174 = vunpack.c.l.b16 %v631
    %v1175 = vunpack.c.h.b16 %v631
    %v1176 = vunpack.c.l.b16 %v632
    %v1177 = vunpack.c.h.b16 %v632
    %v1178 = vunpack.c.l.b16 %v633
    %v1179 = vunpack.c.h.b16 %v633
    %v1180 = vunpack.c.l.b16 %v634
    %v1181 = vunpack.c.h.b16 %v634
    %v1182 = vunpack.c.l.b16 %v635
    %v1183 = vunpack.c.h.b16 %v635
    %v1184 = vunpack.c.l.b16 %v636
    %v1185 = vunpack.c.h.b16 %v636
    %v1186 = vunpack.c.l.b16 %v637
    %v1187 = vunpack.c.h.b16 %v637
    %v1188 = vunpack.c.l.b16 %v638
    %v1189 = vunpack.c.h.b16 %v638
    %v1190 = vunpack.c.l.b16 %v639
    %v1191 = vunpack.c.h.b16 %v639
    %v1192 = vunpack.c.l.b16 %v640
    %v1193 = vunpack.c.h.b16 %v640
    %v1194 = vunpack.c.l.b16 %v641
    %v1195 = vunpack.c.h.b16 %v641
    %v1196 = vunpack.c.l.b16 %v642
    %v1197 = vunpack.c.h.b16 %v642
    %v1198 = vunpack.c.l.b16 %v643
    %v1199 = vunpack.c.h.b16 %v643
    %v1200 = vunpack.c.l.b16 %v644
    %v1201 = vunpack.c.h.b16 %v644
    %v1202 = vunpack.c.l.b16 %v645
    %v1203 = vunpack.c.h.b16 %v645
    %v1204 = vunpack.c.l.b16 %v646
    %v1205 = vunpack.c.h.b16 %v646
    %v1206 = vunpack.c.l.b16 %v647
    %v1207 = vunpack.c.h.b16 %v647
    %v1208 = vunpack.c.l.b16 %v648
    %v1209 = vunpack.c.h.b16 %v648
    %v1210 = vunpack.c.l.b16 %v649
    %v1211 = vunpack.c.h.b16 %v649
    %v1212 = vunpack.c.l.b16 %v650
    %v1213 = vunpack.c.h.b16 %v650
    %v1214 = vunpack.c.l.b16 %v651
    %v1215 = vunpack.c.h.b16 %v651
    %v1216 = vunpack.c.l.b16 %v652
    %v1217 = vunpack.c.h.b16 %v652
    %v1218 = vunpack.c.l.b16 %v653
    %v1219 = vunpack.c.h.b16 %v653
    %v1220 = vunpack.c.l.b16 %v654
    %v1221 = vunpack.c.h.b16 %v654
    %v1222 = vunpack.c.l.b16 %v655
    %v1223 = vunpack.c.h.b16 %v655
    %v1224 = vunpack.c.l.b16 %v656
    %v1225 = vunpack.c.h.b16 %v656
    %v1226 = vunpack.c.l.b16 %v657
    %v1227 = vunpack.c.h.b16 %v657
    %v1228 = vunpack.c.l.b16 %v658
    %v1229 = vunpack.c.h.b16 %v658
    %v1230 = vunpack.c.l.b16 %v659
    %v1231 = vunpack.c.h.b16 %v659
    %v1232 = vunpack.c.l.b16 %v660
    %v1233 = vunpack.c.h.b16 %v660
    %v1234 = vunpack.c.l.b16 %v661
    %v1235 = vunpack.c.h.b16 %v661
    %v1236 = vunpack.c.l.b16 %v662
    %v1237 = vunpack.c.h.b16 %v662
    %v1238 = vunpack.c.l.b16 %v663
    %v1239 = vunpack.c.h.b16 %v663
    %v1240 = vunpack.c.l.b16 %v664
    %v1241 = vunpack.c.h.b16 %v664
    %v1242 = vunpack.c.l.b16 %v665
    %v1243 = vunpack.c.h.b16 %v665
    %v1244 = vunpack.c.l.b16 %v666
    %v1245 = vunpack.c.h.b16 %v666
    %v1246 = vunpack.c.l.b16 %v667
    %v1247 = vunpack.c.h.b16 %v667
    %v1248 = vunpack.c.l.b16 %v668
    %v1249 = vunpack.c.h.b16 %v668
    %v1250 = vunpack.c.l.b16 %v669
    %v1251 = vunpack.c.h.b16 %v669
    %v1252 = vunpack.c.l.b16 %v670
    %v1253 = vunpack.c.h.b16 %v670
    %v1254 = vunpack.c.l.b16 %v671
    %v1255 = vunpack.c.h.b16 %v671
    %v1256 = vunpack.c.l.b16 %v672
    %v1257 = vunpack.c.h.b16 %v672
    %v1258 = vunpack.c.l.b16 %v673
    %v1259 = vunpack.c.h.b16 %v673
    %v1260 = vunpack.c.l.b16 %v674
    %v1261 = vunpack.c.h.b16 %v674
    %v1262 = vunpack.c.l.b16 %v675
    %v1263 = vunpack.c.h.b16 %v675
    %v1264 = vunpack.c.l.b16 %v676
    %v1265 = vunpack.c.h.b16 %v676
    %v1266 = vunpack.c.l.b16 %v677
    %v1267 = vunpack.c.h.b16 %v677
    %v1268 = vunpack.c.l.b16 %v678
    %v1269 = vunpack.c.h.b16 %v678
    %v1270 = vunpack.c.l.b16 %v679
    %v1271 = vunpack.c.h.b16 %v679
    %v1272 = vunpack.c.l.b16 %v680
    %v1273 = vunpack.c.h.b16 %v680
    %v1274 = vunpack.c.l.b16 %v681
    %v1275 = vunpack.c.h.b16 %v681
    %v1276 = vunpack.c.l.b16 %v682
    %v1277 = vunpack.c.h.b16 %v682
    %v1278 = vunpack.c.l.b16 %v683
    %v1279 = vunpack.c.h.b16 %v683
    %v1280 = vunpack.c.l.b16 %v684
    %v1281 = vunpack.c.h.b16 %v684
    %v1282 = vunpack.c.l.b16 %v685
    %v1283 = vunpack.c.h.b16 %v685
    %v1284 = vunpack.c.l.b16 %v686
    %v1285 = vunpack.c.h.b16 %v686
    %v1286 = vunpack.c.l.b16 %v687
    %v1287 = vunpack.c.h.b16 %v687
    %v1288 = vunpack.c.l.b16 %v688
    %v1289 = vunpack.c.h.b16 %v688
    %v1290 = vunpack.c.l.b16 %v689
    %v1291 = vunpack.c.h.b16 %v689
    %v1292 = vunpack.c.l.b16 %v690
    %v1293 = vunpack.c.h.b16 %v690
    %v1294 = vunpack.c.l.b16 %v691
    %v1295 = vunpack.c.h.b16 %v691
    %v1296 = vunpack.c.l.b16 %v692
    %v1297 = vunpack.c.h.b16 %v692
    %v1298 = vunpack.c.l.b16 %v693
    %v1299 = vunpack.c.h.b16 %v693
    %v1300 = vunpack.c.l.b16 %v694
    %v1301 = vunpack.c.h.b16 %v694
    %v1302 = vunpack.c.l.b16 %v695
    %v1303 = vunpack.c.h.b16 %v695
    %v1304 = vunpack.c.l.b16 %v696
    %v1305 = vunpack.c.h.b16 %v696
    %v1306 = vunpack.c.l.b16 %v697
    %v1307 = vunpack.c.h.b16 %v697
    %v1308 = vunpack.c.l.b16 %v698
    %v1309 = vunpack.c.h.b16 %v698
    %v1310 = vunpack.c.l.b16 %v699
    %v1311 = vunpack.c.h.b16 %v699
    %v1312 = vunpack.c.l.b16 %v700
    %v1313 = vunpack.c.h.b16 %v700
    %v1314 = vunpack.c.l.b16 %v701
    %v1315 = vunpack.c.h.b16 %v701
    %v1316 = vunpack.c.l.b16 %v702
    %v1317 = vunpack.c.h.b16 %v702
    %v1318 = vunpack.c.l.b16 %v703
    %v1319 = vunpack.c.h.b16 %v703
    %v1320 = vunpack.c.l.b16 %v704
    %v1321 = vunpack.c.h.b16 %v704
    %v1322 = vunpack.c.l.b16 %v705
    %v1323 = vunpack.c.h.b16 %v705
    %v1324 = vunpack.c.l.b16 %v706
    %v1325 = vunpack.c.h.b16 %v706
    %v1326 = vunpack.c.l.b16 %v707
    %v1327 = vunpack.c.h.b16 %v707
    %v1328 = vunpack.c.l.b16 %v708
    %v1329 = vunpack.c.h.b16 %v708
    %v1330 = vunpack.c.l.b16 %v709
    %v1331 = vunpack.c.h.b16 %v709
    %v1332 = vunpack.c.l.b16 %v710
    %v1333 = vunpack.c.h.b16 %v710
    %v1334 = vunpack.c.l.b16 %v711
    %v1335 = vunpack.c.h.b16 %v711
    %v1336 = vunpack.c.l.b16 %v712
    %v1337 = vunpack.c.h.b16 %v712
    %v1338 = vunpack.c.l.b16 %v713
    %v1339 = vunpack.c.h.b16 %v713
    %v1340 = vunpack.c.l.b16 %v714
    %v1341 = vunpack.c.h.b16 %v714
    %v1342 = vunpack.c.l.b16 %v715
    %v1343 = vunpack.c.h.b16 %v715
    %v1344 = vunpack.c.l.b16 %v716
    %v1345 = vunpack.c.h.b16 %v716
    %v1346 = vunpack.c.l.b16 %v717
    %v1347 = vunpack.c.h.b16 %v717
    %v1348 = vunpack.c.l.b16 %v718
    %v1349 = vunpack.c.h.b16 %v718
    %v1350 = vunpack.c.l.b16 %v719
    %v1351 = vunpack.c.h.b16 %v719
    %v1352 = vunpack.c.l.b16 %v720
    %v1353 = vunpack.c.h.b16 %v720
    %v1354 = vunpack.c.l.b16 %v721
    %v1355 = vunpack.c.h.b16 %v721
    %v1356 = vunpack.c.l.b16 %v722
    %v1357 = vunpack.c.h.b16 %v722
    %v1358 = vunpack.c.l.b16 %v723
    %v1359 = vunpack.c.h.b16 %v723
    %v1360 = vunpack.c.l.b16 %v724
    %v1361 = vunpack.c.h.b16 %v724
    %v1362 = vunpack.c.l.b16 %v725
    %v1363 = vunpack.c.h.b16 %v725
    %v1364 = vunpack.c.l.b16 %v726
    %v1365 = vunpack.c.h.b16 %v726
    %v1366 = vunpack.c.l.b16 %v727
    %v1367 = vunpack.c.h.b16 %v727
    %v1368 = vunpack.c.l.b16 %v728
    %v1369 = vunpack.c.h.b16 %v728
    %v1370 = vunpack.c.l.b16 %v729
    %v1371 = vunpack.c.h.b16 %v729
    %v1372 = vunpack.c.l.b16 %v730
    %v1373 = vunpack.c.h.b16 %v730
    %v1374 = vunpack.c.l.b16 %v731
    %v1375 = vunpack.c.h.b16 %v731
    %v1376 = vunpack.c.l.b16 %v732
    %v1377 = vunpack.c.h.b16 %v732
    %v1378 = vunpack.c.l.b16 %v733
    %v1379 = vunpack.c.h.b16 %v733
    %v1380 = vunpack.c.l.b16 %v734
    %v1381 = vunpack.c.h.b16 %v734
    %v1382 = vunpack.c.l.b16 %v735
    %v1383 = vunpack.c.h.b16 %v735
    %v1384 = vunpack.c.l.b16 %v736
    %v1385 = vunpack.c.h.b16 %v736
    %v1386 = vunpack.c.l.b16 %v737
    %v1387 = vunpack.c.h.b16 %v737
    %v1388 = vunpack.c.l.b16 %v738
    %v1389 = vunpack.c.h.b16 %v738
    %v1390 = vunpack.c.l.b16 %v739
    %v1391 = vunpack.c.h.b16 %v739
    %v1392 = vunpack.c.l.b16 %v740
    %v1393 = vunpack.c.h.b16 %v740
    %v1394 = vunpack.c.l.b16 %v741
    %v1395 = vunpack.c.h.b16 %v741
    %v1396 = vunpack.c.l.b16 %v742
    %v1397 = vunpack.c.h.b16 %v742
    %v1398 = vunpack.c.l.b16 %v743
    %v1399 = vunpack.c.h.b16 %v743
    %v1400 = vunpack.c.l.b16 %v744
    %v1401 = vunpack.c.h.b16 %v744
    %v1402 = vunpack.c.l.b16 %v745
    %v1403 = vunpack.c.h.b16 %v745
    %v1404 = vunpack.c.l.b16 %v746
    %v1405 = vunpack.c.h.b16 %v746
    %v1406 = vunpack.c.l.b16 %v747
    %v1407 = vunpack.c.h.b16 %v747
    %v1408 = vunpack.c.l.b16 %v748
    %v1409 = vunpack.c.h.b16 %v748
    %v1410 = vunpack.c.l.b16 %v749
    %v1411 = vunpack.c.h.b16 %v749
    %v1412 = vunpack.c.l.b16 %v750
    %v1413 = vunpack.c.h.b16 %v750
    %v1414 = vunpack.c.l.b16 %v751
    %v1415 = vunpack.c.h.b16 %v751
    %v1416 = vunpack.c.l.b16 %v752
    %v1417 = vunpack.c.h.b16 %v752
    %v1418 = vunpack.c.l.b16 %v753
    %v1419 = vunpack.c.h.b16 %v753
    %v1420 = vunpack.c.l.b16 %v754
    %v1421 = vunpack.c.h.b16 %v754
    %v1422 = vunpack.c.l.b16 %v755
    %v1423 = vunpack.c.h.b16 %v755
    %v1424 = vunpack.c.l.b16 %v756
    %v1425 = vunpack.c.h.b16 %v756
    %v1426 = vunpack.c.l.b16 %v757
    %v1427 = vunpack.c.h.b16 %v757
    %v1428 = vunpack.c.l.b16 %v758
    %v1429 = vunpack.c.h.b16 %v758
    %v1430 = vunpack.c.l.b16 %v759
    %v1431 = vunpack.c.h.b16 %v759
    %v1432 = vunpack.c.l.b16 %v760
    %v1433 = vunpack.c.h.b16 %v760
    %v1434 = vunpack.c.l.b16 %v761
    %v1435 = vunpack.c.h.b16 %v761
    %v1436 = vunpack.c.l.b16 %v762
    %v1437 = vunpack.c.h.b16 %v762
    %v1438 = vunpack.c.l.b16 %v763
    %v1439 = vunpack.c.h.b16 %v763
    %v1440 = vunpack.c.l.b16 %v764
    %v1441 = vunpack.c.h.b16 %v764
    %v1442 = vunpack.c.l.b16 %v765
    %v1443 = vunpack.c.h.b16 %v765
    %v1444 = vunpack.c.l.b16 %v766
    %v1445 = vunpack.c.h.b16 %v766
    %v1446 = vunpack.c.l.b16 %v767
    %v1447 = vunpack.c.h.b16 %v767
    %v1448 = vunpack.c.l.b16 %v768
    %v1449 = vunpack.c.h.b16 %v768
    %v1450 = vunpack.c.l.b16 %v769
    %v1451 = vunpack.c.h.b16 %v769
    %v1452 = vunpack.c.l.b16 %v770
    %v1453 = vunpack.c.h.b16 %v770
    %v1454 = vunpack.c.l.b16 %v771
    %v1455 = vunpack.c.h.b16 %v771
    %v1456 = vunpack.c.l.b16 %v772
    %v1457 = vunpack.c.h.b16 %v772
    %v1458 = vunpack.c.l.b16 %v773
    %v1459 = vunpack.c.h.b16 %v773
    %v1460 = vunpack.c.l.b16 %v774
    %v1461 = vunpack.c.h.b16 %v774
    %v1462 = vunpack.c.l.b16 %v775
    %v1463 = vunpack.c.h.b16 %v775
    %v1464 = vunpack.c.l.b16 %v776
    %v1465 = vunpack.c.h.b16 %v776
    %v1466 = vunpack.c.l.b16 %v777
    %v1467 = vunpack.c.h.b16 %v777
    %v1468 = vunpack.c.l.b16 %v778
    %v1469 = vunpack.c.h.b16 %v778
    %v1470 = vunpack.c.l.b16 %v779
    %v1471 = vunpack.c.h.b16 %v779
    %v1472 = vunpack.c.l.b16 %v780
    %v1473 = vunpack.c.h.b16 %v780
    %v1474 = vunpack.c.l.b16 %v781
    %v1475 = vunpack.c.h.b16 %v781
    %v1476 = vunpack.c.l.b16 %v782
    %v1477 = vunpack.c.h.b16 %v782
    %v1478 = vunpack.c.l.b16 %v783
    %v1479 = vunpack.c.h.b16 %v783
    %v1480 = vunpack.c.l.b16 %v784
    %v1481 = vunpack.c.h.b16 %v784
    %v1482 = vunpack.c.l.b16 %v785
    %v1483 = vunpack.c.h.b16 %v785
    %v1484 = vunpack.c.l.b16 %v786
    %v1485 = vunpack.c.h.b16 %v786
    %v1486 = vunpack.c.l.b16 %v787
    %v1487 = vunpack.c.h.b16 %v787
    %v1488 = vunpack.c.l.b16 %v788
    %v1489 = vunpack.c.h.b16 %v788
    %v1490 = vunpack.c.l.b16 %v789
    %v1491 = vunpack.c.h.b16 %v789
    %v1492 = vunpack.c.l.b16 %v790
    %v1493 = vunpack.c.h.b16 %v790
    %v1494 = vunpack.c.l.b16 %v791
    %v1495 = vunpack.c.h.b16 %v791
    %v1496 = vunpack.c.l.b16 %v792
    %v1497 = vunpack.c.h.b16 %v792
    %v1498 = vunpack.c.l.b16 %v793
    %v1499 = vunpack.c.h.b16 %v793
    %v1500 = vunpack.c.l.b16 %v794
    %v1501 = vunpack.c.h.b16 %v794
    %v1502 = vunpack.c.l.b16 %v795
    %v1503 = vunpack.c.h.b16 %v795
    %v1504 = vunpack.c.l.b16 %v796
    %v1505 = vunpack.c.h.b16 %v796
    %v1506 = vunpack.c.l.b16 %v797
    %v1507 = vunpack.c.h.b16 %v797
    %v1508 = vunpack.c.l.b16 %v798
    %v1509 = vunpack.c.h.b16 %v798
    %v1510 = vunpack.c.l.b16 %v799
    %v1511 = vunpack.c.h.b16 %v799
    %v1512 = vunpack.c.l.b16 %v800
    %v1513 = vunpack.c.h.b16 %v800
    %v1514 = vunpack.c.l.b16 %v801
    %v1515 = vunpack.c.h.b16 %v801
    %v1516 = vunpack.c.l.b16 %v802
    %v1517 = vunpack.c.h.b16 %v802
    %v1518 = vunpack.c.l.b16 %v803
    %v1519 = vunpack.c.h.b16 %v803
    %v1520 = vunpack.c.l.b16 %v804
    %v1521 = vunpack.c.h.b16 %v804
    %v1522 = vunpack.c.l.b16 %v805
    %v1523 = vunpack.c.h.b16 %v805
    %v1524 = vunpack.c.l.b16 %v806
    %v1525 = vunpack.c.h.b16 %v806
    %v1526 = vunpack.c.l.b16 %v807
    %v1527 = vunpack.c.h.b16 %v807
    %v1528 = vunpack.c.l.b16 %v808
    %v1529 = vunpack.c.h.b16 %v808
    %v1530 = vunpack.c.l.b16 %v809
    %v1531 = vunpack.c.h.b16 %v809
    %v1532 = vunpack.c.l.b16 %v810
    %v1533 = vunpack.c.h.b16 %v810
    %v1534 = vunpack.c.l.b16 %v811
    %v1535 = vunpack.c.h.b16 %v811
    %v1536 = vunpack.c.l.b16 %v812
    %v1537 = vunpack.c.h.b16 %v812
    %v1538 = vunpack.c.l.b16 %v813
    %v1539 = vunpack.c.h.b16 %v813
    %v1540 = vunpack.c.l.b16 %v814
    %v1541 = vunpack.c.h.b16 %v814
    %v1542 = vunpack.c.l.b16 %v815
    %v1543 = vunpack.c.h.b16 %v815
    %v1544 = vunpack.c.l.b16 %v816
    %v1545 = vunpack.c.h.b16 %v816
    %v1546 = vunpack.c.l.b16 %v817
    %v1547 = vunpack.c.h.b16 %v817
    %v1548 = vunpack.c.l.b16 %v818
    %v1549 = vunpack.c.h.b16 %v818
    %v1550 = vunpack.c.l.b16 %v819
    %v1551 = vunpack.c.h.b16 %v819
    %v1552 = vunpack.c.l.b16 %v820
    %v1553 = vunpack.c.h.b16 %v820
    %v1554 = vunpack.c.l.b16 %v821
    %v1555 = vunpack.c.h.b16 %v821
    %v1556 = vunpack.c.l.b16 %v822
    %v1557 = vunpack.c.h.b16 %v822
    %v1558 = vunpack.c.l.b16 %v823
    %v1559 = vunpack.c.h.b16 %v823
    %v1560 = vunpack.c.l.b16 %v824
    %v1561 = vunpack.c.h.b16 %v824
    %v1562 = vunpack.c.l.b16 %v825
    %v1563 = vunpack.c.h.b16 %v825
    %v1564 = vunpack.c.l.b16 %v826
    %v1565 = vunpack.c.h.b16 %v826
    %v1566 = vunpack.c.l.b16 %v827
    %v1567 = vunpack.c.h.b16 %v827
    %v1568 = vunpack.c.l.b16 %v828
    %v1569 = vunpack.c.h.b16 %v828
    %v1570 = vunpack.c.l.b16 %v829
    %v1571 = vunpack.c.h.b16 %v829
    %v1572 = vunpack.c.l.b16 %v830
    %v1573 = vunpack.c.h.b16 %v830
    %v1574 = vunpack.c.l.b16 %v831
    %v1575 = vunpack.c.h.b16 %v831
    %v1576 = vunpack.c.l.b16 %v832
    %v1577 = vunpack.c.h.b16 %v832
    %v1578 = vunpack.c.l.b16 %v833
    %v1579 = vunpack.c.h.b16 %v833
    %v1580 = vunpack.c.l.b16 %v834
    %v1581 = vunpack.c.h.b16 %v834
    %v1582 = vunpack.c.l.b16 %v835
    %v1583 = vunpack.c.h.b16 %v835
    %v1584 = vunpack.c.l.b16 %v836
    %v1585 = vunpack.c.h.b16 %v836
    %v1586 = vunpack.c.l.b16 %v837
    %v1587 = vunpack.c.h.b16 %v837
    %v1588 = vunpack.c.l.b16 %v838
    %v1589 = vunpack.c.h.b16 %v838
    %v1590 = vunpack.c.l.b16 %v839
    %v1591 = vunpack.c.h.b16 %v839
    %v1592 = vunpack.c.l.b16 %v840
    %v1593 = vunpack.c.h.b16 %v840
    %v1594 = vunpack.c.l.b16 %v841
    %v1595 = vunpack.c.h.b16 %v841
    %v1596 = vunpack.c.l.b16 %v842
    %v1597 = vunpack.c.h.b16 %v842
    %v1598 = vunpack.c.l.b16 %v843
    %v1599 = vunpack.c.h.b16 %v843
    %v1600 = vunpack.c.l.b16 %v844
    %v1601 = vunpack.c.h.b16 %v844
    %v1602 = vunpack.c.l.b16 %v845
    %v1603 = vunpack.c.h.b16 %v845
    %v1604 = vunpack.c.l.b16 %v846
    %v1605 = vunpack.c.h.b16 %v846
    %v1606 = vunpack.c.l.b16 %v847
    %v1607 = vunpack.c.h.b16 %v847
    %v1608 = vunpack.c.l.b16 %v848
    %v1609 = vunpack.c.h.b16 %v848
    %v1610 = vunpack.c.l.b16 %v849
    %v1611 = vunpack.c.h.b16 %v849
    %v1612 = vunpack.c.l.b16 %v850
    %v1613 = vunpack.c.h.b16 %v850
    %v1614 = vunpack.c.l.b16 %v851
    %v1615 = vunpack.c.h.b16 %v851
    %v1616 = vunpack.c.l.b16 %v852
    %v1617 = vunpack.c.h.b16 %v852
    %v1618 = vunpack.c.l.b16 %v853
    %v1619 = vunpack.c.h.b16 %v853
    %v1620 = vunpack.c.l.b16 %v854
    %v1621 = vunpack.c.h.b16 %v854
    %v1622 = vunpack.c.l.b16 %v855
    %v1623 = vunpack.c.h.b16 %v855
    %v1624 = vunpack.c.l.b16 %v856
    %v1625 = vunpack.c.h.b16 %v856
    %v1626 = vunpack.c.l.b16 %v857
    %v1627 = vunpack.c.h.b16 %v857
    %v1628 = vunpack.c.l.b16 %v858
    %v1629 = vunpack.c.h.b16 %v858
    %v1630 = vunpack.c.l.b16 %v859
    %v1631 = vunpack.c.h.b16 %v859
    %v1632 = vunpack.c.l.b16 %v860
    %v1633 = vunpack.c.h.b16 %v860
    %v1634 = vunpack.c.l.b16 %v861
    %v1635 = vunpack.c.h.b16 %v861
    %v1636 = vunpack.c.l.b16 %v862
    %v1637 = vunpack.c.h.b16 %v862
    %v1638 = vunpack.c.l.b16 %v863
    %v1639 = vunpack.c.h.b16 %v863
    %v1640 = vunpack.c.l.b16 %v864
    %v1641 = vunpack.c.h.b16 %v864
    %v1642 = vunpack.c.l.b16 %v865
    %v1643 = vunpack.c.h.b16 %v865
    %v1644 = vunpack.c.l.b16 %v866
    %v1645 = vunpack.c.h.b16 %v866
    %v1646 = vunpack.c.l.b16 %v867
    %v1647 = vunpack.c.h.b16 %v867
    %v1648 = vunpack.c.l.b16 %v868
    %v1649 = vunpack.c.h.b16 %v868
    %v1650 = vunpack.c.l.b16 %v869
    %v1651 = vunpack.c.h.b16 %v869
    %v1652 = vunpack.c.l.b16 %v870
    %v1653 = vunpack.c.h.b16 %v870
    %v1654 = vunpack.c.l.b16 %v871
    %v1655 = vunpack.c.h.b16 %v871
    %v1656 = vunpack.c.l.b16 %v872
    %v1657 = vunpack.c.h.b16 %v872
    %v1658 = vunpack.c.l.b16 %v873
    %v1659 = vunpack.c.h.b16 %v873
    %v1660 = vpack.c.b16 %v1156, %v1148
    %v1661 = vpack.c.b16 %v1157, %v1149
    %v1662 = vpack.c.b16 %v1158, %v1150
    %v1663 = vpack.c.b16 %v1159, %v1151
    %v1664 = vpack.c.b16 %v1160, %v1152
    %v1665 = vpack.c.b16 %v1161, %v1153
    %v1666 = vpack.c.b16 %v1162, %v1154
    %v1667 = vpack.c.b16 %v1163, %v1155
    %v1668 = vpack.c.b16 %v1172, %v1164
    %v1669 = vpack.c.b16 %v1173, %v1165
    %v1670 = vpack.c.b16 %v1174, %v1166
    %v1671 = vpack.c.b16 %v1175, %v1167
    %v1672 = vpack.c.b16 %v1176, %v1168
    %v1673 = vpack.c.b16 %v1177, %v1169
    %v1674 = vpack.c.b16 %v1178, %v1170
    %v1675 = vpack.c.b16 %v1179, %v1171
    %v1676 = vpack.c.b16 %v1188, %v1180
    %v1677 = vpack.c.b16 %v1189, %v1181
    %v1678 = vpack.c.b16 %v1190, %v1182
    %v1679 = vpack.c.b16 %v1191, %v1183
    %v1680 = vpack.c.b16 %v1192, %v1184
    %v1681 = vpack.c.b16 %v1193, %v1185
    %v1682 = vpack.c.b16 %v1194, %v1186
    %v1683 = vpack.c.b16 %v1195, %v1187
    %v1684 = vpack.c.b16 %v1204, %v1196
    %v1685 = vpack.c.b16 %v1205, %v1197
    %v1686 = vpack.c.b16 %v1206, %v1198
    %v1687 = vpack.c.b16 %v1207, %v1199
    %v1688 = vpack.c.b16 %v1208, %v1200
    %v1689 = vpack.c.b16 %v1209, %v1201
    %v1690 = vpack.c.b16 %v1210, %v1202
    %v1691 = vpack.c.b16 %v1211, %v1203
    %v1692 = vpack.c.b16 %v1220, %v1212
    %v1693 = vpack.c.b16 %v1221, %v1213
    %v1694 = vpack.c.b16 %v1222, %v1214
    %v1695 = vpack.c.b16 %v1223, %v1215
    %v1696 = vpack.c.b16 %v1224, %v1216
    %v1697 = vpack.c.b16 %v1225, %v1217
    %v1698 = vpack.c.b16 %v1226, %v1218
    %v1699 = vpack.c.b16 %v1227, %v1219
    %v1700 = vpack.c.b16 %v1236, %v1228
    %v1701 = vpack.c.b16 %v1237, %v1229
    %v1702 = vpack.c.b16 %v1238, %v1230
    %v1703 = vpack.c.b16 %v1239, %v1231
    %v1704 = vpack.c.b16 %v1240, %v1232
    %v1705 = vpack.c.b16 %v1241, %v1233
    %v1706 = vpack.c.b16 %v1242, %v1234
    %v1707 = vpack.c.b16 %v1243, %v1235
    %v1708 = vpack.c.b16 %v1252, %v1244
    %v1709 = vpack.c.b16 %v1253, %v1245
    %v1710 = vpack.c.b16 %v1254, %v1246
    %v1711 = vpack.c.b16 %v1255, %v1247
    %v1712 = vpack.c.b16 %v1256, %v1248
    %v1713 = vpack.c.b16 %v1257, %v1249
    %v1714 = vpack.c.b16 %v1258, %v1250
    %v1715 = vpack.c.b16 %v1259, %v1251
    %v1716 = vpack.c.b16 %v1268, %v1260
    %v1717 = vpack.c.b16 %v1269, %v1261
    %v1718 = vpack.c.b16 %v1270, %v1262
    %v1719 = vpack.c.b16 %v1271, %v1263
    %v1720 = vpack.c.b16 %v1272, %v1264
    %v1721 = vpack.c.b16 %v1273, %v1265
    %v1722 = vpack.c.b16 %v1274, %v1266
    %v1723 = vpack.c.b16 %v1275, %v1267
    %v1724 = vpack.c.b16 %v1284, %v1276
    %v1725 = vpack.c.b16 %v1285, %v1277
    %v1726 = vpack.c.b16 %v1286, %v1278
    %v1727 = vpack.c.b16 %v1287, %v1279
    %v1728 = vpack.c.b16 %v1288, %v1280
    %v1729 = vpack.c.b16 %v1289, %v1281
    %v1730 = vpack.c.b16 %v1290, %v1282
    %v1731 = vpack.c.b16 %v1291, %v1283
    %v1732 = vpack.c.b16 %v1300, %v1292
    %v1733 = vpack.c.b16 %v1301, %v1293
    %v1734 = vpack.c.b16 %v1302, %v1294
    %v1735 = vpack.c.b16 %v1303, %v1295
    %v1736 = vpack.c.b16 %v1304, %v1296
    %v1737 = vpack.c.b16 %v1305, %v1297
    %v1738 = vpack.c.b16 %v1306, %v1298
    %v1739 = vpack.c.b16 %v1307, %v1299
    %v1740 = vpack.c.b16 %v1316, %v1308
    %v1741 = vpack.c.b16 %v1317, %v1309
    %v1742 = vpack.c.b16 %v1318, %v1310
    %v1743 = vpack.c.b16 %v1319, %v1311
    %v1744 = vpack.c.b16 %v1320, %v1312
    %v1745 = vpack.c.b16 %v1321, %v1313
    %v1746 = vpack.c.b16 %v1322, %v1314
    %v1747 = vpack.c.b16 %v1323, %v1315
    %v1748 = vpack.c.b16 %v1332, %v1324
    %v1749 = vpack.c.b16 %v1333, %v1325
    %v1750 = vpack.c.b16 %v1334, %v1326
    %v1751 = vpack.c.b16 %v1335, %v1327
    %v1752 = vpack.c.b16 %v1336, %v1328
    %v1753 = vpack.c.b16 %v1337, %v1329
    %v1754 = vpack.c.b16 %v1338, %v1330
    %v1755 = vpack.c.b16 %v1339, %v1331
    %v1756 = vpack.c.b16 %v1348, %v1340
    %v1757 = vpack.c.b16 %v1349, %v1341
    %v1758 = vpack.c.b16 %v1350, %v1342
    %v1759 = vpack.c.b16 %v1351, %v1343
    %v1760 = vpack.c.b16 %v1352, %v1344
    %v1761 = vpack.c.b16 %v1353, %v1345
    %v1762 = vpack.c.b16 %v1354, %v1346
    %v1763 = vpack.c.b16 %v1355, %v1347
    %v1764 = vpack.c.b16 %v1364, %v1356
    %v1765 = vpack.c.b16 %v1365, %v1357
    %v1766 = vpack.c.b16 %v1366, %v1358
    %v1767 = vpack.c.b16 %v1367, %v1359
    %v1768 = vpack.c.b16 %v1368, %v1360
    %v1769 = vpack.c.b16 %v1369, %v1361
    %v1770 = vpack.c.b16 %v1370, %v1362
    %v1771 = vpack.c.b16 %v1371, %v1363
    %v1772 = vpack.c.b16 %v1380, %v1372
    %v1773 = vpack.c.b16 %v1381, %v1373
    %v1774 = vpack.c.b16 %v1382, %v1374
    %v1775 = vpack.c.b16 %v1383, %v1375
    %v1776 = vpack.c.b16 %v1384, %v1376
    %v1777 = vpack.c.b16 %v1385, %v1377
    %v1778 = vpack.c.b16 %v1386, %v1378
    %v1779 = vpack.c.b16 %v1387, %v1379
    %v1780 = vpack.c.b16 %v1396, %v1388
    %v1781 = vpack.c.b16 %v1397, %v1389
    %v1782 = vpack.c.b16 %v1398, %v1390
    %v1783 = vpack.c.b16 %v1399, %v1391
    %v1784 = vpack.c.b16 %v1400, %v1392
    %v1785 = vpack.c.b16 %v1401, %v1393
    %v1786 = vpack.c.b16 %v1402, %v1394
    %v1787 = vpack.c.b16 %v1403, %v1395
    %v1788 = vpack.c.b16 %v1412, %v1404
    %v1789 = vpack.c.b16 %v1413, %v1405
    %v1790 = vpack.c.b16 %v1414, %v1406
    %v1791 = vpack.c.b16 %v1415, %v1407
    %v1792 = vpack.c.b16 %v1416, %v1408
    %v1793 = vpack.c.b16 %v1417, %v1409
    %v1794 = vpack.c.b16 %v1418, %v1410
    %v1795 = vpack.c.b16 %v1419, %v1411
    %v1796 = vpack.c.b16 %v1428, %v1420
    %v1797 = vpack.c.b16 %v1429, %v1421
    %v1798 = vpack.c.b16 %v1430, %v1422
    %v1799 = vpack.c.b16 %v1431, %v1423
    %v1800 = vpack.c.b16 %v1432, %v1424
    %v1801 = vpack.c.b16 %v1433, %v1425
    %v1802 = vpack.c.b16 %v1434, %v1426
    %v1803 = vpack.c.b16 %v1435, %v1427
    %v1804 = vpack.c.b16 %v1444, %v1436
    %v1805 = vpack.c.b16 %v1445, %v1437
    %v1806 = vpack.c.b16 %v1446, %v1438
    %v1807 = vpack.c.b16 %v1447, %v1439
    %v1808 = vpack.c.b16 %v1448, %v1440
    %v1809 = vpack.c.b16 %v1449, %v1441
    %v1810 = vpack.c.b16 %v1450, %v1442
    %v1811 = vpack.c.b16 %v1451, %v1443
    %v1812 = vpack.c.b16 %v1460, %v1452
    %v1813 = vpack.c.b16 %v1461, %v1453
    %v1814 = vpack.c.b16 %v1462, %v1454
    %v1815 = vpack.c.b16 %v1463, %v1455
    %v1816 = vpack.c.b16 %v1464, %v1456
    %v1817 = vpack.c.b16 %v1465, %v1457
    %v1818 = vpack.c.b16 %v1466, %v1458
    %v1819 = vpack.c.b16 %v1467, %v1459
    %v1820 = vpack.c.b16 %v1476, %v1468
    %v1821 = vpack.c.b16 %v1477, %v1469
    %v1822 = vpack.c.b16 %v1478, %v1470
    %v1823 = vpack.c.b16 %v1479, %v1471
    %v1824 = vpack.c.b16 %v1480, %v1472
    %v1825 = vpack.c.b16 %v1481, %v1473
    %v1826 = vpack.c.b16 %v1482, %v1474
    %v1827 = vpack.c.b16 %v1483, %v1475
    %v1828 = vpack.c.b16 %v1492, %v1484
    %v1829 = vpack.c.b16 %v1493, %v1485
    %v1830 = vpack.c.b16 %v1494, %v1486
    %v1831 = vpack.c.b16 %v1495, %v1487
    %v1832 = vpack.c.b16 %v1496, %v1488
    %v1833 = vpack.c.b16 %v1497, %v1489
    %v1834 = vpack.c.b16 %v1498, %v1490
    %v1835 = vpack.c.b16 %v1499, %v1491
    %v1836 = vpack.c.b16 %v1508, %v1500
    %v1837 = vpack.c.b16 %v1509, %v1501
    %v1838 = vpack.c.b16 %v1510, %v1502
    %v1839 = vpack.c.b16 %v1511, %v1503
    %v1840 = vpack.c.b16 %v1512, %v1504
    %v1841 = vpack.c.b16 %v1513, %v1505
    %v1842 = vpack.c.b16 %v1514, %v1506
    %v1843 = vpack.c.b16 %v1515, %v1507
    %v1844 = vpack.c.b16 %v1524, %v1516
    %v1845 = vpack.c.b16 %v1525, %v1517
    %v1846 = vpack.c.b16 %v1526, %v1518
    %v1847 = vpack.c.b16 %v1527, %v1519
    %v1848 = vpack.c.b16 %v1528, %v1520
    %v1849 = vpack.c.b16 %v1529, %v1521
    %v1850 = vpack.c.b16 %v1530, %v1522
    %v1851 = vpack.c.b16 %v1531, %v1523
    %v1852 = vpack.c.b16 %v1540, %v1532
    %v1853 = vpack.c.b16 %v1541, %v1533
    %v1854 = vpack.c.b16 %v1542, %v1534
    %v1855 = vpack.c.b16 %v1543, %v1535
    %v1856 = vpack.c.b16 %v1544, %v1536
    %v1857 = vpack.c.b16 %v1545, %v1537
    %v1858 = vpack.c.b16 %v1546, %v1538
    %v1859 = vpack.c.b16 %v1547, %v1539
    %v1860 = vpack.c.b16 %v1556, %v1548
    %v1861 = vpack.c.b16 %v1557, %v1549
    %v1862 = vpack.c.b16 %v1558, %v1550
    %v1863 = vpack.c.b16 %v1559, %v1551
    %v1864 = vpack.c.b16 %v1560, %v1552
    %v1865 = vpack.c.b16 %v1561, %v1553
    %v1866 = vpack.c.b16 %v1562, %v1554
    %v1867 = vpack.c.b16 %v1563, %v1555
    %v1868 = vpack.c.b16 %v1572, %v1564
    %v1869 = vpack.c.b16 %v1573, %v1565
    %v1870 = vpack.c.b16 %v1574, %v1566
    %v1871 = vpack.c.b16 %v1575, %v1567
    %v1872 = vpack.c.b16 %v1576, %v1568
    %v1873 = vpack.c.b16 %v1577, %v1569
    %v1874 = vpack.c.b16 %v1578, %v1570
    %v1875 = vpack.c.b16 %v1579, %v1571
    %v1876 = vpack.c.b16 %v1588, %v1580
    %v1877 = vpack.c.b16 %v1589, %v1581
    %v1878 = vpack.c.b16 %v1590, %v1582
    %v1879 = vpack.c.b16 %v1591, %v1583
    %v1880 = vpack.c.b16 %v1592, %v1584
    %v1881 = vpack.c.b16 %v1593, %v1585
    %v1882 = vpack.c.b16 %v1594, %v1586
    %v1883 = vpack.c.b16 %v1595, %v1587
    %v1884 = vpack.c.b16 %v1604, %v1596
    %v1885 = vpack.c.b16 %v1605, %v1597
    %v1886 = vpack.c.b16 %v1606, %v1598
    %v1887 = vpack.c.b16 %v1607, %v1599
    %v1888 = vpack.c.b16 %v1608, %v1600
    %v1889 = vpack.c.b16 %v1609, %v1601
    %v1890 = vpack.c.b16 %v1610, %v1602
    %v1891 = vpack.c.b16 %v1611, %v1603
    %v1892 = vpack.c.b16 %v1620, %v1612
    %v1893 = vpack.c.b16 %v1621, %v1613
    %v1894 = vpack.c.b16 %v1622, %v1614
    %v1895 = vpack.c.b16 %v1623, %v1615
    %v1896 = vpack.c.b16 %v1624, %v1616
    %v1897 = vpack.c.b16 %v1625, %v1617
    %v1898 = vpack.c.b16 %v1626, %v1618
    %v1899 = vpack.c.b16 %v1627, %v1619
    %v1900 = vpack.c.b16 %v1636, %v1628
    %v1901 = vpack.c.b16 %v1637, %v1629
    %v1902 = vpack.c.b16 %v1638, %v1630
    %v1903 = vpack.c.b16 %v1639, %v1631
    %v1904 = vpack.c.b16 %v1640, %v1632
    %v1905 = vpack.c.b16 %v1641, %v1633
    %v1906 = vpack.c.b16 %v1642, %v1634
    %v1907 = vpack.c.b16 %v1643, %v1635
    %v1908 = vpack.c.b16 %v1652, %v1644
    %v1909 = vpack.c.b16 %v1653, %v1645
    %v1910 = vpack.c.b16 %v1654, %v1646
    %v1911 = vpack.c.b16 %v1655, %v1647
    %v1912 = vpack.c.b16 %v1656, %v1648
    %v1913 = vpack.c.b16 %v1657, %v1649
    %v1914 = vpack.c.b16 %v1658, %v1650
    %v1915 = vpack.c.b16 %v1659, %v1651
    %2172 = vmatpush.bf16.msra.mxu0 %v1716
    %2173 = vmatpush.bf16.msra.mxu0 %v1708
    %2174 = vmatpush.bf16.msra.mxu0 %v1700
    %2175 = vmatpush.bf16.msra.mxu0 %v1692
    %2176 = vmatpush.bf16.msra.mxu0 %v1684
    %2177 = vmatpush.bf16.msra.mxu0 %v1676
    %2178 = vmatpush.bf16.msra.mxu0 %v1668
    %2179 = vmatpush.bf16.msra.mxu0 %v1660
    %2180 = vmatmul.bf16.gmra.mxu0 %v614
    %v2181 = vpop.f32.mrf.mxu0
    %v2182 = vadd.f32 %v876, %v2181
    %v2183 = vpop.f32.mrf.mxu0
    %2184 = vdwg.mxu0
    %2185 = vmatpush.bf16.msra.mxu0 %v1780
    %2186 = vmatpush.bf16.msra.mxu0 %v1772
    %2187 = vmatpush.bf16.msra.mxu0 %v1764
    %2188 = vmatpush.bf16.msra.mxu0 %v1756
    %2189 = vmatpush.bf16.msra.mxu0 %v1748
    %2190 = vmatpush.bf16.msra.mxu0 %v1740
    %2191 = vmatpush.bf16.msra.mxu0 %v1732
    %2192 = vmatpush.bf16.msra.mxu0 %v1724
    %2193 = vmatmul.bf16.gmra.mxu0 %v615
    %v2194 = vpop.f32.mrf.mxu0
    %v2195 = vadd.f32 %v2182, %v2194
    %v2196 = vpop.f32.mrf.mxu0
    %2197 = vdwg.mxu0
    %2198 = vmatpush.bf16.msra.mxu0 %v1844
    %2199 = vmatpush.bf16.msra.mxu0 %v1836
    %2200 = vmatpush.bf16.msra.mxu0 %v1828
    %2201 = vmatpush.bf16.msra.mxu0 %v1820
    %2202 = vmatpush.bf16.msra.mxu0 %v1812
    %2203 = vmatpush.bf16.msra.mxu0 %v1804
    %2204 = vmatpush.bf16.msra.mxu0 %v1796
    %2205 = vmatpush.bf16.msra.mxu0 %v1788
    %2206 = vmatmul.bf16.gmra.mxu0 %v616
    %v2207 = vpop.f32.mrf.mxu0
    %v2208 = vadd.f32 %v2195, %v2207
    %v2209 = vpop.f32.mrf.mxu0
    %2210 = vdwg.mxu0
    %2211 = vmatpush.bf16.msra.mxu0 %v1908
    %2212 = vmatpush.bf16.msra.mxu0 %v1900
    %2213 = vmatpush.bf16.msra.mxu0 %v1892
    %2214 = vmatpush.bf16.msra.mxu0 %v1884
    %2215 = vmatpush.bf16.msra.mxu0 %v1876
    %2216 = vmatpush.bf16.msra.mxu0 %v1868
    %2217 = vmatpush.bf16.msra.mxu0 %v1860
    %2218 = vmatpush.bf16.msra.mxu0 %v1852
    %2219 = vmatmul.bf16.gmra.mxu0 %v617
    %v2220 = vpop.f32.mrf.mxu0
    %v2221 = vadd.f32 %v2208, %v2220
    %v2222 = vpop.f32.mrf.mxu0
    %2223 = vdwg.mxu0
    %2224 = vmatpush.bf16.msra.mxu0 %v1717
    %2225 = vmatpush.bf16.msra.mxu0 %v1709
    %2226 = vmatpush.bf16.msra.mxu0 %v1701
    %2227 = vmatpush.bf16.msra.mxu0 %v1693
    %2228 = vmatpush.bf16.msra.mxu0 %v1685
    %2229 = vmatpush.bf16.msra.mxu0 %v1677
    %2230 = vmatpush.bf16.msra.mxu0 %v1669
    %2231 = vmatpush.bf16.msra.mxu0 %v1661
    %2232 = vmatmul.bf16.gmra.mxu0 %v614
    %v2233 = vpop.f32.mrf.mxu0
    %v2234 = vadd.f32 %v877, %v2233
    %v2235 = vpop.f32.mrf.mxu0
    %2236 = vdwg.mxu0
    %2237 = vmatpush.bf16.msra.mxu0 %v1781
    %2238 = vmatpush.bf16.msra.mxu0 %v1773
    %2239 = vmatpush.bf16.msra.mxu0 %v1765
    %2240 = vmatpush.bf16.msra.mxu0 %v1757
    %2241 = vmatpush.bf16.msra.mxu0 %v1749
    %2242 = vmatpush.bf16.msra.mxu0 %v1741
    %2243 = vmatpush.bf16.msra.mxu0 %v1733
    %2244 = vmatpush.bf16.msra.mxu0 %v1725
    %2245 = vmatmul.bf16.gmra.mxu0 %v615
    %v2246 = vpop.f32.mrf.mxu0
    %v2247 = vadd.f32 %v2234, %v2246
    %v2248 = vpop.f32.mrf.mxu0
    %2249 = vdwg.mxu0
    %2250 = vmatpush.bf16.msra.mxu0 %v1845
    %2251 = vmatpush.bf16.msra.mxu0 %v1837
    %2252 = vmatpush.bf16.msra.mxu0 %v1829
    %2253 = vmatpush.bf16.msra.mxu0 %v1821
    %2254 = vmatpush.bf16.msra.mxu0 %v1813
    %2255 = vmatpush.bf16.msra.mxu0 %v1805
    %2256 = vmatpush.bf16.msra.mxu0 %v1797
    %2257 = vmatpush.bf16.msra.mxu0 %v1789
    %2258 = vmatmul.bf16.gmra.mxu0 %v616
    %v2259 = vpop.f32.mrf.mxu0
    %v2260 = vadd.f32 %v2247, %v2259
    %v2261 = vpop.f32.mrf.mxu0
    %2262 = vdwg.mxu0
    %2263 = vmatpush.bf16.msra.mxu0 %v1909
    %2264 = vmatpush.bf16.msra.mxu0 %v1901
    %2265 = vmatpush.bf16.msra.mxu0 %v1893
    %2266 = vmatpush.bf16.msra.mxu0 %v1885
    %2267 = vmatpush.bf16.msra.mxu0 %v1877
    %2268 = vmatpush.bf16.msra.mxu0 %v1869
    %2269 = vmatpush.bf16.msra.mxu0 %v1861
    %2270 = vmatpush.bf16.msra.mxu0 %v1853
    %2271 = vmatmul.bf16.gmra.mxu0 %v617
    %v2272 = vpop.f32.mrf.mxu0
    %v2273 = vadd.f32 %v2260, %v2272
    %v2274 = vpop.f32.mrf.mxu0
    %2275 = vdwg.mxu0
    %2276 = vmatpush.bf16.msra.mxu0 %v1718
    %2277 = vmatpush.bf16.msra.mxu0 %v1710
    %2278 = vmatpush.bf16.msra.mxu0 %v1702
    %2279 = vmatpush.bf16.msra.mxu0 %v1694
    %2280 = vmatpush.bf16.msra.mxu0 %v1686
    %2281 = vmatpush.bf16.msra.mxu0 %v1678
    %2282 = vmatpush.bf16.msra.mxu0 %v1670
    %2283 = vmatpush.bf16.msra.mxu0 %v1662
    %2284 = vmatmul.bf16.gmra.mxu0 %v614
    %v2285 = vpop.f32.mrf.mxu0
    %v2286 = vadd.f32 %v878, %v2285
    %v2287 = vpop.f32.mrf.mxu0
    %2288 = vdwg.mxu0
    %2289 = vmatpush.bf16.msra.mxu0 %v1782
    %2290 = vmatpush.bf16.msra.mxu0 %v1774
    %2291 = vmatpush.bf16.msra.mxu0 %v1766
    %2292 = vmatpush.bf16.msra.mxu0 %v1758
    %2293 = vmatpush.bf16.msra.mxu0 %v1750
    %2294 = vmatpush.bf16.msra.mxu0 %v1742
    %2295 = vmatpush.bf16.msra.mxu0 %v1734
    %2296 = vmatpush.bf16.msra.mxu0 %v1726
    %2297 = vmatmul.bf16.gmra.mxu0 %v615
    %v2298 = vpop.f32.mrf.mxu0
    %v2299 = vadd.f32 %v2286, %v2298
    %v2300 = vpop.f32.mrf.mxu0
    %2301 = vdwg.mxu0
    %2302 = vmatpush.bf16.msra.mxu0 %v1846
    %2303 = vmatpush.bf16.msra.mxu0 %v1838
    %2304 = vmatpush.bf16.msra.mxu0 %v1830
    %2305 = vmatpush.bf16.msra.mxu0 %v1822
    %2306 = vmatpush.bf16.msra.mxu0 %v1814
    %2307 = vmatpush.bf16.msra.mxu0 %v1806
    %2308 = vmatpush.bf16.msra.mxu0 %v1798
    %2309 = vmatpush.bf16.msra.mxu0 %v1790
    %2310 = vmatmul.bf16.gmra.mxu0 %v616
    %v2311 = vpop.f32.mrf.mxu0
    %v2312 = vadd.f32 %v2299, %v2311
    %v2313 = vpop.f32.mrf.mxu0
    %2314 = vdwg.mxu0
    %2315 = vmatpush.bf16.msra.mxu0 %v1910
    %2316 = vmatpush.bf16.msra.mxu0 %v1902
    %2317 = vmatpush.bf16.msra.mxu0 %v1894
    %2318 = vmatpush.bf16.msra.mxu0 %v1886
    %2319 = vmatpush.bf16.msra.mxu0 %v1878
    %2320 = vmatpush.bf16.msra.mxu0 %v1870
    %2321 = vmatpush.bf16.msra.mxu0 %v1862
    %2322 = vmatpush.bf16.msra.mxu0 %v1854
    %2323 = vmatmul.bf16.gmra.mxu0 %v617
    %v2324 = vpop.f32.mrf.mxu0
    %v2325 = vadd.f32 %v2312, %v2324
    %v2326 = vpop.f32.mrf.mxu0
    %2327 = vdwg.mxu0
    %2328 = vmatpush.bf16.msra.mxu0 %v1719
    %2329 = vmatpush.bf16.msra.mxu0 %v1711
    %2330 = vmatpush.bf16.msra.mxu0 %v1703
    %2331 = vmatpush.bf16.msra.mxu0 %v1695
    %2332 = vmatpush.bf16.msra.mxu0 %v1687
    %2333 = vmatpush.bf16.msra.mxu0 %v1679
    %2334 = vmatpush.bf16.msra.mxu0 %v1671
    %2335 = vmatpush.bf16.msra.mxu0 %v1663
    %2336 = vmatmul.bf16.gmra.mxu0 %v614
    %v2337 = vpop.f32.mrf.mxu0
    %v2338 = vadd.f32 %v879, %v2337
    %v2339 = vpop.f32.mrf.mxu0
    %2340 = vdwg.mxu0
    %2341 = vmatpush.bf16.msra.mxu0 %v1783
    %2342 = vmatpush.bf16.msra.mxu0 %v1775
    %2343 = vmatpush.bf16.msra.mxu0 %v1767
    %2344 = vmatpush.bf16.msra.mxu0 %v1759
    %2345 = vmatpush.bf16.msra.mxu0 %v1751
    %2346 = vmatpush.bf16.msra.mxu0 %v1743
    %2347 = vmatpush.bf16.msra.mxu0 %v1735
    %2348 = vmatpush.bf16.msra.mxu0 %v1727
    %2349 = vmatmul.bf16.gmra.mxu0 %v615
    %v2350 = vpop.f32.mrf.mxu0
    %v2351 = vadd.f32 %v2338, %v2350
    %v2352 = vpop.f32.mrf.mxu0
    %2353 = vdwg.mxu0
    %2354 = vmatpush.bf16.msra.mxu0 %v1847
    %2355 = vmatpush.bf16.msra.mxu0 %v1839
    %2356 = vmatpush.bf16.msra.mxu0 %v1831
    %2357 = vmatpush.bf16.msra.mxu0 %v1823
    %2358 = vmatpush.bf16.msra.mxu0 %v1815
    %2359 = vmatpush.bf16.msra.mxu0 %v1807
    %2360 = vmatpush.bf16.msra.mxu0 %v1799
    %2361 = vmatpush.bf16.msra.mxu0 %v1791
    %2362 = vmatmul.bf16.gmra.mxu0 %v616
    %v2363 = vpop.f32.mrf.mxu0
    %v2364 = vadd.f32 %v2351, %v2363
    %v2365 = vpop.f32.mrf.mxu0
    %2366 = vdwg.mxu0
    %2367 = vmatpush.bf16.msra.mxu0 %v1911
    %2368 = vmatpush.bf16.msra.mxu0 %v1903
    %2369 = vmatpush.bf16.msra.mxu0 %v1895
    %2370 = vmatpush.bf16.msra.mxu0 %v1887
    %2371 = vmatpush.bf16.msra.mxu0 %v1879
    %2372 = vmatpush.bf16.msra.mxu0 %v1871
    %2373 = vmatpush.bf16.msra.mxu0 %v1863
    %2374 = vmatpush.bf16.msra.mxu0 %v1855
    %2375 = vmatmul.bf16.gmra.mxu0 %v617
    %v2376 = vpop.f32.mrf.mxu0
    %v2377 = vadd.f32 %v2364, %v2376
    %v2378 = vpop.f32.mrf.mxu0
    %2379 = vdwg.mxu0
    %2380 = vmatpush.bf16.msra.mxu0 %v1720
    %2381 = vmatpush.bf16.msra.mxu0 %v1712
    %2382 = vmatpush.bf16.msra.mxu0 %v1704
    %2383 = vmatpush.bf16.msra.mxu0 %v1696
    %2384 = vmatpush.bf16.msra.mxu0 %v1688
    %2385 = vmatpush.bf16.msra.mxu0 %v1680
    %2386 = vmatpush.bf16.msra.mxu0 %v1672
    %2387 = vmatpush.bf16.msra.mxu0 %v1664
    %2388 = vmatmul.bf16.gmra.mxu0 %v614
    %v2389 = vpop.f32.mrf.mxu0
    %v2390 = vadd.f32 %v880, %v2389
    %v2391 = vpop.f32.mrf.mxu0
    %2392 = vdwg.mxu0
    %2393 = vmatpush.bf16.msra.mxu0 %v1784
    %2394 = vmatpush.bf16.msra.mxu0 %v1776
    %2395 = vmatpush.bf16.msra.mxu0 %v1768
    %2396 = vmatpush.bf16.msra.mxu0 %v1760
    %2397 = vmatpush.bf16.msra.mxu0 %v1752
    %2398 = vmatpush.bf16.msra.mxu0 %v1744
    %2399 = vmatpush.bf16.msra.mxu0 %v1736
    %2400 = vmatpush.bf16.msra.mxu0 %v1728
    %2401 = vmatmul.bf16.gmra.mxu0 %v615
    %v2402 = vpop.f32.mrf.mxu0
    %v2403 = vadd.f32 %v2390, %v2402
    %v2404 = vpop.f32.mrf.mxu0
    %2405 = vdwg.mxu0
    %2406 = vmatpush.bf16.msra.mxu0 %v1848
    %2407 = vmatpush.bf16.msra.mxu0 %v1840
    %2408 = vmatpush.bf16.msra.mxu0 %v1832
    %2409 = vmatpush.bf16.msra.mxu0 %v1824
    %2410 = vmatpush.bf16.msra.mxu0 %v1816
    %2411 = vmatpush.bf16.msra.mxu0 %v1808
    %2412 = vmatpush.bf16.msra.mxu0 %v1800
    %2413 = vmatpush.bf16.msra.mxu0 %v1792
    %2414 = vmatmul.bf16.gmra.mxu0 %v616
    %v2415 = vpop.f32.mrf.mxu0
    %v2416 = vadd.f32 %v2403, %v2415
    %v2417 = vpop.f32.mrf.mxu0
    %2418 = vdwg.mxu0
    %2419 = vmatpush.bf16.msra.mxu0 %v1912
    %2420 = vmatpush.bf16.msra.mxu0 %v1904
    %2421 = vmatpush.bf16.msra.mxu0 %v1896
    %2422 = vmatpush.bf16.msra.mxu0 %v1888
    %2423 = vmatpush.bf16.msra.mxu0 %v1880
    %2424 = vmatpush.bf16.msra.mxu0 %v1872
    %2425 = vmatpush.bf16.msra.mxu0 %v1864
    %2426 = vmatpush.bf16.msra.mxu0 %v1856
    %2427 = vmatmul.bf16.gmra.mxu0 %v617
    %v2428 = vpop.f32.mrf.mxu0
    %v2429 = vadd.f32 %v2416, %v2428
    %v2430 = vpop.f32.mrf.mxu0
    %2431 = vdwg.mxu0
    %2432 = vmatpush.bf16.msra.mxu0 %v1721
    %2433 = vmatpush.bf16.msra.mxu0 %v1713
    %2434 = vmatpush.bf16.msra.mxu0 %v1705
    %2435 = vmatpush.bf16.msra.mxu0 %v1697
    %2436 = vmatpush.bf16.msra.mxu0 %v1689
    %2437 = vmatpush.bf16.msra.mxu0 %v1681
    %2438 = vmatpush.bf16.msra.mxu0 %v1673
    %2439 = vmatpush.bf16.msra.mxu0 %v1665
    %2440 = vmatmul.bf16.gmra.mxu0 %v614
    %v2441 = vpop.f32.mrf.mxu0
    %v2442 = vadd.f32 %v881, %v2441
    %v2443 = vpop.f32.mrf.mxu0
    %2444 = vdwg.mxu0
    %2445 = vmatpush.bf16.msra.mxu0 %v1785
    %2446 = vmatpush.bf16.msra.mxu0 %v1777
    %2447 = vmatpush.bf16.msra.mxu0 %v1769
    %2448 = vmatpush.bf16.msra.mxu0 %v1761
    %2449 = vmatpush.bf16.msra.mxu0 %v1753
    %2450 = vmatpush.bf16.msra.mxu0 %v1745
    %2451 = vmatpush.bf16.msra.mxu0 %v1737
    %2452 = vmatpush.bf16.msra.mxu0 %v1729
    %2453 = vmatmul.bf16.gmra.mxu0 %v615
    %v2454 = vpop.f32.mrf.mxu0
    %v2455 = vadd.f32 %v2442, %v2454
    %v2456 = vpop.f32.mrf.mxu0
    %2457 = vdwg.mxu0
    %2458 = vmatpush.bf16.msra.mxu0 %v1849
    %2459 = vmatpush.bf16.msra.mxu0 %v1841
    %2460 = vmatpush.bf16.msra.mxu0 %v1833
    %2461 = vmatpush.bf16.msra.mxu0 %v1825
    %2462 = vmatpush.bf16.msra.mxu0 %v1817
    %2463 = vmatpush.bf16.msra.mxu0 %v1809
    %2464 = vmatpush.bf16.msra.mxu0 %v1801
    %2465 = vmatpush.bf16.msra.mxu0 %v1793
    %2466 = vmatmul.bf16.gmra.mxu0 %v616
    %v2467 = vpop.f32.mrf.mxu0
    %v2468 = vadd.f32 %v2455, %v2467
    %v2469 = vpop.f32.mrf.mxu0
    %2470 = vdwg.mxu0
    %2471 = vmatpush.bf16.msra.mxu0 %v1913
    %2472 = vmatpush.bf16.msra.mxu0 %v1905
    %2473 = vmatpush.bf16.msra.mxu0 %v1897
    %2474 = vmatpush.bf16.msra.mxu0 %v1889
    %2475 = vmatpush.bf16.msra.mxu0 %v1881
    %2476 = vmatpush.bf16.msra.mxu0 %v1873
    %2477 = vmatpush.bf16.msra.mxu0 %v1865
    %2478 = vmatpush.bf16.msra.mxu0 %v1857
    %2479 = vmatmul.bf16.gmra.mxu0 %v617
    %v2480 = vpop.f32.mrf.mxu0
    %v2481 = vadd.f32 %v2468, %v2480
    %v2482 = vpop.f32.mrf.mxu0
    %2483 = vdwg.mxu0
    %2484 = vmatpush.bf16.msra.mxu0 %v1722
    %2485 = vmatpush.bf16.msra.mxu0 %v1714
    %2486 = vmatpush.bf16.msra.mxu0 %v1706
    %2487 = vmatpush.bf16.msra.mxu0 %v1698
    %2488 = vmatpush.bf16.msra.mxu0 %v1690
    %2489 = vmatpush.bf16.msra.mxu0 %v1682
    %2490 = vmatpush.bf16.msra.mxu0 %v1674
    %2491 = vmatpush.bf16.msra.mxu0 %v1666
    %2492 = vmatmul.bf16.gmra.mxu0 %v614
    %v2493 = vpop.f32.mrf.mxu0
    %v2494 = vadd.f32 %v882, %v2493
    %v2495 = vpop.f32.mrf.mxu0
    %2496 = vdwg.mxu0
    %2497 = vmatpush.bf16.msra.mxu0 %v1786
    %2498 = vmatpush.bf16.msra.mxu0 %v1778
    %2499 = vmatpush.bf16.msra.mxu0 %v1770
    %2500 = vmatpush.bf16.msra.mxu0 %v1762
    %2501 = vmatpush.bf16.msra.mxu0 %v1754
    %2502 = vmatpush.bf16.msra.mxu0 %v1746
    %2503 = vmatpush.bf16.msra.mxu0 %v1738
    %2504 = vmatpush.bf16.msra.mxu0 %v1730
    %2505 = vmatmul.bf16.gmra.mxu0 %v615
    %v2506 = vpop.f32.mrf.mxu0
    %v2507 = vadd.f32 %v2494, %v2506
    %v2508 = vpop.f32.mrf.mxu0
    %2509 = vdwg.mxu0
    %2510 = vmatpush.bf16.msra.mxu0 %v1850
    %2511 = vmatpush.bf16.msra.mxu0 %v1842
    %2512 = vmatpush.bf16.msra.mxu0 %v1834
    %2513 = vmatpush.bf16.msra.mxu0 %v1826
    %2514 = vmatpush.bf16.msra.mxu0 %v1818
    %2515 = vmatpush.bf16.msra.mxu0 %v1810
    %2516 = vmatpush.bf16.msra.mxu0 %v1802
    %2517 = vmatpush.bf16.msra.mxu0 %v1794
    %2518 = vmatmul.bf16.gmra.mxu0 %v616
    %v2519 = vpop.f32.mrf.mxu0
    %v2520 = vadd.f32 %v2507, %v2519
    %v2521 = vpop.f32.mrf.mxu0
    %2522 = vdwg.mxu0
    %2523 = vmatpush.bf16.msra.mxu0 %v1914
    %2524 = vmatpush.bf16.msra.mxu0 %v1906
    %2525 = vmatpush.bf16.msra.mxu0 %v1898
    %2526 = vmatpush.bf16.msra.mxu0 %v1890
    %2527 = vmatpush.bf16.msra.mxu0 %v1882
    %2528 = vmatpush.bf16.msra.mxu0 %v1874
    %2529 = vmatpush.bf16.msra.mxu0 %v1866
    %2530 = vmatpush.bf16.msra.mxu0 %v1858
    %2531 = vmatmul.bf16.gmra.mxu0 %v617
    %v2532 = vpop.f32.mrf.mxu0
    %v2533 = vadd.f32 %v2520, %v2532
    %v2534 = vpop.f32.mrf.mxu0
    %2535 = vdwg.mxu0
    %2536 = vmatpush.bf16.msra.mxu0 %v1723
    %2537 = vmatpush.bf16.msra.mxu0 %v1715
    %2538 = vmatpush.bf16.msra.mxu0 %v1707
    %2539 = vmatpush.bf16.msra.mxu0 %v1699
    %2540 = vmatpush.bf16.msra.mxu0 %v1691
    %2541 = vmatpush.bf16.msra.mxu0 %v1683
    %2542 = vmatpush.bf16.msra.mxu0 %v1675
    %2543 = vmatpush.bf16.msra.mxu0 %v1667
    %2544 = vmatmul.bf16.gmra.mxu0 %v614
    %v2545 = vpop.f32.mrf.mxu0
    %v2546 = vadd.f32 %v883, %v2545
    %v2547 = vpop.f32.mrf.mxu0
    %2548 = vdwg.mxu0
    %2549 = vmatpush.bf16.msra.mxu0 %v1787
    %2550 = vmatpush.bf16.msra.mxu0 %v1779
    %2551 = vmatpush.bf16.msra.mxu0 %v1771
    %2552 = vmatpush.bf16.msra.mxu0 %v1763
    %2553 = vmatpush.bf16.msra.mxu0 %v1755
    %2554 = vmatpush.bf16.msra.mxu0 %v1747
    %2555 = vmatpush.bf16.msra.mxu0 %v1739
    %2556 = vmatpush.bf16.msra.mxu0 %v1731
    %2557 = vmatmul.bf16.gmra.mxu0 %v615
    %v2558 = vpop.f32.mrf.mxu0
    %v2559 = vadd.f32 %v2546, %v2558
    %v2560 = vpop.f32.mrf.mxu0
    %2561 = vdwg.mxu0
    %2562 = vmatpush.bf16.msra.mxu0 %v1851
    %2563 = vmatpush.bf16.msra.mxu0 %v1843
    %2564 = vmatpush.bf16.msra.mxu0 %v1835
    %2565 = vmatpush.bf16.msra.mxu0 %v1827
    %2566 = vmatpush.bf16.msra.mxu0 %v1819
    %2567 = vmatpush.bf16.msra.mxu0 %v1811
    %2568 = vmatpush.bf16.msra.mxu0 %v1803
    %2569 = vmatpush.bf16.msra.mxu0 %v1795
    %2570 = vmatmul.bf16.gmra.mxu0 %v616
    %v2571 = vpop.f32.mrf.mxu0
    %v2572 = vadd.f32 %v2559, %v2571
    %v2573 = vpop.f32.mrf.mxu0
    %2574 = vdwg.mxu0
    %2575 = vmatpush.bf16.msra.mxu0 %v1915
    %2576 = vmatpush.bf16.msra.mxu0 %v1907
    %2577 = vmatpush.bf16.msra.mxu0 %v1899
    %2578 = vmatpush.bf16.msra.mxu0 %v1891
    %2579 = vmatpush.bf16.msra.mxu0 %v1883
    %2580 = vmatpush.bf16.msra.mxu0 %v1875
    %2581 = vmatpush.bf16.msra.mxu0 %v1867
    %2582 = vmatpush.bf16.msra.mxu0 %v1859
    %2583 = vmatmul.bf16.gmra.mxu0 %v617
    %v2584 = vpop.f32.mrf.mxu0
    %v2585 = vadd.f32 %v2572, %v2584
    %v2586 = vpop.f32.mrf.mxu0
    %2587 = vdwg.mxu0
    %v2588 = vmax.f32 %v2221, 0.0
    %v2589 = vmax.f32 %v2273, 0.0
    %v2590 = vmax.f32 %v2325, 0.0
    %v2591 = vmax.f32 %v2377, 0.0
    %v2592 = vmax.f32 %v2429, 0.0
    %v2593 = vmax.f32 %v2481, 0.0
    %v2594 = vmax.f32 %v2533, 0.0
    %v2595 = vmax.f32 %v2585, 0.0
    %v2596 = vpack.c.bf16 %v2588, %v2588
    %v2597 = vpack.c.bf16 %v2589, %v2589
    %v2598 = vpack.c.bf16 %v2590, %v2590
    %v2599 = vpack.c.bf16 %v2591, %v2591
    %v2600 = vpack.c.bf16 %v2592, %v2592
    %v2601 = vpack.c.bf16 %v2593, %v2593
    %v2602 = vpack.c.bf16 %v2594, %v2594
    %v2603 = vpack.c.bf16 %v2595, %v2595
    %v2604 = vld [vmem:[%s7] sm:$0xf]
    %v2605 = vld [vmem:[%s7 + $0x4] sm:$0xf]
    %v2606 = vld [vmem:[%s7 + $0x8] sm:$0xf]
    %v2607 = vld [vmem:[%s7 + $0xc] sm:$0xf]
    %v2608 = vld [vmem:[%s7 + $0x10] sm:$0xf]
    %v2609 = vld [vmem:[%s7 + $0x14] sm:$0xf]
    %v2610 = vld [vmem:[%s7 + $0x18] sm:$0xf]
    %v2611 = vld [vmem:[%s7 + $0x1c] sm:$0xf]
    %v2612 = vld [vmem:[%s7 + $0x20] sm:$0xf]
    %v2613 = vld [vmem:[%s7 + $0x24] sm:$0xf]
    %v2614 = vld [vmem:[%s7 + $0x28] sm:$0xf]
    %v2615 = vld [vmem:[%s7 + $0x2c] sm:$0xf]
    %v2616 = vld [vmem:[%s7 + $0x30] sm:$0xf]
    %v2617 = vld [vmem:[%s7 + $0x34] sm:$0xf]
    %v2618 = vld [vmem:[%s7 + $0x38] sm:$0xf]
    %v2619 = vld [vmem:[%s7 + $0x3c] sm:$0xf]
    %v2620 = vld [vmem:[%s7 + $0x40] sm:$0xf]
    %v2621 = vld [vmem:[%s7 + $0x44] sm:$0xf]
    %v2622 = vld [vmem:[%s7 + $0x48] sm:$0xf]
    %v2623 = vld [vmem:[%s7 + $0x4c] sm:$0xf]
    %v2624 = vld [vmem:[%s7 + $0x50] sm:$0xf]
    %v2625 = vld [vmem:[%s7 + $0x54] sm:$0xf]
    %v2626 = vld [vmem:[%s7 + $0x58] sm:$0xf]
    %v2627 = vld [vmem:[%s7 + $0x5c] sm:$0xf]
    %v2628 = vld [vmem:[%s7 + $0x60] sm:$0xf]
    %v2629 = vld [vmem:[%s7 + $0x64] sm:$0xf]
    %v2630 = vld [vmem:[%s7 + $0x68] sm:$0xf]
    %v2631 = vld [vmem:[%s7 + $0x6c] sm:$0xf]
    %v2632 = vld [vmem:[%s7 + $0x70] sm:$0xf]
    %v2633 = vld [vmem:[%s7 + $0x74] sm:$0xf]
    %v2634 = vld [vmem:[%s7 + $0x78] sm:$0xf]
    %v2635 = vld [vmem:[%s7 + $0x7c] sm:$0xf]
    %v2636 = vld [vmem:[%s7 + $0x80] sm:$0xf]
    %v2637 = vld [vmem:[%s7 + $0x84] sm:$0xf]
    %v2638 = vld [vmem:[%s7 + $0x88] sm:$0xf]
    %v2639 = vld [vmem:[%s7 + $0x8c] sm:$0xf]
    %v2640 = vld [vmem:[%s7 + $0x90] sm:$0xf]
    %v2641 = vld [vmem:[%s7 + $0x94] sm:$0xf]
    %v2642 = vld [vmem:[%s7 + $0x98] sm:$0xf]
    %v2643 = vld [vmem:[%s7 + $0x9c] sm:$0xf]
    %v2644 = vld [vmem:[%s7 + $0xa0] sm:$0xf]
    %v2645 = vld [vmem:[%s7 + $0xa4] sm:$0xf]
    %v2646 = vld [vmem:[%s7 + $0xa8] sm:$0xf]
    %v2647 = vld [vmem:[%s7 + $0xac] sm:$0xf]
    %v2648 = vld [vmem:[%s7 + $0xb0] sm:$0xf]
    %v2649 = vld [vmem:[%s7 + $0xb4] sm:$0xf]
    %v2650 = vld [vmem:[%s7 + $0xb8] sm:$0xf]
    %v2651 = vld [vmem:[%s7 + $0xbc] sm:$0xf]
    %v2652 = vld [vmem:[%s7 + $0xc0] sm:$0xf]
    %v2653 = vld [vmem:[%s7 + $0xc4] sm:$0xf]
    %v2654 = vld [vmem:[%s7 + $0xc8] sm:$0xf]
    %v2655 = vld [vmem:[%s7 + $0xcc] sm:$0xf]
    %v2656 = vld [vmem:[%s7 + $0xd0] sm:$0xf]
    %v2657 = vld [vmem:[%s7 + $0xd4] sm:$0xf]
    %v2658 = vld [vmem:[%s7 + $0xd8] sm:$0xf]
    %v2659 = vld [vmem:[%s7 + $0xdc] sm:$0xf]
    %v2660 = vld [vmem:[%s7 + $0xe0] sm:$0xf]
    %v2661 = vld [vmem:[%s7 + $0xe4] sm:$0xf]
    %v2662 = vld [vmem:[%s7 + $0xe8] sm:$0xf]
    %v2663 = vld [vmem:[%s7 + $0xec] sm:$0xf]
    %v2664 = vld [vmem:[%s7 + $0xf0] sm:$0xf]
    %v2665 = vld [vmem:[%s7 + $0xf4] sm:$0xf]
    %v2666 = vld [vmem:[%s7 + $0xf8] sm:$0xf]
    %v2667 = vld [vmem:[%s7 + $0xfc] sm:$0xf]
    %v2668 = vld [vmem:[%s7 + $0x100] sm:$0xf]
    %v2669 = vld [vmem:[%s7 + $0x104] sm:$0xf]
    %v2670 = vld [vmem:[%s7 + $0x108] sm:$0xf]
    %v2671 = vld [vmem:[%s7 + $0x10c] sm:$0xf]
    %v2672 = vld [vmem:[%s7 + $0x110] sm:$0xf]
    %v2673 = vld [vmem:[%s7 + $0x114] sm:$0xf]
    %v2674 = vld [vmem:[%s7 + $0x118] sm:$0xf]
    %v2675 = vld [vmem:[%s7 + $0x11c] sm:$0xf]
    %v2676 = vld [vmem:[%s7 + $0x120] sm:$0xf]
    %v2677 = vld [vmem:[%s7 + $0x124] sm:$0xf]
    %v2678 = vld [vmem:[%s7 + $0x128] sm:$0xf]
    %v2679 = vld [vmem:[%s7 + $0x12c] sm:$0xf]
    %v2680 = vld [vmem:[%s7 + $0x130] sm:$0xf]
    %v2681 = vld [vmem:[%s7 + $0x134] sm:$0xf]
    %v2682 = vld [vmem:[%s7 + $0x138] sm:$0xf]
    %v2683 = vld [vmem:[%s7 + $0x13c] sm:$0xf]
    %v2684 = vld [vmem:[%s7 + $0x140] sm:$0xf]
    %v2685 = vld [vmem:[%s7 + $0x144] sm:$0xf]
    %v2686 = vld [vmem:[%s7 + $0x148] sm:$0xf]
    %v2687 = vld [vmem:[%s7 + $0x14c] sm:$0xf]
    %v2688 = vld [vmem:[%s7 + $0x150] sm:$0xf]
    %v2689 = vld [vmem:[%s7 + $0x154] sm:$0xf]
    %v2690 = vld [vmem:[%s7 + $0x158] sm:$0xf]
    %v2691 = vld [vmem:[%s7 + $0x15c] sm:$0xf]
    %v2692 = vld [vmem:[%s7 + $0x160] sm:$0xf]
    %v2693 = vld [vmem:[%s7 + $0x164] sm:$0xf]
    %v2694 = vld [vmem:[%s7 + $0x168] sm:$0xf]
    %v2695 = vld [vmem:[%s7 + $0x16c] sm:$0xf]
    %v2696 = vld [vmem:[%s7 + $0x170] sm:$0xf]
    %v2697 = vld [vmem:[%s7 + $0x174] sm:$0xf]
    %v2698 = vld [vmem:[%s7 + $0x178] sm:$0xf]
    %v2699 = vld [vmem:[%s7 + $0x17c] sm:$0xf]
    %v2700 = vld [vmem:[%s7 + $0x180] sm:$0xf]
    %v2701 = vld [vmem:[%s7 + $0x184] sm:$0xf]
    %v2702 = vld [vmem:[%s7 + $0x188] sm:$0xf]
    %v2703 = vld [vmem:[%s7 + $0x18c] sm:$0xf]
    %v2704 = vld [vmem:[%s7 + $0x190] sm:$0xf]
    %v2705 = vld [vmem:[%s7 + $0x194] sm:$0xf]
    %v2706 = vld [vmem:[%s7 + $0x198] sm:$0xf]
    %v2707 = vld [vmem:[%s7 + $0x19c] sm:$0xf]
    %v2708 = vld [vmem:[%s7 + $0x1a0] sm:$0xf]
    %v2709 = vld [vmem:[%s7 + $0x1a4] sm:$0xf]
    %v2710 = vld [vmem:[%s7 + $0x1a8] sm:$0xf]
    %v2711 = vld [vmem:[%s7 + $0x1ac] sm:$0xf]
    %v2712 = vld [vmem:[%s7 + $0x1b0] sm:$0xf]
    %v2713 = vld [vmem:[%s7 + $0x1b4] sm:$0xf]
    %v2714 = vld [vmem:[%s7 + $0x1b8] sm:$0xf]
    %v2715 = vld [vmem:[%s7 + $0x1bc] sm:$0xf]
    %v2716 = vld [vmem:[%s7 + $0x1c0] sm:$0xf]
    %v2717 = vld [vmem:[%s7 + $0x1c4] sm:$0xf]
    %v2718 = vld [vmem:[%s7 + $0x1c8] sm:$0xf]
    %v2719 = vld [vmem:[%s7 + $0x1cc] sm:$0xf]
    %v2720 = vld [vmem:[%s7 + $0x1d0] sm:$0xf]
    %v2721 = vld [vmem:[%s7 + $0x1d4] sm:$0xf]
    %v2722 = vld [vmem:[%s7 + $0x1d8] sm:$0xf]
    %v2723 = vld [vmem:[%s7 + $0x1dc] sm:$0xf]
    %v2724 = vld [vmem:[%s7 + $0x1e0] sm:$0xf]
    %v2725 = vld [vmem:[%s7 + $0x1e4] sm:$0xf]
    %v2726 = vld [vmem:[%s7 + $0x1e8] sm:$0xf]
    %v2727 = vld [vmem:[%s7 + $0x1ec] sm:$0xf]
    %v2728 = vld [vmem:[%s7 + $0x1f0] sm:$0xf]
    %v2729 = vld [vmem:[%s7 + $0x1f4] sm:$0xf]
    %v2730 = vld [vmem:[%s7 + $0x1f8] sm:$0xf]
    %v2731 = vld [vmem:[%s7 + $0x1fc] sm:$0xf]
    %v2732 = vld [vmem:[%s8] sm:$0x1]
    %v2734 = vperm.slane %v2732, 0
    %v2864 = vunpack.c.l.b16 %v2604
    %v2865 = vunpack.c.l.b16 %v2605
    %v2866 = vunpack.c.l.b16 %v2606
    %v2867 = vunpack.c.l.b16 %v2607
    %v2868 = vunpack.c.l.b16 %v2608
    %v2869 = vunpack.c.l.b16 %v2609
    %v2870 = vunpack.c.l.b16 %v2610
    %v2871 = vunpack.c.l.b16 %v2611
    %v2872 = vunpack.c.l.b16 %v2612
    %v2873 = vunpack.c.l.b16 %v2613
    %v2874 = vunpack.c.l.b16 %v2614
    %v2875 = vunpack.c.l.b16 %v2615
    %v2876 = vunpack.c.l.b16 %v2616
    %v2877 = vunpack.c.l.b16 %v2617
    %v2878 = vunpack.c.l.b16 %v2618
    %v2879 = vunpack.c.l.b16 %v2619
    %v2880 = vunpack.c.l.b16 %v2620
    %v2881 = vunpack.c.l.b16 %v2621
    %v2882 = vunpack.c.l.b16 %v2622
    %v2883 = vunpack.c.l.b16 %v2623
    %v2884 = vunpack.c.l.b16 %v2624
    %v2885 = vunpack.c.l.b16 %v2625
    %v2886 = vunpack.c.l.b16 %v2626
    %v2887 = vunpack.c.l.b16 %v2627
    %v2888 = vunpack.c.l.b16 %v2628
    %v2889 = vunpack.c.l.b16 %v2629
    %v2890 = vunpack.c.l.b16 %v2630
    %v2891 = vunpack.c.l.b16 %v2631
    %v2892 = vunpack.c.l.b16 %v2632
    %v2893 = vunpack.c.l.b16 %v2633
    %v2894 = vunpack.c.l.b16 %v2634
    %v2895 = vunpack.c.l.b16 %v2635
    %v2896 = vunpack.c.l.b16 %v2636
    %v2897 = vunpack.c.l.b16 %v2637
    %v2898 = vunpack.c.l.b16 %v2638
    %v2899 = vunpack.c.l.b16 %v2639
    %v2900 = vunpack.c.l.b16 %v2640
    %v2901 = vunpack.c.l.b16 %v2641
    %v2902 = vunpack.c.l.b16 %v2642
    %v2903 = vunpack.c.l.b16 %v2643
    %v2904 = vunpack.c.l.b16 %v2644
    %v2905 = vunpack.c.l.b16 %v2645
    %v2906 = vunpack.c.l.b16 %v2646
    %v2907 = vunpack.c.l.b16 %v2647
    %v2908 = vunpack.c.l.b16 %v2648
    %v2909 = vunpack.c.l.b16 %v2649
    %v2910 = vunpack.c.l.b16 %v2650
    %v2911 = vunpack.c.l.b16 %v2651
    %v2912 = vunpack.c.l.b16 %v2652
    %v2913 = vunpack.c.l.b16 %v2653
    %v2914 = vunpack.c.l.b16 %v2654
    %v2915 = vunpack.c.l.b16 %v2655
    %v2916 = vunpack.c.l.b16 %v2656
    %v2917 = vunpack.c.l.b16 %v2657
    %v2918 = vunpack.c.l.b16 %v2658
    %v2919 = vunpack.c.l.b16 %v2659
    %v2920 = vunpack.c.l.b16 %v2660
    %v2921 = vunpack.c.l.b16 %v2661
    %v2922 = vunpack.c.l.b16 %v2662
    %v2923 = vunpack.c.l.b16 %v2663
    %v2924 = vunpack.c.l.b16 %v2664
    %v2925 = vunpack.c.l.b16 %v2665
    %v2926 = vunpack.c.l.b16 %v2666
    %v2927 = vunpack.c.l.b16 %v2667
    %v2928 = vunpack.c.l.b16 %v2668
    %v2929 = vunpack.c.l.b16 %v2669
    %v2930 = vunpack.c.l.b16 %v2670
    %v2931 = vunpack.c.l.b16 %v2671
    %v2932 = vunpack.c.l.b16 %v2672
    %v2933 = vunpack.c.l.b16 %v2673
    %v2934 = vunpack.c.l.b16 %v2674
    %v2935 = vunpack.c.l.b16 %v2675
    %v2936 = vunpack.c.l.b16 %v2676
    %v2937 = vunpack.c.l.b16 %v2677
    %v2938 = vunpack.c.l.b16 %v2678
    %v2939 = vunpack.c.l.b16 %v2679
    %v2940 = vunpack.c.l.b16 %v2680
    %v2941 = vunpack.c.l.b16 %v2681
    %v2942 = vunpack.c.l.b16 %v2682
    %v2943 = vunpack.c.l.b16 %v2683
    %v2944 = vunpack.c.l.b16 %v2684
    %v2945 = vunpack.c.l.b16 %v2685
    %v2946 = vunpack.c.l.b16 %v2686
    %v2947 = vunpack.c.l.b16 %v2687
    %v2948 = vunpack.c.l.b16 %v2688
    %v2949 = vunpack.c.l.b16 %v2689
    %v2950 = vunpack.c.l.b16 %v2690
    %v2951 = vunpack.c.l.b16 %v2691
    %v2952 = vunpack.c.l.b16 %v2692
    %v2953 = vunpack.c.l.b16 %v2693
    %v2954 = vunpack.c.l.b16 %v2694
    %v2955 = vunpack.c.l.b16 %v2695
    %v2956 = vunpack.c.l.b16 %v2696
    %v2957 = vunpack.c.l.b16 %v2697
    %v2958 = vunpack.c.l.b16 %v2698
    %v2959 = vunpack.c.l.b16 %v2699
    %v2960 = vunpack.c.l.b16 %v2700
    %v2961 = vunpack.c.l.b16 %v2701
    %v2962 = vunpack.c.l.b16 %v2702
    %v2963 = vunpack.c.l.b16 %v2703
    %v2964 = vunpack.c.l.b16 %v2704
    %v2965 = vunpack.c.l.b16 %v2705
    %v2966 = vunpack.c.l.b16 %v2706
    %v2967 = vunpack.c.l.b16 %v2707
    %v2968 = vunpack.c.l.b16 %v2708
    %v2969 = vunpack.c.l.b16 %v2709
    %v2970 = vunpack.c.l.b16 %v2710
    %v2971 = vunpack.c.l.b16 %v2711
    %v2972 = vunpack.c.l.b16 %v2712
    %v2973 = vunpack.c.l.b16 %v2713
    %v2974 = vunpack.c.l.b16 %v2714
    %v2975 = vunpack.c.l.b16 %v2715
    %v2976 = vunpack.c.l.b16 %v2716
    %v2977 = vunpack.c.l.b16 %v2717
    %v2978 = vunpack.c.l.b16 %v2718
    %v2979 = vunpack.c.l.b16 %v2719
    %v2980 = vunpack.c.l.b16 %v2720
    %v2981 = vunpack.c.l.b16 %v2721
    %v2982 = vunpack.c.l.b16 %v2722
    %v2983 = vunpack.c.l.b16 %v2723
    %v2984 = vunpack.c.l.b16 %v2724
    %v2985 = vunpack.c.l.b16 %v2725
    %v2986 = vunpack.c.l.b16 %v2726
    %v2987 = vunpack.c.l.b16 %v2727
    %v2988 = vunpack.c.l.b16 %v2728
    %v2989 = vunpack.c.l.b16 %v2729
    %v2990 = vunpack.c.l.b16 %v2730
    %v2991 = vunpack.c.l.b16 %v2731
    %v2992 = vpack.c.b16 %v2865, %v2864
    %v2993 = vpack.c.b16 %v2867, %v2866
    %v2994 = vpack.c.b16 %v2869, %v2868
    %v2995 = vpack.c.b16 %v2871, %v2870
    %v2996 = vpack.c.b16 %v2873, %v2872
    %v2997 = vpack.c.b16 %v2875, %v2874
    %v2998 = vpack.c.b16 %v2877, %v2876
    %v2999 = vpack.c.b16 %v2879, %v2878
    %v3000 = vpack.c.b16 %v2881, %v2880
    %v3001 = vpack.c.b16 %v2883, %v2882
    %v3002 = vpack.c.b16 %v2885, %v2884
    %v3003 = vpack.c.b16 %v2887, %v2886
    %v3004 = vpack.c.b16 %v2889, %v2888
    %v3005 = vpack.c.b16 %v2891, %v2890
    %v3006 = vpack.c.b16 %v2893, %v2892
    %v3007 = vpack.c.b16 %v2895, %v2894
    %v3008 = vpack.c.b16 %v2897, %v2896
    %v3009 = vpack.c.b16 %v2899, %v2898
    %v3010 = vpack.c.b16 %v2901, %v2900
    %v3011 = vpack.c.b16 %v2903, %v2902
    %v3012 = vpack.c.b16 %v2905, %v2904
    %v3013 = vpack.c.b16 %v2907, %v2906
    %v3014 = vpack.c.b16 %v2909, %v2908
    %v3015 = vpack.c.b16 %v2911, %v2910
    %v3016 = vpack.c.b16 %v2913, %v2912
    %v3017 = vpack.c.b16 %v2915, %v2914
    %v3018 = vpack.c.b16 %v2917, %v2916
    %v3019 = vpack.c.b16 %v2919, %v2918
    %v3020 = vpack.c.b16 %v2921, %v2920
    %v3021 = vpack.c.b16 %v2923, %v2922
    %v3022 = vpack.c.b16 %v2925, %v2924
    %v3023 = vpack.c.b16 %v2927, %v2926
    %v3024 = vpack.c.b16 %v2929, %v2928
    %v3025 = vpack.c.b16 %v2931, %v2930
    %v3026 = vpack.c.b16 %v2933, %v2932
    %v3027 = vpack.c.b16 %v2935, %v2934
    %v3028 = vpack.c.b16 %v2937, %v2936
    %v3029 = vpack.c.b16 %v2939, %v2938
    %v3030 = vpack.c.b16 %v2941, %v2940
    %v3031 = vpack.c.b16 %v2943, %v2942
    %v3032 = vpack.c.b16 %v2945, %v2944
    %v3033 = vpack.c.b16 %v2947, %v2946
    %v3034 = vpack.c.b16 %v2949, %v2948
    %v3035 = vpack.c.b16 %v2951, %v2950
    %v3036 = vpack.c.b16 %v2953, %v2952
    %v3037 = vpack.c.b16 %v2955, %v2954
    %v3038 = vpack.c.b16 %v2957, %v2956
    %v3039 = vpack.c.b16 %v2959, %v2958
    %v3040 = vpack.c.b16 %v2961, %v2960
    %v3041 = vpack.c.b16 %v2963, %v2962
    %v3042 = vpack.c.b16 %v2965, %v2964
    %v3043 = vpack.c.b16 %v2967, %v2966
    %v3044 = vpack.c.b16 %v2969, %v2968
    %v3045 = vpack.c.b16 %v2971, %v2970
    %v3046 = vpack.c.b16 %v2973, %v2972
    %v3047 = vpack.c.b16 %v2975, %v2974
    %v3048 = vpack.c.b16 %v2977, %v2976
    %v3049 = vpack.c.b16 %v2979, %v2978
    %v3050 = vpack.c.b16 %v2981, %v2980
    %v3051 = vpack.c.b16 %v2983, %v2982
    %v3052 = vpack.c.b16 %v2985, %v2984
    %v3053 = vpack.c.b16 %v2987, %v2986
    %v3054 = vpack.c.b16 %v2989, %v2988
    %v3055 = vpack.c.b16 %v2991, %v2990
    %3120 = vmatpush.bf16.msra.mxu0 %v2999
    %3121 = vmatpush.bf16.msra.mxu0 %v2998
    %3122 = vmatpush.bf16.msra.mxu0 %v2997
    %3123 = vmatpush.bf16.msra.mxu0 %v2996
    %3124 = vmatpush.bf16.msra.mxu0 %v2995
    %3125 = vmatpush.bf16.msra.mxu0 %v2994
    %3126 = vmatpush.bf16.msra.mxu0 %v2993
    %3127 = vmatpush.bf16.msra.mxu0 %v2992
    %3128 = vmatmul.bf16.gmra.mxu0 %v2596
    %v3129 = vpop.f32.mrf.mxu0
    %v3130 = vadd.f32 %v2734, %v3129
    %v3131 = vpop.f32.mrf.mxu0
    %3132 = vdwg.mxu0
    %3133 = vmatpush.bf16.msra.mxu0 %v3007
    %3134 = vmatpush.bf16.msra.mxu0 %v3006
    %3135 = vmatpush.bf16.msra.mxu0 %v3005
    %3136 = vmatpush.bf16.msra.mxu0 %v3004
    %3137 = vmatpush.bf16.msra.mxu0 %v3003
    %3138 = vmatpush.bf16.msra.mxu0 %v3002
    %3139 = vmatpush.bf16.msra.mxu0 %v3001
    %3140 = vmatpush.bf16.msra.mxu0 %v3000
    %3141 = vmatmul.bf16.gmra.mxu0 %v2597
    %v3142 = vpop.f32.mrf.mxu0
    %v3143 = vadd.f32 %v3130, %v3142
    %v3144 = vpop.f32.mrf.mxu0
    %3145 = vdwg.mxu0
    %3146 = vmatpush.bf16.msra.mxu0 %v3015
    %3147 = vmatpush.bf16.msra.mxu0 %v3014
    %3148 = vmatpush.bf16.msra.mxu0 %v3013
    %3149 = vmatpush.bf16.msra.mxu0 %v3012
    %3150 = vmatpush.bf16.msra.mxu0 %v3011
    %3151 = vmatpush.bf16.msra.mxu0 %v3010
    %3152 = vmatpush.bf16.msra.mxu0 %v3009
    %3153 = vmatpush.bf16.msra.mxu0 %v3008
    %3154 = vmatmul.bf16.gmra.mxu0 %v2598
    %v3155 = vpop.f32.mrf.mxu0
    %v3156 = vadd.f32 %v3143, %v3155
    %v3157 = vpop.f32.mrf.mxu0
    %3158 = vdwg.mxu0
    %3159 = vmatpush.bf16.msra.mxu0 %v3023
    %3160 = vmatpush.bf16.msra.mxu0 %v3022
    %3161 = vmatpush.bf16.msra.mxu0 %v3021
    %3162 = vmatpush.bf16.msra.mxu0 %v3020
    %3163 = vmatpush.bf16.msra.mxu0 %v3019
    %3164 = vmatpush.bf16.msra.mxu0 %v3018
    %3165 = vmatpush.bf16.msra.mxu0 %v3017
    %3166 = vmatpush.bf16.msra.mxu0 %v3016
    %3167 = vmatmul.bf16.gmra.mxu0 %v2599
    %v3168 = vpop.f32.mrf.mxu0
    %v3169 = vadd.f32 %v3156, %v3168
    %v3170 = vpop.f32.mrf.mxu0
    %3171 = vdwg.mxu0
    %3172 = vmatpush.bf16.msra.mxu0 %v3031
    %3173 = vmatpush.bf16.msra.mxu0 %v3030
    %3174 = vmatpush.bf16.msra.mxu0 %v3029
    %3175 = vmatpush.bf16.msra.mxu0 %v3028
    %3176 = vmatpush.bf16.msra.mxu0 %v3027
    %3177 = vmatpush.bf16.msra.mxu0 %v3026
    %3178 = vmatpush.bf16.msra.mxu0 %v3025
    %3179 = vmatpush.bf16.msra.mxu0 %v3024
    %3180 = vmatmul.bf16.gmra.mxu0 %v2600
    %v3181 = vpop.f32.mrf.mxu0
    %v3182 = vadd.f32 %v3169, %v3181
    %v3183 = vpop.f32.mrf.mxu0
    %3184 = vdwg.mxu0
    %3185 = vmatpush.bf16.msra.mxu0 %v3039
    %3186 = vmatpush.bf16.msra.mxu0 %v3038
    %3187 = vmatpush.bf16.msra.mxu0 %v3037
    %3188 = vmatpush.bf16.msra.mxu0 %v3036
    %3189 = vmatpush.bf16.msra.mxu0 %v3035
    %3190 = vmatpush.bf16.msra.mxu0 %v3034
    %3191 = vmatpush.bf16.msra.mxu0 %v3033
    %3192 = vmatpush.bf16.msra.mxu0 %v3032
    %3193 = vmatmul.bf16.gmra.mxu0 %v2601
    %v3194 = vpop.f32.mrf.mxu0
    %v3195 = vadd.f32 %v3182, %v3194
    %v3196 = vpop.f32.mrf.mxu0
    %3197 = vdwg.mxu0
    %3198 = vmatpush.bf16.msra.mxu0 %v3047
    %3199 = vmatpush.bf16.msra.mxu0 %v3046
    %3200 = vmatpush.bf16.msra.mxu0 %v3045
    %3201 = vmatpush.bf16.msra.mxu0 %v3044
    %3202 = vmatpush.bf16.msra.mxu0 %v3043
    %3203 = vmatpush.bf16.msra.mxu0 %v3042
    %3204 = vmatpush.bf16.msra.mxu0 %v3041
    %3205 = vmatpush.bf16.msra.mxu0 %v3040
    %3206 = vmatmul.bf16.gmra.mxu0 %v2602
    %v3207 = vpop.f32.mrf.mxu0
    %v3208 = vadd.f32 %v3195, %v3207
    %v3209 = vpop.f32.mrf.mxu0
    %3210 = vdwg.mxu0
    %3211 = vmatpush.bf16.msra.mxu0 %v3055
    %3212 = vmatpush.bf16.msra.mxu0 %v3054
    %3213 = vmatpush.bf16.msra.mxu0 %v3053
    %3214 = vmatpush.bf16.msra.mxu0 %v3052
    %3215 = vmatpush.bf16.msra.mxu0 %v3051
    %3216 = vmatpush.bf16.msra.mxu0 %v3050
    %3217 = vmatpush.bf16.msra.mxu0 %v3049
    %3218 = vmatpush.bf16.msra.mxu0 %v3048
    %3219 = vmatmul.bf16.gmra.mxu0 %v2603
    %v3220 = vpop.f32.mrf.mxu0
    %v3221 = vadd.f32 %v3208, %v3220
    %v3222 = vpop.f32.mrf.mxu0
    %3223 = vdwg.mxu0
    %vm3224 = vcmask 386048
    %3225 = vst.msk [vmem:[%s12] sm:$0x3] %vm3224, %v3221
    %v3226 = vld [vmem:[%s9] sm:$0xf]
    %v3227 = vld [vmem:[%s10] sm:$0xf]
    %v3228 = vld [vmem:[%s11] sm:$0x7]
    %v3229 = vmax.f32 %v3226, 0.0
    %vm3230 = vcmp.ne.f32.partialorder %v3226, %v3226
    %v3231 = vadd.f32 %v3226, 0.0
    %v3232 = vand.u32 2147483647, %v3226
    %v3233 = vsub.f32 0.0, %v3232
    %v3234 = vmul.f32 %v3233, 1.442695
    %v3235 = vpow.pop %v3234
    %v3236 = vadd.f32 %v3235, 1.0
    %v3237 = vlog2.pop %v3236
    %v3238 = vmul.f32 %v3237, 0.6931472
    %v3239 = vmul.f32 -0.5, %v3235
    %v3240 = vadd.f32 %v3239, 1.0
    %v3241 = vmul.f32 %v3240, %v3235
    %v3242 = vand.u32 2147483647, %v3235
    %vm3243 = vcmp.lt.f32.partialorder %v3242, 0.0004427343
    %v3244 = vsel %vm3243, %v3241, %v3238
    %v3245 = vadd.f32 %v3229, %v3244
    %v3246 = vsel %vm3230, %v3231, %v3245
    %v3247 = vtanh.pop %v3228
    %v3248 = vadd.f32 %v46, 0.5
    %v3249 = vperm.slane %v3246, 0
    %v3250 = vmul.f32 %v3248, %v3249
    %v3251 = vperm.slane %v3227, 0
    %v3252 = vadd.f32 %v3250, %v3251
    %v3253 = vtanh.pop %v3252
    %v3254 = vperm.slane %v3247, 0
    %v3255 = vmul.f32 %v3253, %v3254
    %v3256 = vadd.f32 %v3252, %v3255
    %v3257 = vperm.slane %v3246, 1
    %v3258 = vmul.f32 %v3256, %v3257
    %v3259 = vperm.slane %v3227, 1
    %v3260 = vadd.f32 %v3258, %v3259
    %v3261 = vtanh.pop %v3260
    %v3262 = vperm.slane %v3247, 1
    %v3263 = vmul.f32 %v3261, %v3262
    %v3264 = vadd.f32 %v3260, %v3263
    %v3265 = vperm.slane %v3246, 2
    %v3266 = vmul.f32 %v3264, %v3265
    %v3267 = vperm.slane %v3227, 2
    %v3268 = vadd.f32 %v3266, %v3267
    %v3269 = vtanh.pop %v3268
    %v3270 = vperm.slane %v3247, 2
    %v3271 = vmul.f32 %v3269, %v3270
    %v3272 = vadd.f32 %v3268, %v3271
    %v3273 = vperm.slane %v3246, 3
    %v3274 = vmul.f32 %v3272, %v3273
    %v3275 = vperm.slane %v3227, 3
    %v3276 = vadd.f32 %v3274, %v3275
    %v3277 = vsub.f32 0.0, %v3276
    %v3278 = vmul.f32 %v3277, 1.442695
    %v3279 = vpow.pop %v3278
    %v3280 = vadd.f32 %v3279, 1.0
    %v3281 = vrcp.pop %v3280
    %v3282 = vmul.f32 %v3280, %v3281
    %v3283 = vsub.f32 1.0, %v3282
    %v3284 = vmul.f32 %v3281, %v3283
    %v3285 = vadd.f32 %v3281, %v3284
    %vm3286 = vweird.f32 %v3280
    %vm3287 = vweird.f32 %v3281
    %vm3288 = vmor %vm3286, %vm3287
    %v3289 = vsel %vm3288, %v3281, %v3285
    %v3290 = vand.u32 2147483647, %v3280
    %vm3291 = vcmp.eq.f32.partialorder %v3290, 8.507059e+37
    %v3292 = vand.u32 %v3280, 2147483648
    %v3293 = vor.u32 1.1754944e-38, %v3292
    %v3294 = vsel %vm3291, %v3293, %v3289
    %v3295 = vmul.f32 1.0, %v3294
    %v3296 = vsub.f32 %v46, 0.5
    %v3297 = vmul.f32 %v3296, %v3249
    %v3298 = vadd.f32 %v3297, %v3251
    %v3299 = vtanh.pop %v3298
    %v3300 = vmul.f32 %v3299, %v3254
    %v3301 = vadd.f32 %v3298, %v3300
    %v3302 = vmul.f32 %v3301, %v3257
    %v3303 = vadd.f32 %v3302, %v3259
    %v3304 = vtanh.pop %v3303
    %v3305 = vmul.f32 %v3304, %v3262
    %v3306 = vadd.f32 %v3303, %v3305
    %v3307 = vmul.f32 %v3306, %v3265
    %v3308 = vadd.f32 %v3307, %v3267
    %v3309 = vtanh.pop %v3308
    %v3310 = vmul.f32 %v3309, %v3270
    %v3311 = vadd.f32 %v3308, %v3310
    %v3312 = vmul.f32 %v3311, %v3273
    %v3313 = vadd.f32 %v3312, %v3275
    %v3314 = vsub.f32 0.0, %v3313
    %v3315 = vmul.f32 %v3314, 1.442695
    %v3316 = vpow.pop %v3315
    %v3317 = vadd.f32 %v3316, 1.0
    %v3318 = vrcp.pop %v3317
    %v3319 = vmul.f32 %v3317, %v3318
    %v3320 = vsub.f32 1.0, %v3319
    %v3321 = vmul.f32 %v3318, %v3320
    %v3322 = vadd.f32 %v3318, %v3321
    %vm3323 = vweird.f32 %v3317
    %vm3324 = vweird.f32 %v3318
    %vm3325 = vmor %vm3323, %vm3324
    %v3326 = vsel %vm3325, %v3318, %v3322
    %v3327 = vand.u32 2147483647, %v3317
    %vm3328 = vcmp.eq.f32.partialorder %v3327, 8.507059e+37
    %v3329 = vand.u32 %v3317, 2147483648
    %v3330 = vor.u32 1.1754944e-38, %v3329
    %v3331 = vsel %vm3328, %v3330, %v3326
    %v3332 = vmul.f32 1.0, %v3331
    %v3333 = vsub.f32 %v3295, %v3332
    %v3334 = vadd.f32 %v3333, 1e-10
    %v3335 = vlog2.pop %v3334
    %v3336 = vmul.f32 %v3335, 0.6931472
    %v3337 = vsub.f32 0.0, %v3336
    %v3338 = vmul.f32 %v3337, 1.442695
    %v3339 = vmax.f32 %v3338, 0.0
    %v3340 = vmin.f32 %v3339, 50.0
    %vm3341 = vcmask 254976
    %v3342 = vsel %vm3341, %v3340, 0.0
    %3343 = vadd.xlane.f32.xlu0 %v3342
    %v3344 = vpop.xlane.xlu0 %3343
    %v3345 = vrot.slane %v3344, 4
    %v3346 = vadd.f32 %v3344, %v3345
    %v3347 = vrot.slane %v3346, 2
    %v3348 = vadd.f32 %v3346, %v3347
    %v3349 = vrot.slane %v3348, 1
    %v3350 = vadd.f32 %v3348, %v3349
    %s3351 = vtos %v3350
    %v3352 = vstv %s3351
    %vm3353 = vcmask 0
    %3354 = vst.msk [vmem:[#allocation2] sm:$0x1] %vm3353, %v3352
    // Predicated region
    $region50: #{forward.7} parent=1 // pred_check
      _
    $region51: #{forward.7} parent=1 // pred_check_branch
      %3356 = sbr.rel (0) target = $region53
    $region52: #{forward.7} parent=1 // pred_region
      _
    $region53: #{forward.7} parent=1 // pred_fallthru
      _
    // Predicated region
    $region54: #{forward.7} parent=1 // pred_check
      _
    $region55: #{forward.7} parent=1 // pred_check_branch
      %3358 = sbr.rel (0) target = $region57
    $region56: #{forward.7} parent=1 // pred_region
      %3360 = vsyncadd [#allocation3], 0
      %s3362 = sshll.u32 [#allocation2], 4
      %s3363 = int_to_ptr.vmem [resolvable:$true] %s3362
      %s3364 = sshll.u32 %s13, 4
      %s3365 = int_to_ptr.hbm [resolvable:$true] %s3364
      %3367 = dma.vmem_to_hbm [thread:$0]  %s3363, 16, %s3365, [#allocation3]
    $region57: #{forward.7} parent=1 // pred_fallthru
      _
    // Predicated region
    $region58: #{forward.7} parent=1 // pred_check
      _
    $region59: #{forward.7} parent=1 // pred_check_branch
      %3369 = sbr.rel (0) target = $region61
    $region60: #{forward.7} parent=1 // pred_region
      _
    $region61: #{forward.7} parent=1 // pred_fallthru
      _
    // Predicated region
    $region62: #{forward.7} parent=1 // pred_check
      _
    $region63: #{forward.7} parent=1 // pred_check_branch
      %3371 = sbr.rel (0) target = $region65
    $region64: #{forward.7} parent=1 // pred_region
      %3373 = dma.done [#allocation3], 16
    $region65: #{forward.7} parent=1 // pred_fallthru
      _
    %3374 = vsyncpa [#allocation3], 1

// kernel: forward.6
$region0: #{forward.6}
  #allocation0 [shape = 'u32[]', space=smem, size = 0x4, offset = 0x4, fixed_abs, tag = 'smem constant byte address 0x4 - core index']
  #allocation1 [shape = 'u32[72,128]{1,0:T(1,128)}', space=vmem, size = 0x9000, scoped, tag = 'internal scratch']
  #allocation2 [shape = 'f32[32,1]{1,0:T(8,128)}', space=vmem, size = 0x4000, scoped, tag = 'scratch operand']
  %s0 = inlined_call_operand.vmem [shape: bf16[2,128,16], index: 0, kind: input, shape index: {}]
  %s1 = inlined_call_operand.vmem [shape: f32[2,3,16], index: 1, kind: input, shape index: {}]
  %s2 = inlined_call_operand.vmem [shape: bf16[256,128], index: 2, kind: input, shape index: {}]
  %s3 = inlined_call_operand.vmem [shape: f32[256,3], index: 3, kind: input, shape index: {}]
  %s4 = inlined_call_operand.vmem [shape: f32[256,1], index: 4, kind: input, shape index: {}]
  %s5 = inlined_call_operand.vmem [shape: bf16[512,256], index: 5, kind: input, shape index: {}]
  %s6 = inlined_call_operand.vmem [shape: f32[512,1], index: 6, kind: input, shape index: {}]
  %s7 = inlined_call_operand.vmem [shape: bf16[1024,512], index: 7, kind: input, shape index: {}]
  %s8 = inlined_call_operand.vmem [shape: f32[1024,1], index: 8, kind: input, shape index: {}]
  %s9 = inlined_call_operand.vmem [shape: bf16[32,1024], index: 9, kind: input, shape index: {}]
  %s10 = inlined_call_operand.vmem [shape: f32[32,1], index: 10, kind: input, shape index: {}]
  %s11 = inlined_call_operand.vmem [shape: f32[2,32,1], index: 11, kind: output, shape index: {}]
  %s12 = sld [smem:[#allocation0]]
  $region85: #{forward.6} parent=0
    _
  %s14 = ssub.s32 1, %s12
  %s15 = scalar_select 0, %s14, %s12
  loop: start=0, step=1, limit=4
  $region2: #{forward.6} parent=0 // loop_pre_header
    _
  $region3: #{forward.6} parent=0 // loop_header
    %s17 = sphi 0, %s21
    %p18 = scmp.ge.s32.totalorder %s17, 4
    %s24 = sphi 0, %s36
    %s25 = sphi 0, %s32
    %s26 = sphi 0, %s24
    %s27 = sphi 0, %s25
    %s28 = sphi 0, %s26
    %s29 = sphi 0, %s27
    %s41 = sphi 0, %s43
    %s44 = sphi 0, %s41
    %s45 = sphi 0, %s44
    %s61 = sphi 0, %s45
    %s69 = sphi 0, %s71
    %s72 = sphi 0, %s69
    %s73 = sphi 0, %s72
    %s89 = sphi 0, %s73
    %s93 = sphi 0, %s93
    %s95 = sphi 0, %s93
    %s96 = sphi 0, %s95
    %s110 = sphi 0, %s96
    %s114 = sphi 0, %s114
    %s116 = sphi 0, %s114
    %s117 = sphi 0, %s116
    %s131 = sphi 0, %s117
    %s135 = sphi 0, %s135
    %s137 = sphi 0, %s135
    %s138 = sphi 0, %s137
    %s152 = sphi 0, %s138
    %s156 = sphi 0, %s156
    %s158 = sphi 0, %s156
    %s159 = sphi 0, %s158
    %s173 = sphi 0, %s159
    %s177 = sphi 0, %s177
    %s179 = sphi 0, %s177
    %s180 = sphi 0, %s179
    %s194 = sphi 0, %s180
    %s198 = sphi 0, %s198
    %s200 = sphi 0, %s198
    %s201 = sphi 0, %s200
    %s215 = sphi 0, %s201
    %s219 = sphi 0, %s219
    %s221 = sphi 0, %s219
    %s222 = sphi 0, %s221
    %s236 = sphi 0, %s222
    %s240 = sphi 0, %s240
    %s242 = sphi 0, %s240
    %s243 = sphi 0, %s242
    %s257 = sphi 0, %s243
    %s261 = sphi 0, %s261
    %s263 = sphi 0, %s261
    %s264 = sphi 0, %s263
    %s278 = sphi 0, %s264
    %s284 = sphi 0, %s286
    %s287 = sphi 0, %s284
    %s288 = sphi 0, %s287
    %s304 = sphi 0, %s288
  $region4: #{forward.6} parent=0 // loop_header_branch
    %20 = sbr.rel (%p18) target = $region8
  $region5: #{forward.6} parent=0 // loop_body
    %s22 = ssub.s32 %s17, 1
    %s23 = ssub.s32 %s17, 2
    %s30 = sadd.s32 1, %s25
    %p31 = scmp.ge.s32.totalorder %s30, 1
    %s32 = scalar_select %p31, 0, %s30
    %s33 = sadd.s32 1, %s24
    %s34 = scalar_select %p31, %s33, %s24
    %p35 = scmp.ge.s32.totalorder %s34, 2
    %s36 = scalar_select %p35, 0, %s34
    %s37 = ssub.s32 %s24, %s36
    %s38 = ssub.s32 %s25, %s32
    %s39 = sor.u32 %s37, %s38
    %p40 = scmp.eq.s32.totalorder %s39, 0
    %s42 = sadd.s32 %s41, 1
    %s43 = scalar_select %p40, %s41, %s42
    %p46 = pneg %p40
    %p47 = scmp.eq.s32.totalorder %s17, 1
    %p48 = por %p46, %p47
    %p49 = scmp.ne.s32.totalorder %s41, %s44
    %p50 = scmp.eq.s32.totalorder %s17, 0
    %p51 = por %p49, %p50
    %p52 = scmp.ne.s32.totalorder %s41, %s44
    %p53 = scmp.eq.s32.totalorder %s22, 1
    %p54 = por %p52, %p53
    %p55 = scmp.ne.s32.totalorder %s44, %s45
    %p56 = scmp.eq.s32.totalorder %s22, 0
    %p57 = por %p55, %p56
    %p58 = scmp.ne.s32.totalorder %s44, %s45
    %p59 = scmp.eq.s32.totalorder %s23, 1
    %p60 = por %p58, %p59
    %p62 = scmp.ne.s32.totalorder %s45, %s61
    %p63 = scmp.eq.s32.totalorder %s23, 0
    %p64 = por %p62, %p63
    %s65 = ssub.s32 %s24, %s36
    %s66 = ssub.s32 %s25, %s32
    %s67 = sor.u32 %s65, %s66
    %p68 = scmp.eq.s32.totalorder %s67, 0
    %s70 = sadd.s32 %s69, 1
    %s71 = scalar_select %p68, %s69, %s70
    %p74 = pneg %p68
    %p75 = scmp.eq.s32.totalorder %s17, 1
    %p76 = por %p74, %p75
    %p77 = scmp.ne.s32.totalorder %s69, %s72
    %p78 = scmp.eq.s32.totalorder %s17, 0
    %p79 = por %p77, %p78
    %p80 = scmp.ne.s32.totalorder %s69, %s72
    %p81 = scmp.eq.s32.totalorder %s22, 1
    %p82 = por %p80, %p81
    %p83 = scmp.ne.s32.totalorder %s72, %s73
    %p84 = scmp.eq.s32.totalorder %s22, 0
    %p85 = por %p83, %p84
    %p86 = scmp.ne.s32.totalorder %s72, %s73
    %p87 = scmp.eq.s32.totalorder %s23, 1
    %p88 = por %p86, %p87
    %p90 = scmp.ne.s32.totalorder %s73, %s89
    %p91 = scmp.eq.s32.totalorder %s23, 0
    %p92 = por %p90, %p91
    %s94 = sadd.s32 %s93, 1
    %p97 = scmp.eq.s32.totalorder %s17, 1
    %p98 = scmp.ne.s32.totalorder %s93, %s95
    %p99 = scmp.eq.s32.totalorder %s17, 0
    %p100 = por %p98, %p99
    %p101 = scmp.ne.s32.totalorder %s93, %s95
    %p102 = scmp.eq.s32.totalorder %s22, 1
    %p103 = por %p101, %p102
    %p104 = scmp.ne.s32.totalorder %s95, %s96
    %p105 = scmp.eq.s32.totalorder %s22, 0
    %p106 = por %p104, %p105
    %p107 = scmp.ne.s32.totalorder %s95, %s96
    %p108 = scmp.eq.s32.totalorder %s23, 1
    %p109 = por %p107, %p108
    %p111 = scmp.ne.s32.totalorder %s96, %s110
    %p112 = scmp.eq.s32.totalorder %s23, 0
    %p113 = por %p111, %p112
    %s115 = sadd.s32 %s114, 1
    %p118 = scmp.eq.s32.totalorder %s17, 1
    %p119 = scmp.ne.s32.totalorder %s114, %s116
    %p120 = scmp.eq.s32.totalorder %s17, 0
    %p121 = por %p119, %p120
    %p122 = scmp.ne.s32.totalorder %s114, %s116
    %p123 = scmp.eq.s32.totalorder %s22, 1
    %p124 = por %p122, %p123
    %p125 = scmp.ne.s32.totalorder %s116, %s117
    %p126 = scmp.eq.s32.totalorder %s22, 0
    %p127 = por %p125, %p126
    %p128 = scmp.ne.s32.totalorder %s116, %s117
    %p129 = scmp.eq.s32.totalorder %s23, 1
    %p130 = por %p128, %p129
    %p132 = scmp.ne.s32.totalorder %s117, %s131
    %p133 = scmp.eq.s32.totalorder %s23, 0
    %p134 = por %p132, %p133
    %s136 = sadd.s32 %s135, 1
    %p139 = scmp.eq.s32.totalorder %s17, 1
    %p140 = scmp.ne.s32.totalorder %s135, %s137
    %p141 = scmp.eq.s32.totalorder %s17, 0
    %p142 = por %p140, %p141
    %p143 = scmp.ne.s32.totalorder %s135, %s137
    %p144 = scmp.eq.s32.totalorder %s22, 1
    %p145 = por %p143, %p144
    %p146 = scmp.ne.s32.totalorder %s137, %s138
    %p147 = scmp.eq.s32.totalorder %s22, 0
    %p148 = por %p146, %p147
    %p149 = scmp.ne.s32.totalorder %s137, %s138
    %p150 = scmp.eq.s32.totalorder %s23, 1
    %p151 = por %p149, %p150
    %p153 = scmp.ne.s32.totalorder %s138, %s152
    %p154 = scmp.eq.s32.totalorder %s23, 0
    %p155 = por %p153, %p154
    %s157 = sadd.s32 %s156, 1
    %p160 = scmp.eq.s32.totalorder %s17, 1
    %p161 = scmp.ne.s32.totalorder %s156, %s158
    %p162 = scmp.eq.s32.totalorder %s17, 0
    %p163 = por %p161, %p162
    %p164 = scmp.ne.s32.totalorder %s156, %s158
    %p165 = scmp.eq.s32.totalorder %s22, 1
    %p166 = por %p164, %p165
    %p167 = scmp.ne.s32.totalorder %s158, %s159
    %p168 = scmp.eq.s32.totalorder %s22, 0
    %p169 = por %p167, %p168
    %p170 = scmp.ne.s32.totalorder %s158, %s159
    %p171 = scmp.eq.s32.totalorder %s23, 1
    %p172 = por %p170, %p171
    %p174 = scmp.ne.s32.totalorder %s159, %s173
    %p175 = scmp.eq.s32.totalorder %s23, 0
    %p176 = por %p174, %p175
    %s178 = sadd.s32 %s177, 1
    %p181 = scmp.eq.s32.totalorder %s17, 1
    %p182 = scmp.ne.s32.totalorder %s177, %s179
    %p183 = scmp.eq.s32.totalorder %s17, 0
    %p184 = por %p182, %p183
    %p185 = scmp.ne.s32.totalorder %s177, %s179
    %p186 = scmp.eq.s32.totalorder %s22, 1
    %p187 = por %p185, %p186
    %p188 = scmp.ne.s32.totalorder %s179, %s180
    %p189 = scmp.eq.s32.totalorder %s22, 0
    %p190 = por %p188, %p189
    %p191 = scmp.ne.s32.totalorder %s179, %s180
    %p192 = scmp.eq.s32.totalorder %s23, 1
    %p193 = por %p191, %p192
    %p195 = scmp.ne.s32.totalorder %s180, %s194
    %p196 = scmp.eq.s32.totalorder %s23, 0
    %p197 = por %p195, %p196
    %s199 = sadd.s32 %s198, 1
    %p202 = scmp.eq.s32.totalorder %s17, 1
    %p203 = scmp.ne.s32.totalorder %s198, %s200
    %p204 = scmp.eq.s32.totalorder %s17, 0
    %p205 = por %p203, %p204
    %p206 = scmp.ne.s32.totalorder %s198, %s200
    %p207 = scmp.eq.s32.totalorder %s22, 1
    %p208 = por %p206, %p207
    %p209 = scmp.ne.s32.totalorder %s200, %s201
    %p210 = scmp.eq.s32.totalorder %s22, 0
    %p211 = por %p209, %p210
    %p212 = scmp.ne.s32.totalorder %s200, %s201
    %p213 = scmp.eq.s32.totalorder %s23, 1
    %p214 = por %p212, %p213
    %p216 = scmp.ne.s32.totalorder %s201, %s215
    %p217 = scmp.eq.s32.totalorder %s23, 0
    %p218 = por %p216, %p217
    %s220 = sadd.s32 %s219, 1
    %p223 = scmp.eq.s32.totalorder %s17, 1
    %p224 = scmp.ne.s32.totalorder %s219, %s221
    %p225 = scmp.eq.s32.totalorder %s17, 0
    %p226 = por %p224, %p225
    %p227 = scmp.ne.s32.totalorder %s219, %s221
    %p228 = scmp.eq.s32.totalorder %s22, 1
    %p229 = por %p227, %p228
    %p230 = scmp.ne.s32.totalorder %s221, %s222
    %p231 = scmp.eq.s32.totalorder %s22, 0
    %p232 = por %p230, %p231
    %p233 = scmp.ne.s32.totalorder %s221, %s222
    %p234 = scmp.eq.s32.totalorder %s23, 1
    %p235 = por %p233, %p234
    %p237 = scmp.ne.s32.totalorder %s222, %s236
    %p238 = scmp.eq.s32.totalorder %s23, 0
    %p239 = por %p237, %p238
    %s241 = sadd.s32 %s240, 1
    %p244 = scmp.eq.s32.totalorder %s17, 1
    %p245 = scmp.ne.s32.totalorder %s240, %s242
    %p246 = scmp.eq.s32.totalorder %s17, 0
    %p247 = por %p245, %p246
    %p248 = scmp.ne.s32.totalorder %s240, %s242
    %p249 = scmp.eq.s32.totalorder %s22, 1
    %p250 = por %p248, %p249
    %p251 = scmp.ne.s32.totalorder %s242, %s243
    %p252 = scmp.eq.s32.totalorder %s22, 0
    %p253 = por %p251, %p252
    %p254 = scmp.ne.s32.totalorder %s242, %s243
    %p255 = scmp.eq.s32.totalorder %s23, 1
    %p256 = por %p254, %p255
    %p258 = scmp.ne.s32.totalorder %s243, %s257
    %p259 = scmp.eq.s32.totalorder %s23, 0
    %p260 = por %p258, %p259
    %s262 = sadd.s32 %s261, 1
    %p265 = scmp.eq.s32.totalorder %s17, 1
    %p266 = scmp.ne.s32.totalorder %s261, %s263
    %p267 = scmp.eq.s32.totalorder %s17, 0
    %p268 = por %p266, %p267
    %p269 = scmp.ne.s32.totalorder %s261, %s263
    %p270 = scmp.eq.s32.totalorder %s22, 1
    %p271 = por %p269, %p270
    %p272 = scmp.ne.s32.totalorder %s263, %s264
    %p273 = scmp.eq.s32.totalorder %s22, 0
    %p274 = por %p272, %p273
    %p275 = scmp.ne.s32.totalorder %s263, %s264
    %p276 = scmp.eq.s32.totalorder %s23, 1
    %p277 = por %p275, %p276
    %p279 = scmp.ne.s32.totalorder %s264, %s278
    %p280 = scmp.eq.s32.totalorder %s23, 0
    %p281 = por %p279, %p280
    %s282 = ssub.s32 %s24, %s36
    %p283 = scmp.eq.s32.totalorder %s282, 0
    %s285 = sadd.s32 %s284, 1
    %s286 = scalar_select %p283, %s284, %s285
    %p289 = pneg %p283
    %p290 = scmp.eq.s32.totalorder %s17, 1
    %p291 = por %p289, %p290
    %p292 = scmp.ne.s32.totalorder %s284, %s287
    %p293 = scmp.eq.s32.totalorder %s17, 0
    %p294 = por %p292, %p293
    %p295 = scmp.ne.s32.totalorder %s284, %s287
    %p296 = scmp.eq.s32.totalorder %s22, 1
    %p297 = por %p295, %p296
    %p298 = scmp.ne.s32.totalorder %s287, %s288
    %p299 = scmp.eq.s32.totalorder %s22, 0
    %p300 = por %p298, %p299
    %p301 = scmp.ne.s32.totalorder %s287, %s288
    %p302 = scmp.eq.s32.totalorder %s23, 1
    %p303 = por %p301, %p302
    %p305 = scmp.ne.s32.totalorder %s288, %s304
    %p306 = scmp.eq.s32.totalorder %s23, 0
    %p307 = por %p305, %p306
    %p308 = scmp.le.s32.totalorder 1, %s17
    %p309 = scmp.lt.s32.totalorder %s17, 3
    %p310 = pnand %p308, %p309
    %p311 = pneg %p310
    // Predicated region
    $region9: #{forward.6} parent=5 // pred_check
      _
    $region10: #{forward.6} parent=5 // pred_check_branch
      %313 = sbr.rel (%p310) target = $region12
    $region11: #{forward.6} parent=5 // pred_region
      %s314 = ssub.s32 %s17, 1
      // Predicated region
      $region13: #{forward.6} parent=11 // pred_check
        %p315 = pneg %p106
      $region14: #{forward.6} parent=11 // pred_check_branch
        %317 = sbr.rel (%p315) target = $region16
      $region15: #{forward.6} parent=11 // pred_region
        _
      $region16: #{forward.6} parent=11 // pred_fallthru
        _
      // Predicated region
      $region17: #{forward.6} parent=11 // pred_check
        %p318 = pneg %p127
      $region18: #{forward.6} parent=11 // pred_check_branch
        %320 = sbr.rel (%p318) target = $region20
      $region19: #{forward.6} parent=11 // pred_region
        _
      $region20: #{forward.6} parent=11 // pred_fallthru
        _
      // Predicated region
      $region21: #{forward.6} parent=11 // pred_check
        %p321 = pneg %p148
      $region22: #{forward.6} parent=11 // pred_check_branch
        %323 = sbr.rel (%p321) target = $region24
      $region23: #{forward.6} parent=11 // pred_region
        _
      $region24: #{forward.6} parent=11 // pred_fallthru
        _
      // Predicated region
      $region25: #{forward.6} parent=11 // pred_check
        %p324 = pneg %p169
      $region26: #{forward.6} parent=11 // pred_check_branch
        %326 = sbr.rel (%p324) target = $region28
      $region27: #{forward.6} parent=11 // pred_region
        _
      $region28: #{forward.6} parent=11 // pred_fallthru
        _
      // Predicated region
      $region29: #{forward.6} parent=11 // pred_check
        %p327 = pneg %p190
      $region30: #{forward.6} parent=11 // pred_check_branch
        %329 = sbr.rel (%p327) target = $region32
      $region31: #{forward.6} parent=11 // pred_region
        _
      $region32: #{forward.6} parent=11 // pred_fallthru
        _
      // Predicated region
      $region33: #{forward.6} parent=11 // pred_check
        %p330 = pneg %p211
      $region34: #{forward.6} parent=11 // pred_check_branch
        %332 = sbr.rel (%p330) target = $region36
      $region35: #{forward.6} parent=11 // pred_region
        _
      $region36: #{forward.6} parent=11 // pred_fallthru
        _
      // Predicated region
      $region37: #{forward.6} parent=11 // pred_check
        %p333 = pneg %p232
      $region38: #{forward.6} parent=11 // pred_check_branch
        %335 = sbr.rel (%p333) target = $region40
      $region39: #{forward.6} parent=11 // pred_region
        _
      $region40: #{forward.6} parent=11 // pred_fallthru
        _
      // Predicated region
      $region41: #{forward.6} parent=11 // pred_check
        %p336 = pneg %p253
      $region42: #{forward.6} parent=11 // pred_check_branch
        %338 = sbr.rel (%p336) target = $region44
      $region43: #{forward.6} parent=11 // pred_region
        _
      $region44: #{forward.6} parent=11 // pred_fallthru
        _
      // Predicated region
      $region45: #{forward.6} parent=11 // pred_check
        %p339 = pneg %p274
      $region46: #{forward.6} parent=11 // pred_check_branch
        %341 = sbr.rel (%p339) target = $region48
      $region47: #{forward.6} parent=11 // pred_region
        _
      $region48: #{forward.6} parent=11 // pred_fallthru
        _
    $region12: #{forward.6} parent=5 // pred_fallthru
      _
    %p342 = scmp.lt.s32.totalorder %s17, 2
    // Predicated region
    $region49: #{forward.6} parent=5 // pred_check
      %p343 = pneg %p342
    $region50: #{forward.6} parent=5 // pred_check_branch
      %345 = sbr.rel (%p343) target = $region52
    $region51: #{forward.6} parent=5 // pred_region
      // Predicated region
      $region53: #{forward.6} parent=51 // pred_check
        %p346 = pneg %p51
      $region54: #{forward.6} parent=51 // pred_check_branch
        %348 = sbr.rel (%p346) target = $region56
      $region55: #{forward.6} parent=51 // pred_region
        %p349 = scmp.lt.s32.totalorder %s24, 1
        %s350 = scalar_select %p349, %s24, 1
        %p351 = scmp.lt.s32.totalorder %s25, 0
        %s352 = scalar_select %p351, %s25, 0
        %s353 = smul.addr %s350, 16
        %s354 = sadd.s32 %s352, %s353
        %s355 = smul.addr %s354, 4
        %s356 = scalar_lea.vmem %s0, %s355
      $region56: #{forward.6} parent=51 // pred_fallthru
        _
      // Predicated region
      $region57: #{forward.6} parent=51 // pred_check
        %p357 = pneg %p79
      $region58: #{forward.6} parent=51 // pred_check_branch
        %359 = sbr.rel (%p357) target = $region60
      $region59: #{forward.6} parent=51 // pred_region
        %p360 = scmp.lt.s32.totalorder %s24, 1
        %s361 = scalar_select %p360, %s24, 1
        %p362 = scmp.lt.s32.totalorder %s25, 0
        %s363 = scalar_select %p362, %s25, 0
        %s364 = sadd.s32 %s363, %s361
        %s365 = smul.addr %s364, 4
        %s366 = scalar_lea.vmem %s1, %s365
      $region60: #{forward.6} parent=51 // pred_fallthru
        _
    $region52: #{forward.6} parent=5 // pred_fallthru
      _
    %p367 = scmp.le.s32.totalorder 1, %s17
    %p368 = scmp.lt.s32.totalorder %s17, 3
    %p369 = pnand %p367, %p368
    %p370 = pneg %p369
    // Predicated region
    $region61: #{forward.6} parent=5 // pred_check
      _
    $region62: #{forward.6} parent=5 // pred_check_branch
      %372 = sbr.rel (%p369) target = $region64
    $region63: #{forward.6} parent=5 // pred_region
      %s373 = ssub.s32 %s17, 1
      %p374 = scmp.lt.s32.totalorder %s26, 1
      %s375 = scalar_select %p374, %s26, 1
      %p376 = scmp.lt.s32.totalorder %s27, 0
      %s377 = scalar_select %p376, %s27, 0
      %s378 = smul.addr %s375, 16
      %s379 = sadd.s32 %s377, %s378
      %s380 = smul.addr %s379, 4
      %s381 = scalar_lea.vmem %s0, %s380
      %p382 = pneg %p57
      %p383 = pneg %p54
      %p384 = scmp.lt.s32.totalorder %s26, 1
      %s385 = scalar_select %p384, %s26, 1
      %p386 = scmp.lt.s32.totalorder %s27, 0
      %s387 = scalar_select %p386, %s27, 0
      %s388 = sadd.s32 %s387, %s385
      %s389 = smul.addr %s388, 4
      %s390 = scalar_lea.vmem %s1, %s389
      %p391 = pneg %p85
      %p392 = pneg %p82
      %p393 = pneg %p106
      %p394 = pneg %p103
      %p395 = pneg %p127
      %p396 = pneg %p124
      %p397 = pneg %p148
      %p398 = pneg %p145
      %p399 = pneg %p169
      %p400 = pneg %p166
      %p401 = pneg %p190
      %p402 = pneg %p187
      %p403 = pneg %p211
      %p404 = pneg %p208
      %p405 = pneg %p232
      %p406 = pneg %p229
      %p407 = pneg %p253
      %p408 = pneg %p250
      %p409 = pneg %p274
      %p410 = pneg %p271
      %p411 = pneg %p300
      %p412 = pneg %p297
      %p413 = scmp.lt.s32.totalorder %s26, 1
      %s414 = scalar_select %p413, %s26, 1
      %s415 = smul.addr %s414, 4
      %s416 = smul.addr %s415, 8
      %s417 = scalar_lea.vmem %s11, %s416
      %p418 = scmp.lt.s32.totalorder %s26, 1
      %s419 = scalar_select %p418, %s26, 1
      %p420 = scmp.lt.s32.totalorder %s27, 0
      %s421 = scalar_select %p420, %s27, 0
      %s422 = smul.addr %s419, 16
      %s423 = sadd.s32 %s421, %s422
      %s424 = smul.addr %s423, 4
      %s425 = scalar_lea.vmem %s0, %s424
      %p426 = scmp.lt.s32.totalorder %s26, 1
      %s427 = scalar_select %p426, %s26, 1
      %p428 = scmp.lt.s32.totalorder %s27, 0
      %s429 = scalar_select %p428, %s27, 0
      %s430 = sadd.s32 %s429, %s427
      %s431 = smul.addr %s430, 4
      %s432 = scalar_lea.vmem %s1, %s431
      %p433 = scmp.lt.s32.totalorder %s26, 1
      %s434 = scalar_select %p433, %s26, 1
      %s435 = smul.addr %s434, 4
      %s436 = smul.addr %s435, 8
      %s437 = scalar_lea.vmem %s11, %s436
      %p438 = scmp.eq.s32.totalorder %s27, 0
      // Predicated region
      $region65: #{forward.6} parent=63 // pred_check
        %p439 = pneg %p438
      $region66: #{forward.6} parent=63 // pred_check_branch
        %441 = sbr.rel (%p439) target = $region68
      $region67: #{forward.6} parent=63 // pred_region
        %vm442 = vcmask 7168
        %443 = vst.msk [vmem:[#allocation2] sm:$0xff] %vm442, -inf
        %444 = vst.msk [vmem:[#allocation2 + $0x8] sm:$0xff] %vm442, -inf
        %445 = vst.msk [vmem:[#allocation2 + $0x10] sm:$0xff] %vm442, -inf
        %446 = vst.msk [vmem:[#allocation2 + $0x18] sm:$0xff] %vm442, -inf
      $region68: #{forward.6} parent=63 // pred_fallthru
        _
      %v447 = vld [vmem:[%s425] sm:$0xf]
      %v448 = vld [vmem:[%s425 + $0x4] sm:$0xf]
      %v449 = vld [vmem:[%s425 + $0x8] sm:$0xf]
      %v450 = vld [vmem:[%s425 + $0xc] sm:$0xf]
      %v451 = vld [vmem:[%s425 + $0x10] sm:$0xf]
      %v452 = vld [vmem:[%s425 + $0x14] sm:$0xf]
      %v453 = vld [vmem:[%s425 + $0x18] sm:$0xf]
      %v454 = vld [vmem:[%s425 + $0x1c] sm:$0xf]
      %v455 = vld [vmem:[%s425 + $0x20] sm:$0xf]
      %v456 = vld [vmem:[%s425 + $0x24] sm:$0xf]
      %v457 = vld [vmem:[%s425 + $0x28] sm:$0xf]
      %v458 = vld [vmem:[%s425 + $0x2c] sm:$0xf]
      %v459 = vld [vmem:[%s425 + $0x30] sm:$0xf]
      %v460 = vld [vmem:[%s425 + $0x34] sm:$0xf]
      %v461 = vld [vmem:[%s425 + $0x38] sm:$0xf]
      %v462 = vld [vmem:[%s425 + $0x3c] sm:$0xf]
      %v463 = vld [vmem:[%s432] sm:$0x7]
      %v464 = vld [vmem:[%s3] sm:$0xff]
      %v465 = vld [vmem:[%s3 + $0x8] sm:$0xff]
      %v466 = vld [vmem:[%s3 + $0x10] sm:$0xff]
      %v467 = vld [vmem:[%s3 + $0x18] sm:$0xff]
      %v468 = vld [vmem:[%s3 + $0x20] sm:$0xff]
      %v469 = vld [vmem:[%s3 + $0x28] sm:$0xff]
      %v470 = vld [vmem:[%s3 + $0x30] sm:$0xff]
      %v471 = vld [vmem:[%s3 + $0x38] sm:$0xff]
      %v472 = vld [vmem:[%s3 + $0x40] sm:$0xff]
      %v473 = vld [vmem:[%s3 + $0x48] sm:$0xff]
      %v474 = vld [vmem:[%s3 + $0x50] sm:$0xff]
      %v475 = vld [vmem:[%s3 + $0x58] sm:$0xff]
      %v476 = vld [vmem:[%s3 + $0x60] sm:$0xff]
      %v477 = vld [vmem:[%s3 + $0x68] sm:$0xff]
      %v478 = vld [vmem:[%s3 + $0x70] sm:$0xff]
      %v479 = vld [vmem:[%s3 + $0x78] sm:$0xff]
      %v480 = vld [vmem:[%s3 + $0x80] sm:$0xff]
      %v481 = vld [vmem:[%s3 + $0x88] sm:$0xff]
      %v482 = vld [vmem:[%s3 + $0x90] sm:$0xff]
      %v483 = vld [vmem:[%s3 + $0x98] sm:$0xff]
      %v484 = vld [vmem:[%s3 + $0xa0] sm:$0xff]
      %v485 = vld [vmem:[%s3 + $0xa8] sm:$0xff]
      %v486 = vld [vmem:[%s3 + $0xb0] sm:$0xff]
      %v487 = vld [vmem:[%s3 + $0xb8] sm:$0xff]
      %v488 = vld [vmem:[%s3 + $0xc0] sm:$0xff]
      %v489 = vld [vmem:[%s3 + $0xc8] sm:$0xff]
      %v490 = vld [vmem:[%s3 + $0xd0] sm:$0xff]
      %v491 = vld [vmem:[%s3 + $0xd8] sm:$0xff]
      %v492 = vld [vmem:[%s3 + $0xe0] sm:$0xff]
      %v493 = vld [vmem:[%s3 + $0xe8] sm:$0xff]
      %v494 = vld [vmem:[%s3 + $0xf0] sm:$0xff]
      %v495 = vld [vmem:[%s3 + $0xf8] sm:$0xff]
      %v496 = vld [vmem:[%s4] sm:$0xff]
      %v497 = vld [vmem:[%s4 + $0x8] sm:$0xff]
      %v498 = vld [vmem:[%s4 + $0x10] sm:$0xff]
      %v499 = vld [vmem:[%s4 + $0x18] sm:$0xff]
      %v500 = vld [vmem:[%s4 + $0x20] sm:$0xff]
      %v501 = vld [vmem:[%s4 + $0x28] sm:$0xff]
      %v502 = vld [vmem:[%s4 + $0x30] sm:$0xff]
      %v503 = vld [vmem:[%s4 + $0x38] sm:$0xff]
      %v504 = vld [vmem:[%s4 + $0x40] sm:$0xff]
      %v505 = vld [vmem:[%s4 + $0x48] sm:$0xff]
      %v506 = vld [vmem:[%s4 + $0x50] sm:$0xff]
      %v507 = vld [vmem:[%s4 + $0x58] sm:$0xff]
      %v508 = vld [vmem:[%s4 + $0x60] sm:$0xff]
      %v509 = vld [vmem:[%s4 + $0x68] sm:$0xff]
      %v510 = vld [vmem:[%s4 + $0x70] sm:$0xff]
      %v511 = vld [vmem:[%s4 + $0x78] sm:$0xff]
      %v512 = vld [vmem:[%s4 + $0x80] sm:$0xff]
      %v513 = vld [vmem:[%s4 + $0x88] sm:$0xff]
      %v514 = vld [vmem:[%s4 + $0x90] sm:$0xff]
      %v515 = vld [vmem:[%s4 + $0x98] sm:$0xff]
      %v516 = vld [vmem:[%s4 + $0xa0] sm:$0xff]
      %v517 = vld [vmem:[%s4 + $0xa8] sm:$0xff]
      %v518 = vld [vmem:[%s4 + $0xb0] sm:$0xff]
      %v519 = vld [vmem:[%s4 + $0xb8] sm:$0xff]
      %v520 = vld [vmem:[%s4 + $0xc0] sm:$0xff]
      %v521 = vld [vmem:[%s4 + $0xc8] sm:$0xff]
      %v522 = vld [vmem:[%s4 + $0xd0] sm:$0xff]
      %v523 = vld [vmem:[%s4 + $0xd8] sm:$0xff]
      %v524 = vld [vmem:[%s4 + $0xe0] sm:$0xff]
      %v525 = vld [vmem:[%s4 + $0xe8] sm:$0xff]
      %v526 = vld [vmem:[%s4 + $0xf0] sm:$0xff]
      %v527 = vld [vmem:[%s4 + $0xf8] sm:$0xff]
      %v528 = vld [vmem:[%s2] sm:$0xf]
      %v529 = vld [vmem:[%s2 + $0x4] sm:$0xf]
      %v530 = vld [vmem:[%s2 + $0x8] sm:$0xf]
      %v531 = vld [vmem:[%s2 + $0xc] sm:$0xf]
      %v532 = vld [vmem:[%s2 + $0x10] sm:$0xf]
      %v533 = vld [vmem:[%s2 + $0x14] sm:$0xf]
      %v534 = vld [vmem:[%s2 + $0x18] sm:$0xf]
      %v535 = vld [vmem:[%s2 + $0x1c] sm:$0xf]
      %v536 = vld [vmem:[%s2 + $0x20] sm:$0xf]
      %v537 = vld [vmem:[%s2 + $0x24] sm:$0xf]
      %v538 = vld [vmem:[%s2 + $0x28] sm:$0xf]
      %v539 = vld [vmem:[%s2 + $0x2c] sm:$0xf]
      %v540 = vld [vmem:[%s2 + $0x30] sm:$0xf]
      %v541 = vld [vmem:[%s2 + $0x34] sm:$0xf]
      %v542 = vld [vmem:[%s2 + $0x38] sm:$0xf]
      %v543 = vld [vmem:[%s2 + $0x3c] sm:$0xf]
      %v544 = vld [vmem:[%s2 + $0x40] sm:$0xf]
      %v545 = vld [vmem:[%s2 + $0x44] sm:$0xf]
      %v546 = vld [vmem:[%s2 + $0x48] sm:$0xf]
      %v547 = vld [vmem:[%s2 + $0x4c] sm:$0xf]
      %v548 = vld [vmem:[%s2 + $0x50] sm:$0xf]
      %v549 = vld [vmem:[%s2 + $0x54] sm:$0xf]
      %v550 = vld [vmem:[%s2 + $0x58] sm:$0xf]
      %v551 = vld [vmem:[%s2 + $0x5c] sm:$0xf]
      %v552 = vld [vmem:[%s2 + $0x60] sm:$0xf]
      %v553 = vld [vmem:[%s2 + $0x64] sm:$0xf]
      %v554 = vld [vmem:[%s2 + $0x68] sm:$0xf]
      %v555 = vld [vmem:[%s2 + $0x6c] sm:$0xf]
      %v556 = vld [vmem:[%s2 + $0x70] sm:$0xf]
      %v557 = vld [vmem:[%s2 + $0x74] sm:$0xf]
      %v558 = vld [vmem:[%s2 + $0x78] sm:$0xf]
      %v559 = vld [vmem:[%s2 + $0x7c] sm:$0xf]
      %561 = vset.pattern.permute.xlu0 0
      %562 = vperm.xlu0 %561, %v464
      %v563 = vpop.permute.xlu0 %562
      %566 = vset.pattern.permute.xlu0 0
      %567 = vperm.xlu0 %566, %v465
      %v568 = vpop.permute.xlu0 %567
      %571 = vset.pattern.permute.xlu0 0
      %572 = vperm.xlu0 %571, %v466
      %v573 = vpop.permute.xlu0 %572
      %576 = vset.pattern.permute.xlu0 0
      %577 = vperm.xlu0 %576, %v467
      %v578 = vpop.permute.xlu0 %577
      %581 = vset.pattern.permute.xlu0 0
      %582 = vperm.xlu0 %581, %v468
      %v583 = vpop.permute.xlu0 %582
      %586 = vset.pattern.permute.xlu0 0
      %587 = vperm.xlu0 %586, %v469
      %v588 = vpop.permute.xlu0 %587
      %591 = vset.pattern.permute.xlu0 0
      %592 = vperm.xlu0 %591, %v470
      %v593 = vpop.permute.xlu0 %592
      %596 = vset.pattern.permute.xlu0 0
      %597 = vperm.xlu0 %596, %v471
      %v598 = vpop.permute.xlu0 %597
      %601 = vset.pattern.permute.xlu0 0
      %602 = vperm.xlu0 %601, %v472
      %v603 = vpop.permute.xlu0 %602
      %606 = vset.pattern.permute.xlu0 0
      %607 = vperm.xlu0 %606, %v473
      %v608 = vpop.permute.xlu0 %607
      %611 = vset.pattern.permute.xlu0 0
      %612 = vperm.xlu0 %611, %v474
      %v613 = vpop.permute.xlu0 %612
      %616 = vset.pattern.permute.xlu0 0
      %617 = vperm.xlu0 %616, %v475
      %v618 = vpop.permute.xlu0 %617
      %621 = vset.pattern.permute.xlu0 0
      %622 = vperm.xlu0 %621, %v476
      %v623 = vpop.permute.xlu0 %622
      %626 = vset.pattern.permute.xlu0 0
      %627 = vperm.xlu0 %626, %v477
      %v628 = vpop.permute.xlu0 %627
      %631 = vset.pattern.permute.xlu0 0
      %632 = vperm.xlu0 %631, %v478
      %v633 = vpop.permute.xlu0 %632
      %636 = vset.pattern.permute.xlu0 0
      %637 = vperm.xlu0 %636, %v479
      %v638 = vpop.permute.xlu0 %637
      %641 = vset.pattern.permute.xlu0 0
      %642 = vperm.xlu0 %641, %v480
      %v643 = vpop.permute.xlu0 %642
      %646 = vset.pattern.permute.xlu0 0
      %647 = vperm.xlu0 %646, %v481
      %v648 = vpop.permute.xlu0 %647
      %651 = vset.pattern.permute.xlu0 0
      %652 = vperm.xlu0 %651, %v482
      %v653 = vpop.permute.xlu0 %652
      %656 = vset.pattern.permute.xlu0 0
      %657 = vperm.xlu0 %656, %v483
      %v658 = vpop.permute.xlu0 %657
      %661 = vset.pattern.permute.xlu0 0
      %662 = vperm.xlu0 %661, %v484
      %v663 = vpop.permute.xlu0 %662
      %666 = vset.pattern.permute.xlu0 0
      %667 = vperm.xlu0 %666, %v485
      %v668 = vpop.permute.xlu0 %667
      %671 = vset.pattern.permute.xlu0 0
      %672 = vperm.xlu0 %671, %v486
      %v673 = vpop.permute.xlu0 %672
      %676 = vset.pattern.permute.xlu0 0
      %677 = vperm.xlu0 %676, %v487
      %v678 = vpop.permute.xlu0 %677
      %681 = vset.pattern.permute.xlu0 0
      %682 = vperm.xlu0 %681, %v488
      %v683 = vpop.permute.xlu0 %682
      %686 = vset.pattern.permute.xlu0 0
      %687 = vperm.xlu0 %686, %v489
      %v688 = vpop.permute.xlu0 %687
      %691 = vset.pattern.permute.xlu0 0
      %692 = vperm.xlu0 %691, %v490
      %v693 = vpop.permute.xlu0 %692
      %696 = vset.pattern.permute.xlu0 0
      %697 = vperm.xlu0 %696, %v491
      %v698 = vpop.permute.xlu0 %697
      %701 = vset.pattern.permute.xlu0 0
      %702 = vperm.xlu0 %701, %v492
      %v703 = vpop.permute.xlu0 %702
      %706 = vset.pattern.permute.xlu0 0
      %707 = vperm.xlu0 %706, %v493
      %v708 = vpop.permute.xlu0 %707
      %711 = vset.pattern.permute.xlu0 0
      %712 = vperm.xlu0 %711, %v494
      %v713 = vpop.permute.xlu0 %712
      %716 = vset.pattern.permute.xlu0 0
      %717 = vperm.xlu0 %716, %v495
      %v718 = vpop.permute.xlu0 %717
      %v720 = vperm.slane %v463, 0
      %v721 = vmul.f32 %v563, %v720
      %v722 = vmul.f32 %v568, %v720
      %v723 = vmul.f32 %v573, %v720
      %v724 = vmul.f32 %v578, %v720
      %v725 = vmul.f32 %v583, %v720
      %v726 = vmul.f32 %v588, %v720
      %v727 = vmul.f32 %v593, %v720
      %v728 = vmul.f32 %v598, %v720
      %v729 = vmul.f32 %v603, %v720
      %v730 = vmul.f32 %v608, %v720
      %v731 = vmul.f32 %v613, %v720
      %v732 = vmul.f32 %v618, %v720
      %v733 = vmul.f32 %v623, %v720
      %v734 = vmul.f32 %v628, %v720
      %v735 = vmul.f32 %v633, %v720
      %v736 = vmul.f32 %v638, %v720
      %v737 = vmul.f32 %v643, %v720
      %v738 = vmul.f32 %v648, %v720
      %v739 = vmul.f32 %v653, %v720
      %v740 = vmul.f32 %v658, %v720
      %v741 = vmul.f32 %v663, %v720
      %v742 = vmul.f32 %v668, %v720
      %v743 = vmul.f32 %v673, %v720
      %v744 = vmul.f32 %v678, %v720
      %v745 = vmul.f32 %v683, %v720
      %v746 = vmul.f32 %v688, %v720
      %v747 = vmul.f32 %v693, %v720
      %v748 = vmul.f32 %v698, %v720
      %v749 = vmul.f32 %v703, %v720
      %v750 = vmul.f32 %v708, %v720
      %v751 = vmul.f32 %v713, %v720
      %v752 = vmul.f32 %v718, %v720
      %753 = vset.pattern.permute.xlu0 1
      %754 = vperm.xlu0 %753, %v464
      %v755 = vpop.permute.xlu0 %754
      %757 = vset.pattern.permute.xlu0 1
      %758 = vperm.xlu0 %757, %v465
      %v759 = vpop.permute.xlu0 %758
      %761 = vset.pattern.permute.xlu0 1
      %762 = vperm.xlu0 %761, %v466
      %v763 = vpop.permute.xlu0 %762
      %765 = vset.pattern.permute.xlu0 1
      %766 = vperm.xlu0 %765, %v467
      %v767 = vpop.permute.xlu0 %766
      %769 = vset.pattern.permute.xlu0 1
      %770 = vperm.xlu0 %769, %v468
      %v771 = vpop.permute.xlu0 %770
      %773 = vset.pattern.permute.xlu0 1
      %774 = vperm.xlu0 %773, %v469
      %v775 = vpop.permute.xlu0 %774
      %777 = vset.pattern.permute.xlu0 1
      %778 = vperm.xlu0 %777, %v470
      %v779 = vpop.permute.xlu0 %778
      %781 = vset.pattern.permute.xlu0 1
      %782 = vperm.xlu0 %781, %v471
      %v783 = vpop.permute.xlu0 %782
      %785 = vset.pattern.permute.xlu0 1
      %786 = vperm.xlu0 %785, %v472
      %v787 = vpop.permute.xlu0 %786
      %789 = vset.pattern.permute.xlu0 1
      %790 = vperm.xlu0 %789, %v473
      %v791 = vpop.permute.xlu0 %790
      %793 = vset.pattern.permute.xlu0 1
      %794 = vperm.xlu0 %793, %v474
      %v795 = vpop.permute.xlu0 %794
      %797 = vset.pattern.permute.xlu0 1
      %798 = vperm.xlu0 %797, %v475
      %v799 = vpop.permute.xlu0 %798
      %801 = vset.pattern.permute.xlu0 1
      %802 = vperm.xlu0 %801, %v476
      %v803 = vpop.permute.xlu0 %802
      %805 = vset.pattern.permute.xlu0 1
      %806 = vperm.xlu0 %805, %v477
      %v807 = vpop.permute.xlu0 %806
      %809 = vset.pattern.permute.xlu0 1
      %810 = vperm.xlu0 %809, %v478
      %v811 = vpop.permute.xlu0 %810
      %813 = vset.pattern.permute.xlu0 1
      %814 = vperm.xlu0 %813, %v479
      %v815 = vpop.permute.xlu0 %814
      %817 = vset.pattern.permute.xlu0 1
      %818 = vperm.xlu0 %817, %v480
      %v819 = vpop.permute.xlu0 %818
      %821 = vset.pattern.permute.xlu0 1
      %822 = vperm.xlu0 %821, %v481
      %v823 = vpop.permute.xlu0 %822
      %825 = vset.pattern.permute.xlu0 1
      %826 = vperm.xlu0 %825, %v482
      %v827 = vpop.permute.xlu0 %826
      %829 = vset.pattern.permute.xlu0 1
      %830 = vperm.xlu0 %829, %v483
      %v831 = vpop.permute.xlu0 %830
      %833 = vset.pattern.permute.xlu0 1
      %834 = vperm.xlu0 %833, %v484
      %v835 = vpop.permute.xlu0 %834
      %837 = vset.pattern.permute.xlu0 1
      %838 = vperm.xlu0 %837, %v485
      %v839 = vpop.permute.xlu0 %838
      %841 = vset.pattern.permute.xlu0 1
      %842 = vperm.xlu0 %841, %v486
      %v843 = vpop.permute.xlu0 %842
      %845 = vset.pattern.permute.xlu0 1
      %846 = vperm.xlu0 %845, %v487
      %v847 = vpop.permute.xlu0 %846
      %849 = vset.pattern.permute.xlu0 1
      %850 = vperm.xlu0 %849, %v488
      %v851 = vpop.permute.xlu0 %850
      %853 = vset.pattern.permute.xlu0 1
      %854 = vperm.xlu0 %853, %v489
      %v855 = vpop.permute.xlu0 %854
      %857 = vset.pattern.permute.xlu0 1
      %858 = vperm.xlu0 %857, %v490
      %v859 = vpop.permute.xlu0 %858
      %861 = vset.pattern.permute.xlu0 1
      %862 = vperm.xlu0 %861, %v491
      %v863 = vpop.permute.xlu0 %862
      %865 = vset.pattern.permute.xlu0 1
      %866 = vperm.xlu0 %865, %v492
      %v867 = vpop.permute.xlu0 %866
      %869 = vset.pattern.permute.xlu0 1
      %870 = vperm.xlu0 %869, %v493
      %v871 = vpop.permute.xlu0 %870
      %873 = vset.pattern.permute.xlu0 1
      %874 = vperm.xlu0 %873, %v494
      %v875 = vpop.permute.xlu0 %874
      %877 = vset.pattern.permute.xlu0 1
      %878 = vperm.xlu0 %877, %v495
      %v879 = vpop.permute.xlu0 %878
      %v881 = vperm.slane %v463, 1
      %v882 = vmul.f32 %v755, %v881
      %v883 = vmul.f32 %v759, %v881
      %v884 = vmul.f32 %v763, %v881
      %v885 = vmul.f32 %v767, %v881
      %v886 = vmul.f32 %v771, %v881
      %v887 = vmul.f32 %v775, %v881
      %v888 = vmul.f32 %v779, %v881
      %v889 = vmul.f32 %v783, %v881
      %v890 = vmul.f32 %v787, %v881
      %v891 = vmul.f32 %v791, %v881
      %v892 = vmul.f32 %v795, %v881
      %v893 = vmul.f32 %v799, %v881
      %v894 = vmul.f32 %v803, %v881
      %v895 = vmul.f32 %v807, %v881
      %v896 = vmul.f32 %v811, %v881
      %v897 = vmul.f32 %v815, %v881
      %v898 = vmul.f32 %v819, %v881
      %v899 = vmul.f32 %v823, %v881
      %v900 = vmul.f32 %v827, %v881
      %v901 = vmul.f32 %v831, %v881
      %v902 = vmul.f32 %v835, %v881
      %v903 = vmul.f32 %v839, %v881
      %v904 = vmul.f32 %v843, %v881
      %v905 = vmul.f32 %v847, %v881
      %v906 = vmul.f32 %v851, %v881
      %v907 = vmul.f32 %v855, %v881
      %v908 = vmul.f32 %v859, %v881
      %v909 = vmul.f32 %v863, %v881
      %v910 = vmul.f32 %v867, %v881
      %v911 = vmul.f32 %v871, %v881
      %v912 = vmul.f32 %v875, %v881
      %v913 = vmul.f32 %v879, %v881
      %v914 = vadd.f32 %v721, %v882
      %v915 = vadd.f32 %v722, %v883
      %v916 = vadd.f32 %v723, %v884
      %v917 = vadd.f32 %v724, %v885
      %v918 = vadd.f32 %v725, %v886
      %v919 = vadd.f32 %v726, %v887
      %v920 = vadd.f32 %v727, %v888
      %v921 = vadd.f32 %v728, %v889
      %v922 = vadd.f32 %v729, %v890
      %v923 = vadd.f32 %v730, %v891
      %v924 = vadd.f32 %v731, %v892
      %v925 = vadd.f32 %v732, %v893
      %v926 = vadd.f32 %v733, %v894
      %v927 = vadd.f32 %v734, %v895
      %v928 = vadd.f32 %v735, %v896
      %v929 = vadd.f32 %v736, %v897
      %v930 = vadd.f32 %v737, %v898
      %v931 = vadd.f32 %v738, %v899
      %v932 = vadd.f32 %v739, %v900
      %v933 = vadd.f32 %v740, %v901
      %v934 = vadd.f32 %v741, %v902
      %v935 = vadd.f32 %v742, %v903
      %v936 = vadd.f32 %v743, %v904
      %v937 = vadd.f32 %v744, %v905
      %v938 = vadd.f32 %v745, %v906
      %v939 = vadd.f32 %v746, %v907
      %v940 = vadd.f32 %v747, %v908
      %v941 = vadd.f32 %v748, %v909
      %v942 = vadd.f32 %v749, %v910
      %v943 = vadd.f32 %v750, %v911
      %v944 = vadd.f32 %v751, %v912
      %v945 = vadd.f32 %v752, %v913
      %946 = vset.pattern.permute.xlu0 2
      %947 = vperm.xlu0 %946, %v464
      %v948 = vpop.permute.xlu0 %947
      %950 = vset.pattern.permute.xlu0 2
      %951 = vperm.xlu0 %950, %v465
      %v952 = vpop.permute.xlu0 %951
      %954 = vset.pattern.permute.xlu0 2
      %955 = vperm.xlu0 %954, %v466
      %v956 = vpop.permute.xlu0 %955
      %958 = vset.pattern.permute.xlu0 2
      %959 = vperm.xlu0 %958, %v467
      %v960 = vpop.permute.xlu0 %959
      %962 = vset.pattern.permute.xlu0 2
      %963 = vperm.xlu0 %962, %v468
      %v964 = vpop.permute.xlu0 %963
      %966 = vset.pattern.permute.xlu0 2
      %967 = vperm.xlu0 %966, %v469
      %v968 = vpop.permute.xlu0 %967
      %970 = vset.pattern.permute.xlu0 2
      %971 = vperm.xlu0 %970, %v470
      %v972 = vpop.permute.xlu0 %971
      %974 = vset.pattern.permute.xlu0 2
      %975 = vperm.xlu0 %974, %v471
      %v976 = vpop.permute.xlu0 %975
      %978 = vset.pattern.permute.xlu0 2
      %979 = vperm.xlu0 %978, %v472
      %v980 = vpop.permute.xlu0 %979
      %982 = vset.pattern.permute.xlu0 2
      %983 = vperm.xlu0 %982, %v473
      %v984 = vpop.permute.xlu0 %983
      %986 = vset.pattern.permute.xlu0 2
      %987 = vperm.xlu0 %986, %v474
      %v988 = vpop.permute.xlu0 %987
      %990 = vset.pattern.permute.xlu0 2
      %991 = vperm.xlu0 %990, %v475
      %v992 = vpop.permute.xlu0 %991
      %994 = vset.pattern.permute.xlu0 2
      %995 = vperm.xlu0 %994, %v476
      %v996 = vpop.permute.xlu0 %995
      %998 = vset.pattern.permute.xlu0 2
      %999 = vperm.xlu0 %998, %v477
      %v1000 = vpop.permute.xlu0 %999
      %1002 = vset.pattern.permute.xlu0 2
      %1003 = vperm.xlu0 %1002, %v478
      %v1004 = vpop.permute.xlu0 %1003
      %1006 = vset.pattern.permute.xlu0 2
      %1007 = vperm.xlu0 %1006, %v479
      %v1008 = vpop.permute.xlu0 %1007
      %1010 = vset.pattern.permute.xlu0 2
      %1011 = vperm.xlu0 %1010, %v480
      %v1012 = vpop.permute.xlu0 %1011
      %1014 = vset.pattern.permute.xlu0 2
      %1015 = vperm.xlu0 %1014, %v481
      %v1016 = vpop.permute.xlu0 %1015
      %1018 = vset.pattern.permute.xlu0 2
      %1019 = vperm.xlu0 %1018, %v482
      %v1020 = vpop.permute.xlu0 %1019
      %1022 = vset.pattern.permute.xlu0 2
      %1023 = vperm.xlu0 %1022, %v483
      %v1024 = vpop.permute.xlu0 %1023
      %1026 = vset.pattern.permute.xlu0 2
      %1027 = vperm.xlu0 %1026, %v484
      %v1028 = vpop.permute.xlu0 %1027
      %1030 = vset.pattern.permute.xlu0 2
      %1031 = vperm.xlu0 %1030, %v485
      %v1032 = vpop.permute.xlu0 %1031
      %1034 = vset.pattern.permute.xlu0 2
      %1035 = vperm.xlu0 %1034, %v486
      %v1036 = vpop.permute.xlu0 %1035
      %1038 = vset.pattern.permute.xlu0 2
      %1039 = vperm.xlu0 %1038, %v487
      %v1040 = vpop.permute.xlu0 %1039
      %1042 = vset.pattern.permute.xlu0 2
      %1043 = vperm.xlu0 %1042, %v488
      %v1044 = vpop.permute.xlu0 %1043
      %1046 = vset.pattern.permute.xlu0 2
      %1047 = vperm.xlu0 %1046, %v489
      %v1048 = vpop.permute.xlu0 %1047
      %1050 = vset.pattern.permute.xlu0 2
      %1051 = vperm.xlu0 %1050, %v490
      %v1052 = vpop.permute.xlu0 %1051
      %1054 = vset.pattern.permute.xlu0 2
      %1055 = vperm.xlu0 %1054, %v491
      %v1056 = vpop.permute.xlu0 %1055
      %1058 = vset.pattern.permute.xlu0 2
      %1059 = vperm.xlu0 %1058, %v492
      %v1060 = vpop.permute.xlu0 %1059
      %1062 = vset.pattern.permute.xlu0 2
      %1063 = vperm.xlu0 %1062, %v493
      %v1064 = vpop.permute.xlu0 %1063
      %1066 = vset.pattern.permute.xlu0 2
      %1067 = vperm.xlu0 %1066, %v494
      %v1068 = vpop.permute.xlu0 %1067
      %1070 = vset.pattern.permute.xlu0 2
      %1071 = vperm.xlu0 %1070, %v495
      %v1072 = vpop.permute.xlu0 %1071
      %v1074 = vperm.slane %v463, 2
      %v1075 = vmul.f32 %v948, %v1074
      %v1076 = vmul.f32 %v952, %v1074
      %v1077 = vmul.f32 %v956, %v1074
      %v1078 = vmul.f32 %v960, %v1074
      %v1079 = vmul.f32 %v964, %v1074
      %v1080 = vmul.f32 %v968, %v1074
      %v1081 = vmul.f32 %v972, %v1074
      %v1082 = vmul.f32 %v976, %v1074
      %v1083 = vmul.f32 %v980, %v1074
      %v1084 = vmul.f32 %v984, %v1074
      %v1085 = vmul.f32 %v988, %v1074
      %v1086 = vmul.f32 %v992, %v1074
      %v1087 = vmul.f32 %v996, %v1074
      %v1088 = vmul.f32 %v1000, %v1074
      %v1089 = vmul.f32 %v1004, %v1074
      %v1090 = vmul.f32 %v1008, %v1074
      %v1091 = vmul.f32 %v1012, %v1074
      %v1092 = vmul.f32 %v1016, %v1074
      %v1093 = vmul.f32 %v1020, %v1074
      %v1094 = vmul.f32 %v1024, %v1074
      %v1095 = vmul.f32 %v1028, %v1074
      %v1096 = vmul.f32 %v1032, %v1074
      %v1097 = vmul.f32 %v1036, %v1074
      %v1098 = vmul.f32 %v1040, %v1074
      %v1099 = vmul.f32 %v1044, %v1074
      %v1100 = vmul.f32 %v1048, %v1074
      %v1101 = vmul.f32 %v1052, %v1074
      %v1102 = vmul.f32 %v1056, %v1074
      %v1103 = vmul.f32 %v1060, %v1074
      %v1104 = vmul.f32 %v1064, %v1074
      %v1105 = vmul.f32 %v1068, %v1074
      %v1106 = vmul.f32 %v1072, %v1074
      %v1107 = vadd.f32 %v914, %v1075
      %v1108 = vadd.f32 %v915, %v1076
      %v1109 = vadd.f32 %v916, %v1077
      %v1110 = vadd.f32 %v917, %v1078
      %v1111 = vadd.f32 %v918, %v1079
      %v1112 = vadd.f32 %v919, %v1080
      %v1113 = vadd.f32 %v920, %v1081
      %v1114 = vadd.f32 %v921, %v1082
      %v1115 = vadd.f32 %v922, %v1083
      %v1116 = vadd.f32 %v923, %v1084
      %v1117 = vadd.f32 %v924, %v1085
      %v1118 = vadd.f32 %v925, %v1086
      %v1119 = vadd.f32 %v926, %v1087
      %v1120 = vadd.f32 %v927, %v1088
      %v1121 = vadd.f32 %v928, %v1089
      %v1122 = vadd.f32 %v929, %v1090
      %v1123 = vadd.f32 %v930, %v1091
      %v1124 = vadd.f32 %v931, %v1092
      %v1125 = vadd.f32 %v932, %v1093
      %v1126 = vadd.f32 %v933, %v1094
      %v1127 = vadd.f32 %v934, %v1095
      %v1128 = vadd.f32 %v935, %v1096
      %v1129 = vadd.f32 %v936, %v1097
      %v1130 = vadd.f32 %v937, %v1098
      %v1131 = vadd.f32 %v938, %v1099
      %v1132 = vadd.f32 %v939, %v1100
      %v1133 = vadd.f32 %v940, %v1101
      %v1134 = vadd.f32 %v941, %v1102
      %v1135 = vadd.f32 %v942, %v1103
      %v1136 = vadd.f32 %v943, %v1104
      %v1137 = vadd.f32 %v944, %v1105
      %v1138 = vadd.f32 %v945, %v1106
      %v1171 = vunpack.c.l.b16 %v528
      %v1172 = vunpack.c.l.b16 %v529
      %v1173 = vunpack.c.l.b16 %v530
      %v1174 = vunpack.c.l.b16 %v531
      %v1175 = vunpack.c.l.b16 %v532
      %v1176 = vunpack.c.l.b16 %v533
      %v1177 = vunpack.c.l.b16 %v534
      %v1178 = vunpack.c.l.b16 %v535
      %v1179 = vunpack.c.l.b16 %v536
      %v1180 = vunpack.c.l.b16 %v537
      %v1181 = vunpack.c.l.b16 %v538
      %v1182 = vunpack.c.l.b16 %v539
      %v1183 = vunpack.c.l.b16 %v540
      %v1184 = vunpack.c.l.b16 %v541
      %v1185 = vunpack.c.l.b16 %v542
      %v1186 = vunpack.c.l.b16 %v543
      %v1187 = vunpack.c.l.b16 %v544
      %v1188 = vunpack.c.l.b16 %v545
      %v1189 = vunpack.c.l.b16 %v546
      %v1190 = vunpack.c.l.b16 %v547
      %v1191 = vunpack.c.l.b16 %v548
      %v1192 = vunpack.c.l.b16 %v549
      %v1193 = vunpack.c.l.b16 %v550
      %v1194 = vunpack.c.l.b16 %v551
      %v1195 = vunpack.c.l.b16 %v552
      %v1196 = vunpack.c.l.b16 %v553
      %v1197 = vunpack.c.l.b16 %v554
      %v1198 = vunpack.c.l.b16 %v555
      %v1199 = vunpack.c.l.b16 %v556
      %v1200 = vunpack.c.l.b16 %v557
      %v1201 = vunpack.c.l.b16 %v558
      %v1202 = vunpack.c.l.b16 %v559
      %v1203 = vpack.c.b16 %v1172, %v1171
      %v1204 = vpack.c.b16 %v1174, %v1173
      %v1205 = vpack.c.b16 %v1176, %v1175
      %v1206 = vpack.c.b16 %v1178, %v1177
      %v1207 = vpack.c.b16 %v1180, %v1179
      %v1208 = vpack.c.b16 %v1182, %v1181
      %v1209 = vpack.c.b16 %v1184, %v1183
      %v1210 = vpack.c.b16 %v1186, %v1185
      %v1211 = vpack.c.b16 %v1188, %v1187
      %v1212 = vpack.c.b16 %v1190, %v1189
      %v1213 = vpack.c.b16 %v1192, %v1191
      %v1214 = vpack.c.b16 %v1194, %v1193
      %v1215 = vpack.c.b16 %v1196, %v1195
      %v1216 = vpack.c.b16 %v1198, %v1197
      %v1217 = vpack.c.b16 %v1200, %v1199
      %v1218 = vpack.c.b16 %v1202, %v1201
      %v1251 = vunpack.c.l.b16 %v447
      %v1252 = vunpack.c.l.b16 %v448
      %v1253 = vunpack.c.l.b16 %v449
      %v1254 = vunpack.c.l.b16 %v450
      %v1255 = vunpack.c.l.b16 %v451
      %v1256 = vunpack.c.l.b16 %v452
      %v1257 = vunpack.c.l.b16 %v453
      %v1258 = vunpack.c.l.b16 %v454
      %v1259 = vunpack.c.l.b16 %v455
      %v1260 = vunpack.c.l.b16 %v456
      %v1261 = vunpack.c.l.b16 %v457
      %v1262 = vunpack.c.l.b16 %v458
      %v1263 = vunpack.c.l.b16 %v459
      %v1264 = vunpack.c.l.b16 %v460
      %v1265 = vunpack.c.l.b16 %v461
      %v1266 = vunpack.c.l.b16 %v462
      %v1267 = vpack.c.b16 %v1252, %v1251
      %v1268 = vpack.c.b16 %v1254, %v1253
      %v1269 = vpack.c.b16 %v1256, %v1255
      %v1270 = vpack.c.b16 %v1258, %v1257
      %v1271 = vpack.c.b16 %v1260, %v1259
      %v1272 = vpack.c.b16 %v1262, %v1261
      %v1273 = vpack.c.b16 %v1264, %v1263
      %v1274 = vpack.c.b16 %v1266, %v1265
      %1283 = vmatpush.bf16.msra.mxu0 %v1274
      %1284 = vmatpush.bf16.msra.mxu0 %v1273
      %1285 = vmatpush.bf16.msra.mxu0 %v1272
      %1286 = vmatpush.bf16.msra.mxu0 %v1271
      %1287 = vmatpush.bf16.msra.mxu0 %v1270
      %1288 = vmatpush.bf16.msra.mxu0 %v1269
      %1289 = vmatpush.bf16.msra.mxu0 %v1268
      %1290 = vmatpush.bf16.msra.mxu0 %v1267
      %1291 = vmatmul.bf16.gmra.mxu0 %v1203
      %v1292 = vpop.f32.mrf.mxu0
      %v1293 = vadd.f32 %v1107, %v1292
      %v1294 = vpop.f32.mrf.mxu0
      %v1295 = vadd.f32 %v1108, %v1294
      %1296 = vmatmul.bf16.gmra.mxu0 %v1204
      %v1297 = vpop.f32.mrf.mxu0
      %v1298 = vadd.f32 %v1109, %v1297
      %v1299 = vpop.f32.mrf.mxu0
      %v1300 = vadd.f32 %v1110, %v1299
      %1301 = vmatmul.bf16.gmra.mxu0 %v1205
      %v1302 = vpop.f32.mrf.mxu0
      %v1303 = vadd.f32 %v1111, %v1302
      %v1304 = vpop.f32.mrf.mxu0
      %v1305 = vadd.f32 %v1112, %v1304
      %1306 = vmatmul.bf16.gmra.mxu0 %v1206
      %v1307 = vpop.f32.mrf.mxu0
      %v1308 = vadd.f32 %v1113, %v1307
      %v1309 = vpop.f32.mrf.mxu0
      %v1310 = vadd.f32 %v1114, %v1309
      %1311 = vmatmul.bf16.gmra.mxu0 %v1207
      %v1312 = vpop.f32.mrf.mxu0
      %v1313 = vadd.f32 %v1115, %v1312
      %v1314 = vpop.f32.mrf.mxu0
      %v1315 = vadd.f32 %v1116, %v1314
      %1316 = vmatmul.bf16.gmra.mxu0 %v1208
      %v1317 = vpop.f32.mrf.mxu0
      %v1318 = vadd.f32 %v1117, %v1317
      %v1319 = vpop.f32.mrf.mxu0
      %v1320 = vadd.f32 %v1118, %v1319
      %1321 = vmatmul.bf16.gmra.mxu0 %v1209
      %v1322 = vpop.f32.mrf.mxu0
      %v1323 = vadd.f32 %v1119, %v1322
      %v1324 = vpop.f32.mrf.mxu0
      %v1325 = vadd.f32 %v1120, %v1324
      %1326 = vmatmul.bf16.gmra.mxu0 %v1210
      %v1327 = vpop.f32.mrf.mxu0
      %v1328 = vadd.f32 %v1121, %v1327
      %v1329 = vpop.f32.mrf.mxu0
      %v1330 = vadd.f32 %v1122, %v1329
      %1331 = vmatmul.bf16.gmra.mxu0 %v1211
      %v1332 = vpop.f32.mrf.mxu0
      %v1333 = vadd.f32 %v1123, %v1332
      %v1334 = vpop.f32.mrf.mxu0
      %v1335 = vadd.f32 %v1124, %v1334
      %1336 = vmatmul.bf16.gmra.mxu0 %v1212
      %v1337 = vpop.f32.mrf.mxu0
      %v1338 = vadd.f32 %v1125, %v1337
      %v1339 = vpop.f32.mrf.mxu0
      %v1340 = vadd.f32 %v1126, %v1339
      %1341 = vmatmul.bf16.gmra.mxu0 %v1213
      %v1342 = vpop.f32.mrf.mxu0
      %v1343 = vadd.f32 %v1127, %v1342
      %v1344 = vpop.f32.mrf.mxu0
      %v1345 = vadd.f32 %v1128, %v1344
      %1346 = vmatmul.bf16.gmra.mxu0 %v1214
      %v1347 = vpop.f32.mrf.mxu0
      %v1348 = vadd.f32 %v1129, %v1347
      %v1349 = vpop.f32.mrf.mxu0
      %v1350 = vadd.f32 %v1130, %v1349
      %1351 = vmatmul.bf16.gmra.mxu0 %v1215
      %v1352 = vpop.f32.mrf.mxu0
      %v1353 = vadd.f32 %v1131, %v1352
      %v1354 = vpop.f32.mrf.mxu0
      %v1355 = vadd.f32 %v1132, %v1354
      %1356 = vmatmul.bf16.gmra.mxu0 %v1216
      %v1357 = vpop.f32.mrf.mxu0
      %v1358 = vadd.f32 %v1133, %v1357
      %v1359 = vpop.f32.mrf.mxu0
      %v1360 = vadd.f32 %v1134, %v1359
      %1361 = vmatmul.bf16.gmra.mxu0 %v1217
      %v1362 = vpop.f32.mrf.mxu0
      %v1363 = vadd.f32 %v1135, %v1362
      %v1364 = vpop.f32.mrf.mxu0
      %v1365 = vadd.f32 %v1136, %v1364
      %1366 = vmatmul.bf16.gmra.mxu0 %v1218
      %v1367 = vpop.f32.mrf.mxu0
      %v1368 = vadd.f32 %v1137, %v1367
      %v1369 = vpop.f32.mrf.mxu0
      %v1370 = vadd.f32 %v1138, %v1369
      %1371 = vdwg.mxu0
      %1373 = vset.pattern.permute.xlu0 0
      %1374 = vperm.xlu0 %1373, %v496
      %v1375 = vpop.permute.xlu0 %1374
      %1378 = vset.pattern.permute.xlu0 0
      %1379 = vperm.xlu0 %1378, %v497
      %v1380 = vpop.permute.xlu0 %1379
      %1383 = vset.pattern.permute.xlu0 0
      %1384 = vperm.xlu0 %1383, %v498
      %v1385 = vpop.permute.xlu0 %1384
      %1388 = vset.pattern.permute.xlu0 0
      %1389 = vperm.xlu0 %1388, %v499
      %v1390 = vpop.permute.xlu0 %1389
      %1393 = vset.pattern.permute.xlu0 0
      %1394 = vperm.xlu0 %1393, %v500
      %v1395 = vpop.permute.xlu0 %1394
      %1398 = vset.pattern.permute.xlu0 0
      %1399 = vperm.xlu0 %1398, %v501
      %v1400 = vpop.permute.xlu0 %1399
      %1403 = vset.pattern.permute.xlu0 0
      %1404 = vperm.xlu0 %1403, %v502
      %v1405 = vpop.permute.xlu0 %1404
      %1408 = vset.pattern.permute.xlu0 0
      %1409 = vperm.xlu0 %1408, %v503
      %v1410 = vpop.permute.xlu0 %1409
      %1413 = vset.pattern.permute.xlu0 0
      %1414 = vperm.xlu0 %1413, %v504
      %v1415 = vpop.permute.xlu0 %1414
      %1418 = vset.pattern.permute.xlu0 0
      %1419 = vperm.xlu0 %1418, %v505
      %v1420 = vpop.permute.xlu0 %1419
      %1423 = vset.pattern.permute.xlu0 0
      %1424 = vperm.xlu0 %1423, %v506
      %v1425 = vpop.permute.xlu0 %1424
      %1428 = vset.pattern.permute.xlu0 0
      %1429 = vperm.xlu0 %1428, %v507
      %v1430 = vpop.permute.xlu0 %1429
      %1433 = vset.pattern.permute.xlu0 0
      %1434 = vperm.xlu0 %1433, %v508
      %v1435 = vpop.permute.xlu0 %1434
      %1438 = vset.pattern.permute.xlu0 0
      %1439 = vperm.xlu0 %1438, %v509
      %v1440 = vpop.permute.xlu0 %1439
      %1443 = vset.pattern.permute.xlu0 0
      %1444 = vperm.xlu0 %1443, %v510
      %v1445 = vpop.permute.xlu0 %1444
      %1448 = vset.pattern.permute.xlu0 0
      %1449 = vperm.xlu0 %1448, %v511
      %v1450 = vpop.permute.xlu0 %1449
      %1453 = vset.pattern.permute.xlu0 0
      %1454 = vperm.xlu0 %1453, %v512
      %v1455 = vpop.permute.xlu0 %1454
      %1458 = vset.pattern.permute.xlu0 0
      %1459 = vperm.xlu0 %1458, %v513
      %v1460 = vpop.permute.xlu0 %1459
      %1463 = vset.pattern.permute.xlu0 0
      %1464 = vperm.xlu0 %1463, %v514
      %v1465 = vpop.permute.xlu0 %1464
      %1468 = vset.pattern.permute.xlu0 0
      %1469 = vperm.xlu0 %1468, %v515
      %v1470 = vpop.permute.xlu0 %1469
      %1473 = vset.pattern.permute.xlu0 0
      %1474 = vperm.xlu0 %1473, %v516
      %v1475 = vpop.permute.xlu0 %1474
      %1478 = vset.pattern.permute.xlu0 0
      %1479 = vperm.xlu0 %1478, %v517
      %v1480 = vpop.permute.xlu0 %1479
      %1483 = vset.pattern.permute.xlu0 0
      %1484 = vperm.xlu0 %1483, %v518
      %v1485 = vpop.permute.xlu0 %1484
      %1488 = vset.pattern.permute.xlu0 0
      %1489 = vperm.xlu0 %1488, %v519
      %v1490 = vpop.permute.xlu0 %1489
      %1493 = vset.pattern.permute.xlu0 0
      %1494 = vperm.xlu0 %1493, %v520
      %v1495 = vpop.permute.xlu0 %1494
      %1498 = vset.pattern.permute.xlu0 0
      %1499 = vperm.xlu0 %1498, %v521
      %v1500 = vpop.permute.xlu0 %1499
      %1503 = vset.pattern.permute.xlu0 0
      %1504 = vperm.xlu0 %1503, %v522
      %v1505 = vpop.permute.xlu0 %1504
      %1508 = vset.pattern.permute.xlu0 0
      %1509 = vperm.xlu0 %1508, %v523
      %v1510 = vpop.permute.xlu0 %1509
      %1513 = vset.pattern.permute.xlu0 0
      %1514 = vperm.xlu0 %1513, %v524
      %v1515 = vpop.permute.xlu0 %1514
      %1518 = vset.pattern.permute.xlu0 0
      %1519 = vperm.xlu0 %1518, %v525
      %v1520 = vpop.permute.xlu0 %1519
      %1523 = vset.pattern.permute.xlu0 0
      %1524 = vperm.xlu0 %1523, %v526
      %v1525 = vpop.permute.xlu0 %1524
      %1528 = vset.pattern.permute.xlu0 0
      %1529 = vperm.xlu0 %1528, %v527
      %v1530 = vpop.permute.xlu0 %1529
      %v1532 = vadd.f32 %v1293, %v1375
      %v1533 = vadd.f32 %v1295, %v1380
      %v1534 = vadd.f32 %v1298, %v1385
      %v1535 = vadd.f32 %v1300, %v1390
      %v1536 = vadd.f32 %v1303, %v1395
      %v1537 = vadd.f32 %v1305, %v1400
      %v1538 = vadd.f32 %v1308, %v1405
      %v1539 = vadd.f32 %v1310, %v1410
      %v1540 = vadd.f32 %v1313, %v1415
      %v1541 = vadd.f32 %v1315, %v1420
      %v1542 = vadd.f32 %v1318, %v1425
      %v1543 = vadd.f32 %v1320, %v1430
      %v1544 = vadd.f32 %v1323, %v1435
      %v1545 = vadd.f32 %v1325, %v1440
      %v1546 = vadd.f32 %v1328, %v1445
      %v1547 = vadd.f32 %v1330, %v1450
      %v1548 = vadd.f32 %v1333, %v1455
      %v1549 = vadd.f32 %v1335, %v1460
      %v1550 = vadd.f32 %v1338, %v1465
      %v1551 = vadd.f32 %v1340, %v1470
      %v1552 = vadd.f32 %v1343, %v1475
      %v1553 = vadd.f32 %v1345, %v1480
      %v1554 = vadd.f32 %v1348, %v1485
      %v1555 = vadd.f32 %v1350, %v1490
      %v1556 = vadd.f32 %v1353, %v1495
      %v1557 = vadd.f32 %v1355, %v1500
      %v1558 = vadd.f32 %v1358, %v1505
      %v1559 = vadd.f32 %v1360, %v1510
      %v1560 = vadd.f32 %v1363, %v1515
      %v1561 = vadd.f32 %v1365, %v1520
      %v1562 = vadd.f32 %v1368, %v1525
      %v1563 = vadd.f32 %v1370, %v1530
      %v1564 = vmax.f32 %v1532, 0.0
      %v1565 = vmax.f32 %v1533, 0.0
      %v1566 = vmax.f32 %v1534, 0.0
      %v1567 = vmax.f32 %v1535, 0.0
      %v1568 = vmax.f32 %v1536, 0.0
      %v1569 = vmax.f32 %v1537, 0.0
      %v1570 = vmax.f32 %v1538, 0.0
      %v1571 = vmax.f32 %v1539, 0.0
      %v1572 = vmax.f32 %v1540, 0.0
      %v1573 = vmax.f32 %v1541, 0.0
      %v1574 = vmax.f32 %v1542, 0.0
      %v1575 = vmax.f32 %v1543, 0.0
      %v1576 = vmax.f32 %v1544, 0.0
      %v1577 = vmax.f32 %v1545, 0.0
      %v1578 = vmax.f32 %v1546, 0.0
      %v1579 = vmax.f32 %v1547, 0.0
      %v1580 = vmax.f32 %v1548, 0.0
      %v1581 = vmax.f32 %v1549, 0.0
      %v1582 = vmax.f32 %v1550, 0.0
      %v1583 = vmax.f32 %v1551, 0.0
      %v1584 = vmax.f32 %v1552, 0.0
      %v1585 = vmax.f32 %v1553, 0.0
      %v1586 = vmax.f32 %v1554, 0.0
      %v1587 = vmax.f32 %v1555, 0.0
      %v1588 = vmax.f32 %v1556, 0.0
      %v1589 = vmax.f32 %v1557, 0.0
      %v1590 = vmax.f32 %v1558, 0.0
      %v1591 = vmax.f32 %v1559, 0.0
      %v1592 = vmax.f32 %v1560, 0.0
      %v1593 = vmax.f32 %v1561, 0.0
      %v1594 = vmax.f32 %v1562, 0.0
      %v1595 = vmax.f32 %v1563, 0.0
      %v1596 = vpack.c.bf16 %v1565, %v1564
      %v1597 = vpack.c.bf16 %v1567, %v1566
      %v1598 = vpack.c.bf16 %v1569, %v1568
      %v1599 = vpack.c.bf16 %v1571, %v1570
      %v1600 = vpack.c.bf16 %v1573, %v1572
      %v1601 = vpack.c.bf16 %v1575, %v1574
      %v1602 = vpack.c.bf16 %v1577, %v1576
      %v1603 = vpack.c.bf16 %v1579, %v1578
      %v1604 = vpack.c.bf16 %v1581, %v1580
      %v1605 = vpack.c.bf16 %v1583, %v1582
      %v1606 = vpack.c.bf16 %v1585, %v1584
      %v1607 = vpack.c.bf16 %v1587, %v1586
      %v1608 = vpack.c.bf16 %v1589, %v1588
      %v1609 = vpack.c.bf16 %v1591, %v1590
      %v1610 = vpack.c.bf16 %v1593, %v1592
      %v1611 = vpack.c.bf16 %v1595, %v1594
      %v1612 = vld [vmem:[%s5] sm:$0xff]
      %v1613 = vld [vmem:[%s5 + $0x8] sm:$0xff]
      %v1614 = vld [vmem:[%s5 + $0x10] sm:$0xff]
      %v1615 = vld [vmem:[%s5 + $0x18] sm:$0xff]
      %v1616 = vld [vmem:[%s5 + $0x20] sm:$0xff]
      %v1617 = vld [vmem:[%s5 + $0x28] sm:$0xff]
      %v1618 = vld [vmem:[%s5 + $0x30] sm:$0xff]
      %v1619 = vld [vmem:[%s5 + $0x38] sm:$0xff]
      %v1620 = vld [vmem:[%s5 + $0x40] sm:$0xff]
      %v1621 = vld [vmem:[%s5 + $0x48] sm:$0xff]
      %v1622 = vld [vmem:[%s5 + $0x50] sm:$0xff]
      %v1623 = vld [vmem:[%s5 + $0x58] sm:$0xff]
      %v1624 = vld [vmem:[%s5 + $0x60] sm:$0xff]
      %v1625 = vld [vmem:[%s5 + $0x68] sm:$0xff]
      %v1626 = vld [vmem:[%s5 + $0x70] sm:$0xff]
      %v1627 = vld [vmem:[%s5 + $0x78] sm:$0xff]
      %v1628 = vld [vmem:[%s5 + $0x80] sm:$0xff]
      %v1629 = vld [vmem:[%s5 + $0x88] sm:$0xff]
      %v1630 = vld [vmem:[%s5 + $0x90] sm:$0xff]
      %v1631 = vld [vmem:[%s5 + $0x98] sm:$0xff]
      %v1632 = vld [vmem:[%s5 + $0xa0] sm:$0xff]
      %v1633 = vld [vmem:[%s5 + $0xa8] sm:$0xff]
      %v1634 = vld [vmem:[%s5 + $0xb0] sm:$0xff]
      %v1635 = vld [vmem:[%s5 + $0xb8] sm:$0xff]
      %v1636 = vld [vmem:[%s5 + $0xc0] sm:$0xff]
      %v1637 = vld [vmem:[%s5 + $0xc8] sm:$0xff]
      %v1638 = vld [vmem:[%s5 + $0xd0] sm:$0xff]
      %v1639 = vld [vmem:[%s5 + $0xd8] sm:$0xff]
      %v1640 = vld [vmem:[%s5 + $0xe0] sm:$0xff]
      %v1641 = vld [vmem:[%s5 + $0xe8] sm:$0xff]
      %v1642 = vld [vmem:[%s5 + $0xf0] sm:$0xff]
      %v1643 = vld [vmem:[%s5 + $0xf8] sm:$0xff]
      %v1644 = vld [vmem:[%s5 + $0x100] sm:$0xff]
      %v1645 = vld [vmem:[%s5 + $0x108] sm:$0xff]
      %v1646 = vld [vmem:[%s5 + $0x110] sm:$0xff]
      %v1647 = vld [vmem:[%s5 + $0x118] sm:$0xff]
      %v1648 = vld [vmem:[%s5 + $0x120] sm:$0xff]
      %v1649 = vld [vmem:[%s5 + $0x128] sm:$0xff]
      %v1650 = vld [vmem:[%s5 + $0x130] sm:$0xff]
      %v1651 = vld [vmem:[%s5 + $0x138] sm:$0xff]
      %v1652 = vld [vmem:[%s5 + $0x140] sm:$0xff]
      %v1653 = vld [vmem:[%s5 + $0x148] sm:$0xff]
      %v1654 = vld [vmem:[%s5 + $0x150] sm:$0xff]
      %v1655 = vld [vmem:[%s5 + $0x158] sm:$0xff]
      %v1656 = vld [vmem:[%s5 + $0x160] sm:$0xff]
      %v1657 = vld [vmem:[%s5 + $0x168] sm:$0xff]
      %v1658 = vld [vmem:[%s5 + $0x170] sm:$0xff]
      %v1659 = vld [vmem:[%s5 + $0x178] sm:$0xff]
      %v1660 = vld [vmem:[%s5 + $0x180] sm:$0xff]
      %v1661 = vld [vmem:[%s5 + $0x188] sm:$0xff]
      %v1662 = vld [vmem:[%s5 + $0x190] sm:$0xff]
      %v1663 = vld [vmem:[%s5 + $0x198] sm:$0xff]
      %v1664 = vld [vmem:[%s5 + $0x1a0] sm:$0xff]
      %v1665 = vld [vmem:[%s5 + $0x1a8] sm:$0xff]
      %v1666 = vld [vmem:[%s5 + $0x1b0] sm:$0xff]
      %v1667 = vld [vmem:[%s5 + $0x1b8] sm:$0xff]
      %v1668 = vld [vmem:[%s5 + $0x1c0] sm:$0xff]
      %v1669 = vld [vmem:[%s5 + $0x1c8] sm:$0xff]
      %v1670 = vld [vmem:[%s5 + $0x1d0] sm:$0xff]
      %v1671 = vld [vmem:[%s5 + $0x1d8] sm:$0xff]
      %v1672 = vld [vmem:[%s5 + $0x1e0] sm:$0xff]
      %v1673 = vld [vmem:[%s5 + $0x1e8] sm:$0xff]
      %v1674 = vld [vmem:[%s5 + $0x1f0] sm:$0xff]
      %v1675 = vld [vmem:[%s5 + $0x1f8] sm:$0xff]
      %v1676 = vld [vmem:[%s6] sm:$0xff]
      %v1677 = vld [vmem:[%s6 + $0x8] sm:$0xff]
      %v1678 = vld [vmem:[%s6 + $0x10] sm:$0xff]
      %v1679 = vld [vmem:[%s6 + $0x18] sm:$0xff]
      %v1680 = vld [vmem:[%s6 + $0x20] sm:$0xff]
      %v1681 = vld [vmem:[%s6 + $0x28] sm:$0xff]
      %v1682 = vld [vmem:[%s6 + $0x30] sm:$0xff]
      %v1683 = vld [vmem:[%s6 + $0x38] sm:$0xff]
      %v1684 = vld [vmem:[%s6 + $0x40] sm:$0xff]
      %v1685 = vld [vmem:[%s6 + $0x48] sm:$0xff]
      %v1686 = vld [vmem:[%s6 + $0x50] sm:$0xff]
      %v1687 = vld [vmem:[%s6 + $0x58] sm:$0xff]
      %v1688 = vld [vmem:[%s6 + $0x60] sm:$0xff]
      %v1689 = vld [vmem:[%s6 + $0x68] sm:$0xff]
      %v1690 = vld [vmem:[%s6 + $0x70] sm:$0xff]
      %v1691 = vld [vmem:[%s6 + $0x78] sm:$0xff]
      %v1692 = vld [vmem:[%s6 + $0x80] sm:$0xff]
      %v1693 = vld [vmem:[%s6 + $0x88] sm:$0xff]
      %v1694 = vld [vmem:[%s6 + $0x90] sm:$0xff]
      %v1695 = vld [vmem:[%s6 + $0x98] sm:$0xff]
      %v1696 = vld [vmem:[%s6 + $0xa0] sm:$0xff]
      %v1697 = vld [vmem:[%s6 + $0xa8] sm:$0xff]
      %v1698 = vld [vmem:[%s6 + $0xb0] sm:$0xff]
      %v1699 = vld [vmem:[%s6 + $0xb8] sm:$0xff]
      %v1700 = vld [vmem:[%s6 + $0xc0] sm:$0xff]
      %v1701 = vld [vmem:[%s6 + $0xc8] sm:$0xff]
      %v1702 = vld [vmem:[%s6 + $0xd0] sm:$0xff]
      %v1703 = vld [vmem:[%s6 + $0xd8] sm:$0xff]
      %v1704 = vld [vmem:[%s6 + $0xe0] sm:$0xff]
      %v1705 = vld [vmem:[%s6 + $0xe8] sm:$0xff]
      %v1706 = vld [vmem:[%s6 + $0xf0] sm:$0xff]
      %v1707 = vld [vmem:[%s6 + $0xf8] sm:$0xff]
      %v1708 = vld [vmem:[%s6 + $0x100] sm:$0xff]
      %v1709 = vld [vmem:[%s6 + $0x108] sm:$0xff]
      %v1710 = vld [vmem:[%s6 + $0x110] sm:$0xff]
      %v1711 = vld [vmem:[%s6 + $0x118] sm:$0xff]
      %v1712 = vld [vmem:[%s6 + $0x120] sm:$0xff]
      %v1713 = vld [vmem:[%s6 + $0x128] sm:$0xff]
      %v1714 = vld [vmem:[%s6 + $0x130] sm:$0xff]
      %v1715 = vld [vmem:[%s6 + $0x138] sm:$0xff]
      %v1716 = vld [vmem:[%s6 + $0x140] sm:$0xff]
      %v1717 = vld [vmem:[%s6 + $0x148] sm:$0xff]
      %v1718 = vld [vmem:[%s6 + $0x150] sm:$0xff]
      %v1719 = vld [vmem:[%s6 + $0x158] sm:$0xff]
      %v1720 = vld [vmem:[%s6 + $0x160] sm:$0xff]
      %v1721 = vld [vmem:[%s6 + $0x168] sm:$0xff]
      %v1722 = vld [vmem:[%s6 + $0x170] sm:$0xff]
      %v1723 = vld [vmem:[%s6 + $0x178] sm:$0xff]
      %v1724 = vld [vmem:[%s6 + $0x180] sm:$0xff]
      %v1725 = vld [vmem:[%s6 + $0x188] sm:$0xff]
      %v1726 = vld [vmem:[%s6 + $0x190] sm:$0xff]
      %v1727 = vld [vmem:[%s6 + $0x198] sm:$0xff]
      %v1728 = vld [vmem:[%s6 + $0x1a0] sm:$0xff]
      %v1729 = vld [vmem:[%s6 + $0x1a8] sm:$0xff]
      %v1730 = vld [vmem:[%s6 + $0x1b0] sm:$0xff]
      %v1731 = vld [vmem:[%s6 + $0x1b8] sm:$0xff]
      %v1732 = vld [vmem:[%s6 + $0x1c0] sm:$0xff]
      %v1733 = vld [vmem:[%s6 + $0x1c8] sm:$0xff]
      %v1734 = vld [vmem:[%s6 + $0x1d0] sm:$0xff]
      %v1735 = vld [vmem:[%s6 + $0x1d8] sm:$0xff]
      %v1736 = vld [vmem:[%s6 + $0x1e0] sm:$0xff]
      %v1737 = vld [vmem:[%s6 + $0x1e8] sm:$0xff]
      %v1738 = vld [vmem:[%s6 + $0x1f0] sm:$0xff]
      %v1739 = vld [vmem:[%s6 + $0x1f8] sm:$0xff]
      %1741 = vset.pattern.permute.xlu0 0
      %1742 = vperm.xlu0 %1741, %v1676
      %v1743 = vpop.permute.xlu0 %1742
      %1746 = vset.pattern.permute.xlu0 0
      %1747 = vperm.xlu0 %1746, %v1677
      %v1748 = vpop.permute.xlu0 %1747
      %1751 = vset.pattern.permute.xlu0 0
      %1752 = vperm.xlu0 %1751, %v1678
      %v1753 = vpop.permute.xlu0 %1752
      %1756 = vset.pattern.permute.xlu0 0
      %1757 = vperm.xlu0 %1756, %v1679
      %v1758 = vpop.permute.xlu0 %1757
      %1761 = vset.pattern.permute.xlu0 0
      %1762 = vperm.xlu0 %1761, %v1680
      %v1763 = vpop.permute.xlu0 %1762
      %1766 = vset.pattern.permute.xlu0 0
      %1767 = vperm.xlu0 %1766, %v1681
      %v1768 = vpop.permute.xlu0 %1767
      %1771 = vset.pattern.permute.xlu0 0
      %1772 = vperm.xlu0 %1771, %v1682
      %v1773 = vpop.permute.xlu0 %1772
      %1776 = vset.pattern.permute.xlu0 0
      %1777 = vperm.xlu0 %1776, %v1683
      %v1778 = vpop.permute.xlu0 %1777
      %1781 = vset.pattern.permute.xlu0 0
      %1782 = vperm.xlu0 %1781, %v1684
      %v1783 = vpop.permute.xlu0 %1782
      %1786 = vset.pattern.permute.xlu0 0
      %1787 = vperm.xlu0 %1786, %v1685
      %v1788 = vpop.permute.xlu0 %1787
      %1791 = vset.pattern.permute.xlu0 0
      %1792 = vperm.xlu0 %1791, %v1686
      %v1793 = vpop.permute.xlu0 %1792
      %1796 = vset.pattern.permute.xlu0 0
      %1797 = vperm.xlu0 %1796, %v1687
      %v1798 = vpop.permute.xlu0 %1797
      %1801 = vset.pattern.permute.xlu0 0
      %1802 = vperm.xlu0 %1801, %v1688
      %v1803 = vpop.permute.xlu0 %1802
      %1806 = vset.pattern.permute.xlu0 0
      %1807 = vperm.xlu0 %1806, %v1689
      %v1808 = vpop.permute.xlu0 %1807
      %1811 = vset.pattern.permute.xlu0 0
      %1812 = vperm.xlu0 %1811, %v1690
      %v1813 = vpop.permute.xlu0 %1812
      %1816 = vset.pattern.permute.xlu0 0
      %1817 = vperm.xlu0 %1816, %v1691
      %v1818 = vpop.permute.xlu0 %1817
      %1821 = vset.pattern.permute.xlu0 0
      %1822 = vperm.xlu0 %1821, %v1692
      %v1823 = vpop.permute.xlu0 %1822
      %1826 = vset.pattern.permute.xlu0 0
      %1827 = vperm.xlu0 %1826, %v1693
      %v1828 = vpop.permute.xlu0 %1827
      %1831 = vset.pattern.permute.xlu0 0
      %1832 = vperm.xlu0 %1831, %v1694
      %v1833 = vpop.permute.xlu0 %1832
      %1836 = vset.pattern.permute.xlu0 0
      %1837 = vperm.xlu0 %1836, %v1695
      %v1838 = vpop.permute.xlu0 %1837
      %1841 = vset.pattern.permute.xlu0 0
      %1842 = vperm.xlu0 %1841, %v1696
      %v1843 = vpop.permute.xlu0 %1842
      %1846 = vset.pattern.permute.xlu0 0
      %1847 = vperm.xlu0 %1846, %v1697
      %v1848 = vpop.permute.xlu0 %1847
      %1851 = vset.pattern.permute.xlu0 0
      %1852 = vperm.xlu0 %1851, %v1698
      %v1853 = vpop.permute.xlu0 %1852
      %1856 = vset.pattern.permute.xlu0 0
      %1857 = vperm.xlu0 %1856, %v1699
      %v1858 = vpop.permute.xlu0 %1857
      %1861 = vset.pattern.permute.xlu0 0
      %1862 = vperm.xlu0 %1861, %v1700
      %v1863 = vpop.permute.xlu0 %1862
      %1866 = vset.pattern.permute.xlu0 0
      %1867 = vperm.xlu0 %1866, %v1701
      %v1868 = vpop.permute.xlu0 %1867
      %1871 = vset.pattern.permute.xlu0 0
      %1872 = vperm.xlu0 %1871, %v1702
      %v1873 = vpop.permute.xlu0 %1872
      %1876 = vset.pattern.permute.xlu0 0
      %1877 = vperm.xlu0 %1876, %v1703
      %v1878 = vpop.permute.xlu0 %1877
      %1881 = vset.pattern.permute.xlu0 0
      %1882 = vperm.xlu0 %1881, %v1704
      %v1883 = vpop.permute.xlu0 %1882
      %1886 = vset.pattern.permute.xlu0 0
      %1887 = vperm.xlu0 %1886, %v1705
      %v1888 = vpop.permute.xlu0 %1887
      %1891 = vset.pattern.permute.xlu0 0
      %1892 = vperm.xlu0 %1891, %v1706
      %v1893 = vpop.permute.xlu0 %1892
      %1896 = vset.pattern.permute.xlu0 0
      %1897 = vperm.xlu0 %1896, %v1707
      %v1898 = vpop.permute.xlu0 %1897
      %1901 = vset.pattern.permute.xlu0 0
      %1902 = vperm.xlu0 %1901, %v1708
      %v1903 = vpop.permute.xlu0 %1902
      %1906 = vset.pattern.permute.xlu0 0
      %1907 = vperm.xlu0 %1906, %v1709
      %v1908 = vpop.permute.xlu0 %1907
      %1911 = vset.pattern.permute.xlu0 0
      %1912 = vperm.xlu0 %1911, %v1710
      %v1913 = vpop.permute.xlu0 %1912
      %1916 = vset.pattern.permute.xlu0 0
      %1917 = vperm.xlu0 %1916, %v1711
      %v1918 = vpop.permute.xlu0 %1917
      %1921 = vset.pattern.permute.xlu0 0
      %1922 = vperm.xlu0 %1921, %v1712
      %v1923 = vpop.permute.xlu0 %1922
      %1926 = vset.pattern.permute.xlu0 0
      %1927 = vperm.xlu0 %1926, %v1713
      %v1928 = vpop.permute.xlu0 %1927
      %1931 = vset.pattern.permute.xlu0 0
      %1932 = vperm.xlu0 %1931, %v1714
      %v1933 = vpop.permute.xlu0 %1932
      %1936 = vset.pattern.permute.xlu0 0
      %1937 = vperm.xlu0 %1936, %v1715
      %v1938 = vpop.permute.xlu0 %1937
      %1941 = vset.pattern.permute.xlu0 0
      %1942 = vperm.xlu0 %1941, %v1716
      %v1943 = vpop.permute.xlu0 %1942
      %1946 = vset.pattern.permute.xlu0 0
      %1947 = vperm.xlu0 %1946, %v1717
      %v1948 = vpop.permute.xlu0 %1947
      %1951 = vset.pattern.permute.xlu0 0
      %1952 = vperm.xlu0 %1951, %v1718
      %v1953 = vpop.permute.xlu0 %1952
      %1956 = vset.pattern.permute.xlu0 0
      %1957 = vperm.xlu0 %1956, %v1719
      %v1958 = vpop.permute.xlu0 %1957
      %1961 = vset.pattern.permute.xlu0 0
      %1962 = vperm.xlu0 %1961, %v1720
      %v1963 = vpop.permute.xlu0 %1962
      %1966 = vset.pattern.permute.xlu0 0
      %1967 = vperm.xlu0 %1966, %v1721
      %v1968 = vpop.permute.xlu0 %1967
      %1971 = vset.pattern.permute.xlu0 0
      %1972 = vperm.xlu0 %1971, %v1722
      %v1973 = vpop.permute.xlu0 %1972
      %1976 = vset.pattern.permute.xlu0 0
      %1977 = vperm.xlu0 %1976, %v1723
      %v1978 = vpop.permute.xlu0 %1977
      %1981 = vset.pattern.permute.xlu0 0
      %1982 = vperm.xlu0 %1981, %v1724
      %v1983 = vpop.permute.xlu0 %1982
      %1986 = vset.pattern.permute.xlu0 0
      %1987 = vperm.xlu0 %1986, %v1725
      %v1988 = vpop.permute.xlu0 %1987
      %1991 = vset.pattern.permute.xlu0 0
      %1992 = vperm.xlu0 %1991, %v1726
      %v1993 = vpop.permute.xlu0 %1992
      %1996 = vset.pattern.permute.xlu0 0
      %1997 = vperm.xlu0 %1996, %v1727
      %v1998 = vpop.permute.xlu0 %1997
      %2001 = vset.pattern.permute.xlu0 0
      %2002 = vperm.xlu0 %2001, %v1728
      %v2003 = vpop.permute.xlu0 %2002
      %2006 = vset.pattern.permute.xlu0 0
      %2007 = vperm.xlu0 %2006, %v1729
      %v2008 = vpop.permute.xlu0 %2007
      %2011 = vset.pattern.permute.xlu0 0
      %2012 = vperm.xlu0 %2011, %v1730
      %v2013 = vpop.permute.xlu0 %2012
      %2016 = vset.pattern.permute.xlu0 0
      %2017 = vperm.xlu0 %2016, %v1731
      %v2018 = vpop.permute.xlu0 %2017
      %2021 = vset.pattern.permute.xlu0 0
      %2022 = vperm.xlu0 %2021, %v1732
      %v2023 = vpop.permute.xlu0 %2022
      %2026 = vset.pattern.permute.xlu0 0
      %2027 = vperm.xlu0 %2026, %v1733
      %v2028 = vpop.permute.xlu0 %2027
      %2031 = vset.pattern.permute.xlu0 0
      %2032 = vperm.xlu0 %2031, %v1734
      %v2033 = vpop.permute.xlu0 %2032
      %2036 = vset.pattern.permute.xlu0 0
      %2037 = vperm.xlu0 %2036, %v1735
      %v2038 = vpop.permute.xlu0 %2037
      %2041 = vset.pattern.permute.xlu0 0
      %2042 = vperm.xlu0 %2041, %v1736
      %v2043 = vpop.permute.xlu0 %2042
      %2046 = vset.pattern.permute.xlu0 0
      %2047 = vperm.xlu0 %2046, %v1737
      %v2048 = vpop.permute.xlu0 %2047
      %2051 = vset.pattern.permute.xlu0 0
      %2052 = vperm.xlu0 %2051, %v1738
      %v2053 = vpop.permute.xlu0 %2052
      %2056 = vset.pattern.permute.xlu0 0
      %2057 = vperm.xlu0 %2056, %v1739
      %v2058 = vpop.permute.xlu0 %2057
      %v2124 = vunpack.c.l.b16 %v1612
      %v2125 = vunpack.c.h.b16 %v1612
      %v2126 = vunpack.c.l.b16 %v1613
      %v2127 = vunpack.c.h.b16 %v1613
      %v2128 = vunpack.c.l.b16 %v1614
      %v2129 = vunpack.c.h.b16 %v1614
      %v2130 = vunpack.c.l.b16 %v1615
      %v2131 = vunpack.c.h.b16 %v1615
      %v2132 = vunpack.c.l.b16 %v1616
      %v2133 = vunpack.c.h.b16 %v1616
      %v2134 = vunpack.c.l.b16 %v1617
      %v2135 = vunpack.c.h.b16 %v1617
      %v2136 = vunpack.c.l.b16 %v1618
      %v2137 = vunpack.c.h.b16 %v1618
      %v2138 = vunpack.c.l.b16 %v1619
      %v2139 = vunpack.c.h.b16 %v1619
      %v2140 = vunpack.c.l.b16 %v1620
      %v2141 = vunpack.c.h.b16 %v1620
      %v2142 = vunpack.c.l.b16 %v1621
      %v2143 = vunpack.c.h.b16 %v1621
      %v2144 = vunpack.c.l.b16 %v1622
      %v2145 = vunpack.c.h.b16 %v1622
      %v2146 = vunpack.c.l.b16 %v1623
      %v2147 = vunpack.c.h.b16 %v1623
      %v2148 = vunpack.c.l.b16 %v1624
      %v2149 = vunpack.c.h.b16 %v1624
      %v2150 = vunpack.c.l.b16 %v1625
      %v2151 = vunpack.c.h.b16 %v1625
      %v2152 = vunpack.c.l.b16 %v1626
      %v2153 = vunpack.c.h.b16 %v1626
      %v2154 = vunpack.c.l.b16 %v1627
      %v2155 = vunpack.c.h.b16 %v1627
      %v2156 = vunpack.c.l.b16 %v1628
      %v2157 = vunpack.c.h.b16 %v1628
      %v2158 = vunpack.c.l.b16 %v1629
      %v2159 = vunpack.c.h.b16 %v1629
      %v2160 = vunpack.c.l.b16 %v1630
      %v2161 = vunpack.c.h.b16 %v1630
      %v2162 = vunpack.c.l.b16 %v1631
      %v2163 = vunpack.c.h.b16 %v1631
      %v2164 = vunpack.c.l.b16 %v1632
      %v2165 = vunpack.c.h.b16 %v1632
      %v2166 = vunpack.c.l.b16 %v1633
      %v2167 = vunpack.c.h.b16 %v1633
      %v2168 = vunpack.c.l.b16 %v1634
      %v2169 = vunpack.c.h.b16 %v1634
      %v2170 = vunpack.c.l.b16 %v1635
      %v2171 = vunpack.c.h.b16 %v1635
      %v2172 = vunpack.c.l.b16 %v1636
      %v2173 = vunpack.c.h.b16 %v1636
      %v2174 = vunpack.c.l.b16 %v1637
      %v2175 = vunpack.c.h.b16 %v1637
      %v2176 = vunpack.c.l.b16 %v1638
      %v2177 = vunpack.c.h.b16 %v1638
      %v2178 = vunpack.c.l.b16 %v1639
      %v2179 = vunpack.c.h.b16 %v1639
      %v2180 = vunpack.c.l.b16 %v1640
      %v2181 = vunpack.c.h.b16 %v1640
      %v2182 = vunpack.c.l.b16 %v1641
      %v2183 = vunpack.c.h.b16 %v1641
      %v2184 = vunpack.c.l.b16 %v1642
      %v2185 = vunpack.c.h.b16 %v1642
      %v2186 = vunpack.c.l.b16 %v1643
      %v2187 = vunpack.c.h.b16 %v1643
      %v2188 = vunpack.c.l.b16 %v1644
      %v2189 = vunpack.c.h.b16 %v1644
      %v2190 = vunpack.c.l.b16 %v1645
      %v2191 = vunpack.c.h.b16 %v1645
      %v2192 = vunpack.c.l.b16 %v1646
      %v2193 = vunpack.c.h.b16 %v1646
      %v2194 = vunpack.c.l.b16 %v1647
      %v2195 = vunpack.c.h.b16 %v1647
      %v2196 = vunpack.c.l.b16 %v1648
      %v2197 = vunpack.c.h.b16 %v1648
      %v2198 = vunpack.c.l.b16 %v1649
      %v2199 = vunpack.c.h.b16 %v1649
      %v2200 = vunpack.c.l.b16 %v1650
      %v2201 = vunpack.c.h.b16 %v1650
      %v2202 = vunpack.c.l.b16 %v1651
      %v2203 = vunpack.c.h.b16 %v1651
      %v2204 = vunpack.c.l.b16 %v1652
      %v2205 = vunpack.c.h.b16 %v1652
      %v2206 = vunpack.c.l.b16 %v1653
      %v2207 = vunpack.c.h.b16 %v1653
      %v2208 = vunpack.c.l.b16 %v1654
      %v2209 = vunpack.c.h.b16 %v1654
      %v2210 = vunpack.c.l.b16 %v1655
      %v2211 = vunpack.c.h.b16 %v1655
      %v2212 = vunpack.c.l.b16 %v1656
      %v2213 = vunpack.c.h.b16 %v1656
      %v2214 = vunpack.c.l.b16 %v1657
      %v2215 = vunpack.c.h.b16 %v1657
      %v2216 = vunpack.c.l.b16 %v1658
      %v2217 = vunpack.c.h.b16 %v1658
      %v2218 = vunpack.c.l.b16 %v1659
      %v2219 = vunpack.c.h.b16 %v1659
      %v2220 = vunpack.c.l.b16 %v1660
      %v2221 = vunpack.c.h.b16 %v1660
      %v2222 = vunpack.c.l.b16 %v1661
      %v2223 = vunpack.c.h.b16 %v1661
      %v2224 = vunpack.c.l.b16 %v1662
      %v2225 = vunpack.c.h.b16 %v1662
      %v2226 = vunpack.c.l.b16 %v1663
      %v2227 = vunpack.c.h.b16 %v1663
      %v2228 = vunpack.c.l.b16 %v1664
      %v2229 = vunpack.c.h.b16 %v1664
      %v2230 = vunpack.c.l.b16 %v1665
      %v2231 = vunpack.c.h.b16 %v1665
      %v2232 = vunpack.c.l.b16 %v1666
      %v2233 = vunpack.c.h.b16 %v1666
      %v2234 = vunpack.c.l.b16 %v1667
      %v2235 = vunpack.c.h.b16 %v1667
      %v2236 = vunpack.c.l.b16 %v1668
      %v2237 = vunpack.c.h.b16 %v1668
      %v2238 = vunpack.c.l.b16 %v1669
      %v2239 = vunpack.c.h.b16 %v1669
      %v2240 = vunpack.c.l.b16 %v1670
      %v2241 = vunpack.c.h.b16 %v1670
      %v2242 = vunpack.c.l.b16 %v1671
      %v2243 = vunpack.c.h.b16 %v1671
      %v2244 = vunpack.c.l.b16 %v1672
      %v2245 = vunpack.c.h.b16 %v1672
      %v2246 = vunpack.c.l.b16 %v1673
      %v2247 = vunpack.c.h.b16 %v1673
      %v2248 = vunpack.c.l.b16 %v1674
      %v2249 = vunpack.c.h.b16 %v1674
      %v2250 = vunpack.c.l.b16 %v1675
      %v2251 = vunpack.c.h.b16 %v1675
      %v2252 = vpack.c.b16 %v2126, %v2124
      %v2253 = vpack.c.b16 %v2127, %v2125
      %v2254 = vpack.c.b16 %v2130, %v2128
      %v2255 = vpack.c.b16 %v2131, %v2129
      %v2256 = vpack.c.b16 %v2134, %v2132
      %v2257 = vpack.c.b16 %v2135, %v2133
      %v2258 = vpack.c.b16 %v2138, %v2136
      %v2259 = vpack.c.b16 %v2139, %v2137
      %v2260 = vpack.c.b16 %v2142, %v2140
      %v2261 = vpack.c.b16 %v2143, %v2141
      %v2262 = vpack.c.b16 %v2146, %v2144
      %v2263 = vpack.c.b16 %v2147, %v2145
      %v2264 = vpack.c.b16 %v2150, %v2148
      %v2265 = vpack.c.b16 %v2151, %v2149
      %v2266 = vpack.c.b16 %v2154, %v2152
      %v2267 = vpack.c.b16 %v2155, %v2153
      %v2268 = vpack.c.b16 %v2158, %v2156
      %v2269 = vpack.c.b16 %v2159, %v2157
      %v2270 = vpack.c.b16 %v2162, %v2160
      %v2271 = vpack.c.b16 %v2163, %v2161
      %v2272 = vpack.c.b16 %v2166, %v2164
      %v2273 = vpack.c.b16 %v2167, %v2165
      %v2274 = vpack.c.b16 %v2170, %v2168
      %v2275 = vpack.c.b16 %v2171, %v2169
      %v2276 = vpack.c.b16 %v2174, %v2172
      %v2277 = vpack.c.b16 %v2175, %v2173
      %v2278 = vpack.c.b16 %v2178, %v2176
      %v2279 = vpack.c.b16 %v2179, %v2177
      %v2280 = vpack.c.b16 %v2182, %v2180
      %v2281 = vpack.c.b16 %v2183, %v2181
      %v2282 = vpack.c.b16 %v2186, %v2184
      %v2283 = vpack.c.b16 %v2187, %v2185
      %v2284 = vpack.c.b16 %v2190, %v2188
      %v2285 = vpack.c.b16 %v2191, %v2189
      %v2286 = vpack.c.b16 %v2194, %v2192
      %v2287 = vpack.c.b16 %v2195, %v2193
      %v2288 = vpack.c.b16 %v2198, %v2196
      %v2289 = vpack.c.b16 %v2199, %v2197
      %v2290 = vpack.c.b16 %v2202, %v2200
      %v2291 = vpack.c.b16 %v2203, %v2201
      %v2292 = vpack.c.b16 %v2206, %v2204
      %v2293 = vpack.c.b16 %v2207, %v2205
      %v2294 = vpack.c.b16 %v2210, %v2208
      %v2295 = vpack.c.b16 %v2211, %v2209
      %v2296 = vpack.c.b16 %v2214, %v2212
      %v2297 = vpack.c.b16 %v2215, %v2213
      %v2298 = vpack.c.b16 %v2218, %v2216
      %v2299 = vpack.c.b16 %v2219, %v2217
      %v2300 = vpack.c.b16 %v2222, %v2220
      %v2301 = vpack.c.b16 %v2223, %v2221
      %v2302 = vpack.c.b16 %v2226, %v2224
      %v2303 = vpack.c.b16 %v2227, %v2225
      %v2304 = vpack.c.b16 %v2230, %v2228
      %v2305 = vpack.c.b16 %v2231, %v2229
      %v2306 = vpack.c.b16 %v2234, %v2232
      %v2307 = vpack.c.b16 %v2235, %v2233
      %v2308 = vpack.c.b16 %v2238, %v2236
      %v2309 = vpack.c.b16 %v2239, %v2237
      %v2310 = vpack.c.b16 %v2242, %v2240
      %v2311 = vpack.c.b16 %v2243, %v2241
      %v2312 = vpack.c.b16 %v2246, %v2244
      %v2313 = vpack.c.b16 %v2247, %v2245
      %v2314 = vpack.c.b16 %v2250, %v2248
      %v2315 = vpack.c.b16 %v2251, %v2249
      %2380 = vmatpush.bf16.msra.mxu0 %v1603
      %2381 = vmatpush.bf16.msra.mxu0 %v1602
      %2382 = vmatpush.bf16.msra.mxu0 %v1601
      %2383 = vmatpush.bf16.msra.mxu0 %v1600
      %2384 = vmatpush.bf16.msra.mxu0 %v1599
      %2385 = vmatpush.bf16.msra.mxu0 %v1598
      %2386 = vmatpush.bf16.msra.mxu0 %v1597
      %2387 = vmatpush.bf16.msra.mxu0 %v1596
      %2388 = vmatmul.bf16.gmra.mxu0 %v2252
      %v2389 = vpop.f32.mrf.mxu0
      %v2390 = vadd.f32 %v1743, %v2389
      %v2391 = vpop.f32.mrf.mxu0
      %v2392 = vadd.f32 %v1748, %v2391
      %2393 = vmatmul.bf16.gmra.mxu0 %v2254
      %v2394 = vpop.f32.mrf.mxu0
      %v2395 = vadd.f32 %v1753, %v2394
      %v2396 = vpop.f32.mrf.mxu0
      %v2397 = vadd.f32 %v1758, %v2396
      %2398 = vmatmul.bf16.gmra.mxu0 %v2256
      %v2399 = vpop.f32.mrf.mxu0
      %v2400 = vadd.f32 %v1763, %v2399
      %v2401 = vpop.f32.mrf.mxu0
      %v2402 = vadd.f32 %v1768, %v2401
      %2403 = vmatmul.bf16.gmra.mxu0 %v2258
      %v2404 = vpop.f32.mrf.mxu0
      %v2405 = vadd.f32 %v1773, %v2404
      %v2406 = vpop.f32.mrf.mxu0
      %v2407 = vadd.f32 %v1778, %v2406
      %2408 = vmatmul.bf16.gmra.mxu0 %v2260
      %v2409 = vpop.f32.mrf.mxu0
      %v2410 = vadd.f32 %v1783, %v2409
      %v2411 = vpop.f32.mrf.mxu0
      %v2412 = vadd.f32 %v1788, %v2411
      %2413 = vmatmul.bf16.gmra.mxu0 %v2262
      %v2414 = vpop.f32.mrf.mxu0
      %v2415 = vadd.f32 %v1793, %v2414
      %v2416 = vpop.f32.mrf.mxu0
      %v2417 = vadd.f32 %v1798, %v2416
      %2418 = vmatmul.bf16.gmra.mxu0 %v2264
      %v2419 = vpop.f32.mrf.mxu0
      %v2420 = vadd.f32 %v1803, %v2419
      %v2421 = vpop.f32.mrf.mxu0
      %v2422 = vadd.f32 %v1808, %v2421
      %2423 = vmatmul.bf16.gmra.mxu0 %v2266
      %v2424 = vpop.f32.mrf.mxu0
      %v2425 = vadd.f32 %v1813, %v2424
      %v2426 = vpop.f32.mrf.mxu0
      %v2427 = vadd.f32 %v1818, %v2426
      %2428 = vmatmul.bf16.gmra.mxu0 %v2268
      %v2429 = vpop.f32.mrf.mxu0
      %v2430 = vadd.f32 %v1823, %v2429
      %v2431 = vpop.f32.mrf.mxu0
      %v2432 = vadd.f32 %v1828, %v2431
      %2433 = vmatmul.bf16.gmra.mxu0 %v2270
      %v2434 = vpop.f32.mrf.mxu0
      %v2435 = vadd.f32 %v1833, %v2434
      %v2436 = vpop.f32.mrf.mxu0
      %v2437 = vadd.f32 %v1838, %v2436
      %2438 = vmatmul.bf16.gmra.mxu0 %v2272
      %v2439 = vpop.f32.mrf.mxu0
      %v2440 = vadd.f32 %v1843, %v2439
      %v2441 = vpop.f32.mrf.mxu0
      %v2442 = vadd.f32 %v1848, %v2441
      %2443 = vmatmul.bf16.gmra.mxu0 %v2274
      %v2444 = vpop.f32.mrf.mxu0
      %v2445 = vadd.f32 %v1853, %v2444
      %v2446 = vpop.f32.mrf.mxu0
      %v2447 = vadd.f32 %v1858, %v2446
      %2448 = vmatmul.bf16.gmra.mxu0 %v2276
      %v2449 = vpop.f32.mrf.mxu0
      %v2450 = vadd.f32 %v1863, %v2449
      %v2451 = vpop.f32.mrf.mxu0
      %v2452 = vadd.f32 %v1868, %v2451
      %2453 = vmatmul.bf16.gmra.mxu0 %v2278
      %v2454 = vpop.f32.mrf.mxu0
      %v2455 = vadd.f32 %v1873, %v2454
      %v2456 = vpop.f32.mrf.mxu0
      %v2457 = vadd.f32 %v1878, %v2456
      %2458 = vmatmul.bf16.gmra.mxu0 %v2280
      %v2459 = vpop.f32.mrf.mxu0
      %v2460 = vadd.f32 %v1883, %v2459
      %v2461 = vpop.f32.mrf.mxu0
      %v2462 = vadd.f32 %v1888, %v2461
      %2463 = vmatmul.bf16.gmra.mxu0 %v2282
      %v2464 = vpop.f32.mrf.mxu0
      %v2465 = vadd.f32 %v1893, %v2464
      %v2466 = vpop.f32.mrf.mxu0
      %v2467 = vadd.f32 %v1898, %v2466
      %2468 = vmatmul.bf16.gmra.mxu0 %v2284
      %v2469 = vpop.f32.mrf.mxu0
      %v2470 = vadd.f32 %v1903, %v2469
      %v2471 = vpop.f32.mrf.mxu0
      %v2472 = vadd.f32 %v1908, %v2471
      %2473 = vmatmul.bf16.gmra.mxu0 %v2286
      %v2474 = vpop.f32.mrf.mxu0
      %v2475 = vadd.f32 %v1913, %v2474
      %v2476 = vpop.f32.mrf.mxu0
      %v2477 = vadd.f32 %v1918, %v2476
      %2478 = vmatmul.bf16.gmra.mxu0 %v2288
      %v2479 = vpop.f32.mrf.mxu0
      %v2480 = vadd.f32 %v1923, %v2479
      %v2481 = vpop.f32.mrf.mxu0
      %v2482 = vadd.f32 %v1928, %v2481
      %2483 = vmatmul.bf16.gmra.mxu0 %v2290
      %v2484 = vpop.f32.mrf.mxu0
      %v2485 = vadd.f32 %v1933, %v2484
      %v2486 = vpop.f32.mrf.mxu0
      %v2487 = vadd.f32 %v1938, %v2486
      %2488 = vmatmul.bf16.gmra.mxu0 %v2292
      %v2489 = vpop.f32.mrf.mxu0
      %v2490 = vadd.f32 %v1943, %v2489
      %v2491 = vpop.f32.mrf.mxu0
      %v2492 = vadd.f32 %v1948, %v2491
      %2493 = vmatmul.bf16.gmra.mxu0 %v2294
      %v2494 = vpop.f32.mrf.mxu0
      %v2495 = vadd.f32 %v1953, %v2494
      %v2496 = vpop.f32.mrf.mxu0
      %v2497 = vadd.f32 %v1958, %v2496
      %2498 = vmatmul.bf16.gmra.mxu0 %v2296
      %v2499 = vpop.f32.mrf.mxu0
      %v2500 = vadd.f32 %v1963, %v2499
      %v2501 = vpop.f32.mrf.mxu0
      %v2502 = vadd.f32 %v1968, %v2501
      %2503 = vmatmul.bf16.gmra.mxu0 %v2298
      %v2504 = vpop.f32.mrf.mxu0
      %v2505 = vadd.f32 %v1973, %v2504
      %v2506 = vpop.f32.mrf.mxu0
      %v2507 = vadd.f32 %v1978, %v2506
      %2508 = vmatmul.bf16.gmra.mxu0 %v2300
      %v2509 = vpop.f32.mrf.mxu0
      %v2510 = vadd.f32 %v1983, %v2509
      %v2511 = vpop.f32.mrf.mxu0
      %v2512 = vadd.f32 %v1988, %v2511
      %2513 = vmatmul.bf16.gmra.mxu0 %v2302
      %v2514 = vpop.f32.mrf.mxu0
      %v2515 = vadd.f32 %v1993, %v2514
      %v2516 = vpop.f32.mrf.mxu0
      %v2517 = vadd.f32 %v1998, %v2516
      %2518 = vmatmul.bf16.gmra.mxu0 %v2304
      %v2519 = vpop.f32.mrf.mxu0
      %v2520 = vadd.f32 %v2003, %v2519
      %v2521 = vpop.f32.mrf.mxu0
      %v2522 = vadd.f32 %v2008, %v2521
      %2523 = vmatmul.bf16.gmra.mxu0 %v2306
      %v2524 = vpop.f32.mrf.mxu0
      %v2525 = vadd.f32 %v2013, %v2524
      %v2526 = vpop.f32.mrf.mxu0
      %v2527 = vadd.f32 %v2018, %v2526
      %2528 = vmatmul.bf16.gmra.mxu0 %v2308
      %v2529 = vpop.f32.mrf.mxu0
      %v2530 = vadd.f32 %v2023, %v2529
      %v2531 = vpop.f32.mrf.mxu0
      %v2532 = vadd.f32 %v2028, %v2531
      %2533 = vmatmul.bf16.gmra.mxu0 %v2310
      %v2534 = vpop.f32.mrf.mxu0
      %v2535 = vadd.f32 %v2033, %v2534
      %v2536 = vpop.f32.mrf.mxu0
      %v2537 = vadd.f32 %v2038, %v2536
      %2538 = vmatmul.bf16.gmra.mxu0 %v2312
      %v2539 = vpop.f32.mrf.mxu0
      %v2540 = vadd.f32 %v2043, %v2539
      %v2541 = vpop.f32.mrf.mxu0
      %v2542 = vadd.f32 %v2048, %v2541
      %2543 = vmatmul.bf16.gmra.mxu0 %v2314
      %v2544 = vpop.f32.mrf.mxu0
      %v2545 = vadd.f32 %v2053, %v2544
      %v2546 = vpop.f32.mrf.mxu0
      %v2547 = vadd.f32 %v2058, %v2546
      %2548 = vdwg.mxu0
      %2549 = vmatpush.bf16.msra.mxu0 %v1611
      %2550 = vmatpush.bf16.msra.mxu0 %v1610
      %2551 = vmatpush.bf16.msra.mxu0 %v1609
      %2552 = vmatpush.bf16.msra.mxu0 %v1608
      %2553 = vmatpush.bf16.msra.mxu0 %v1607
      %2554 = vmatpush.bf16.msra.mxu0 %v1606
      %2555 = vmatpush.bf16.msra.mxu0 %v1605
      %2556 = vmatpush.bf16.msra.mxu0 %v1604
      %2557 = vmatmul.bf16.gmra.mxu0 %v2253
      %v2558 = vpop.f32.mrf.mxu0
      %v2559 = vadd.f32 %v2390, %v2558
      %v2560 = vpop.f32.mrf.mxu0
      %v2561 = vadd.f32 %v2392, %v2560
      %2562 = vmatmul.bf16.gmra.mxu0 %v2255
      %v2563 = vpop.f32.mrf.mxu0
      %v2564 = vadd.f32 %v2395, %v2563
      %v2565 = vpop.f32.mrf.mxu0
      %v2566 = vadd.f32 %v2397, %v2565
      %2567 = vmatmul.bf16.gmra.mxu0 %v2257
      %v2568 = vpop.f32.mrf.mxu0
      %v2569 = vadd.f32 %v2400, %v2568
      %v2570 = vpop.f32.mrf.mxu0
      %v2571 = vadd.f32 %v2402, %v2570
      %2572 = vmatmul.bf16.gmra.mxu0 %v2259
      %v2573 = vpop.f32.mrf.mxu0
      %v2574 = vadd.f32 %v2405, %v2573
      %v2575 = vpop.f32.mrf.mxu0
      %v2576 = vadd.f32 %v2407, %v2575
      %2577 = vmatmul.bf16.gmra.mxu0 %v2261
      %v2578 = vpop.f32.mrf.mxu0
      %v2579 = vadd.f32 %v2410, %v2578
      %v2580 = vpop.f32.mrf.mxu0
      %v2581 = vadd.f32 %v2412, %v2580
      %2582 = vmatmul.bf16.gmra.mxu0 %v2263
      %v2583 = vpop.f32.mrf.mxu0
      %v2584 = vadd.f32 %v2415, %v2583
      %v2585 = vpop.f32.mrf.mxu0
      %v2586 = vadd.f32 %v2417, %v2585
      %2587 = vmatmul.bf16.gmra.mxu0 %v2265
      %v2588 = vpop.f32.mrf.mxu0
      %v2589 = vadd.f32 %v2420, %v2588
      %v2590 = vpop.f32.mrf.mxu0
      %v2591 = vadd.f32 %v2422, %v2590
      %2592 = vmatmul.bf16.gmra.mxu0 %v2267
      %v2593 = vpop.f32.mrf.mxu0
      %v2594 = vadd.f32 %v2425, %v2593
      %v2595 = vpop.f32.mrf.mxu0
      %v2596 = vadd.f32 %v2427, %v2595
      %2597 = vmatmul.bf16.gmra.mxu0 %v2269
      %v2598 = vpop.f32.mrf.mxu0
      %v2599 = vadd.f32 %v2430, %v2598
      %v2600 = vpop.f32.mrf.mxu0
      %v2601 = vadd.f32 %v2432, %v2600
      %2602 = vmatmul.bf16.gmra.mxu0 %v2271
      %v2603 = vpop.f32.mrf.mxu0
      %v2604 = vadd.f32 %v2435, %v2603
      %v2605 = vpop.f32.mrf.mxu0
      %v2606 = vadd.f32 %v2437, %v2605
      %2607 = vmatmul.bf16.gmra.mxu0 %v2273
      %v2608 = vpop.f32.mrf.mxu0
      %v2609 = vadd.f32 %v2440, %v2608
      %v2610 = vpop.f32.mrf.mxu0
      %v2611 = vadd.f32 %v2442, %v2610
      %2612 = vmatmul.bf16.gmra.mxu0 %v2275
      %v2613 = vpop.f32.mrf.mxu0
      %v2614 = vadd.f32 %v2445, %v2613
      %v2615 = vpop.f32.mrf.mxu0
      %v2616 = vadd.f32 %v2447, %v2615
      %2617 = vmatmul.bf16.gmra.mxu0 %v2277
      %v2618 = vpop.f32.mrf.mxu0
      %v2619 = vadd.f32 %v2450, %v2618
      %v2620 = vpop.f32.mrf.mxu0
      %v2621 = vadd.f32 %v2452, %v2620
      %2622 = vmatmul.bf16.gmra.mxu0 %v2279
      %v2623 = vpop.f32.mrf.mxu0
      %v2624 = vadd.f32 %v2455, %v2623
      %v2625 = vpop.f32.mrf.mxu0
      %v2626 = vadd.f32 %v2457, %v2625
      %2627 = vmatmul.bf16.gmra.mxu0 %v2281
      %v2628 = vpop.f32.mrf.mxu0
      %v2629 = vadd.f32 %v2460, %v2628
      %v2630 = vpop.f32.mrf.mxu0
      %v2631 = vadd.f32 %v2462, %v2630
      %2632 = vmatmul.bf16.gmra.mxu0 %v2283
      %v2633 = vpop.f32.mrf.mxu0
      %v2634 = vadd.f32 %v2465, %v2633
      %v2635 = vpop.f32.mrf.mxu0
      %v2636 = vadd.f32 %v2467, %v2635
      %2637 = vmatmul.bf16.gmra.mxu0 %v2285
      %v2638 = vpop.f32.mrf.mxu0
      %v2639 = vadd.f32 %v2470, %v2638
      %v2640 = vpop.f32.mrf.mxu0
      %v2641 = vadd.f32 %v2472, %v2640
      %2642 = vmatmul.bf16.gmra.mxu0 %v2287
      %v2643 = vpop.f32.mrf.mxu0
      %v2644 = vadd.f32 %v2475, %v2643
      %v2645 = vpop.f32.mrf.mxu0
      %v2646 = vadd.f32 %v2477, %v2645
      %2647 = vmatmul.bf16.gmra.mxu0 %v2289
      %v2648 = vpop.f32.mrf.mxu0
      %v2649 = vadd.f32 %v2480, %v2648
      %v2650 = vpop.f32.mrf.mxu0
      %v2651 = vadd.f32 %v2482, %v2650
      %2652 = vmatmul.bf16.gmra.mxu0 %v2291
      %v2653 = vpop.f32.mrf.mxu0
      %v2654 = vadd.f32 %v2485, %v2653
      %v2655 = vpop.f32.mrf.mxu0
      %v2656 = vadd.f32 %v2487, %v2655
      %2657 = vmatmul.bf16.gmra.mxu0 %v2293
      %v2658 = vpop.f32.mrf.mxu0
      %v2659 = vadd.f32 %v2490, %v2658
      %v2660 = vpop.f32.mrf.mxu0
      %v2661 = vadd.f32 %v2492, %v2660
      %2662 = vmatmul.bf16.gmra.mxu0 %v2295
      %v2663 = vpop.f32.mrf.mxu0
      %v2664 = vadd.f32 %v2495, %v2663
      %v2665 = vpop.f32.mrf.mxu0
      %v2666 = vadd.f32 %v2497, %v2665
      %2667 = vmatmul.bf16.gmra.mxu0 %v2297
      %v2668 = vpop.f32.mrf.mxu0
      %v2669 = vadd.f32 %v2500, %v2668
      %v2670 = vpop.f32.mrf.mxu0
      %v2671 = vadd.f32 %v2502, %v2670
      %2672 = vmatmul.bf16.gmra.mxu0 %v2299
      %v2673 = vpop.f32.mrf.mxu0
      %v2674 = vadd.f32 %v2505, %v2673
      %v2675 = vpop.f32.mrf.mxu0
      %v2676 = vadd.f32 %v2507, %v2675
      %2677 = vmatmul.bf16.gmra.mxu0 %v2301
      %v2678 = vpop.f32.mrf.mxu0
      %v2679 = vadd.f32 %v2510, %v2678
      %v2680 = vpop.f32.mrf.mxu0
      %v2681 = vadd.f32 %v2512, %v2680
      %2682 = vmatmul.bf16.gmra.mxu0 %v2303
      %v2683 = vpop.f32.mrf.mxu0
      %v2684 = vadd.f32 %v2515, %v2683
      %v2685 = vpop.f32.mrf.mxu0
      %v2686 = vadd.f32 %v2517, %v2685
      %2687 = vmatmul.bf16.gmra.mxu0 %v2305
      %v2688 = vpop.f32.mrf.mxu0
      %v2689 = vadd.f32 %v2520, %v2688
      %v2690 = vpop.f32.mrf.mxu0
      %v2691 = vadd.f32 %v2522, %v2690
      %2692 = vmatmul.bf16.gmra.mxu0 %v2307
      %v2693 = vpop.f32.mrf.mxu0
      %v2694 = vadd.f32 %v2525, %v2693
      %v2695 = vpop.f32.mrf.mxu0
      %v2696 = vadd.f32 %v2527, %v2695
      %2697 = vmatmul.bf16.gmra.mxu0 %v2309
      %v2698 = vpop.f32.mrf.mxu0
      %v2699 = vadd.f32 %v2530, %v2698
      %v2700 = vpop.f32.mrf.mxu0
      %v2701 = vadd.f32 %v2532, %v2700
      %2702 = vmatmul.bf16.gmra.mxu0 %v2311
      %v2703 = vpop.f32.mrf.mxu0
      %v2704 = vadd.f32 %v2535, %v2703
      %v2705 = vpop.f32.mrf.mxu0
      %v2706 = vadd.f32 %v2537, %v2705
      %2707 = vmatmul.bf16.gmra.mxu0 %v2313
      %v2708 = vpop.f32.mrf.mxu0
      %v2709 = vadd.f32 %v2540, %v2708
      %v2710 = vpop.f32.mrf.mxu0
      %v2711 = vadd.f32 %v2542, %v2710
      %2712 = vmatmul.bf16.gmra.mxu0 %v2315
      %v2713 = vpop.f32.mrf.mxu0
      %v2714 = vadd.f32 %v2545, %v2713
      %v2715 = vpop.f32.mrf.mxu0
      %v2716 = vadd.f32 %v2547, %v2715
      %2717 = vdwg.mxu0
      %v2718 = vmax.f32 %v2559, 0.0
      %v2719 = vmax.f32 %v2561, 0.0
      %v2720 = vmax.f32 %v2564, 0.0
      %v2721 = vmax.f32 %v2566, 0.0
      %v2722 = vmax.f32 %v2569, 0.0
      %v2723 = vmax.f32 %v2571, 0.0
      %v2724 = vmax.f32 %v2574, 0.0
      %v2725 = vmax.f32 %v2576, 0.0
      %v2726 = vmax.f32 %v2579, 0.0
      %v2727 = vmax.f32 %v2581, 0.0
      %v2728 = vmax.f32 %v2584, 0.0
      %v2729 = vmax.f32 %v2586, 0.0
      %v2730 = vmax.f32 %v2589, 0.0
      %v2731 = vmax.f32 %v2591, 0.0
      %v2732 = vmax.f32 %v2594, 0.0
      %v2733 = vmax.f32 %v2596, 0.0
      %v2734 = vmax.f32 %v2599, 0.0
      %v2735 = vmax.f32 %v2601, 0.0
      %v2736 = vmax.f32 %v2604, 0.0
      %v2737 = vmax.f32 %v2606, 0.0
      %v2738 = vmax.f32 %v2609, 0.0
      %v2739 = vmax.f32 %v2611, 0.0
      %v2740 = vmax.f32 %v2614, 0.0
      %v2741 = vmax.f32 %v2616, 0.0
      %v2742 = vmax.f32 %v2619, 0.0
      %v2743 = vmax.f32 %v2621, 0.0
      %v2744 = vmax.f32 %v2624, 0.0
      %v2745 = vmax.f32 %v2626, 0.0
      %v2746 = vmax.f32 %v2629, 0.0
      %v2747 = vmax.f32 %v2631, 0.0
      %v2748 = vmax.f32 %v2634, 0.0
      %v2749 = vmax.f32 %v2636, 0.0
      %v2750 = vmax.f32 %v2639, 0.0
      %v2751 = vmax.f32 %v2641, 0.0
      %v2752 = vmax.f32 %v2644, 0.0
      %v2753 = vmax.f32 %v2646, 0.0
      %v2754 = vmax.f32 %v2649, 0.0
      %v2755 = vmax.f32 %v2651, 0.0
      %v2756 = vmax.f32 %v2654, 0.0
      %v2757 = vmax.f32 %v2656, 0.0
      %v2758 = vmax.f32 %v2659, 0.0
      %v2759 = vmax.f32 %v2661, 0.0
      %v2760 = vmax.f32 %v2664, 0.0
      %v2761 = vmax.f32 %v2666, 0.0
      %v2762 = vmax.f32 %v2669, 0.0
      %v2763 = vmax.f32 %v2671, 0.0
      %v2764 = vmax.f32 %v2674, 0.0
      %v2765 = vmax.f32 %v2676, 0.0
      %v2766 = vmax.f32 %v2679, 0.0
      %v2767 = vmax.f32 %v2681, 0.0
      %v2768 = vmax.f32 %v2684, 0.0
      %v2769 = vmax.f32 %v2686, 0.0
      %v2770 = vmax.f32 %v2689, 0.0
      %v2771 = vmax.f32 %v2691, 0.0
      %v2772 = vmax.f32 %v2694, 0.0
      %v2773 = vmax.f32 %v2696, 0.0
      %v2774 = vmax.f32 %v2699, 0.0
      %v2775 = vmax.f32 %v2701, 0.0
      %v2776 = vmax.f32 %v2704, 0.0
      %v2777 = vmax.f32 %v2706, 0.0
      %v2778 = vmax.f32 %v2709, 0.0
      %v2779 = vmax.f32 %v2711, 0.0
      %v2780 = vmax.f32 %v2714, 0.0
      %v2781 = vmax.f32 %v2716, 0.0
      %v2782 = vpack.c.bf16 %v2719, %v2718
      %v2783 = vpack.c.bf16 %v2721, %v2720
      %v2784 = vpack.c.bf16 %v2723, %v2722
      %v2785 = vpack.c.bf16 %v2725, %v2724
      %v2786 = vpack.c.bf16 %v2727, %v2726
      %v2787 = vpack.c.bf16 %v2729, %v2728
      %v2788 = vpack.c.bf16 %v2731, %v2730
      %v2789 = vpack.c.bf16 %v2733, %v2732
      %v2790 = vpack.c.bf16 %v2735, %v2734
      %v2791 = vpack.c.bf16 %v2737, %v2736
      %v2792 = vpack.c.bf16 %v2739, %v2738
      %v2793 = vpack.c.bf16 %v2741, %v2740
      %v2794 = vpack.c.bf16 %v2743, %v2742
      %v2795 = vpack.c.bf16 %v2745, %v2744
      %v2796 = vpack.c.bf16 %v2747, %v2746
      %v2797 = vpack.c.bf16 %v2749, %v2748
      %v2798 = vpack.c.bf16 %v2751, %v2750
      %v2799 = vpack.c.bf16 %v2753, %v2752
      %v2800 = vpack.c.bf16 %v2755, %v2754
      %v2801 = vpack.c.bf16 %v2757, %v2756
      %v2802 = vpack.c.bf16 %v2759, %v2758
      %v2803 = vpack.c.bf16 %v2761, %v2760
      %v2804 = vpack.c.bf16 %v2763, %v2762
      %v2805 = vpack.c.bf16 %v2765, %v2764
      %v2806 = vpack.c.bf16 %v2767, %v2766
      %v2807 = vpack.c.bf16 %v2769, %v2768
      %v2808 = vpack.c.bf16 %v2771, %v2770
      %v2809 = vpack.c.bf16 %v2773, %v2772
      %v2810 = vpack.c.bf16 %v2775, %v2774
      %v2811 = vpack.c.bf16 %v2777, %v2776
      %v2812 = vpack.c.bf16 %v2779, %v2778
      %v2813 = vpack.c.bf16 %v2781, %v2780
      %v2814 = vld [vmem:[%s7] sm:$0xff]
      %v2815 = vld [vmem:[%s7 + $0x8] sm:$0xff]
      %v2816 = vld [vmem:[%s7 + $0x10] sm:$0xff]
      %v2817 = vld [vmem:[%s7 + $0x18] sm:$0xff]
      %v2818 = vld [vmem:[%s7 + $0x20] sm:$0xff]
      %v2819 = vld [vmem:[%s7 + $0x28] sm:$0xff]
      %v2820 = vld [vmem:[%s7 + $0x30] sm:$0xff]
      %v2821 = vld [vmem:[%s7 + $0x38] sm:$0xff]
      %v2822 = vld [vmem:[%s7 + $0x40] sm:$0xff]
      %v2823 = vld [vmem:[%s7 + $0x48] sm:$0xff]
      %v2824 = vld [vmem:[%s7 + $0x50] sm:$0xff]
      %v2825 = vld [vmem:[%s7 + $0x58] sm:$0xff]
      %v2826 = vld [vmem:[%s7 + $0x60] sm:$0xff]
      %v2827 = vld [vmem:[%s7 + $0x68] sm:$0xff]
      %v2828 = vld [vmem:[%s7 + $0x70] sm:$0xff]
      %v2829 = vld [vmem:[%s7 + $0x78] sm:$0xff]
      %v2830 = vld [vmem:[%s7 + $0x80] sm:$0xff]
      %v2831 = vld [vmem:[%s7 + $0x88] sm:$0xff]
      %v2832 = vld [vmem:[%s7 + $0x90] sm:$0xff]
      %v2833 = vld [vmem:[%s7 + $0x98] sm:$0xff]
      %v2834 = vld [vmem:[%s7 + $0xa0] sm:$0xff]
      %v2835 = vld [vmem:[%s7 + $0xa8] sm:$0xff]
      %v2836 = vld [vmem:[%s7 + $0xb0] sm:$0xff]
      %v2837 = vld [vmem:[%s7 + $0xb8] sm:$0xff]
      %v2838 = vld [vmem:[%s7 + $0xc0] sm:$0xff]
      %v2839 = vld [vmem:[%s7 + $0xc8] sm:$0xff]
      %v2840 = vld [vmem:[%s7 + $0xd0] sm:$0xff]
      %v2841 = vld [vmem:[%s7 + $0xd8] sm:$0xff]
      %v2842 = vld [vmem:[%s7 + $0xe0] sm:$0xff]
      %v2843 = vld [vmem:[%s7 + $0xe8] sm:$0xff]
      %v2844 = vld [vmem:[%s7 + $0xf0] sm:$0xff]
      %v2845 = vld [vmem:[%s7 + $0xf8] sm:$0xff]
      %v2846 = vld [vmem:[%s7 + $0x100] sm:$0xff]
      %v2847 = vld [vmem:[%s7 + $0x108] sm:$0xff]
      %v2848 = vld [vmem:[%s7 + $0x110] sm:$0xff]
      %v2849 = vld [vmem:[%s7 + $0x118] sm:$0xff]
      %v2850 = vld [vmem:[%s7 + $0x120] sm:$0xff]
      %v2851 = vld [vmem:[%s7 + $0x128] sm:$0xff]
      %v2852 = vld [vmem:[%s7 + $0x130] sm:$0xff]
      %v2853 = vld [vmem:[%s7 + $0x138] sm:$0xff]
      %v2854 = vld [vmem:[%s7 + $0x140] sm:$0xff]
      %v2855 = vld [vmem:[%s7 + $0x148] sm:$0xff]
      %v2856 = vld [vmem:[%s7 + $0x150] sm:$0xff]
      %v2857 = vld [vmem:[%s7 + $0x158] sm:$0xff]
      %v2858 = vld [vmem:[%s7 + $0x160] sm:$0xff]
      %v2859 = vld [vmem:[%s7 + $0x168] sm:$0xff]
      %v2860 = vld [vmem:[%s7 + $0x170] sm:$0xff]
      %v2861 = vld [vmem:[%s7 + $0x178] sm:$0xff]
      %v2862 = vld [vmem:[%s7 + $0x180] sm:$0xff]
      %v2863 = vld [vmem:[%s7 + $0x188] sm:$0xff]
      %v2864 = vld [vmem:[%s7 + $0x190] sm:$0xff]
      %v2865 = vld [vmem:[%s7 + $0x198] sm:$0xff]
      %v2866 = vld [vmem:[%s7 + $0x1a0] sm:$0xff]
      %v2867 = vld [vmem:[%s7 + $0x1a8] sm:$0xff]
      %v2868 = vld [vmem:[%s7 + $0x1b0] sm:$0xff]
      %v2869 = vld [vmem:[%s7 + $0x1b8] sm:$0xff]
      %v2870 = vld [vmem:[%s7 + $0x1c0] sm:$0xff]
      %v2871 = vld [vmem:[%s7 + $0x1c8] sm:$0xff]
      %v2872 = vld [vmem:[%s7 + $0x1d0] sm:$0xff]
      %v2873 = vld [vmem:[%s7 + $0x1d8] sm:$0xff]
      %v2874 = vld [vmem:[%s7 + $0x1e0] sm:$0xff]
      %v2875 = vld [vmem:[%s7 + $0x1e8] sm:$0xff]
      %v2876 = vld [vmem:[%s7 + $0x1f0] sm:$0xff]
      %v2877 = vld [vmem:[%s7 + $0x1f8] sm:$0xff]
      %v2878 = vld [vmem:[%s7 + $0x200] sm:$0xff]
      %v2879 = vld [vmem:[%s7 + $0x208] sm:$0xff]
      %v2880 = vld [vmem:[%s7 + $0x210] sm:$0xff]
      %v2881 = vld [vmem:[%s7 + $0x218] sm:$0xff]
      %v2882 = vld [vmem:[%s7 + $0x220] sm:$0xff]
      %v2883 = vld [vmem:[%s7 + $0x228] sm:$0xff]
      %v2884 = vld [vmem:[%s7 + $0x230] sm:$0xff]
      %v2885 = vld [vmem:[%s7 + $0x238] sm:$0xff]
      %v2886 = vld [vmem:[%s7 + $0x240] sm:$0xff]
      %v2887 = vld [vmem:[%s7 + $0x248] sm:$0xff]
      %v2888 = vld [vmem:[%s7 + $0x250] sm:$0xff]
      %v2889 = vld [vmem:[%s7 + $0x258] sm:$0xff]
      %v2890 = vld [vmem:[%s7 + $0x260] sm:$0xff]
      %v2891 = vld [vmem:[%s7 + $0x268] sm:$0xff]
      %v2892 = vld [vmem:[%s7 + $0x270] sm:$0xff]
      %v2893 = vld [vmem:[%s7 + $0x278] sm:$0xff]
      %v2894 = vld [vmem:[%s7 + $0x280] sm:$0xff]
      %v2895 = vld [vmem:[%s7 + $0x288] sm:$0xff]
      %v2896 = vld [vmem:[%s7 + $0x290] sm:$0xff]
      %v2897 = vld [vmem:[%s7 + $0x298] sm:$0xff]
      %v2898 = vld [vmem:[%s7 + $0x2a0] sm:$0xff]
      %v2899 = vld [vmem:[%s7 + $0x2a8] sm:$0xff]
      %v2900 = vld [vmem:[%s7 + $0x2b0] sm:$0xff]
      %v2901 = vld [vmem:[%s7 + $0x2b8] sm:$0xff]
      %v2902 = vld [vmem:[%s7 + $0x2c0] sm:$0xff]
      %v2903 = vld [vmem:[%s7 + $0x2c8] sm:$0xff]
      %v2904 = vld [vmem:[%s7 + $0x2d0] sm:$0xff]
      %v2905 = vld [vmem:[%s7 + $0x2d8] sm:$0xff]
      %v2906 = vld [vmem:[%s7 + $0x2e0] sm:$0xff]
      %v2907 = vld [vmem:[%s7 + $0x2e8] sm:$0xff]
      %v2908 = vld [vmem:[%s7 + $0x2f0] sm:$0xff]
      %v2909 = vld [vmem:[%s7 + $0x2f8] sm:$0xff]
      %v2910 = vld [vmem:[%s7 + $0x300] sm:$0xff]
      %v2911 = vld [vmem:[%s7 + $0x308] sm:$0xff]
      %v2912 = vld [vmem:[%s7 + $0x310] sm:$0xff]
      %v2913 = vld [vmem:[%s7 + $0x318] sm:$0xff]
      %v2914 = vld [vmem:[%s7 + $0x320] sm:$0xff]
      %v2915 = vld [vmem:[%s7 + $0x328] sm:$0xff]
      %v2916 = vld [vmem:[%s7 + $0x330] sm:$0xff]
      %v2917 = vld [vmem:[%s7 + $0x338] sm:$0xff]
      %v2918 = vld [vmem:[%s7 + $0x340] sm:$0xff]
      %v2919 = vld [vmem:[%s7 + $0x348] sm:$0xff]
      %v2920 = vld [vmem:[%s7 + $0x350] sm:$0xff]
      %v2921 = vld [vmem:[%s7 + $0x358] sm:$0xff]
      %v2922 = vld [vmem:[%s7 + $0x360] sm:$0xff]
      %v2923 = vld [vmem:[%s7 + $0x368] sm:$0xff]
      %v2924 = vld [vmem:[%s7 + $0x370] sm:$0xff]
      %v2925 = vld [vmem:[%s7 + $0x378] sm:$0xff]
      %v2926 = vld [vmem:[%s7 + $0x380] sm:$0xff]
      %v2927 = vld [vmem:[%s7 + $0x388] sm:$0xff]
      %v2928 = vld [vmem:[%s7 + $0x390] sm:$0xff]
      %v2929 = vld [vmem:[%s7 + $0x398] sm:$0xff]
      %v2930 = vld [vmem:[%s7 + $0x3a0] sm:$0xff]
      %v2931 = vld [vmem:[%s7 + $0x3a8] sm:$0xff]
      %v2932 = vld [vmem:[%s7 + $0x3b0] sm:$0xff]
      %v2933 = vld [vmem:[%s7 + $0x3b8] sm:$0xff]
      %v2934 = vld [vmem:[%s7 + $0x3c0] sm:$0xff]
      %v2935 = vld [vmem:[%s7 + $0x3c8] sm:$0xff]
      %v2936 = vld [vmem:[%s7 + $0x3d0] sm:$0xff]
      %v2937 = vld [vmem:[%s7 + $0x3d8] sm:$0xff]
      %v2938 = vld [vmem:[%s7 + $0x3e0] sm:$0xff]
      %v2939 = vld [vmem:[%s7 + $0x3e8] sm:$0xff]
      %v2940 = vld [vmem:[%s7 + $0x3f0] sm:$0xff]
      %v2941 = vld [vmem:[%s7 + $0x3f8] sm:$0xff]
      %v2942 = vld [vmem:[%s7 + $0x400] sm:$0xff]
      %v2943 = vld [vmem:[%s7 + $0x408] sm:$0xff]
      %v2944 = vld [vmem:[%s7 + $0x410] sm:$0xff]
      %v2945 = vld [vmem:[%s7 + $0x418] sm:$0xff]
      %v2946 = vld [vmem:[%s7 + $0x420] sm:$0xff]
      %v2947 = vld [vmem:[%s7 + $0x428] sm:$0xff]
      %v2948 = vld [vmem:[%s7 + $0x430] sm:$0xff]
      %v2949 = vld [vmem:[%s7 + $0x438] sm:$0xff]
      %v2950 = vld [vmem:[%s7 + $0x440] sm:$0xff]
      %v2951 = vld [vmem:[%s7 + $0x448] sm:$0xff]
      %v2952 = vld [vmem:[%s7 + $0x450] sm:$0xff]
      %v2953 = vld [vmem:[%s7 + $0x458] sm:$0xff]
      %v2954 = vld [vmem:[%s7 + $0x460] sm:$0xff]
      %v2955 = vld [vmem:[%s7 + $0x468] sm:$0xff]
      %v2956 = vld [vmem:[%s7 + $0x470] sm:$0xff]
      %v2957 = vld [vmem:[%s7 + $0x478] sm:$0xff]
      %v2958 = vld [vmem:[%s7 + $0x480] sm:$0xff]
      %v2959 = vld [vmem:[%s7 + $0x488] sm:$0xff]
      %v2960 = vld [vmem:[%s7 + $0x490] sm:$0xff]
      %v2961 = vld [vmem:[%s7 + $0x498] sm:$0xff]
      %v2962 = vld [vmem:[%s7 + $0x4a0] sm:$0xff]
      %v2963 = vld [vmem:[%s7 + $0x4a8] sm:$0xff]
      %v2964 = vld [vmem:[%s7 + $0x4b0] sm:$0xff]
      %v2965 = vld [vmem:[%s7 + $0x4b8] sm:$0xff]
      %v2966 = vld [vmem:[%s7 + $0x4c0] sm:$0xff]
      %v2967 = vld [vmem:[%s7 + $0x4c8] sm:$0xff]
      %v2968 = vld [vmem:[%s7 + $0x4d0] sm:$0xff]
      %v2969 = vld [vmem:[%s7 + $0x4d8] sm:$0xff]
      %v2970 = vld [vmem:[%s7 + $0x4e0] sm:$0xff]
      %v2971 = vld [vmem:[%s7 + $0x4e8] sm:$0xff]
      %v2972 = vld [vmem:[%s7 + $0x4f0] sm:$0xff]
      %v2973 = vld [vmem:[%s7 + $0x4f8] sm:$0xff]
      %v2974 = vld [vmem:[%s7 + $0x500] sm:$0xff]
      %v2975 = vld [vmem:[%s7 + $0x508] sm:$0xff]
      %v2976 = vld [vmem:[%s7 + $0x510] sm:$0xff]
      %v2977 = vld [vmem:[%s7 + $0x518] sm:$0xff]
      %v2978 = vld [vmem:[%s7 + $0x520] sm:$0xff]
      %v2979 = vld [vmem:[%s7 + $0x528] sm:$0xff]
      %v2980 = vld [vmem:[%s7 + $0x530] sm:$0xff]
      %v2981 = vld [vmem:[%s7 + $0x538] sm:$0xff]
      %v2982 = vld [vmem:[%s7 + $0x540] sm:$0xff]
      %v2983 = vld [vmem:[%s7 + $0x548] sm:$0xff]
      %v2984 = vld [vmem:[%s7 + $0x550] sm:$0xff]
      %v2985 = vld [vmem:[%s7 + $0x558] sm:$0xff]
      %v2986 = vld [vmem:[%s7 + $0x560] sm:$0xff]
      %v2987 = vld [vmem:[%s7 + $0x568] sm:$0xff]
      %v2988 = vld [vmem:[%s7 + $0x570] sm:$0xff]
      %v2989 = vld [vmem:[%s7 + $0x578] sm:$0xff]
      %v2990 = vld [vmem:[%s7 + $0x580] sm:$0xff]
      %v2991 = vld [vmem:[%s7 + $0x588] sm:$0xff]
      %v2992 = vld [vmem:[%s7 + $0x590] sm:$0xff]
      %v2993 = vld [vmem:[%s7 + $0x598] sm:$0xff]
      %v2994 = vld [vmem:[%s7 + $0x5a0] sm:$0xff]
      %v2995 = vld [vmem:[%s7 + $0x5a8] sm:$0xff]
      %v2996 = vld [vmem:[%s7 + $0x5b0] sm:$0xff]
      %v2997 = vld [vmem:[%s7 + $0x5b8] sm:$0xff]
      %v2998 = vld [vmem:[%s7 + $0x5c0] sm:$0xff]
      %v2999 = vld [vmem:[%s7 + $0x5c8] sm:$0xff]
      %v3000 = vld [vmem:[%s7 + $0x5d0] sm:$0xff]
      %v3001 = vld [vmem:[%s7 + $0x5d8] sm:$0xff]
      %v3002 = vld [vmem:[%s7 + $0x5e0] sm:$0xff]
      %v3003 = vld [vmem:[%s7 + $0x5e8] sm:$0xff]
      %v3004 = vld [vmem:[%s7 + $0x5f0] sm:$0xff]
      %v3005 = vld [vmem:[%s7 + $0x5f8] sm:$0xff]
      %v3006 = vld [vmem:[%s7 + $0x600] sm:$0xff]
      %v3007 = vld [vmem:[%s7 + $0x608] sm:$0xff]
      %v3008 = vld [vmem:[%s7 + $0x610] sm:$0xff]
      %v3009 = vld [vmem:[%s7 + $0x618] sm:$0xff]
      %v3010 = vld [vmem:[%s7 + $0x620] sm:$0xff]
      %v3011 = vld [vmem:[%s7 + $0x628] sm:$0xff]
      %v3012 = vld [vmem:[%s7 + $0x630] sm:$0xff]
      %v3013 = vld [vmem:[%s7 + $0x638] sm:$0xff]
      %v3014 = vld [vmem:[%s7 + $0x640] sm:$0xff]
      %v3015 = vld [vmem:[%s7 + $0x648] sm:$0xff]
      %v3016 = vld [vmem:[%s7 + $0x650] sm:$0xff]
      %v3017 = vld [vmem:[%s7 + $0x658] sm:$0xff]
      %v3018 = vld [vmem:[%s7 + $0x660] sm:$0xff]
      %v3019 = vld [vmem:[%s7 + $0x668] sm:$0xff]
      %v3020 = vld [vmem:[%s7 + $0x670] sm:$0xff]
      %v3021 = vld [vmem:[%s7 + $0x678] sm:$0xff]
      %v3022 = vld [vmem:[%s7 + $0x680] sm:$0xff]
      %v3023 = vld [vmem:[%s7 + $0x688] sm:$0xff]
      %v3024 = vld [vmem:[%s7 + $0x690] sm:$0xff]
      %v3025 = vld [vmem:[%s7 + $0x698] sm:$0xff]
      %v3026 = vld [vmem:[%s7 + $0x6a0] sm:$0xff]
      %v3027 = vld [vmem:[%s7 + $0x6a8] sm:$0xff]
      %v3028 = vld [vmem:[%s7 + $0x6b0] sm:$0xff]
      %v3029 = vld [vmem:[%s7 + $0x6b8] sm:$0xff]
      %v3030 = vld [vmem:[%s7 + $0x6c0] sm:$0xff]
      %v3031 = vld [vmem:[%s7 + $0x6c8] sm:$0xff]
      %v3032 = vld [vmem:[%s7 + $0x6d0] sm:$0xff]
      %v3033 = vld [vmem:[%s7 + $0x6d8] sm:$0xff]
      %v3034 = vld [vmem:[%s7 + $0x6e0] sm:$0xff]
      %v3035 = vld [vmem:[%s7 + $0x6e8] sm:$0xff]
      %v3036 = vld [vmem:[%s7 + $0x6f0] sm:$0xff]
      %v3037 = vld [vmem:[%s7 + $0x6f8] sm:$0xff]
      %v3038 = vld [vmem:[%s7 + $0x700] sm:$0xff]
      %v3039 = vld [vmem:[%s7 + $0x708] sm:$0xff]
      %v3040 = vld [vmem:[%s7 + $0x710] sm:$0xff]
      %v3041 = vld [vmem:[%s7 + $0x718] sm:$0xff]
      %v3042 = vld [vmem:[%s7 + $0x720] sm:$0xff]
      %v3043 = vld [vmem:[%s7 + $0x728] sm:$0xff]
      %v3044 = vld [vmem:[%s7 + $0x730] sm:$0xff]
      %v3045 = vld [vmem:[%s7 + $0x738] sm:$0xff]
      %v3046 = vld [vmem:[%s7 + $0x740] sm:$0xff]
      %v3047 = vld [vmem:[%s7 + $0x748] sm:$0xff]
      %v3048 = vld [vmem:[%s7 + $0x750] sm:$0xff]
      %v3049 = vld [vmem:[%s7 + $0x758] sm:$0xff]
      %v3050 = vld [vmem:[%s7 + $0x760] sm:$0xff]
      %v3051 = vld [vmem:[%s7 + $0x768] sm:$0xff]
      %v3052 = vld [vmem:[%s7 + $0x770] sm:$0xff]
      %v3053 = vld [vmem:[%s7 + $0x778] sm:$0xff]
      %v3054 = vld [vmem:[%s7 + $0x780] sm:$0xff]
      %v3055 = vld [vmem:[%s7 + $0x788] sm:$0xff]
      %v3056 = vld [vmem:[%s7 + $0x790] sm:$0xff]
      %v3057 = vld [vmem:[%s7 + $0x798] sm:$0xff]
      %v3058 = vld [vmem:[%s7 + $0x7a0] sm:$0xff]
      %v3059 = vld [vmem:[%s7 + $0x7a8] sm:$0xff]
      %v3060 = vld [vmem:[%s7 + $0x7b0] sm:$0xff]
      %v3061 = vld [vmem:[%s7 + $0x7b8] sm:$0xff]
      %v3062 = vld [vmem:[%s7 + $0x7c0] sm:$0xff]
      %v3063 = vld [vmem:[%s7 + $0x7c8] sm:$0xff]
      %v3064 = vld [vmem:[%s7 + $0x7d0] sm:$0xff]
      %v3065 = vld [vmem:[%s7 + $0x7d8] sm:$0xff]
      %v3066 = vld [vmem:[%s7 + $0x7e0] sm:$0xff]
      %v3067 = vld [vmem:[%s7 + $0x7e8] sm:$0xff]
      %v3068 = vld [vmem:[%s7 + $0x7f0] sm:$0xff]
      %v3069 = vld [vmem:[%s7 + $0x7f8] sm:$0xff]
      %v3070 = vld [vmem:[%s8] sm:$0xff]
      %v3071 = vld [vmem:[%s8 + $0x8] sm:$0xff]
      %v3072 = vld [vmem:[%s8 + $0x10] sm:$0xff]
      %v3073 = vld [vmem:[%s8 + $0x18] sm:$0xff]
      %v3074 = vld [vmem:[%s8 + $0x20] sm:$0xff]
      %v3075 = vld [vmem:[%s8 + $0x28] sm:$0xff]
      %v3076 = vld [vmem:[%s8 + $0x30] sm:$0xff]
      %v3077 = vld [vmem:[%s8 + $0x38] sm:$0xff]
      %v3078 = vld [vmem:[%s8 + $0x40] sm:$0xff]
      %v3079 = vld [vmem:[%s8 + $0x48] sm:$0xff]
      %v3080 = vld [vmem:[%s8 + $0x50] sm:$0xff]
      %v3081 = vld [vmem:[%s8 + $0x58] sm:$0xff]
      %v3082 = vld [vmem:[%s8 + $0x60] sm:$0xff]
      %v3083 = vld [vmem:[%s8 + $0x68] sm:$0xff]
      %v3084 = vld [vmem:[%s8 + $0x70] sm:$0xff]
      %v3085 = vld [vmem:[%s8 + $0x78] sm:$0xff]
      %v3086 = vld [vmem:[%s8 + $0x80] sm:$0xff]
      %v3087 = vld [vmem:[%s8 + $0x88] sm:$0xff]
      %v3088 = vld [vmem:[%s8 + $0x90] sm:$0xff]
      %v3089 = vld [vmem:[%s8 + $0x98] sm:$0xff]
      %v3090 = vld [vmem:[%s8 + $0xa0] sm:$0xff]
      %v3091 = vld [vmem:[%s8 + $0xa8] sm:$0xff]
      %v3092 = vld [vmem:[%s8 + $0xb0] sm:$0xff]
      %v3093 = vld [vmem:[%s8 + $0xb8] sm:$0xff]
      %v3094 = vld [vmem:[%s8 + $0xc0] sm:$0xff]
      %v3095 = vld [vmem:[%s8 + $0xc8] sm:$0xff]
      %v3096 = vld [vmem:[%s8 + $0xd0] sm:$0xff]
      %v3097 = vld [vmem:[%s8 + $0xd8] sm:$0xff]
      %v3098 = vld [vmem:[%s8 + $0xe0] sm:$0xff]
      %v3099 = vld [vmem:[%s8 + $0xe8] sm:$0xff]
      %v3100 = vld [vmem:[%s8 + $0xf0] sm:$0xff]
      %v3101 = vld [vmem:[%s8 + $0xf8] sm:$0xff]
      %v3102 = vld [vmem:[%s8 + $0x100] sm:$0xff]
      %v3103 = vld [vmem:[%s8 + $0x108] sm:$0xff]
      %v3104 = vld [vmem:[%s8 + $0x110] sm:$0xff]
      %v3105 = vld [vmem:[%s8 + $0x118] sm:$0xff]
      %v3106 = vld [vmem:[%s8 + $0x120] sm:$0xff]
      %v3107 = vld [vmem:[%s8 + $0x128] sm:$0xff]
      %v3108 = vld [vmem:[%s8 + $0x130] sm:$0xff]
      %v3109 = vld [vmem:[%s8 + $0x138] sm:$0xff]
      %v3110 = vld [vmem:[%s8 + $0x140] sm:$0xff]
      %v3111 = vld [vmem:[%s8 + $0x148] sm:$0xff]
      %v3112 = vld [vmem:[%s8 + $0x150] sm:$0xff]
      %v3113 = vld [vmem:[%s8 + $0x158] sm:$0xff]
      %v3114 = vld [vmem:[%s8 + $0x160] sm:$0xff]
      %v3115 = vld [vmem:[%s8 + $0x168] sm:$0xff]
      %v3116 = vld [vmem:[%s8 + $0x170] sm:$0xff]
      %v3117 = vld [vmem:[%s8 + $0x178] sm:$0xff]
      %v3118 = vld [vmem:[%s8 + $0x180] sm:$0xff]
      %v3119 = vld [vmem:[%s8 + $0x188] sm:$0xff]
      %v3120 = vld [vmem:[%s8 + $0x190] sm:$0xff]
      %v3121 = vld [vmem:[%s8 + $0x198] sm:$0xff]
      %v3122 = vld [vmem:[%s8 + $0x1a0] sm:$0xff]
      %v3123 = vld [vmem:[%s8 + $0x1a8] sm:$0xff]
      %v3124 = vld [vmem:[%s8 + $0x1b0] sm:$0xff]
      %v3125 = vld [vmem:[%s8 + $0x1b8] sm:$0xff]
      %v3126 = vld [vmem:[%s8 + $0x1c0] sm:$0xff]
      %v3127 = vld [vmem:[%s8 + $0x1c8] sm:$0xff]
      %v3128 = vld [vmem:[%s8 + $0x1d0] sm:$0xff]
      %v3129 = vld [vmem:[%s8 + $0x1d8] sm:$0xff]
      %v3130 = vld [vmem:[%s8 + $0x1e0] sm:$0xff]
      %v3131 = vld [vmem:[%s8 + $0x1e8] sm:$0xff]
      %v3132 = vld [vmem:[%s8 + $0x1f0] sm:$0xff]
      %v3133 = vld [vmem:[%s8 + $0x1f8] sm:$0xff]
      %v3134 = vld [vmem:[%s8 + $0x200] sm:$0xff]
      %v3135 = vld [vmem:[%s8 + $0x208] sm:$0xff]
      %v3136 = vld [vmem:[%s8 + $0x210] sm:$0xff]
      %v3137 = vld [vmem:[%s8 + $0x218] sm:$0xff]
      %v3138 = vld [vmem:[%s8 + $0x220] sm:$0xff]
      %v3139 = vld [vmem:[%s8 + $0x228] sm:$0xff]
      %v3140 = vld [vmem:[%s8 + $0x230] sm:$0xff]
      %v3141 = vld [vmem:[%s8 + $0x238] sm:$0xff]
      %v3142 = vld [vmem:[%s8 + $0x240] sm:$0xff]
      %v3143 = vld [vmem:[%s8 + $0x248] sm:$0xff]
      %v3144 = vld [vmem:[%s8 + $0x250] sm:$0xff]
      %v3145 = vld [vmem:[%s8 + $0x258] sm:$0xff]
      %v3146 = vld [vmem:[%s8 + $0x260] sm:$0xff]
      %v3147 = vld [vmem:[%s8 + $0x268] sm:$0xff]
      %v3148 = vld [vmem:[%s8 + $0x270] sm:$0xff]
      %v3149 = vld [vmem:[%s8 + $0x278] sm:$0xff]
      %v3150 = vld [vmem:[%s8 + $0x280] sm:$0xff]
      %v3151 = vld [vmem:[%s8 + $0x288] sm:$0xff]
      %v3152 = vld [vmem:[%s8 + $0x290] sm:$0xff]
      %v3153 = vld [vmem:[%s8 + $0x298] sm:$0xff]
      %v3154 = vld [vmem:[%s8 + $0x2a0] sm:$0xff]
      %v3155 = vld [vmem:[%s8 + $0x2a8] sm:$0xff]
      %v3156 = vld [vmem:[%s8 + $0x2b0] sm:$0xff]
      %v3157 = vld [vmem:[%s8 + $0x2b8] sm:$0xff]
      %v3158 = vld [vmem:[%s8 + $0x2c0] sm:$0xff]
      %v3159 = vld [vmem:[%s8 + $0x2c8] sm:$0xff]
      %v3160 = vld [vmem:[%s8 + $0x2d0] sm:$0xff]
      %v3161 = vld [vmem:[%s8 + $0x2d8] sm:$0xff]
      %v3162 = vld [vmem:[%s8 + $0x2e0] sm:$0xff]
      %v3163 = vld [vmem:[%s8 + $0x2e8] sm:$0xff]
      %v3164 = vld [vmem:[%s8 + $0x2f0] sm:$0xff]
      %v3165 = vld [vmem:[%s8 + $0x2f8] sm:$0xff]
      %v3166 = vld [vmem:[%s8 + $0x300] sm:$0xff]
      %v3167 = vld [vmem:[%s8 + $0x308] sm:$0xff]
      %v3168 = vld [vmem:[%s8 + $0x310] sm:$0xff]
      %v3169 = vld [vmem:[%s8 + $0x318] sm:$0xff]
      %v3170 = vld [vmem:[%s8 + $0x320] sm:$0xff]
      %v3171 = vld [vmem:[%s8 + $0x328] sm:$0xff]
      %v3172 = vld [vmem:[%s8 + $0x330] sm:$0xff]
      %v3173 = vld [vmem:[%s8 + $0x338] sm:$0xff]
      %v3174 = vld [vmem:[%s8 + $0x340] sm:$0xff]
      %v3175 = vld [vmem:[%s8 + $0x348] sm:$0xff]
      %v3176 = vld [vmem:[%s8 + $0x350] sm:$0xff]
      %v3177 = vld [vmem:[%s8 + $0x358] sm:$0xff]
      %v3178 = vld [vmem:[%s8 + $0x360] sm:$0xff]
      %v3179 = vld [vmem:[%s8 + $0x368] sm:$0xff]
      %v3180 = vld [vmem:[%s8 + $0x370] sm:$0xff]
      %v3181 = vld [vmem:[%s8 + $0x378] sm:$0xff]
      %v3182 = vld [vmem:[%s8 + $0x380] sm:$0xff]
      %v3183 = vld [vmem:[%s8 + $0x388] sm:$0xff]
      %v3184 = vld [vmem:[%s8 + $0x390] sm:$0xff]
      %v3185 = vld [vmem:[%s8 + $0x398] sm:$0xff]
      %v3186 = vld [vmem:[%s8 + $0x3a0] sm:$0xff]
      %v3187 = vld [vmem:[%s8 + $0x3a8] sm:$0xff]
      %v3188 = vld [vmem:[%s8 + $0x3b0] sm:$0xff]
      %v3189 = vld [vmem:[%s8 + $0x3b8] sm:$0xff]
      %v3190 = vld [vmem:[%s8 + $0x3c0] sm:$0xff]
      %v3191 = vld [vmem:[%s8 + $0x3c8] sm:$0xff]
      %v3192 = vld [vmem:[%s8 + $0x3d0] sm:$0xff]
      %v3193 = vld [vmem:[%s8 + $0x3d8] sm:$0xff]
      %v3194 = vld [vmem:[%s8 + $0x3e0] sm:$0xff]
      %v3195 = vld [vmem:[%s8 + $0x3e8] sm:$0xff]
      %v3196 = vld [vmem:[%s8 + $0x3f0] sm:$0xff]
      %v3197 = vld [vmem:[%s8 + $0x3f8] sm:$0xff]
      %3199 = vset.pattern.permute.xlu0 0
      %3200 = vperm.xlu0 %3199, %v3070
      %v3201 = vpop.permute.xlu0 %3200
      %3204 = vset.pattern.permute.xlu0 0
      %3205 = vperm.xlu0 %3204, %v3071
      %v3206 = vpop.permute.xlu0 %3205
      %3209 = vset.pattern.permute.xlu0 0
      %3210 = vperm.xlu0 %3209, %v3072
      %v3211 = vpop.permute.xlu0 %3210
      %3214 = vset.pattern.permute.xlu0 0
      %3215 = vperm.xlu0 %3214, %v3073
      %v3216 = vpop.permute.xlu0 %3215
      %3219 = vset.pattern.permute.xlu0 0
      %3220 = vperm.xlu0 %3219, %v3074
      %v3221 = vpop.permute.xlu0 %3220
      %3224 = vset.pattern.permute.xlu0 0
      %3225 = vperm.xlu0 %3224, %v3075
      %v3226 = vpop.permute.xlu0 %3225
      %3229 = vset.pattern.permute.xlu0 0
      %3230 = vperm.xlu0 %3229, %v3076
      %v3231 = vpop.permute.xlu0 %3230
      %3234 = vset.pattern.permute.xlu0 0
      %3235 = vperm.xlu0 %3234, %v3077
      %v3236 = vpop.permute.xlu0 %3235
      %3239 = vset.pattern.permute.xlu0 0
      %3240 = vperm.xlu0 %3239, %v3078
      %v3241 = vpop.permute.xlu0 %3240
      %3244 = vset.pattern.permute.xlu0 0
      %3245 = vperm.xlu0 %3244, %v3079
      %v3246 = vpop.permute.xlu0 %3245
      %3249 = vset.pattern.permute.xlu0 0
      %3250 = vperm.xlu0 %3249, %v3080
      %v3251 = vpop.permute.xlu0 %3250
      %3254 = vset.pattern.permute.xlu0 0
      %3255 = vperm.xlu0 %3254, %v3081
      %v3256 = vpop.permute.xlu0 %3255
      %3259 = vset.pattern.permute.xlu0 0
      %3260 = vperm.xlu0 %3259, %v3082
      %v3261 = vpop.permute.xlu0 %3260
      %3264 = vset.pattern.permute.xlu0 0
      %3265 = vperm.xlu0 %3264, %v3083
      %v3266 = vpop.permute.xlu0 %3265
      %3269 = vset.pattern.permute.xlu0 0
      %3270 = vperm.xlu0 %3269, %v3084
      %v3271 = vpop.permute.xlu0 %3270
      %3274 = vset.pattern.permute.xlu0 0
      %3275 = vperm.xlu0 %3274, %v3085
      %v3276 = vpop.permute.xlu0 %3275
      %3279 = vset.pattern.permute.xlu0 0
      %3280 = vperm.xlu0 %3279, %v3086
      %v3281 = vpop.permute.xlu0 %3280
      %3284 = vset.pattern.permute.xlu0 0
      %3285 = vperm.xlu0 %3284, %v3087
      %v3286 = vpop.permute.xlu0 %3285
      %3289 = vset.pattern.permute.xlu0 0
      %3290 = vperm.xlu0 %3289, %v3088
      %v3291 = vpop.permute.xlu0 %3290
      %3294 = vset.pattern.permute.xlu0 0
      %3295 = vperm.xlu0 %3294, %v3089
      %v3296 = vpop.permute.xlu0 %3295
      %3299 = vset.pattern.permute.xlu0 0
      %3300 = vperm.xlu0 %3299, %v3090
      %v3301 = vpop.permute.xlu0 %3300
      %3304 = vset.pattern.permute.xlu0 0
      %3305 = vperm.xlu0 %3304, %v3091
      %v3306 = vpop.permute.xlu0 %3305
      %3309 = vset.pattern.permute.xlu0 0
      %3310 = vperm.xlu0 %3309, %v3092
      %v3311 = vpop.permute.xlu0 %3310
      %3314 = vset.pattern.permute.xlu0 0
      %3315 = vperm.xlu0 %3314, %v3093
      %v3316 = vpop.permute.xlu0 %3315
      %3319 = vset.pattern.permute.xlu0 0
      %3320 = vperm.xlu0 %3319, %v3094
      %v3321 = vpop.permute.xlu0 %3320
      %3324 = vset.pattern.permute.xlu0 0
      %3325 = vperm.xlu0 %3324, %v3095
      %v3326 = vpop.permute.xlu0 %3325
      %3329 = vset.pattern.permute.xlu0 0
      %3330 = vperm.xlu0 %3329, %v3096
      %v3331 = vpop.permute.xlu0 %3330
      %3334 = vset.pattern.permute.xlu0 0
      %3335 = vperm.xlu0 %3334, %v3097
      %v3336 = vpop.permute.xlu0 %3335
      %3339 = vset.pattern.permute.xlu0 0
      %3340 = vperm.xlu0 %3339, %v3098
      %v3341 = vpop.permute.xlu0 %3340
      %3344 = vset.pattern.permute.xlu0 0
      %3345 = vperm.xlu0 %3344, %v3099
      %v3346 = vpop.permute.xlu0 %3345
      %3349 = vset.pattern.permute.xlu0 0
      %3350 = vperm.xlu0 %3349, %v3100
      %v3351 = vpop.permute.xlu0 %3350
      %3354 = vset.pattern.permute.xlu0 0
      %3355 = vperm.xlu0 %3354, %v3101
      %v3356 = vpop.permute.xlu0 %3355
      %3359 = vset.pattern.permute.xlu0 0
      %3360 = vperm.xlu0 %3359, %v3102
      %v3361 = vpop.permute.xlu0 %3360
      %3364 = vset.pattern.permute.xlu0 0
      %3365 = vperm.xlu0 %3364, %v3103
      %v3366 = vpop.permute.xlu0 %3365
      %3369 = vset.pattern.permute.xlu0 0
      %3370 = vperm.xlu0 %3369, %v3104
      %v3371 = vpop.permute.xlu0 %3370
      %3374 = vset.pattern.permute.xlu0 0
      %3375 = vperm.xlu0 %3374, %v3105
      %v3376 = vpop.permute.xlu0 %3375
      %3379 = vset.pattern.permute.xlu0 0
      %3380 = vperm.xlu0 %3379, %v3106
      %v3381 = vpop.permute.xlu0 %3380
      %3384 = vset.pattern.permute.xlu0 0
      %3385 = vperm.xlu0 %3384, %v3107
      %v3386 = vpop.permute.xlu0 %3385
      %3389 = vset.pattern.permute.xlu0 0
      %3390 = vperm.xlu0 %3389, %v3108
      %v3391 = vpop.permute.xlu0 %3390
      %3394 = vset.pattern.permute.xlu0 0
      %3395 = vperm.xlu0 %3394, %v3109
      %v3396 = vpop.permute.xlu0 %3395
      %3399 = vset.pattern.permute.xlu0 0
      %3400 = vperm.xlu0 %3399, %v3110
      %v3401 = vpop.permute.xlu0 %3400
      %3404 = vset.pattern.permute.xlu0 0
      %3405 = vperm.xlu0 %3404, %v3111
      %v3406 = vpop.permute.xlu0 %3405
      %3409 = vset.pattern.permute.xlu0 0
      %3410 = vperm.xlu0 %3409, %v3112
      %v3411 = vpop.permute.xlu0 %3410
      %3414 = vset.pattern.permute.xlu0 0
      %3415 = vperm.xlu0 %3414, %v3113
      %v3416 = vpop.permute.xlu0 %3415
      %3419 = vset.pattern.permute.xlu0 0
      %3420 = vperm.xlu0 %3419, %v3114
      %v3421 = vpop.permute.xlu0 %3420
      %3424 = vset.pattern.permute.xlu0 0
      %3425 = vperm.xlu0 %3424, %v3115
      %v3426 = vpop.permute.xlu0 %3425
      %3429 = vset.pattern.permute.xlu0 0
      %3430 = vperm.xlu0 %3429, %v3116
      %v3431 = vpop.permute.xlu0 %3430
      %3434 = vset.pattern.permute.xlu0 0
      %3435 = vperm.xlu0 %3434, %v3117
      %v3436 = vpop.permute.xlu0 %3435
      %3439 = vset.pattern.permute.xlu0 0
      %3440 = vperm.xlu0 %3439, %v3118
      %v3441 = vpop.permute.xlu0 %3440
      %3444 = vset.pattern.permute.xlu0 0
      %3445 = vperm.xlu0 %3444, %v3119
      %v3446 = vpop.permute.xlu0 %3445
      %3449 = vset.pattern.permute.xlu0 0
      %3450 = vperm.xlu0 %3449, %v3120
      %v3451 = vpop.permute.xlu0 %3450
      %3454 = vset.pattern.permute.xlu0 0
      %3455 = vperm.xlu0 %3454, %v3121
      %v3456 = vpop.permute.xlu0 %3455
      %3459 = vset.pattern.permute.xlu0 0
      %3460 = vperm.xlu0 %3459, %v3122
      %v3461 = vpop.permute.xlu0 %3460
      %3464 = vset.pattern.permute.xlu0 0
      %3465 = vperm.xlu0 %3464, %v3123
      %v3466 = vpop.permute.xlu0 %3465
      %3469 = vset.pattern.permute.xlu0 0
      %3470 = vperm.xlu0 %3469, %v3124
      %v3471 = vpop.permute.xlu0 %3470
      %3474 = vset.pattern.permute.xlu0 0
      %3475 = vperm.xlu0 %3474, %v3125
      %v3476 = vpop.permute.xlu0 %3475
      %3479 = vset.pattern.permute.xlu0 0
      %3480 = vperm.xlu0 %3479, %v3126
      %v3481 = vpop.permute.xlu0 %3480
      %3484 = vset.pattern.permute.xlu0 0
      %3485 = vperm.xlu0 %3484, %v3127
      %v3486 = vpop.permute.xlu0 %3485
      %3489 = vset.pattern.permute.xlu0 0
      %3490 = vperm.xlu0 %3489, %v3128
      %v3491 = vpop.permute.xlu0 %3490
      %3494 = vset.pattern.permute.xlu0 0
      %3495 = vperm.xlu0 %3494, %v3129
      %v3496 = vpop.permute.xlu0 %3495
      %3499 = vset.pattern.permute.xlu0 0
      %3500 = vperm.xlu0 %3499, %v3130
      %v3501 = vpop.permute.xlu0 %3500
      %3504 = vset.pattern.permute.xlu0 0
      %3505 = vperm.xlu0 %3504, %v3131
      %v3506 = vpop.permute.xlu0 %3505
      %3509 = vset.pattern.permute.xlu0 0
      %3510 = vperm.xlu0 %3509, %v3132
      %v3511 = vpop.permute.xlu0 %3510
      %3514 = vset.pattern.permute.xlu0 0
      %3515 = vperm.xlu0 %3514, %v3133
      %v3516 = vpop.permute.xlu0 %3515
      %3519 = vset.pattern.permute.xlu0 0
      %3520 = vperm.xlu0 %3519, %v3134
      %v3521 = vpop.permute.xlu0 %3520
      %3524 = vset.pattern.permute.xlu0 0
      %3525 = vperm.xlu0 %3524, %v3135
      %v3526 = vpop.permute.xlu0 %3525
      %3529 = vset.pattern.permute.xlu0 0
      %3530 = vperm.xlu0 %3529, %v3136
      %v3531 = vpop.permute.xlu0 %3530
      %3534 = vset.pattern.permute.xlu0 0
      %3535 = vperm.xlu0 %3534, %v3137
      %v3536 = vpop.permute.xlu0 %3535
      %3539 = vset.pattern.permute.xlu0 0
      %3540 = vperm.xlu0 %3539, %v3138
      %v3541 = vpop.permute.xlu0 %3540
      %3544 = vset.pattern.permute.xlu0 0
      %3545 = vperm.xlu0 %3544, %v3139
      %v3546 = vpop.permute.xlu0 %3545
      %3549 = vset.pattern.permute.xlu0 0
      %3550 = vperm.xlu0 %3549, %v3140
      %v3551 = vpop.permute.xlu0 %3550
      %3554 = vset.pattern.permute.xlu0 0
      %3555 = vperm.xlu0 %3554, %v3141
      %v3556 = vpop.permute.xlu0 %3555
      %3559 = vset.pattern.permute.xlu0 0
      %3560 = vperm.xlu0 %3559, %v3142
      %v3561 = vpop.permute.xlu0 %3560
      %3564 = vset.pattern.permute.xlu0 0
      %3565 = vperm.xlu0 %3564, %v3143
      %v3566 = vpop.permute.xlu0 %3565
      %3569 = vset.pattern.permute.xlu0 0
      %3570 = vperm.xlu0 %3569, %v3144
      %v3571 = vpop.permute.xlu0 %3570
      %3574 = vset.pattern.permute.xlu0 0
      %3575 = vperm.xlu0 %3574, %v3145
      %v3576 = vpop.permute.xlu0 %3575
      %3579 = vset.pattern.permute.xlu0 0
      %3580 = vperm.xlu0 %3579, %v3146
      %v3581 = vpop.permute.xlu0 %3580
      %3584 = vset.pattern.permute.xlu0 0
      %3585 = vperm.xlu0 %3584, %v3147
      %v3586 = vpop.permute.xlu0 %3585
      %3589 = vset.pattern.permute.xlu0 0
      %3590 = vperm.xlu0 %3589, %v3148
      %v3591 = vpop.permute.xlu0 %3590
      %3594 = vset.pattern.permute.xlu0 0
      %3595 = vperm.xlu0 %3594, %v3149
      %v3596 = vpop.permute.xlu0 %3595
      %3599 = vset.pattern.permute.xlu0 0
      %3600 = vperm.xlu0 %3599, %v3150
      %v3601 = vpop.permute.xlu0 %3600
      %3604 = vset.pattern.permute.xlu0 0
      %3605 = vperm.xlu0 %3604, %v3151
      %v3606 = vpop.permute.xlu0 %3605
      %3609 = vset.pattern.permute.xlu0 0
      %3610 = vperm.xlu0 %3609, %v3152
      %v3611 = vpop.permute.xlu0 %3610
      %3614 = vset.pattern.permute.xlu0 0
      %3615 = vperm.xlu0 %3614, %v3153
      %v3616 = vpop.permute.xlu0 %3615
      %3619 = vset.pattern.permute.xlu0 0
      %3620 = vperm.xlu0 %3619, %v3154
      %v3621 = vpop.permute.xlu0 %3620
      %3624 = vset.pattern.permute.xlu0 0
      %3625 = vperm.xlu0 %3624, %v3155
      %v3626 = vpop.permute.xlu0 %3625
      %3629 = vset.pattern.permute.xlu0 0
      %3630 = vperm.xlu0 %3629, %v3156
      %v3631 = vpop.permute.xlu0 %3630
      %3634 = vset.pattern.permute.xlu0 0
      %3635 = vperm.xlu0 %3634, %v3157
      %v3636 = vpop.permute.xlu0 %3635
      %3639 = vset.pattern.permute.xlu0 0
      %3640 = vperm.xlu0 %3639, %v3158
      %v3641 = vpop.permute.xlu0 %3640
      %3644 = vset.pattern.permute.xlu0 0
      %3645 = vperm.xlu0 %3644, %v3159
      %v3646 = vpop.permute.xlu0 %3645
      %3649 = vset.pattern.permute.xlu0 0
      %3650 = vperm.xlu0 %3649, %v3160
      %v3651 = vpop.permute.xlu0 %3650
      %3654 = vset.pattern.permute.xlu0 0
      %3655 = vperm.xlu0 %3654, %v3161
      %v3656 = vpop.permute.xlu0 %3655
      %3659 = vset.pattern.permute.xlu0 0
      %3660 = vperm.xlu0 %3659, %v3162
      %v3661 = vpop.permute.xlu0 %3660
      %3664 = vset.pattern.permute.xlu0 0
      %3665 = vperm.xlu0 %3664, %v3163
      %v3666 = vpop.permute.xlu0 %3665
      %3669 = vset.pattern.permute.xlu0 0
      %3670 = vperm.xlu0 %3669, %v3164
      %v3671 = vpop.permute.xlu0 %3670
      %3674 = vset.pattern.permute.xlu0 0
      %3675 = vperm.xlu0 %3674, %v3165
      %v3676 = vpop.permute.xlu0 %3675
      %3679 = vset.pattern.permute.xlu0 0
      %3680 = vperm.xlu0 %3679, %v3166
      %v3681 = vpop.permute.xlu0 %3680
      %3684 = vset.pattern.permute.xlu0 0
      %3685 = vperm.xlu0 %3684, %v3167
      %v3686 = vpop.permute.xlu0 %3685
      %3689 = vset.pattern.permute.xlu0 0
      %3690 = vperm.xlu0 %3689, %v3168
      %v3691 = vpop.permute.xlu0 %3690
      %3694 = vset.pattern.permute.xlu0 0
      %3695 = vperm.xlu0 %3694, %v3169
      %v3696 = vpop.permute.xlu0 %3695
      %3699 = vset.pattern.permute.xlu0 0
      %3700 = vperm.xlu0 %3699, %v3170
      %v3701 = vpop.permute.xlu0 %3700
      %3704 = vset.pattern.permute.xlu0 0
      %3705 = vperm.xlu0 %3704, %v3171
      %v3706 = vpop.permute.xlu0 %3705
      %3709 = vset.pattern.permute.xlu0 0
      %3710 = vperm.xlu0 %3709, %v3172
      %v3711 = vpop.permute.xlu0 %3710
      %3714 = vset.pattern.permute.xlu0 0
      %3715 = vperm.xlu0 %3714, %v3173
      %v3716 = vpop.permute.xlu0 %3715
      %3719 = vset.pattern.permute.xlu0 0
      %3720 = vperm.xlu0 %3719, %v3174
      %v3721 = vpop.permute.xlu0 %3720
      %3724 = vset.pattern.permute.xlu0 0
      %3725 = vperm.xlu0 %3724, %v3175
      %v3726 = vpop.permute.xlu0 %3725
      %3729 = vset.pattern.permute.xlu0 0
      %3730 = vperm.xlu0 %3729, %v3176
      %v3731 = vpop.permute.xlu0 %3730
      %3734 = vset.pattern.permute.xlu0 0
      %3735 = vperm.xlu0 %3734, %v3177
      %v3736 = vpop.permute.xlu0 %3735
      %3739 = vset.pattern.permute.xlu0 0
      %3740 = vperm.xlu0 %3739, %v3178
      %v3741 = vpop.permute.xlu0 %3740
      %3744 = vset.pattern.permute.xlu0 0
      %3745 = vperm.xlu0 %3744, %v3179
      %v3746 = vpop.permute.xlu0 %3745
      %3749 = vset.pattern.permute.xlu0 0
      %3750 = vperm.xlu0 %3749, %v3180
      %v3751 = vpop.permute.xlu0 %3750
      %3754 = vset.pattern.permute.xlu0 0
      %3755 = vperm.xlu0 %3754, %v3181
      %v3756 = vpop.permute.xlu0 %3755
      %3759 = vset.pattern.permute.xlu0 0
      %3760 = vperm.xlu0 %3759, %v3182
      %v3761 = vpop.permute.xlu0 %3760
      %3764 = vset.pattern.permute.xlu0 0
      %3765 = vperm.xlu0 %3764, %v3183
      %v3766 = vpop.permute.xlu0 %3765
      %3769 = vset.pattern.permute.xlu0 0
      %3770 = vperm.xlu0 %3769, %v3184
      %v3771 = vpop.permute.xlu0 %3770
      %3774 = vset.pattern.permute.xlu0 0
      %3775 = vperm.xlu0 %3774, %v3185
      %v3776 = vpop.permute.xlu0 %3775
      %3779 = vset.pattern.permute.xlu0 0
      %3780 = vperm.xlu0 %3779, %v3186
      %v3781 = vpop.permute.xlu0 %3780
      %3784 = vset.pattern.permute.xlu0 0
      %3785 = vperm.xlu0 %3784, %v3187
      %v3786 = vpop.permute.xlu0 %3785
      %3789 = vset.pattern.permute.xlu0 0
      %3790 = vperm.xlu0 %3789, %v3188
      %v3791 = vpop.permute.xlu0 %3790
      %3794 = vset.pattern.permute.xlu0 0
      %3795 = vperm.xlu0 %3794, %v3189
      %v3796 = vpop.permute.xlu0 %3795
      %3799 = vset.pattern.permute.xlu0 0
      %3800 = vperm.xlu0 %3799, %v3190
      %v3801 = vpop.permute.xlu0 %3800
      %3804 = vset.pattern.permute.xlu0 0
      %3805 = vperm.xlu0 %3804, %v3191
      %v3806 = vpop.permute.xlu0 %3805
      %3809 = vset.pattern.permute.xlu0 0
      %3810 = vperm.xlu0 %3809, %v3192
      %v3811 = vpop.permute.xlu0 %3810
      %3814 = vset.pattern.permute.xlu0 0
      %3815 = vperm.xlu0 %3814, %v3193
      %v3816 = vpop.permute.xlu0 %3815
      %3819 = vset.pattern.permute.xlu0 0
      %3820 = vperm.xlu0 %3819, %v3194
      %v3821 = vpop.permute.xlu0 %3820
      %3824 = vset.pattern.permute.xlu0 0
      %3825 = vperm.xlu0 %3824, %v3195
      %v3826 = vpop.permute.xlu0 %3825
      %3829 = vset.pattern.permute.xlu0 0
      %3830 = vperm.xlu0 %3829, %v3196
      %v3831 = vpop.permute.xlu0 %3830
      %3834 = vset.pattern.permute.xlu0 0
      %3835 = vperm.xlu0 %3834, %v3197
      %v3836 = vpop.permute.xlu0 %3835
      %v4094 = vunpack.c.l.b16 %v2814
      %v4095 = vunpack.c.h.b16 %v2814
      %v4096 = vunpack.c.l.b16 %v2815
      %v4097 = vunpack.c.h.b16 %v2815
      %v4098 = vunpack.c.l.b16 %v2816
      %v4099 = vunpack.c.h.b16 %v2816
      %v4100 = vunpack.c.l.b16 %v2817
      %v4101 = vunpack.c.h.b16 %v2817
      %v4102 = vunpack.c.l.b16 %v2818
      %v4103 = vunpack.c.h.b16 %v2818
      %v4104 = vunpack.c.l.b16 %v2819
      %v4105 = vunpack.c.h.b16 %v2819
      %v4106 = vunpack.c.l.b16 %v2820
      %v4107 = vunpack.c.h.b16 %v2820
      %v4108 = vunpack.c.l.b16 %v2821
      %v4109 = vunpack.c.h.b16 %v2821
      %v4110 = vunpack.c.l.b16 %v2822
      %v4111 = vunpack.c.h.b16 %v2822
      %v4112 = vunpack.c.l.b16 %v2823
      %v4113 = vunpack.c.h.b16 %v2823
      %v4114 = vunpack.c.l.b16 %v2824
      %v4115 = vunpack.c.h.b16 %v2824
      %v4116 = vunpack.c.l.b16 %v2825
      %v4117 = vunpack.c.h.b16 %v2825
      %v4118 = vunpack.c.l.b16 %v2826
      %v4119 = vunpack.c.h.b16 %v2826
      %v4120 = vunpack.c.l.b16 %v2827
      %v4121 = vunpack.c.h.b16 %v2827
      %v4122 = vunpack.c.l.b16 %v2828
      %v4123 = vunpack.c.h.b16 %v2828
      %v4124 = vunpack.c.l.b16 %v2829
      %v4125 = vunpack.c.h.b16 %v2829
      %v4126 = vunpack.c.l.b16 %v2830
      %v4127 = vunpack.c.h.b16 %v2830
      %v4128 = vunpack.c.l.b16 %v2831
      %v4129 = vunpack.c.h.b16 %v2831
      %v4130 = vunpack.c.l.b16 %v2832
      %v4131 = vunpack.c.h.b16 %v2832
      %v4132 = vunpack.c.l.b16 %v2833
      %v4133 = vunpack.c.h.b16 %v2833
      %v4134 = vunpack.c.l.b16 %v2834
      %v4135 = vunpack.c.h.b16 %v2834
      %v4136 = vunpack.c.l.b16 %v2835
      %v4137 = vunpack.c.h.b16 %v2835
      %v4138 = vunpack.c.l.b16 %v2836
      %v4139 = vunpack.c.h.b16 %v2836
      %v4140 = vunpack.c.l.b16 %v2837
      %v4141 = vunpack.c.h.b16 %v2837
      %v4142 = vunpack.c.l.b16 %v2838
      %v4143 = vunpack.c.h.b16 %v2838
      %v4144 = vunpack.c.l.b16 %v2839
      %v4145 = vunpack.c.h.b16 %v2839
      %v4146 = vunpack.c.l.b16 %v2840
      %v4147 = vunpack.c.h.b16 %v2840
      %v4148 = vunpack.c.l.b16 %v2841
      %v4149 = vunpack.c.h.b16 %v2841
      %v4150 = vunpack.c.l.b16 %v2842
      %v4151 = vunpack.c.h.b16 %v2842
      %v4152 = vunpack.c.l.b16 %v2843
      %v4153 = vunpack.c.h.b16 %v2843
      %v4154 = vunpack.c.l.b16 %v2844
      %v4155 = vunpack.c.h.b16 %v2844
      %v4156 = vunpack.c.l.b16 %v2845
      %v4157 = vunpack.c.h.b16 %v2845
      %v4158 = vunpack.c.l.b16 %v2846
      %v4159 = vunpack.c.h.b16 %v2846
      %v4160 = vunpack.c.l.b16 %v2847
      %v4161 = vunpack.c.h.b16 %v2847
      %v4162 = vunpack.c.l.b16 %v2848
      %v4163 = vunpack.c.h.b16 %v2848
      %v4164 = vunpack.c.l.b16 %v2849
      %v4165 = vunpack.c.h.b16 %v2849
      %v4166 = vunpack.c.l.b16 %v2850
      %v4167 = vunpack.c.h.b16 %v2850
      %v4168 = vunpack.c.l.b16 %v2851
      %v4169 = vunpack.c.h.b16 %v2851
      %v4170 = vunpack.c.l.b16 %v2852
      %v4171 = vunpack.c.h.b16 %v2852
      %v4172 = vunpack.c.l.b16 %v2853
      %v4173 = vunpack.c.h.b16 %v2853
      %v4174 = vunpack.c.l.b16 %v2854
      %v4175 = vunpack.c.h.b16 %v2854
      %v4176 = vunpack.c.l.b16 %v2855
      %v4177 = vunpack.c.h.b16 %v2855
      %v4178 = vunpack.c.l.b16 %v2856
      %v4179 = vunpack.c.h.b16 %v2856
      %v4180 = vunpack.c.l.b16 %v2857
      %v4181 = vunpack.c.h.b16 %v2857
      %v4182 = vunpack.c.l.b16 %v2858
      %v4183 = vunpack.c.h.b16 %v2858
      %v4184 = vunpack.c.l.b16 %v2859
      %v4185 = vunpack.c.h.b16 %v2859
      %v4186 = vunpack.c.l.b16 %v2860
      %v4187 = vunpack.c.h.b16 %v2860
      %v4188 = vunpack.c.l.b16 %v2861
      %v4189 = vunpack.c.h.b16 %v2861
      %v4190 = vunpack.c.l.b16 %v2862
      %v4191 = vunpack.c.h.b16 %v2862
      %v4192 = vunpack.c.l.b16 %v2863
      %v4193 = vunpack.c.h.b16 %v2863
      %v4194 = vunpack.c.l.b16 %v2864
      %v4195 = vunpack.c.h.b16 %v2864
      %v4196 = vunpack.c.l.b16 %v2865
      %v4197 = vunpack.c.h.b16 %v2865
      %v4198 = vunpack.c.l.b16 %v2866
      %v4199 = vunpack.c.h.b16 %v2866
      %v4200 = vunpack.c.l.b16 %v2867
      %v4201 = vunpack.c.h.b16 %v2867
      %v4202 = vunpack.c.l.b16 %v2868
      %v4203 = vunpack.c.h.b16 %v2868
      %v4204 = vunpack.c.l.b16 %v2869
      %v4205 = vunpack.c.h.b16 %v2869
      %v4206 = vunpack.c.l.b16 %v2870
      %v4207 = vunpack.c.h.b16 %v2870
      %v4208 = vunpack.c.l.b16 %v2871
      %v4209 = vunpack.c.h.b16 %v2871
      %v4210 = vunpack.c.l.b16 %v2872
      %v4211 = vunpack.c.h.b16 %v2872
      %v4212 = vunpack.c.l.b16 %v2873
      %v4213 = vunpack.c.h.b16 %v2873
      %v4214 = vunpack.c.l.b16 %v2874
      %v4215 = vunpack.c.h.b16 %v2874
      %v4216 = vunpack.c.l.b16 %v2875
      %v4217 = vunpack.c.h.b16 %v2875
      %v4218 = vunpack.c.l.b16 %v2876
      %v4219 = vunpack.c.h.b16 %v2876
      %v4220 = vunpack.c.l.b16 %v2877
      %v4221 = vunpack.c.h.b16 %v2877
      %v4222 = vunpack.c.l.b16 %v2878
      %v4223 = vunpack.c.h.b16 %v2878
      %v4224 = vunpack.c.l.b16 %v2879
      %v4225 = vunpack.c.h.b16 %v2879
      %v4226 = vunpack.c.l.b16 %v2880
      %v4227 = vunpack.c.h.b16 %v2880
      %v4228 = vunpack.c.l.b16 %v2881
      %v4229 = vunpack.c.h.b16 %v2881
      %v4230 = vunpack.c.l.b16 %v2882
      %v4231 = vunpack.c.h.b16 %v2882
      %v4232 = vunpack.c.l.b16 %v2883
      %v4233 = vunpack.c.h.b16 %v2883
      %v4234 = vunpack.c.l.b16 %v2884
      %v4235 = vunpack.c.h.b16 %v2884
      %v4236 = vunpack.c.l.b16 %v2885
      %v4237 = vunpack.c.h.b16 %v2885
      %v4238 = vunpack.c.l.b16 %v2886
      %v4239 = vunpack.c.h.b16 %v2886
      %v4240 = vunpack.c.l.b16 %v2887
      %v4241 = vunpack.c.h.b16 %v2887
      %v4242 = vunpack.c.l.b16 %v2888
      %v4243 = vunpack.c.h.b16 %v2888
      %v4244 = vunpack.c.l.b16 %v2889
      %v4245 = vunpack.c.h.b16 %v2889
      %v4246 = vunpack.c.l.b16 %v2890
      %v4247 = vunpack.c.h.b16 %v2890
      %v4248 = vunpack.c.l.b16 %v2891
      %v4249 = vunpack.c.h.b16 %v2891
      %v4250 = vunpack.c.l.b16 %v2892
      %v4251 = vunpack.c.h.b16 %v2892
      %v4252 = vunpack.c.l.b16 %v2893
      %v4253 = vunpack.c.h.b16 %v2893
      %v4254 = vunpack.c.l.b16 %v2894
      %v4255 = vunpack.c.h.b16 %v2894
      %v4256 = vunpack.c.l.b16 %v2895
      %v4257 = vunpack.c.h.b16 %v2895
      %v4258 = vunpack.c.l.b16 %v2896
      %v4259 = vunpack.c.h.b16 %v2896
      %v4260 = vunpack.c.l.b16 %v2897
      %v4261 = vunpack.c.h.b16 %v2897
      %v4262 = vunpack.c.l.b16 %v2898
      %v4263 = vunpack.c.h.b16 %v2898
      %v4264 = vunpack.c.l.b16 %v2899
      %v4265 = vunpack.c.h.b16 %v2899
      %v4266 = vunpack.c.l.b16 %v2900
      %v4267 = vunpack.c.h.b16 %v2900
      %v4268 = vunpack.c.l.b16 %v2901
      %v4269 = vunpack.c.h.b16 %v2901
      %v4270 = vunpack.c.l.b16 %v2902
      %v4271 = vunpack.c.h.b16 %v2902
      %v4272 = vunpack.c.l.b16 %v2903
      %v4273 = vunpack.c.h.b16 %v2903
      %v4274 = vunpack.c.l.b16 %v2904
      %v4275 = vunpack.c.h.b16 %v2904
      %v4276 = vunpack.c.l.b16 %v2905
      %v4277 = vunpack.c.h.b16 %v2905
      %v4278 = vunpack.c.l.b16 %v2906
      %v4279 = vunpack.c.h.b16 %v2906
      %v4280 = vunpack.c.l.b16 %v2907
      %v4281 = vunpack.c.h.b16 %v2907
      %v4282 = vunpack.c.l.b16 %v2908
      %v4283 = vunpack.c.h.b16 %v2908
      %v4284 = vunpack.c.l.b16 %v2909
      %v4285 = vunpack.c.h.b16 %v2909
      %v4286 = vunpack.c.l.b16 %v2910
      %v4287 = vunpack.c.h.b16 %v2910
      %v4288 = vunpack.c.l.b16 %v2911
      %v4289 = vunpack.c.h.b16 %v2911
      %v4290 = vunpack.c.l.b16 %v2912
      %v4291 = vunpack.c.h.b16 %v2912
      %v4292 = vunpack.c.l.b16 %v2913
      %v4293 = vunpack.c.h.b16 %v2913
      %v4294 = vunpack.c.l.b16 %v2914
      %v4295 = vunpack.c.h.b16 %v2914
      %v4296 = vunpack.c.l.b16 %v2915
      %v4297 = vunpack.c.h.b16 %v2915
      %v4298 = vunpack.c.l.b16 %v2916
      %v4299 = vunpack.c.h.b16 %v2916
      %v4300 = vunpack.c.l.b16 %v2917
      %v4301 = vunpack.c.h.b16 %v2917
      %v4302 = vunpack.c.l.b16 %v2918
      %v4303 = vunpack.c.h.b16 %v2918
      %v4304 = vunpack.c.l.b16 %v2919
      %v4305 = vunpack.c.h.b16 %v2919
      %v4306 = vunpack.c.l.b16 %v2920
      %v4307 = vunpack.c.h.b16 %v2920
      %v4308 = vunpack.c.l.b16 %v2921
      %v4309 = vunpack.c.h.b16 %v2921
      %v4310 = vunpack.c.l.b16 %v2922
      %v4311 = vunpack.c.h.b16 %v2922
      %v4312 = vunpack.c.l.b16 %v2923
      %v4313 = vunpack.c.h.b16 %v2923
      %v4314 = vunpack.c.l.b16 %v2924
      %v4315 = vunpack.c.h.b16 %v2924
      %v4316 = vunpack.c.l.b16 %v2925
      %v4317 = vunpack.c.h.b16 %v2925
      %v4318 = vunpack.c.l.b16 %v2926
      %v4319 = vunpack.c.h.b16 %v2926
      %v4320 = vunpack.c.l.b16 %v2927
      %v4321 = vunpack.c.h.b16 %v2927
      %v4322 = vunpack.c.l.b16 %v2928
      %v4323 = vunpack.c.h.b16 %v2928
      %v4324 = vunpack.c.l.b16 %v2929
      %v4325 = vunpack.c.h.b16 %v2929
      %v4326 = vunpack.c.l.b16 %v2930
      %v4327 = vunpack.c.h.b16 %v2930
      %v4328 = vunpack.c.l.b16 %v2931
      %v4329 = vunpack.c.h.b16 %v2931
      %v4330 = vunpack.c.l.b16 %v2932
      %v4331 = vunpack.c.h.b16 %v2932
      %v4332 = vunpack.c.l.b16 %v2933
      %v4333 = vunpack.c.h.b16 %v2933
      %v4334 = vunpack.c.l.b16 %v2934
      %v4335 = vunpack.c.h.b16 %v2934
      %v4336 = vunpack.c.l.b16 %v2935
      %v4337 = vunpack.c.h.b16 %v2935
      %v4338 = vunpack.c.l.b16 %v2936
      %v4339 = vunpack.c.h.b16 %v2936
      %v4340 = vunpack.c.l.b16 %v2937
      %v4341 = vunpack.c.h.b16 %v2937
      %v4342 = vunpack.c.l.b16 %v2938
      %v4343 = vunpack.c.h.b16 %v2938
      %v4344 = vunpack.c.l.b16 %v2939
      %v4345 = vunpack.c.h.b16 %v2939
      %v4346 = vunpack.c.l.b16 %v2940
      %v4347 = vunpack.c.h.b16 %v2940
      %v4348 = vunpack.c.l.b16 %v2941
      %v4349 = vunpack.c.h.b16 %v2941
      %v4350 = vunpack.c.l.b16 %v2942
      %v4351 = vunpack.c.h.b16 %v2942
      %v4352 = vunpack.c.l.b16 %v2943
      %v4353 = vunpack.c.h.b16 %v2943
      %v4354 = vunpack.c.l.b16 %v2944
      %v4355 = vunpack.c.h.b16 %v2944
      %v4356 = vunpack.c.l.b16 %v2945
      %v4357 = vunpack.c.h.b16 %v2945
      %v4358 = vunpack.c.l.b16 %v2946
      %v4359 = vunpack.c.h.b16 %v2946
      %v4360 = vunpack.c.l.b16 %v2947
      %v4361 = vunpack.c.h.b16 %v2947
      %v4362 = vunpack.c.l.b16 %v2948
      %v4363 = vunpack.c.h.b16 %v2948
      %v4364 = vunpack.c.l.b16 %v2949
      %v4365 = vunpack.c.h.b16 %v2949
      %v4366 = vunpack.c.l.b16 %v2950
      %v4367 = vunpack.c.h.b16 %v2950
      %v4368 = vunpack.c.l.b16 %v2951
      %v4369 = vunpack.c.h.b16 %v2951
      %v4370 = vunpack.c.l.b16 %v2952
      %v4371 = vunpack.c.h.b16 %v2952
      %v4372 = vunpack.c.l.b16 %v2953
      %v4373 = vunpack.c.h.b16 %v2953
      %v4374 = vunpack.c.l.b16 %v2954
      %v4375 = vunpack.c.h.b16 %v2954
      %v4376 = vunpack.c.l.b16 %v2955
      %v4377 = vunpack.c.h.b16 %v2955
      %v4378 = vunpack.c.l.b16 %v2956
      %v4379 = vunpack.c.h.b16 %v2956
      %v4380 = vunpack.c.l.b16 %v2957
      %v4381 = vunpack.c.h.b16 %v2957
      %v4382 = vunpack.c.l.b16 %v2958
      %v4383 = vunpack.c.h.b16 %v2958
      %v4384 = vunpack.c.l.b16 %v2959
      %v4385 = vunpack.c.h.b16 %v2959
      %v4386 = vunpack.c.l.b16 %v2960
      %v4387 = vunpack.c.h.b16 %v2960
      %v4388 = vunpack.c.l.b16 %v2961
      %v4389 = vunpack.c.h.b16 %v2961
      %v4390 = vunpack.c.l.b16 %v2962
      %v4391 = vunpack.c.h.b16 %v2962
      %v4392 = vunpack.c.l.b16 %v2963
      %v4393 = vunpack.c.h.b16 %v2963
      %v4394 = vunpack.c.l.b16 %v2964
      %v4395 = vunpack.c.h.b16 %v2964
      %v4396 = vunpack.c.l.b16 %v2965
      %v4397 = vunpack.c.h.b16 %v2965
      %v4398 = vunpack.c.l.b16 %v2966
      %v4399 = vunpack.c.h.b16 %v2966
      %v4400 = vunpack.c.l.b16 %v2967
      %v4401 = vunpack.c.h.b16 %v2967
      %v4402 = vunpack.c.l.b16 %v2968
      %v4403 = vunpack.c.h.b16 %v2968
      %v4404 = vunpack.c.l.b16 %v2969
      %v4405 = vunpack.c.h.b16 %v2969
      %v4406 = vunpack.c.l.b16 %v2970
      %v4407 = vunpack.c.h.b16 %v2970
      %v4408 = vunpack.c.l.b16 %v2971
      %v4409 = vunpack.c.h.b16 %v2971
      %v4410 = vunpack.c.l.b16 %v2972
      %v4411 = vunpack.c.h.b16 %v2972
      %v4412 = vunpack.c.l.b16 %v2973
      %v4413 = vunpack.c.h.b16 %v2973
      %v4414 = vunpack.c.l.b16 %v2974
      %v4415 = vunpack.c.h.b16 %v2974
      %v4416 = vunpack.c.l.b16 %v2975
      %v4417 = vunpack.c.h.b16 %v2975
      %v4418 = vunpack.c.l.b16 %v2976
      %v4419 = vunpack.c.h.b16 %v2976
      %v4420 = vunpack.c.l.b16 %v2977
      %v4421 = vunpack.c.h.b16 %v2977
      %v4422 = vunpack.c.l.b16 %v2978
      %v4423 = vunpack.c.h.b16 %v2978
      %v4424 = vunpack.c.l.b16 %v2979
      %v4425 = vunpack.c.h.b16 %v2979
      %v4426 = vunpack.c.l.b16 %v2980
      %v4427 = vunpack.c.h.b16 %v2980
      %v4428 = vunpack.c.l.b16 %v2981
      %v4429 = vunpack.c.h.b16 %v2981
      %v4430 = vunpack.c.l.b16 %v2982
      %v4431 = vunpack.c.h.b16 %v2982
      %v4432 = vunpack.c.l.b16 %v2983
      %v4433 = vunpack.c.h.b16 %v2983
      %v4434 = vunpack.c.l.b16 %v2984
      %v4435 = vunpack.c.h.b16 %v2984
      %v4436 = vunpack.c.l.b16 %v2985
      %v4437 = vunpack.c.h.b16 %v2985
      %v4438 = vunpack.c.l.b16 %v2986
      %v4439 = vunpack.c.h.b16 %v2986
      %v4440 = vunpack.c.l.b16 %v2987
      %v4441 = vunpack.c.h.b16 %v2987
      %v4442 = vunpack.c.l.b16 %v2988
      %v4443 = vunpack.c.h.b16 %v2988
      %v4444 = vunpack.c.l.b16 %v2989
      %v4445 = vunpack.c.h.b16 %v2989
      %v4446 = vunpack.c.l.b16 %v2990
      %v4447 = vunpack.c.h.b16 %v2990
      %v4448 = vunpack.c.l.b16 %v2991
      %v4449 = vunpack.c.h.b16 %v2991
      %v4450 = vunpack.c.l.b16 %v2992
      %v4451 = vunpack.c.h.b16 %v2992
      %v4452 = vunpack.c.l.b16 %v2993
      %v4453 = vunpack.c.h.b16 %v2993
      %v4454 = vunpack.c.l.b16 %v2994
      %v4455 = vunpack.c.h.b16 %v2994
      %v4456 = vunpack.c.l.b16 %v2995
      %v4457 = vunpack.c.h.b16 %v2995
      %v4458 = vunpack.c.l.b16 %v2996
      %v4459 = vunpack.c.h.b16 %v2996
      %v4460 = vunpack.c.l.b16 %v2997
      %v4461 = vunpack.c.h.b16 %v2997
      %v4462 = vunpack.c.l.b16 %v2998
      %v4463 = vunpack.c.h.b16 %v2998
      %v4464 = vunpack.c.l.b16 %v2999
      %v4465 = vunpack.c.h.b16 %v2999
      %v4466 = vunpack.c.l.b16 %v3000
      %v4467 = vunpack.c.h.b16 %v3000
      %v4468 = vunpack.c.l.b16 %v3001
      %v4469 = vunpack.c.h.b16 %v3001
      %v4470 = vunpack.c.l.b16 %v3002
      %v4471 = vunpack.c.h.b16 %v3002
      %v4472 = vunpack.c.l.b16 %v3003
      %v4473 = vunpack.c.h.b16 %v3003
      %v4474 = vunpack.c.l.b16 %v3004
      %v4475 = vunpack.c.h.b16 %v3004
      %v4476 = vunpack.c.l.b16 %v3005
      %v4477 = vunpack.c.h.b16 %v3005
      %v4478 = vunpack.c.l.b16 %v3006
      %v4479 = vunpack.c.h.b16 %v3006
      %v4480 = vunpack.c.l.b16 %v3007
      %v4481 = vunpack.c.h.b16 %v3007
      %v4482 = vunpack.c.l.b16 %v3008
      %v4483 = vunpack.c.h.b16 %v3008
      %v4484 = vunpack.c.l.b16 %v3009
      %v4485 = vunpack.c.h.b16 %v3009
      %v4486 = vunpack.c.l.b16 %v3010
      %v4487 = vunpack.c.h.b16 %v3010
      %v4488 = vunpack.c.l.b16 %v3011
      %v4489 = vunpack.c.h.b16 %v3011
      %v4490 = vunpack.c.l.b16 %v3012
      %v4491 = vunpack.c.h.b16 %v3012
      %v4492 = vunpack.c.l.b16 %v3013
      %v4493 = vunpack.c.h.b16 %v3013
      %v4494 = vunpack.c.l.b16 %v3014
      %v4495 = vunpack.c.h.b16 %v3014
      %v4496 = vunpack.c.l.b16 %v3015
      %v4497 = vunpack.c.h.b16 %v3015
      %v4498 = vunpack.c.l.b16 %v3016
      %v4499 = vunpack.c.h.b16 %v3016
      %v4500 = vunpack.c.l.b16 %v3017
      %v4501 = vunpack.c.h.b16 %v3017
      %v4502 = vunpack.c.l.b16 %v3018
      %v4503 = vunpack.c.h.b16 %v3018
      %v4504 = vunpack.c.l.b16 %v3019
      %v4505 = vunpack.c.h.b16 %v3019
      %v4506 = vunpack.c.l.b16 %v3020
      %v4507 = vunpack.c.h.b16 %v3020
      %v4508 = vunpack.c.l.b16 %v3021
      %v4509 = vunpack.c.h.b16 %v3021
      %v4510 = vunpack.c.l.b16 %v3022
      %v4511 = vunpack.c.h.b16 %v3022
      %v4512 = vunpack.c.l.b16 %v3023
      %v4513 = vunpack.c.h.b16 %v3023
      %v4514 = vunpack.c.l.b16 %v3024
      %v4515 = vunpack.c.h.b16 %v3024
      %v4516 = vunpack.c.l.b16 %v3025
      %v4517 = vunpack.c.h.b16 %v3025
      %v4518 = vunpack.c.l.b16 %v3026
      %v4519 = vunpack.c.h.b16 %v3026
      %v4520 = vunpack.c.l.b16 %v3027
      %v4521 = vunpack.c.h.b16 %v3027
      %v4522 = vunpack.c.l.b16 %v3028
      %v4523 = vunpack.c.h.b16 %v3028
      %v4524 = vunpack.c.l.b16 %v3029
      %v4525 = vunpack.c.h.b16 %v3029
      %v4526 = vunpack.c.l.b16 %v3030
      %v4527 = vunpack.c.h.b16 %v3030
      %v4528 = vunpack.c.l.b16 %v3031
      %v4529 = vunpack.c.h.b16 %v3031
      %v4530 = vunpack.c.l.b16 %v3032
      %v4531 = vunpack.c.h.b16 %v3032
      %v4532 = vunpack.c.l.b16 %v3033
      %v4533 = vunpack.c.h.b16 %v3033
      %v4534 = vunpack.c.l.b16 %v3034
      %v4535 = vunpack.c.h.b16 %v3034
      %v4536 = vunpack.c.l.b16 %v3035
      %v4537 = vunpack.c.h.b16 %v3035
      %v4538 = vunpack.c.l.b16 %v3036
      %v4539 = vunpack.c.h.b16 %v3036
      %v4540 = vunpack.c.l.b16 %v3037
      %v4541 = vunpack.c.h.b16 %v3037
      %v4542 = vunpack.c.l.b16 %v3038
      %v4543 = vunpack.c.h.b16 %v3038
      %v4544 = vunpack.c.l.b16 %v3039
      %v4545 = vunpack.c.h.b16 %v3039
      %v4546 = vunpack.c.l.b16 %v3040
      %v4547 = vunpack.c.h.b16 %v3040
      %v4548 = vunpack.c.l.b16 %v3041
      %v4549 = vunpack.c.h.b16 %v3041
      %v4550 = vunpack.c.l.b16 %v3042
      %v4551 = vunpack.c.h.b16 %v3042
      %v4552 = vunpack.c.l.b16 %v3043
      %v4553 = vunpack.c.h.b16 %v3043
      %v4554 = vunpack.c.l.b16 %v3044
      %v4555 = vunpack.c.h.b16 %v3044
      %v4556 = vunpack.c.l.b16 %v3045
      %v4557 = vunpack.c.h.b16 %v3045
      %v4558 = vunpack.c.l.b16 %v3046
      %v4559 = vunpack.c.h.b16 %v3046
      %v4560 = vunpack.c.l.b16 %v3047
      %v4561 = vunpack.c.h.b16 %v3047
      %v4562 = vunpack.c.l.b16 %v3048
      %v4563 = vunpack.c.h.b16 %v3048
      %v4564 = vunpack.c.l.b16 %v3049
      %v4565 = vunpack.c.h.b16 %v3049
      %v4566 = vunpack.c.l.b16 %v3050
      %v4567 = vunpack.c.h.b16 %v3050
      %v4568 = vunpack.c.l.b16 %v3051
      %v4569 = vunpack.c.h.b16 %v3051
      %v4570 = vunpack.c.l.b16 %v3052
      %v4571 = vunpack.c.h.b16 %v3052
      %v4572 = vunpack.c.l.b16 %v3053
      %v4573 = vunpack.c.h.b16 %v3053
      %v4574 = vunpack.c.l.b16 %v3054
      %v4575 = vunpack.c.h.b16 %v3054
      %v4576 = vunpack.c.l.b16 %v3055
      %v4577 = vunpack.c.h.b16 %v3055
      %v4578 = vunpack.c.l.b16 %v3056
      %v4579 = vunpack.c.h.b16 %v3056
      %v4580 = vunpack.c.l.b16 %v3057
      %v4581 = vunpack.c.h.b16 %v3057
      %v4582 = vunpack.c.l.b16 %v3058
      %v4583 = vunpack.c.h.b16 %v3058
      %v4584 = vunpack.c.l.b16 %v3059
      %v4585 = vunpack.c.h.b16 %v3059
      %v4586 = vunpack.c.l.b16 %v3060
      %v4587 = vunpack.c.h.b16 %v3060
      %v4588 = vunpack.c.l.b16 %v3061
      %v4589 = vunpack.c.h.b16 %v3061
      %v4590 = vunpack.c.l.b16 %v3062
      %v4591 = vunpack.c.h.b16 %v3062
      %v4592 = vunpack.c.l.b16 %v3063
      %v4593 = vunpack.c.h.b16 %v3063
      %v4594 = vunpack.c.l.b16 %v3064
      %v4595 = vunpack.c.h.b16 %v3064
      %v4596 = vunpack.c.l.b16 %v3065
      %v4597 = vunpack.c.h.b16 %v3065
      %v4598 = vunpack.c.l.b16 %v3066
      %v4599 = vunpack.c.h.b16 %v3066
      %v4600 = vunpack.c.l.b16 %v3067
      %v4601 = vunpack.c.h.b16 %v3067
      %v4602 = vunpack.c.l.b16 %v3068
      %v4603 = vunpack.c.h.b16 %v3068
      %v4604 = vunpack.c.l.b16 %v3069
      %v4605 = vunpack.c.h.b16 %v3069
      %v4606 = vpack.c.b16 %v4098, %v4094
      %v4607 = vpack.c.b16 %v4099, %v4095
      %v4608 = vpack.c.b16 %v4100, %v4096
      %v4609 = vpack.c.b16 %v4101, %v4097
      %v4610 = vpack.c.b16 %v4106, %v4102
      %v4611 = vpack.c.b16 %v4107, %v4103
      %v4612 = vpack.c.b16 %v4108, %v4104
      %v4613 = vpack.c.b16 %v4109, %v4105
      %v4614 = vpack.c.b16 %v4114, %v4110
      %v4615 = vpack.c.b16 %v4115, %v4111
      %v4616 = vpack.c.b16 %v4116, %v4112
      %v4617 = vpack.c.b16 %v4117, %v4113
      %v4618 = vpack.c.b16 %v4122, %v4118
      %v4619 = vpack.c.b16 %v4123, %v4119
      %v4620 = vpack.c.b16 %v4124, %v4120
      %v4621 = vpack.c.b16 %v4125, %v4121
      %v4622 = vpack.c.b16 %v4130, %v4126
      %v4623 = vpack.c.b16 %v4131, %v4127
      %v4624 = vpack.c.b16 %v4132, %v4128
      %v4625 = vpack.c.b16 %v4133, %v4129
      %v4626 = vpack.c.b16 %v4138, %v4134
      %v4627 = vpack.c.b16 %v4139, %v4135
      %v4628 = vpack.c.b16 %v4140, %v4136
      %v4629 = vpack.c.b16 %v4141, %v4137
      %v4630 = vpack.c.b16 %v4146, %v4142
      %v4631 = vpack.c.b16 %v4147, %v4143
      %v4632 = vpack.c.b16 %v4148, %v4144
      %v4633 = vpack.c.b16 %v4149, %v4145
      %v4634 = vpack.c.b16 %v4154, %v4150
      %v4635 = vpack.c.b16 %v4155, %v4151
      %v4636 = vpack.c.b16 %v4156, %v4152
      %v4637 = vpack.c.b16 %v4157, %v4153
      %v4638 = vpack.c.b16 %v4162, %v4158
      %v4639 = vpack.c.b16 %v4163, %v4159
      %v4640 = vpack.c.b16 %v4164, %v4160
      %v4641 = vpack.c.b16 %v4165, %v4161
      %v4642 = vpack.c.b16 %v4170, %v4166
      %v4643 = vpack.c.b16 %v4171, %v4167
      %v4644 = vpack.c.b16 %v4172, %v4168
      %v4645 = vpack.c.b16 %v4173, %v4169
      %v4646 = vpack.c.b16 %v4178, %v4174
      %v4647 = vpack.c.b16 %v4179, %v4175
      %v4648 = vpack.c.b16 %v4180, %v4176
      %v4649 = vpack.c.b16 %v4181, %v4177
      %v4650 = vpack.c.b16 %v4186, %v4182
      %v4651 = vpack.c.b16 %v4187, %v4183
      %v4652 = vpack.c.b16 %v4188, %v4184
      %v4653 = vpack.c.b16 %v4189, %v4185
      %v4654 = vpack.c.b16 %v4194, %v4190
      %v4655 = vpack.c.b16 %v4195, %v4191
      %v4656 = vpack.c.b16 %v4196, %v4192
      %v4657 = vpack.c.b16 %v4197, %v4193
      %v4658 = vpack.c.b16 %v4202, %v4198
      %v4659 = vpack.c.b16 %v4203, %v4199
      %v4660 = vpack.c.b16 %v4204, %v4200
      %v4661 = vpack.c.b16 %v4205, %v4201
      %v4662 = vpack.c.b16 %v4210, %v4206
      %v4663 = vpack.c.b16 %v4211, %v4207
      %v4664 = vpack.c.b16 %v4212, %v4208
      %v4665 = vpack.c.b16 %v4213, %v4209
      %v4666 = vpack.c.b16 %v4218, %v4214
      %v4667 = vpack.c.b16 %v4219, %v4215
      %v4668 = vpack.c.b16 %v4220, %v4216
      %v4669 = vpack.c.b16 %v4221, %v4217
      %v4670 = vpack.c.b16 %v4226, %v4222
      %v4671 = vpack.c.b16 %v4227, %v4223
      %v4672 = vpack.c.b16 %v4228, %v4224
      %v4673 = vpack.c.b16 %v4229, %v4225
      %v4674 = vpack.c.b16 %v4234, %v4230
      %v4675 = vpack.c.b16 %v4235, %v4231
      %v4676 = vpack.c.b16 %v4236, %v4232
      %v4677 = vpack.c.b16 %v4237, %v4233
      %v4678 = vpack.c.b16 %v4242, %v4238
      %v4679 = vpack.c.b16 %v4243, %v4239
      %v4680 = vpack.c.b16 %v4244, %v4240
      %v4681 = vpack.c.b16 %v4245, %v4241
      %v4682 = vpack.c.b16 %v4250, %v4246
      %v4683 = vpack.c.b16 %v4251, %v4247
      %v4684 = vpack.c.b16 %v4252, %v4248
      %v4685 = vpack.c.b16 %v4253, %v4249
      %v4686 = vpack.c.b16 %v4258, %v4254
      %v4687 = vpack.c.b16 %v4259, %v4255
      %v4688 = vpack.c.b16 %v4260, %v4256
      %v4689 = vpack.c.b16 %v4261, %v4257
      %v4690 = vpack.c.b16 %v4266, %v4262
      %v4691 = vpack.c.b16 %v4267, %v4263
      %v4692 = vpack.c.b16 %v4268, %v4264
      %v4693 = vpack.c.b16 %v4269, %v4265
      %v4694 = vpack.c.b16 %v4274, %v4270
      %v4695 = vpack.c.b16 %v4275, %v4271
      %v4696 = vpack.c.b16 %v4276, %v4272
      %v4697 = vpack.c.b16 %v4277, %v4273
      %v4698 = vpack.c.b16 %v4282, %v4278
      %v4699 = vpack.c.b16 %v4283, %v4279
      %v4700 = vpack.c.b16 %v4284, %v4280
      %v4701 = vpack.c.b16 %v4285, %v4281
      %v4702 = vpack.c.b16 %v4290, %v4286
      %v4703 = vpack.c.b16 %v4291, %v4287
      %v4704 = vpack.c.b16 %v4292, %v4288
      %v4705 = vpack.c.b16 %v4293, %v4289
      %v4706 = vpack.c.b16 %v4298, %v4294
      %v4707 = vpack.c.b16 %v4299, %v4295
      %v4708 = vpack.c.b16 %v4300, %v4296
      %v4709 = vpack.c.b16 %v4301, %v4297
      %v4710 = vpack.c.b16 %v4306, %v4302
      %v4711 = vpack.c.b16 %v4307, %v4303
      %v4712 = vpack.c.b16 %v4308, %v4304
      %v4713 = vpack.c.b16 %v4309, %v4305
      %v4714 = vpack.c.b16 %v4314, %v4310
      %v4715 = vpack.c.b16 %v4315, %v4311
      %v4716 = vpack.c.b16 %v4316, %v4312
      %v4717 = vpack.c.b16 %v4317, %v4313
      %v4718 = vpack.c.b16 %v4322, %v4318
      %v4719 = vpack.c.b16 %v4323, %v4319
      %v4720 = vpack.c.b16 %v4324, %v4320
      %v4721 = vpack.c.b16 %v4325, %v4321
      %v4722 = vpack.c.b16 %v4330, %v4326
      %v4723 = vpack.c.b16 %v4331, %v4327
      %v4724 = vpack.c.b16 %v4332, %v4328
      %v4725 = vpack.c.b16 %v4333, %v4329
      %v4726 = vpack.c.b16 %v4338, %v4334
      %v4727 = vpack.c.b16 %v4339, %v4335
      %v4728 = vpack.c.b16 %v4340, %v4336
      %v4729 = vpack.c.b16 %v4341, %v4337
      %v4730 = vpack.c.b16 %v4346, %v4342
      %v4731 = vpack.c.b16 %v4347, %v4343
      %v4732 = vpack.c.b16 %v4348, %v4344
      %v4733 = vpack.c.b16 %v4349, %v4345
      %v4734 = vpack.c.b16 %v4354, %v4350
      %v4735 = vpack.c.b16 %v4355, %v4351
      %v4736 = vpack.c.b16 %v4356, %v4352
      %v4737 = vpack.c.b16 %v4357, %v4353
      %v4738 = vpack.c.b16 %v4362, %v4358
      %v4739 = vpack.c.b16 %v4363, %v4359
      %v4740 = vpack.c.b16 %v4364, %v4360
      %v4741 = vpack.c.b16 %v4365, %v4361
      %v4742 = vpack.c.b16 %v4370, %v4366
      %v4743 = vpack.c.b16 %v4371, %v4367
      %v4744 = vpack.c.b16 %v4372, %v4368
      %v4745 = vpack.c.b16 %v4373, %v4369
      %v4746 = vpack.c.b16 %v4378, %v4374
      %v4747 = vpack.c.b16 %v4379, %v4375
      %v4748 = vpack.c.b16 %v4380, %v4376
      %v4749 = vpack.c.b16 %v4381, %v4377
      %v4750 = vpack.c.b16 %v4386, %v4382
      %v4751 = vpack.c.b16 %v4387, %v4383
      %v4752 = vpack.c.b16 %v4388, %v4384
      %v4753 = vpack.c.b16 %v4389, %v4385
      %v4754 = vpack.c.b16 %v4394, %v4390
      %v4755 = vpack.c.b16 %v4395, %v4391
      %v4756 = vpack.c.b16 %v4396, %v4392
      %v4757 = vpack.c.b16 %v4397, %v4393
      %v4758 = vpack.c.b16 %v4402, %v4398
      %v4759 = vpack.c.b16 %v4403, %v4399
      %v4760 = vpack.c.b16 %v4404, %v4400
      %v4761 = vpack.c.b16 %v4405, %v4401
      %v4762 = vpack.c.b16 %v4410, %v4406
      %v4763 = vpack.c.b16 %v4411, %v4407
      %v4764 = vpack.c.b16 %v4412, %v4408
      %v4765 = vpack.c.b16 %v4413, %v4409
      %v4766 = vpack.c.b16 %v4418, %v4414
      %v4767 = vpack.c.b16 %v4419, %v4415
      %v4768 = vpack.c.b16 %v4420, %v4416
      %v4769 = vpack.c.b16 %v4421, %v4417
      %v4770 = vpack.c.b16 %v4426, %v4422
      %v4771 = vpack.c.b16 %v4427, %v4423
      %v4772 = vpack.c.b16 %v4428, %v4424
      %v4773 = vpack.c.b16 %v4429, %v4425
      %v4774 = vpack.c.b16 %v4434, %v4430
      %v4775 = vpack.c.b16 %v4435, %v4431
      %v4776 = vpack.c.b16 %v4436, %v4432
      %v4777 = vpack.c.b16 %v4437, %v4433
      %v4778 = vpack.c.b16 %v4442, %v4438
      %v4779 = vpack.c.b16 %v4443, %v4439
      %v4780 = vpack.c.b16 %v4444, %v4440
      %v4781 = vpack.c.b16 %v4445, %v4441
      %v4782 = vpack.c.b16 %v4450, %v4446
      %v4783 = vpack.c.b16 %v4451, %v4447
      %v4784 = vpack.c.b16 %v4452, %v4448
      %v4785 = vpack.c.b16 %v4453, %v4449
      %v4786 = vpack.c.b16 %v4458, %v4454
      %v4787 = vpack.c.b16 %v4459, %v4455
      %v4788 = vpack.c.b16 %v4460, %v4456
      %v4789 = vpack.c.b16 %v4461, %v4457
      %v4790 = vpack.c.b16 %v4466, %v4462
      %v4791 = vpack.c.b16 %v4467, %v4463
      %v4792 = vpack.c.b16 %v4468, %v4464
      %v4793 = vpack.c.b16 %v4469, %v4465
      %v4794 = vpack.c.b16 %v4474, %v4470
      %v4795 = vpack.c.b16 %v4475, %v4471
      %v4796 = vpack.c.b16 %v4476, %v4472
      %v4797 = vpack.c.b16 %v4477, %v4473
      %v4798 = vpack.c.b16 %v4482, %v4478
      %v4799 = vpack.c.b16 %v4483, %v4479
      %v4800 = vpack.c.b16 %v4484, %v4480
      %v4801 = vpack.c.b16 %v4485, %v4481
      %v4802 = vpack.c.b16 %v4490, %v4486
      %v4803 = vpack.c.b16 %v4491, %v4487
      %v4804 = vpack.c.b16 %v4492, %v4488
      %v4805 = vpack.c.b16 %v4493, %v4489
      %v4806 = vpack.c.b16 %v4498, %v4494
      %v4807 = vpack.c.b16 %v4499, %v4495
      %v4808 = vpack.c.b16 %v4500, %v4496
      %v4809 = vpack.c.b16 %v4501, %v4497
      %v4810 = vpack.c.b16 %v4506, %v4502
      %v4811 = vpack.c.b16 %v4507, %v4503
      %v4812 = vpack.c.b16 %v4508, %v4504
      %v4813 = vpack.c.b16 %v4509, %v4505
      %v4814 = vpack.c.b16 %v4514, %v4510
      %v4815 = vpack.c.b16 %v4515, %v4511
      %v4816 = vpack.c.b16 %v4516, %v4512
      %v4817 = vpack.c.b16 %v4517, %v4513
      %v4818 = vpack.c.b16 %v4522, %v4518
      %v4819 = vpack.c.b16 %v4523, %v4519
      %v4820 = vpack.c.b16 %v4524, %v4520
      %v4821 = vpack.c.b16 %v4525, %v4521
      %v4822 = vpack.c.b16 %v4530, %v4526
      %v4823 = vpack.c.b16 %v4531, %v4527
      %v4824 = vpack.c.b16 %v4532, %v4528
      %v4825 = vpack.c.b16 %v4533, %v4529
      %v4826 = vpack.c.b16 %v4538, %v4534
      %v4827 = vpack.c.b16 %v4539, %v4535
      %v4828 = vpack.c.b16 %v4540, %v4536
      %v4829 = vpack.c.b16 %v4541, %v4537
      %v4830 = vpack.c.b16 %v4546, %v4542
      %v4831 = vpack.c.b16 %v4547, %v4543
      %v4832 = vpack.c.b16 %v4548, %v4544
      %v4833 = vpack.c.b16 %v4549, %v4545
      %v4834 = vpack.c.b16 %v4554, %v4550
      %v4835 = vpack.c.b16 %v4555, %v4551
      %v4836 = vpack.c.b16 %v4556, %v4552
      %v4837 = vpack.c.b16 %v4557, %v4553
      %v4838 = vpack.c.b16 %v4562, %v4558
      %v4839 = vpack.c.b16 %v4563, %v4559
      %v4840 = vpack.c.b16 %v4564, %v4560
      %v4841 = vpack.c.b16 %v4565, %v4561
      %v4842 = vpack.c.b16 %v4570, %v4566
      %v4843 = vpack.c.b16 %v4571, %v4567
      %v4844 = vpack.c.b16 %v4572, %v4568
      %v4845 = vpack.c.b16 %v4573, %v4569
      %v4846 = vpack.c.b16 %v4578, %v4574
      %v4847 = vpack.c.b16 %v4579, %v4575
      %v4848 = vpack.c.b16 %v4580, %v4576
      %v4849 = vpack.c.b16 %v4581, %v4577
      %v4850 = vpack.c.b16 %v4586, %v4582
      %v4851 = vpack.c.b16 %v4587, %v4583
      %v4852 = vpack.c.b16 %v4588, %v4584
      %v4853 = vpack.c.b16 %v4589, %v4585
      %v4854 = vpack.c.b16 %v4594, %v4590
      %v4855 = vpack.c.b16 %v4595, %v4591
      %v4856 = vpack.c.b16 %v4596, %v4592
      %v4857 = vpack.c.b16 %v4597, %v4593
      %v4858 = vpack.c.b16 %v4602, %v4598
      %v4859 = vpack.c.b16 %v4603, %v4599
      %v4860 = vpack.c.b16 %v4604, %v4600
      %v4861 = vpack.c.b16 %v4605, %v4601
      %5118 = vmatpush.bf16.msra.mxu0 %v2789
      %5119 = vmatpush.bf16.msra.mxu0 %v2788
      %5120 = vmatpush.bf16.msra.mxu0 %v2787
      %5121 = vmatpush.bf16.msra.mxu0 %v2786
      %5122 = vmatpush.bf16.msra.mxu0 %v2785
      %5123 = vmatpush.bf16.msra.mxu0 %v2784
      %5124 = vmatpush.bf16.msra.mxu0 %v2783
      %5125 = vmatpush.bf16.msra.mxu0 %v2782
      %5126 = vmatmul.bf16.gmra.mxu0 %v4606
      %v5127 = vpop.f32.mrf.mxu0
      %v5128 = vadd.f32 %v3201, %v5127
      %v5129 = vpop.f32.mrf.mxu0
      %v5130 = vadd.f32 %v3206, %v5129
      %5131 = vmatmul.bf16.gmra.mxu0 %v4610
      %v5132 = vpop.f32.mrf.mxu0
      %v5133 = vadd.f32 %v3211, %v5132
      %v5134 = vpop.f32.mrf.mxu0
      %v5135 = vadd.f32 %v3216, %v5134
      %5136 = vmatmul.bf16.gmra.mxu0 %v4614
      %v5137 = vpop.f32.mrf.mxu0
      %v5138 = vadd.f32 %v3221, %v5137
      %v5139 = vpop.f32.mrf.mxu0
      %v5140 = vadd.f32 %v3226, %v5139
      %5141 = vmatmul.bf16.gmra.mxu0 %v4618
      %v5142 = vpop.f32.mrf.mxu0
      %v5143 = vadd.f32 %v3231, %v5142
      %v5144 = vpop.f32.mrf.mxu0
      %v5145 = vadd.f32 %v3236, %v5144
      %5146 = vmatmul.bf16.gmra.mxu0 %v4622
      %v5147 = vpop.f32.mrf.mxu0
      %v5148 = vadd.f32 %v3241, %v5147
      %v5149 = vpop.f32.mrf.mxu0
      %v5150 = vadd.f32 %v3246, %v5149
      %5151 = vmatmul.bf16.gmra.mxu0 %v4626
      %v5152 = vpop.f32.mrf.mxu0
      %v5153 = vadd.f32 %v3251, %v5152
      %v5154 = vpop.f32.mrf.mxu0
      %v5155 = vadd.f32 %v3256, %v5154
      %5156 = vmatmul.bf16.gmra.mxu0 %v4630
      %v5157 = vpop.f32.mrf.mxu0
      %v5158 = vadd.f32 %v3261, %v5157
      %v5159 = vpop.f32.mrf.mxu0
      %v5160 = vadd.f32 %v3266, %v5159
      %5161 = vmatmul.bf16.gmra.mxu0 %v4634
      %v5162 = vpop.f32.mrf.mxu0
      %v5163 = vadd.f32 %v3271, %v5162
      %v5164 = vpop.f32.mrf.mxu0
      %v5165 = vadd.f32 %v3276, %v5164
      %5166 = vmatmul.bf16.gmra.mxu0 %v4638
      %v5167 = vpop.f32.mrf.mxu0
      %v5168 = vadd.f32 %v3281, %v5167
      %v5169 = vpop.f32.mrf.mxu0
      %v5170 = vadd.f32 %v3286, %v5169
      %5171 = vmatmul.bf16.gmra.mxu0 %v4642
      %v5172 = vpop.f32.mrf.mxu0
      %v5173 = vadd.f32 %v3291, %v5172
      %v5174 = vpop.f32.mrf.mxu0
      %v5175 = vadd.f32 %v3296, %v5174
      %5176 = vmatmul.bf16.gmra.mxu0 %v4646
      %v5177 = vpop.f32.mrf.mxu0
      %v5178 = vadd.f32 %v3301, %v5177
      %v5179 = vpop.f32.mrf.mxu0
      %v5180 = vadd.f32 %v3306, %v5179
      %5181 = vmatmul.bf16.gmra.mxu0 %v4650
      %v5182 = vpop.f32.mrf.mxu0
      %v5183 = vadd.f32 %v3311, %v5182
      %v5184 = vpop.f32.mrf.mxu0
      %v5185 = vadd.f32 %v3316, %v5184
      %5186 = vmatmul.bf16.gmra.mxu0 %v4654
      %v5187 = vpop.f32.mrf.mxu0
      %v5188 = vadd.f32 %v3321, %v5187
      %v5189 = vpop.f32.mrf.mxu0
      %v5190 = vadd.f32 %v3326, %v5189
      %5191 = vmatmul.bf16.gmra.mxu0 %v4658
      %v5192 = vpop.f32.mrf.mxu0
      %v5193 = vadd.f32 %v3331, %v5192
      %v5194 = vpop.f32.mrf.mxu0
      %v5195 = vadd.f32 %v3336, %v5194
      %5196 = vmatmul.bf16.gmra.mxu0 %v4662
      %v5197 = vpop.f32.mrf.mxu0
      %v5198 = vadd.f32 %v3341, %v5197
      %v5199 = vpop.f32.mrf.mxu0
      %v5200 = vadd.f32 %v3346, %v5199
      %5201 = vmatmul.bf16.gmra.mxu0 %v4666
      %v5202 = vpop.f32.mrf.mxu0
      %v5203 = vadd.f32 %v3351, %v5202
      %v5204 = vpop.f32.mrf.mxu0
      %v5205 = vadd.f32 %v3356, %v5204
      %5206 = vmatmul.bf16.gmra.mxu0 %v4670
      %v5207 = vpop.f32.mrf.mxu0
      %v5208 = vadd.f32 %v3361, %v5207
      %v5209 = vpop.f32.mrf.mxu0
      %v5210 = vadd.f32 %v3366, %v5209
      %5211 = vmatmul.bf16.gmra.mxu0 %v4674
      %v5212 = vpop.f32.mrf.mxu0
      %v5213 = vadd.f32 %v3371, %v5212
      %v5214 = vpop.f32.mrf.mxu0
      %v5215 = vadd.f32 %v3376, %v5214
      %5216 = vmatmul.bf16.gmra.mxu0 %v4678
      %v5217 = vpop.f32.mrf.mxu0
      %v5218 = vadd.f32 %v3381, %v5217
      %v5219 = vpop.f32.mrf.mxu0
      %v5220 = vadd.f32 %v3386, %v5219
      %5221 = vmatmul.bf16.gmra.mxu0 %v4682
      %v5222 = vpop.f32.mrf.mxu0
      %v5223 = vadd.f32 %v3391, %v5222
      %v5224 = vpop.f32.mrf.mxu0
      %v5225 = vadd.f32 %v3396, %v5224
      %5226 = vmatmul.bf16.gmra.mxu0 %v4686
      %v5227 = vpop.f32.mrf.mxu0
      %v5228 = vadd.f32 %v3401, %v5227
      %v5229 = vpop.f32.mrf.mxu0
      %v5230 = vadd.f32 %v3406, %v5229
      %5231 = vmatmul.bf16.gmra.mxu0 %v4690
      %v5232 = vpop.f32.mrf.mxu0
      %v5233 = vadd.f32 %v3411, %v5232
      %v5234 = vpop.f32.mrf.mxu0
      %v5235 = vadd.f32 %v3416, %v5234
      %5236 = vmatmul.bf16.gmra.mxu0 %v4694
      %v5237 = vpop.f32.mrf.mxu0
      %v5238 = vadd.f32 %v3421, %v5237
      %v5239 = vpop.f32.mrf.mxu0
      %v5240 = vadd.f32 %v3426, %v5239
      %5241 = vmatmul.bf16.gmra.mxu0 %v4698
      %v5242 = vpop.f32.mrf.mxu0
      %v5243 = vadd.f32 %v3431, %v5242
      %v5244 = vpop.f32.mrf.mxu0
      %v5245 = vadd.f32 %v3436, %v5244
      %5246 = vmatmul.bf16.gmra.mxu0 %v4702
      %v5247 = vpop.f32.mrf.mxu0
      %v5248 = vadd.f32 %v3441, %v5247
      %v5249 = vpop.f32.mrf.mxu0
      %v5250 = vadd.f32 %v3446, %v5249
      %5251 = vmatmul.bf16.gmra.mxu0 %v4706
      %v5252 = vpop.f32.mrf.mxu0
      %v5253 = vadd.f32 %v3451, %v5252
      %v5254 = vpop.f32.mrf.mxu0
      %v5255 = vadd.f32 %v3456, %v5254
      %5256 = vmatmul.bf16.gmra.mxu0 %v4710
      %v5257 = vpop.f32.mrf.mxu0
      %v5258 = vadd.f32 %v3461, %v5257
      %v5259 = vpop.f32.mrf.mxu0
      %v5260 = vadd.f32 %v3466, %v5259
      %5261 = vmatmul.bf16.gmra.mxu0 %v4714
      %v5262 = vpop.f32.mrf.mxu0
      %v5263 = vadd.f32 %v3471, %v5262
      %v5264 = vpop.f32.mrf.mxu0
      %v5265 = vadd.f32 %v3476, %v5264
      %5266 = vmatmul.bf16.gmra.mxu0 %v4718
      %v5267 = vpop.f32.mrf.mxu0
      %v5268 = vadd.f32 %v3481, %v5267
      %v5269 = vpop.f32.mrf.mxu0
      %v5270 = vadd.f32 %v3486, %v5269
      %5271 = vmatmul.bf16.gmra.mxu0 %v4722
      %v5272 = vpop.f32.mrf.mxu0
      %v5273 = vadd.f32 %v3491, %v5272
      %v5274 = vpop.f32.mrf.mxu0
      %v5275 = vadd.f32 %v3496, %v5274
      %5276 = vmatmul.bf16.gmra.mxu0 %v4726
      %v5277 = vpop.f32.mrf.mxu0
      %v5278 = vadd.f32 %v3501, %v5277
      %v5279 = vpop.f32.mrf.mxu0
      %v5280 = vadd.f32 %v3506, %v5279
      %5281 = vmatmul.bf16.gmra.mxu0 %v4730
      %v5282 = vpop.f32.mrf.mxu0
      %v5283 = vadd.f32 %v3511, %v5282
      %v5284 = vpop.f32.mrf.mxu0
      %v5285 = vadd.f32 %v3516, %v5284
      %5286 = vmatmul.bf16.gmra.mxu0 %v4734
      %v5287 = vpop.f32.mrf.mxu0
      %v5288 = vadd.f32 %v3521, %v5287
      %v5289 = vpop.f32.mrf.mxu0
      %v5290 = vadd.f32 %v3526, %v5289
      %5291 = vmatmul.bf16.gmra.mxu0 %v4738
      %v5292 = vpop.f32.mrf.mxu0
      %v5293 = vadd.f32 %v3531, %v5292
      %v5294 = vpop.f32.mrf.mxu0
      %v5295 = vadd.f32 %v3536, %v5294
      %5296 = vmatmul.bf16.gmra.mxu0 %v4742
      %v5297 = vpop.f32.mrf.mxu0
      %v5298 = vadd.f32 %v3541, %v5297
      %v5299 = vpop.f32.mrf.mxu0
      %v5300 = vadd.f32 %v3546, %v5299
      %5301 = vmatmul.bf16.gmra.mxu0 %v4746
      %v5302 = vpop.f32.mrf.mxu0
      %v5303 = vadd.f32 %v3551, %v5302
      %v5304 = vpop.f32.mrf.mxu0
      %v5305 = vadd.f32 %v3556, %v5304
      %5306 = vmatmul.bf16.gmra.mxu0 %v4750
      %v5307 = vpop.f32.mrf.mxu0
      %v5308 = vadd.f32 %v3561, %v5307
      %v5309 = vpop.f32.mrf.mxu0
      %v5310 = vadd.f32 %v3566, %v5309
      %5311 = vmatmul.bf16.gmra.mxu0 %v4754
      %v5312 = vpop.f32.mrf.mxu0
      %v5313 = vadd.f32 %v3571, %v5312
      %v5314 = vpop.f32.mrf.mxu0
      %v5315 = vadd.f32 %v3576, %v5314
      %5316 = vmatmul.bf16.gmra.mxu0 %v4758
      %v5317 = vpop.f32.mrf.mxu0
      %v5318 = vadd.f32 %v3581, %v5317
      %v5319 = vpop.f32.mrf.mxu0
      %v5320 = vadd.f32 %v3586, %v5319
      %5321 = vmatmul.bf16.gmra.mxu0 %v4762
      %v5322 = vpop.f32.mrf.mxu0
      %v5323 = vadd.f32 %v3591, %v5322
      %v5324 = vpop.f32.mrf.mxu0
      %v5325 = vadd.f32 %v3596, %v5324
      %5326 = vmatmul.bf16.gmra.mxu0 %v4766
      %v5327 = vpop.f32.mrf.mxu0
      %v5328 = vadd.f32 %v3601, %v5327
      %v5329 = vpop.f32.mrf.mxu0
      %v5330 = vadd.f32 %v3606, %v5329
      %5331 = vmatmul.bf16.gmra.mxu0 %v4770
      %v5332 = vpop.f32.mrf.mxu0
      %v5333 = vadd.f32 %v3611, %v5332
      %v5334 = vpop.f32.mrf.mxu0
      %v5335 = vadd.f32 %v3616, %v5334
      %5336 = vmatmul.bf16.gmra.mxu0 %v4774
      %v5337 = vpop.f32.mrf.mxu0
      %v5338 = vadd.f32 %v3621, %v5337
      %v5339 = vpop.f32.mrf.mxu0
      %v5340 = vadd.f32 %v3626, %v5339
      %5341 = vmatmul.bf16.gmra.mxu0 %v4778
      %v5342 = vpop.f32.mrf.mxu0
      %v5343 = vadd.f32 %v3631, %v5342
      %v5344 = vpop.f32.mrf.mxu0
      %v5345 = vadd.f32 %v3636, %v5344
      %5346 = vmatmul.bf16.gmra.mxu0 %v4782
      %v5347 = vpop.f32.mrf.mxu0
      %v5348 = vadd.f32 %v3641, %v5347
      %v5349 = vpop.f32.mrf.mxu0
      %v5350 = vadd.f32 %v3646, %v5349
      %5351 = vmatmul.bf16.gmra.mxu0 %v4786
      %v5352 = vpop.f32.mrf.mxu0
      %v5353 = vadd.f32 %v3651, %v5352
      %v5354 = vpop.f32.mrf.mxu0
      %v5355 = vadd.f32 %v3656, %v5354
      %5356 = vmatmul.bf16.gmra.mxu0 %v4790
      %v5357 = vpop.f32.mrf.mxu0
      %v5358 = vadd.f32 %v3661, %v5357
      %v5359 = vpop.f32.mrf.mxu0
      %v5360 = vadd.f32 %v3666, %v5359
      %5361 = vmatmul.bf16.gmra.mxu0 %v4794
      %v5362 = vpop.f32.mrf.mxu0
      %v5363 = vadd.f32 %v3671, %v5362
      %v5364 = vpop.f32.mrf.mxu0
      %v5365 = vadd.f32 %v3676, %v5364
      %5366 = vmatmul.bf16.gmra.mxu0 %v4798
      %v5367 = vpop.f32.mrf.mxu0
      %v5368 = vadd.f32 %v3681, %v5367
      %v5369 = vpop.f32.mrf.mxu0
      %v5370 = vadd.f32 %v3686, %v5369
      %5371 = vmatmul.bf16.gmra.mxu0 %v4802
      %v5372 = vpop.f32.mrf.mxu0
      %v5373 = vadd.f32 %v3691, %v5372
      %v5374 = vpop.f32.mrf.mxu0
      %v5375 = vadd.f32 %v3696, %v5374
      %5376 = vmatmul.bf16.gmra.mxu0 %v4806
      %v5377 = vpop.f32.mrf.mxu0
      %v5378 = vadd.f32 %v3701, %v5377
      %v5379 = vpop.f32.mrf.mxu0
      %v5380 = vadd.f32 %v3706, %v5379
      %5381 = vmatmul.bf16.gmra.mxu0 %v4810
      %v5382 = vpop.f32.mrf.mxu0
      %v5383 = vadd.f32 %v3711, %v5382
      %v5384 = vpop.f32.mrf.mxu0
      %v5385 = vadd.f32 %v3716, %v5384
      %5386 = vmatmul.bf16.gmra.mxu0 %v4814
      %v5387 = vpop.f32.mrf.mxu0
      %v5388 = vadd.f32 %v3721, %v5387
      %v5389 = vpop.f32.mrf.mxu0
      %v5390 = vadd.f32 %v3726, %v5389
      %5391 = vmatmul.bf16.gmra.mxu0 %v4818
      %v5392 = vpop.f32.mrf.mxu0
      %v5393 = vadd.f32 %v3731, %v5392
      %v5394 = vpop.f32.mrf.mxu0
      %v5395 = vadd.f32 %v3736, %v5394
      %5396 = vmatmul.bf16.gmra.mxu0 %v4822
      %v5397 = vpop.f32.mrf.mxu0
      %v5398 = vadd.f32 %v3741, %v5397
      %v5399 = vpop.f32.mrf.mxu0
      %v5400 = vadd.f32 %v3746, %v5399
      %5401 = vmatmul.bf16.gmra.mxu0 %v4826
      %v5402 = vpop.f32.mrf.mxu0
      %v5403 = vadd.f32 %v3751, %v5402
      %v5404 = vpop.f32.mrf.mxu0
      %v5405 = vadd.f32 %v3756, %v5404
      %5406 = vmatmul.bf16.gmra.mxu0 %v4830
      %v5407 = vpop.f32.mrf.mxu0
      %v5408 = vadd.f32 %v3761, %v5407
      %v5409 = vpop.f32.mrf.mxu0
      %v5410 = vadd.f32 %v3766, %v5409
      %5411 = vmatmul.bf16.gmra.mxu0 %v4834
      %v5412 = vpop.f32.mrf.mxu0
      %v5413 = vadd.f32 %v3771, %v5412
      %v5414 = vpop.f32.mrf.mxu0
      %v5415 = vadd.f32 %v3776, %v5414
      %5416 = vmatmul.bf16.gmra.mxu0 %v4838
      %v5417 = vpop.f32.mrf.mxu0
      %v5418 = vadd.f32 %v3781, %v5417
      %v5419 = vpop.f32.mrf.mxu0
      %v5420 = vadd.f32 %v3786, %v5419
      %5421 = vmatmul.bf16.gmra.mxu0 %v4842
      %v5422 = vpop.f32.mrf.mxu0
      %v5423 = vadd.f32 %v3791, %v5422
      %v5424 = vpop.f32.mrf.mxu0
      %v5425 = vadd.f32 %v3796, %v5424
      %5426 = vmatmul.bf16.gmra.mxu0 %v4846
      %v5427 = vpop.f32.mrf.mxu0
      %v5428 = vadd.f32 %v3801, %v5427
      %v5429 = vpop.f32.mrf.mxu0
      %v5430 = vadd.f32 %v3806, %v5429
      %5431 = vmatmul.bf16.gmra.mxu0 %v4850
      %v5432 = vpop.f32.mrf.mxu0
      %v5433 = vadd.f32 %v3811, %v5432
      %v5434 = vpop.f32.mrf.mxu0
      %v5435 = vadd.f32 %v3816, %v5434
      %5436 = vmatmul.bf16.gmra.mxu0 %v4854
      %v5437 = vpop.f32.mrf.mxu0
      %v5438 = vadd.f32 %v3821, %v5437
      %v5439 = vpop.f32.mrf.mxu0
      %v5440 = vadd.f32 %v3826, %v5439
      %5441 = vmatmul.bf16.gmra.mxu0 %v4858
      %v5442 = vpop.f32.mrf.mxu0
      %v5443 = vadd.f32 %v3831, %v5442
      %v5444 = vpop.f32.mrf.mxu0
      %v5445 = vadd.f32 %v3836, %v5444
      %5446 = vdwg.mxu0
      %5447 = vmatpush.bf16.msra.mxu0 %v2797
      %5448 = vmatpush.bf16.msra.mxu0 %v2796
      %5449 = vmatpush.bf16.msra.mxu0 %v2795
      %5450 = vmatpush.bf16.msra.mxu0 %v2794
      %5451 = vmatpush.bf16.msra.mxu0 %v2793
      %5452 = vmatpush.bf16.msra.mxu0 %v2792
      %5453 = vmatpush.bf16.msra.mxu0 %v2791
      %5454 = vmatpush.bf16.msra.mxu0 %v2790
      %5455 = vmatmul.bf16.gmra.mxu0 %v4607
      %v5456 = vpop.f32.mrf.mxu0
      %v5457 = vadd.f32 %v5128, %v5456
      %v5458 = vpop.f32.mrf.mxu0
      %v5459 = vadd.f32 %v5130, %v5458
      %5460 = vmatmul.bf16.gmra.mxu0 %v4611
      %v5461 = vpop.f32.mrf.mxu0
      %v5462 = vadd.f32 %v5133, %v5461
      %v5463 = vpop.f32.mrf.mxu0
      %v5464 = vadd.f32 %v5135, %v5463
      %5465 = vmatmul.bf16.gmra.mxu0 %v4615
      %v5466 = vpop.f32.mrf.mxu0
      %v5467 = vadd.f32 %v5138, %v5466
      %v5468 = vpop.f32.mrf.mxu0
      %v5469 = vadd.f32 %v5140, %v5468
      %5470 = vmatmul.bf16.gmra.mxu0 %v4619
      %v5471 = vpop.f32.mrf.mxu0
      %v5472 = vadd.f32 %v5143, %v5471
      %v5473 = vpop.f32.mrf.mxu0
      %v5474 = vadd.f32 %v5145, %v5473
      %5475 = vmatmul.bf16.gmra.mxu0 %v4623
      %v5476 = vpop.f32.mrf.mxu0
      %v5477 = vadd.f32 %v5148, %v5476
      %v5478 = vpop.f32.mrf.mxu0
      %v5479 = vadd.f32 %v5150, %v5478
      %5480 = vmatmul.bf16.gmra.mxu0 %v4627
      %v5481 = vpop.f32.mrf.mxu0
      %v5482 = vadd.f32 %v5153, %v5481
      %v5483 = vpop.f32.mrf.mxu0
      %v5484 = vadd.f32 %v5155, %v5483
      %5485 = vmatmul.bf16.gmra.mxu0 %v4631
      %v5486 = vpop.f32.mrf.mxu0
      %v5487 = vadd.f32 %v5158, %v5486
      %v5488 = vpop.f32.mrf.mxu0
      %v5489 = vadd.f32 %v5160, %v5488
      %5490 = vmatmul.bf16.gmra.mxu0 %v4635
      %v5491 = vpop.f32.mrf.mxu0
      %v5492 = vadd.f32 %v5163, %v5491
      %v5493 = vpop.f32.mrf.mxu0
      %v5494 = vadd.f32 %v5165, %v5493
      %5495 = vmatmul.bf16.gmra.mxu0 %v4639
      %v5496 = vpop.f32.mrf.mxu0
      %v5497 = vadd.f32 %v5168, %v5496
      %v5498 = vpop.f32.mrf.mxu0
      %v5499 = vadd.f32 %v5170, %v5498
      %5500 = vmatmul.bf16.gmra.mxu0 %v4643
      %v5501 = vpop.f32.mrf.mxu0
      %v5502 = vadd.f32 %v5173, %v5501
      %v5503 = vpop.f32.mrf.mxu0
      %v5504 = vadd.f32 %v5175, %v5503
      %5505 = vmatmul.bf16.gmra.mxu0 %v4647
      %v5506 = vpop.f32.mrf.mxu0
      %v5507 = vadd.f32 %v5178, %v5506
      %v5508 = vpop.f32.mrf.mxu0
      %v5509 = vadd.f32 %v5180, %v5508
      %5510 = vmatmul.bf16.gmra.mxu0 %v4651
      %v5511 = vpop.f32.mrf.mxu0
      %v5512 = vadd.f32 %v5183, %v5511
      %v5513 = vpop.f32.mrf.mxu0
      %v5514 = vadd.f32 %v5185, %v5513
      %5515 = vmatmul.bf16.gmra.mxu0 %v4655
      %v5516 = vpop.f32.mrf.mxu0
      %v5517 = vadd.f32 %v5188, %v5516
      %v5518 = vpop.f32.mrf.mxu0
      %v5519 = vadd.f32 %v5190, %v5518
      %5520 = vmatmul.bf16.gmra.mxu0 %v4659
      %v5521 = vpop.f32.mrf.mxu0
      %v5522 = vadd.f32 %v5193, %v5521
      %v5523 = vpop.f32.mrf.mxu0
      %v5524 = vadd.f32 %v5195, %v5523
      %5525 = vmatmul.bf16.gmra.mxu0 %v4663
      %v5526 = vpop.f32.mrf.mxu0
      %v5527 = vadd.f32 %v5198, %v5526
      %v5528 = vpop.f32.mrf.mxu0
      %v5529 = vadd.f32 %v5200, %v5528
      %5530 = vmatmul.bf16.gmra.mxu0 %v4667
      %v5531 = vpop.f32.mrf.mxu0
      %v5532 = vadd.f32 %v5203, %v5531
      %v5533 = vpop.f32.mrf.mxu0
      %v5534 = vadd.f32 %v5205, %v5533
      %5535 = vmatmul.bf16.gmra.mxu0 %v4671
      %v5536 = vpop.f32.mrf.mxu0
      %v5537 = vadd.f32 %v5208, %v5536
      %v5538 = vpop.f32.mrf.mxu0
      %v5539 = vadd.f32 %v5210, %v5538
      %5540 = vmatmul.bf16.gmra.mxu0 %v4675
      %v5541 = vpop.f32.mrf.mxu0
      %v5542 = vadd.f32 %v5213, %v5541
      %v5543 = vpop.f32.mrf.mxu0
      %v5544 = vadd.f32 %v5215, %v5543
      %5545 = vmatmul.bf16.gmra.mxu0 %v4679
      %v5546 = vpop.f32.mrf.mxu0
      %v5547 = vadd.f32 %v5218, %v5546
      %v5548 = vpop.f32.mrf.mxu0
      %v5549 = vadd.f32 %v5220, %v5548
      %5550 = vmatmul.bf16.gmra.mxu0 %v4683
      %v5551 = vpop.f32.mrf.mxu0
      %v5552 = vadd.f32 %v5223, %v5551
      %v5553 = vpop.f32.mrf.mxu0
      %v5554 = vadd.f32 %v5225, %v5553
      %5555 = vmatmul.bf16.gmra.mxu0 %v4687
      %v5556 = vpop.f32.mrf.mxu0
      %v5557 = vadd.f32 %v5228, %v5556
      %v5558 = vpop.f32.mrf.mxu0
      %v5559 = vadd.f32 %v5230, %v5558
      %5560 = vmatmul.bf16.gmra.mxu0 %v4691
      %v5561 = vpop.f32.mrf.mxu0
      %v5562 = vadd.f32 %v5233, %v5561
      %v5563 = vpop.f32.mrf.mxu0
      %v5564 = vadd.f32 %v5235, %v5563
      %5565 = vmatmul.bf16.gmra.mxu0 %v4695
      %v5566 = vpop.f32.mrf.mxu0
      %v5567 = vadd.f32 %v5238, %v5566
      %v5568 = vpop.f32.mrf.mxu0
      %v5569 = vadd.f32 %v5240, %v5568
      %5570 = vmatmul.bf16.gmra.mxu0 %v4699
      %v5571 = vpop.f32.mrf.mxu0
      %v5572 = vadd.f32 %v5243, %v5571
      %v5573 = vpop.f32.mrf.mxu0
      %v5574 = vadd.f32 %v5245, %v5573
      %5575 = vmatmul.bf16.gmra.mxu0 %v4703
      %v5576 = vpop.f32.mrf.mxu0
      %v5577 = vadd.f32 %v5248, %v5576
      %v5578 = vpop.f32.mrf.mxu0
      %v5579 = vadd.f32 %v5250, %v5578
      %5580 = vmatmul.bf16.gmra.mxu0 %v4707
      %v5581 = vpop.f32.mrf.mxu0
      %v5582 = vadd.f32 %v5253, %v5581
      %v5583 = vpop.f32.mrf.mxu0
      %v5584 = vadd.f32 %v5255, %v5583
      %5585 = vmatmul.bf16.gmra.mxu0 %v4711
      %v5586 = vpop.f32.mrf.mxu0
      %v5587 = vadd.f32 %v5258, %v5586
      %v5588 = vpop.f32.mrf.mxu0
      %v5589 = vadd.f32 %v5260, %v5588
      %5590 = vmatmul.bf16.gmra.mxu0 %v4715
      %v5591 = vpop.f32.mrf.mxu0
      %v5592 = vadd.f32 %v5263, %v5591
      %v5593 = vpop.f32.mrf.mxu0
      %v5594 = vadd.f32 %v5265, %v5593
      %5595 = vmatmul.bf16.gmra.mxu0 %v4719
      %v5596 = vpop.f32.mrf.mxu0
      %v5597 = vadd.f32 %v5268, %v5596
      %v5598 = vpop.f32.mrf.mxu0
      %v5599 = vadd.f32 %v5270, %v5598
      %5600 = vmatmul.bf16.gmra.mxu0 %v4723
      %v5601 = vpop.f32.mrf.mxu0
      %v5602 = vadd.f32 %v5273, %v5601
      %v5603 = vpop.f32.mrf.mxu0
      %v5604 = vadd.f32 %v5275, %v5603
      %5605 = vmatmul.bf16.gmra.mxu0 %v4727
      %v5606 = vpop.f32.mrf.mxu0
      %v5607 = vadd.f32 %v5278, %v5606
      %v5608 = vpop.f32.mrf.mxu0
      %v5609 = vadd.f32 %v5280, %v5608
      %5610 = vmatmul.bf16.gmra.mxu0 %v4731
      %v5611 = vpop.f32.mrf.mxu0
      %v5612 = vadd.f32 %v5283, %v5611
      %v5613 = vpop.f32.mrf.mxu0
      %v5614 = vadd.f32 %v5285, %v5613
      %5615 = vmatmul.bf16.gmra.mxu0 %v4735
      %v5616 = vpop.f32.mrf.mxu0
      %v5617 = vadd.f32 %v5288, %v5616
      %v5618 = vpop.f32.mrf.mxu0
      %v5619 = vadd.f32 %v5290, %v5618
      %5620 = vmatmul.bf16.gmra.mxu0 %v4739
      %v5621 = vpop.f32.mrf.mxu0
      %v5622 = vadd.f32 %v5293, %v5621
      %v5623 = vpop.f32.mrf.mxu0
      %v5624 = vadd.f32 %v5295, %v5623
      %5625 = vmatmul.bf16.gmra.mxu0 %v4743
      %v5626 = vpop.f32.mrf.mxu0
      %v5627 = vadd.f32 %v5298, %v5626
      %v5628 = vpop.f32.mrf.mxu0
      %v5629 = vadd.f32 %v5300, %v5628
      %5630 = vmatmul.bf16.gmra.mxu0 %v4747
      %v5631 = vpop.f32.mrf.mxu0
      %v5632 = vadd.f32 %v5303, %v5631
      %v5633 = vpop.f32.mrf.mxu0
      %v5634 = vadd.f32 %v5305, %v5633
      %5635 = vmatmul.bf16.gmra.mxu0 %v4751
      %v5636 = vpop.f32.mrf.mxu0
      %v5637 = vadd.f32 %v5308, %v5636
      %v5638 = vpop.f32.mrf.mxu0
      %v5639 = vadd.f32 %v5310, %v5638
      %5640 = vmatmul.bf16.gmra.mxu0 %v4755
      %v5641 = vpop.f32.mrf.mxu0
      %v5642 = vadd.f32 %v5313, %v5641
      %v5643 = vpop.f32.mrf.mxu0
      %v5644 = vadd.f32 %v5315, %v5643
      %5645 = vmatmul.bf16.gmra.mxu0 %v4759
      %v5646 = vpop.f32.mrf.mxu0
      %v5647 = vadd.f32 %v5318, %v5646
      %v5648 = vpop.f32.mrf.mxu0
      %v5649 = vadd.f32 %v5320, %v5648
      %5650 = vmatmul.bf16.gmra.mxu0 %v4763
      %v5651 = vpop.f32.mrf.mxu0
      %v5652 = vadd.f32 %v5323, %v5651
      %v5653 = vpop.f32.mrf.mxu0
      %v5654 = vadd.f32 %v5325, %v5653
      %5655 = vmatmul.bf16.gmra.mxu0 %v4767
      %v5656 = vpop.f32.mrf.mxu0
      %v5657 = vadd.f32 %v5328, %v5656
      %v5658 = vpop.f32.mrf.mxu0
      %v5659 = vadd.f32 %v5330, %v5658
      %5660 = vmatmul.bf16.gmra.mxu0 %v4771
      %v5661 = vpop.f32.mrf.mxu0
      %v5662 = vadd.f32 %v5333, %v5661
      %v5663 = vpop.f32.mrf.mxu0
      %v5664 = vadd.f32 %v5335, %v5663
      %5665 = vmatmul.bf16.gmra.mxu0 %v4775
      %v5666 = vpop.f32.mrf.mxu0
      %v5667 = vadd.f32 %v5338, %v5666
      %v5668 = vpop.f32.mrf.mxu0
      %v5669 = vadd.f32 %v5340, %v5668
      %5670 = vmatmul.bf16.gmra.mxu0 %v4779
      %v5671 = vpop.f32.mrf.mxu0
      %v5672 = vadd.f32 %v5343, %v5671
      %v5673 = vpop.f32.mrf.mxu0
      %v5674 = vadd.f32 %v5345, %v5673
      %5675 = vmatmul.bf16.gmra.mxu0 %v4783
      %v5676 = vpop.f32.mrf.mxu0
      %v5677 = vadd.f32 %v5348, %v5676
      %v5678 = vpop.f32.mrf.mxu0
      %v5679 = vadd.f32 %v5350, %v5678
      %5680 = vmatmul.bf16.gmra.mxu0 %v4787
      %v5681 = vpop.f32.mrf.mxu0
      %v5682 = vadd.f32 %v5353, %v5681
      %v5683 = vpop.f32.mrf.mxu0
      %v5684 = vadd.f32 %v5355, %v5683
      %5685 = vmatmul.bf16.gmra.mxu0 %v4791
      %v5686 = vpop.f32.mrf.mxu0
      %v5687 = vadd.f32 %v5358, %v5686
      %v5688 = vpop.f32.mrf.mxu0
      %v5689 = vadd.f32 %v5360, %v5688
      %5690 = vmatmul.bf16.gmra.mxu0 %v4795
      %v5691 = vpop.f32.mrf.mxu0
      %v5692 = vadd.f32 %v5363, %v5691
      %v5693 = vpop.f32.mrf.mxu0
      %v5694 = vadd.f32 %v5365, %v5693
      %5695 = vmatmul.bf16.gmra.mxu0 %v4799
      %v5696 = vpop.f32.mrf.mxu0
      %v5697 = vadd.f32 %v5368, %v5696
      %v5698 = vpop.f32.mrf.mxu0
      %v5699 = vadd.f32 %v5370, %v5698
      %5700 = vmatmul.bf16.gmra.mxu0 %v4803
      %v5701 = vpop.f32.mrf.mxu0
      %v5702 = vadd.f32 %v5373, %v5701
      %v5703 = vpop.f32.mrf.mxu0
      %v5704 = vadd.f32 %v5375, %v5703
      %5705 = vmatmul.bf16.gmra.mxu0 %v4807
      %v5706 = vpop.f32.mrf.mxu0
      %v5707 = vadd.f32 %v5378, %v5706
      %v5708 = vpop.f32.mrf.mxu0
      %v5709 = vadd.f32 %v5380, %v5708
      %5710 = vmatmul.bf16.gmra.mxu0 %v4811
      %v5711 = vpop.f32.mrf.mxu0
      %v5712 = vadd.f32 %v5383, %v5711
      %v5713 = vpop.f32.mrf.mxu0
      %v5714 = vadd.f32 %v5385, %v5713
      %5715 = vmatmul.bf16.gmra.mxu0 %v4815
      %v5716 = vpop.f32.mrf.mxu0
      %v5717 = vadd.f32 %v5388, %v5716
      %v5718 = vpop.f32.mrf.mxu0
      %v5719 = vadd.f32 %v5390, %v5718
      %5720 = vmatmul.bf16.gmra.mxu0 %v4819
      %v5721 = vpop.f32.mrf.mxu0
      %v5722 = vadd.f32 %v5393, %v5721
      %v5723 = vpop.f32.mrf.mxu0
      %v5724 = vadd.f32 %v5395, %v5723
      %5725 = vmatmul.bf16.gmra.mxu0 %v4823
      %v5726 = vpop.f32.mrf.mxu0
      %v5727 = vadd.f32 %v5398, %v5726
      %v5728 = vpop.f32.mrf.mxu0
      %v5729 = vadd.f32 %v5400, %v5728
      %5730 = vmatmul.bf16.gmra.mxu0 %v4827
      %v5731 = vpop.f32.mrf.mxu0
      %v5732 = vadd.f32 %v5403, %v5731
      %v5733 = vpop.f32.mrf.mxu0
      %v5734 = vadd.f32 %v5405, %v5733
      %5735 = vmatmul.bf16.gmra.mxu0 %v4831
      %v5736 = vpop.f32.mrf.mxu0
      %v5737 = vadd.f32 %v5408, %v5736
      %v5738 = vpop.f32.mrf.mxu0
      %v5739 = vadd.f32 %v5410, %v5738
      %5740 = vmatmul.bf16.gmra.mxu0 %v4835
      %v5741 = vpop.f32.mrf.mxu0
      %v5742 = vadd.f32 %v5413, %v5741
      %v5743 = vpop.f32.mrf.mxu0
      %v5744 = vadd.f32 %v5415, %v5743
      %5745 = vmatmul.bf16.gmra.mxu0 %v4839
      %v5746 = vpop.f32.mrf.mxu0
      %v5747 = vadd.f32 %v5418, %v5746
      %v5748 = vpop.f32.mrf.mxu0
      %v5749 = vadd.f32 %v5420, %v5748
      %5750 = vmatmul.bf16.gmra.mxu0 %v4843
      %v5751 = vpop.f32.mrf.mxu0
      %v5752 = vadd.f32 %v5423, %v5751
      %v5753 = vpop.f32.mrf.mxu0
      %v5754 = vadd.f32 %v5425, %v5753
      %5755 = vmatmul.bf16.gmra.mxu0 %v4847
      %v5756 = vpop.f32.mrf.mxu0
      %v5757 = vadd.f32 %v5428, %v5756
      %v5758 = vpop.f32.mrf.mxu0
      %v5759 = vadd.f32 %v5430, %v5758
      %5760 = vmatmul.bf16.gmra.mxu0 %v4851
      %v5761 = vpop.f32.mrf.mxu0
      %v5762 = vadd.f32 %v5433, %v5761
      %v5763 = vpop.f32.mrf.mxu0
      %v5764 = vadd.f32 %v5435, %v5763
      %5765 = vmatmul.bf16.gmra.mxu0 %v4855
      %v5766 = vpop.f32.mrf.mxu0
      %v5767 = vadd.f32 %v5438, %v5766
      %v5768 = vpop.f32.mrf.mxu0
      %v5769 = vadd.f32 %v5440, %v5768
      %5770 = vmatmul.bf16.gmra.mxu0 %v4859
      %v5771 = vpop.f32.mrf.mxu0
      %v5772 = vadd.f32 %v5443, %v5771
      %v5773 = vpop.f32.mrf.mxu0
      %v5774 = vadd.f32 %v5445, %v5773
      %5775 = vdwg.mxu0
      %5776 = vmatpush.bf16.msra.mxu0 %v2805
      %5777 = vmatpush.bf16.msra.mxu0 %v2804
      %5778 = vmatpush.bf16.msra.mxu0 %v2803
      %5779 = vmatpush.bf16.msra.mxu0 %v2802
      %5780 = vmatpush.bf16.msra.mxu0 %v2801
      %5781 = vmatpush.bf16.msra.mxu0 %v2800
      %5782 = vmatpush.bf16.msra.mxu0 %v2799
      %5783 = vmatpush.bf16.msra.mxu0 %v2798
      %5784 = vmatmul.bf16.gmra.mxu0 %v4608
      %v5785 = vpop.f32.mrf.mxu0
      %v5786 = vadd.f32 %v5457, %v5785
      %v5787 = vpop.f32.mrf.mxu0
      %v5788 = vadd.f32 %v5459, %v5787
      %5789 = vmatmul.bf16.gmra.mxu0 %v4612
      %v5790 = vpop.f32.mrf.mxu0
      %v5791 = vadd.f32 %v5462, %v5790
      %v5792 = vpop.f32.mrf.mxu0
      %v5793 = vadd.f32 %v5464, %v5792
      %5794 = vmatmul.bf16.gmra.mxu0 %v4616
      %v5795 = vpop.f32.mrf.mxu0
      %v5796 = vadd.f32 %v5467, %v5795
      %v5797 = vpop.f32.mrf.mxu0
      %v5798 = vadd.f32 %v5469, %v5797
      %5799 = vmatmul.bf16.gmra.mxu0 %v4620
      %v5800 = vpop.f32.mrf.mxu0
      %v5801 = vadd.f32 %v5472, %v5800
      %v5802 = vpop.f32.mrf.mxu0
      %v5803 = vadd.f32 %v5474, %v5802
      %5804 = vmatmul.bf16.gmra.mxu0 %v4624
      %v5805 = vpop.f32.mrf.mxu0
      %v5806 = vadd.f32 %v5477, %v5805
      %v5807 = vpop.f32.mrf.mxu0
      %v5808 = vadd.f32 %v5479, %v5807
      %5809 = vmatmul.bf16.gmra.mxu0 %v4628
      %v5810 = vpop.f32.mrf.mxu0
      %v5811 = vadd.f32 %v5482, %v5810
      %v5812 = vpop.f32.mrf.mxu0
      %v5813 = vadd.f32 %v5484, %v5812
      %5814 = vmatmul.bf16.gmra.mxu0 %v4632
      %v5815 = vpop.f32.mrf.mxu0
      %v5816 = vadd.f32 %v5487, %v5815
      %v5817 = vpop.f32.mrf.mxu0
      %v5818 = vadd.f32 %v5489, %v5817
      %5819 = vmatmul.bf16.gmra.mxu0 %v4636
      %v5820 = vpop.f32.mrf.mxu0
      %v5821 = vadd.f32 %v5492, %v5820
      %v5822 = vpop.f32.mrf.mxu0
      %v5823 = vadd.f32 %v5494, %v5822
      %5824 = vmatmul.bf16.gmra.mxu0 %v4640
      %v5825 = vpop.f32.mrf.mxu0
      %v5826 = vadd.f32 %v5497, %v5825
      %v5827 = vpop.f32.mrf.mxu0
      %v5828 = vadd.f32 %v5499, %v5827
      %5829 = vmatmul.bf16.gmra.mxu0 %v4644
      %v5830 = vpop.f32.mrf.mxu0
      %v5831 = vadd.f32 %v5502, %v5830
      %v5832 = vpop.f32.mrf.mxu0
      %v5833 = vadd.f32 %v5504, %v5832
      %5834 = vmatmul.bf16.gmra.mxu0 %v4648
      %v5835 = vpop.f32.mrf.mxu0
      %v5836 = vadd.f32 %v5507, %v5835
      %v5837 = vpop.f32.mrf.mxu0
      %v5838 = vadd.f32 %v5509, %v5837
      %5839 = vmatmul.bf16.gmra.mxu0 %v4652
      %v5840 = vpop.f32.mrf.mxu0
      %v5841 = vadd.f32 %v5512, %v5840
      %v5842 = vpop.f32.mrf.mxu0
      %v5843 = vadd.f32 %v5514, %v5842
      %5844 = vmatmul.bf16.gmra.mxu0 %v4656
      %v5845 = vpop.f32.mrf.mxu0
      %v5846 = vadd.f32 %v5517, %v5845
      %v5847 = vpop.f32.mrf.mxu0
      %v5848 = vadd.f32 %v5519, %v5847
      %5849 = vmatmul.bf16.gmra.mxu0 %v4660
      %v5850 = vpop.f32.mrf.mxu0
      %v5851 = vadd.f32 %v5522, %v5850
      %v5852 = vpop.f32.mrf.mxu0
      %v5853 = vadd.f32 %v5524, %v5852
      %5854 = vmatmul.bf16.gmra.mxu0 %v4664
      %v5855 = vpop.f32.mrf.mxu0
      %v5856 = vadd.f32 %v5527, %v5855
      %v5857 = vpop.f32.mrf.mxu0
      %v5858 = vadd.f32 %v5529, %v5857
      %5859 = vmatmul.bf16.gmra.mxu0 %v4668
      %v5860 = vpop.f32.mrf.mxu0
      %v5861 = vadd.f32 %v5532, %v5860
      %v5862 = vpop.f32.mrf.mxu0
      %v5863 = vadd.f32 %v5534, %v5862
      %5864 = vmatmul.bf16.gmra.mxu0 %v4672
      %v5865 = vpop.f32.mrf.mxu0
      %v5866 = vadd.f32 %v5537, %v5865
      %v5867 = vpop.f32.mrf.mxu0
      %v5868 = vadd.f32 %v5539, %v5867
      %5869 = vmatmul.bf16.gmra.mxu0 %v4676
      %v5870 = vpop.f32.mrf.mxu0
      %v5871 = vadd.f32 %v5542, %v5870
      %v5872 = vpop.f32.mrf.mxu0
      %v5873 = vadd.f32 %v5544, %v5872
      %5874 = vmatmul.bf16.gmra.mxu0 %v4680
      %v5875 = vpop.f32.mrf.mxu0
      %v5876 = vadd.f32 %v5547, %v5875
      %v5877 = vpop.f32.mrf.mxu0
      %v5878 = vadd.f32 %v5549, %v5877
      %5879 = vmatmul.bf16.gmra.mxu0 %v4684
      %v5880 = vpop.f32.mrf.mxu0
      %v5881 = vadd.f32 %v5552, %v5880
      %v5882 = vpop.f32.mrf.mxu0
      %v5883 = vadd.f32 %v5554, %v5882
      %5884 = vmatmul.bf16.gmra.mxu0 %v4688
      %v5885 = vpop.f32.mrf.mxu0
      %v5886 = vadd.f32 %v5557, %v5885
      %v5887 = vpop.f32.mrf.mxu0
      %v5888 = vadd.f32 %v5559, %v5887
      %5889 = vmatmul.bf16.gmra.mxu0 %v4692
      %v5890 = vpop.f32.mrf.mxu0
      %v5891 = vadd.f32 %v5562, %v5890
      %v5892 = vpop.f32.mrf.mxu0
      %v5893 = vadd.f32 %v5564, %v5892
      %5894 = vmatmul.bf16.gmra.mxu0 %v4696
      %v5895 = vpop.f32.mrf.mxu0
      %v5896 = vadd.f32 %v5567, %v5895
      %v5897 = vpop.f32.mrf.mxu0
      %v5898 = vadd.f32 %v5569, %v5897
      %5899 = vmatmul.bf16.gmra.mxu0 %v4700
      %v5900 = vpop.f32.mrf.mxu0
      %v5901 = vadd.f32 %v5572, %v5900
      %v5902 = vpop.f32.mrf.mxu0
      %v5903 = vadd.f32 %v5574, %v5902
      %5904 = vmatmul.bf16.gmra.mxu0 %v4704
      %v5905 = vpop.f32.mrf.mxu0
      %v5906 = vadd.f32 %v5577, %v5905
      %v5907 = vpop.f32.mrf.mxu0
      %v5908 = vadd.f32 %v5579, %v5907
      %5909 = vmatmul.bf16.gmra.mxu0 %v4708
      %v5910 = vpop.f32.mrf.mxu0
      %v5911 = vadd.f32 %v5582, %v5910
      %v5912 = vpop.f32.mrf.mxu0
      %v5913 = vadd.f32 %v5584, %v5912
      %5914 = vmatmul.bf16.gmra.mxu0 %v4712
      %v5915 = vpop.f32.mrf.mxu0
      %v5916 = vadd.f32 %v5587, %v5915
      %v5917 = vpop.f32.mrf.mxu0
      %v5918 = vadd.f32 %v5589, %v5917
      %5919 = vmatmul.bf16.gmra.mxu0 %v4716
      %v5920 = vpop.f32.mrf.mxu0
      %v5921 = vadd.f32 %v5592, %v5920
      %v5922 = vpop.f32.mrf.mxu0
      %v5923 = vadd.f32 %v5594, %v5922
      %5924 = vmatmul.bf16.gmra.mxu0 %v4720
      %v5925 = vpop.f32.mrf.mxu0
      %v5926 = vadd.f32 %v5597, %v5925
      %v5927 = vpop.f32.mrf.mxu0
      %v5928 = vadd.f32 %v5599, %v5927
      %5929 = vmatmul.bf16.gmra.mxu0 %v4724
      %v5930 = vpop.f32.mrf.mxu0
      %v5931 = vadd.f32 %v5602, %v5930
      %v5932 = vpop.f32.mrf.mxu0
      %v5933 = vadd.f32 %v5604, %v5932
      %5934 = vmatmul.bf16.gmra.mxu0 %v4728
      %v5935 = vpop.f32.mrf.mxu0
      %v5936 = vadd.f32 %v5607, %v5935
      %v5937 = vpop.f32.mrf.mxu0
      %v5938 = vadd.f32 %v5609, %v5937
      %5939 = vmatmul.bf16.gmra.mxu0 %v4732
      %v5940 = vpop.f32.mrf.mxu0
      %v5941 = vadd.f32 %v5612, %v5940
      %v5942 = vpop.f32.mrf.mxu0
      %v5943 = vadd.f32 %v5614, %v5942
      %5944 = vmatmul.bf16.gmra.mxu0 %v4736
      %v5945 = vpop.f32.mrf.mxu0
      %v5946 = vadd.f32 %v5617, %v5945
      %v5947 = vpop.f32.mrf.mxu0
      %v5948 = vadd.f32 %v5619, %v5947
      %5949 = vmatmul.bf16.gmra.mxu0 %v4740
      %v5950 = vpop.f32.mrf.mxu0
      %v5951 = vadd.f32 %v5622, %v5950
      %v5952 = vpop.f32.mrf.mxu0
      %v5953 = vadd.f32 %v5624, %v5952
      %5954 = vmatmul.bf16.gmra.mxu0 %v4744
      %v5955 = vpop.f32.mrf.mxu0
      %v5956 = vadd.f32 %v5627, %v5955
      %v5957 = vpop.f32.mrf.mxu0
      %v5958 = vadd.f32 %v5629, %v5957
      %5959 = vmatmul.bf16.gmra.mxu0 %v4748
      %v5960 = vpop.f32.mrf.mxu0
      %v5961 = vadd.f32 %v5632, %v5960
      %v5962 = vpop.f32.mrf.mxu0
      %v5963 = vadd.f32 %v5634, %v5962
      %5964 = vmatmul.bf16.gmra.mxu0 %v4752
      %v5965 = vpop.f32.mrf.mxu0
      %v5966 = vadd.f32 %v5637, %v5965
      %v5967 = vpop.f32.mrf.mxu0
      %v5968 = vadd.f32 %v5639, %v5967
      %5969 = vmatmul.bf16.gmra.mxu0 %v4756
      %v5970 = vpop.f32.mrf.mxu0
      %v5971 = vadd.f32 %v5642, %v5970
      %v5972 = vpop.f32.mrf.mxu0
      %v5973 = vadd.f32 %v5644, %v5972
      %5974 = vmatmul.bf16.gmra.mxu0 %v4760
      %v5975 = vpop.f32.mrf.mxu0
      %v5976 = vadd.f32 %v5647, %v5975
      %v5977 = vpop.f32.mrf.mxu0
      %v5978 = vadd.f32 %v5649, %v5977
      %5979 = vmatmul.bf16.gmra.mxu0 %v4764
      %v5980 = vpop.f32.mrf.mxu0
      %v5981 = vadd.f32 %v5652, %v5980
      %v5982 = vpop.f32.mrf.mxu0
      %v5983 = vadd.f32 %v5654, %v5982
      %5984 = vmatmul.bf16.gmra.mxu0 %v4768
      %v5985 = vpop.f32.mrf.mxu0
      %v5986 = vadd.f32 %v5657, %v5985
      %v5987 = vpop.f32.mrf.mxu0
      %v5988 = vadd.f32 %v5659, %v5987
      %5989 = vmatmul.bf16.gmra.mxu0 %v4772
      %v5990 = vpop.f32.mrf.mxu0
      %v5991 = vadd.f32 %v5662, %v5990
      %v5992 = vpop.f32.mrf.mxu0
      %v5993 = vadd.f32 %v5664, %v5992
      %5994 = vmatmul.bf16.gmra.mxu0 %v4776
      %v5995 = vpop.f32.mrf.mxu0
      %v5996 = vadd.f32 %v5667, %v5995
      %v5997 = vpop.f32.mrf.mxu0
      %v5998 = vadd.f32 %v5669, %v5997
      %5999 = vmatmul.bf16.gmra.mxu0 %v4780
      %v6000 = vpop.f32.mrf.mxu0
      %v6001 = vadd.f32 %v5672, %v6000
      %v6002 = vpop.f32.mrf.mxu0
      %v6003 = vadd.f32 %v5674, %v6002
      %6004 = vmatmul.bf16.gmra.mxu0 %v4784
      %v6005 = vpop.f32.mrf.mxu0
      %v6006 = vadd.f32 %v5677, %v6005
      %v6007 = vpop.f32.mrf.mxu0
      %v6008 = vadd.f32 %v5679, %v6007
      %6009 = vmatmul.bf16.gmra.mxu0 %v4788
      %v6010 = vpop.f32.mrf.mxu0
      %v6011 = vadd.f32 %v5682, %v6010
      %v6012 = vpop.f32.mrf.mxu0
      %v6013 = vadd.f32 %v5684, %v6012
      %6014 = vmatmul.bf16.gmra.mxu0 %v4792
      %v6015 = vpop.f32.mrf.mxu0
      %v6016 = vadd.f32 %v5687, %v6015
      %v6017 = vpop.f32.mrf.mxu0
      %v6018 = vadd.f32 %v5689, %v6017
      %6019 = vmatmul.bf16.gmra.mxu0 %v4796
      %v6020 = vpop.f32.mrf.mxu0
      %v6021 = vadd.f32 %v5692, %v6020
      %v6022 = vpop.f32.mrf.mxu0
      %v6023 = vadd.f32 %v5694, %v6022
      %6024 = vmatmul.bf16.gmra.mxu0 %v4800
      %v6025 = vpop.f32.mrf.mxu0
      %v6026 = vadd.f32 %v5697, %v6025
      %v6027 = vpop.f32.mrf.mxu0
      %v6028 = vadd.f32 %v5699, %v6027
      %6029 = vmatmul.bf16.gmra.mxu0 %v4804
      %v6030 = vpop.f32.mrf.mxu0
      %v6031 = vadd.f32 %v5702, %v6030
      %v6032 = vpop.f32.mrf.mxu0
      %v6033 = vadd.f32 %v5704, %v6032
      %6034 = vmatmul.bf16.gmra.mxu0 %v4808
      %v6035 = vpop.f32.mrf.mxu0
      %v6036 = vadd.f32 %v5707, %v6035
      %v6037 = vpop.f32.mrf.mxu0
      %v6038 = vadd.f32 %v5709, %v6037
      %6039 = vmatmul.bf16.gmra.mxu0 %v4812
      %v6040 = vpop.f32.mrf.mxu0
      %v6041 = vadd.f32 %v5712, %v6040
      %v6042 = vpop.f32.mrf.mxu0
      %v6043 = vadd.f32 %v5714, %v6042
      %6044 = vmatmul.bf16.gmra.mxu0 %v4816
      %v6045 = vpop.f32.mrf.mxu0
      %v6046 = vadd.f32 %v5717, %v6045
      %v6047 = vpop.f32.mrf.mxu0
      %v6048 = vadd.f32 %v5719, %v6047
      %6049 = vmatmul.bf16.gmra.mxu0 %v4820
      %v6050 = vpop.f32.mrf.mxu0
      %v6051 = vadd.f32 %v5722, %v6050
      %v6052 = vpop.f32.mrf.mxu0
      %v6053 = vadd.f32 %v5724, %v6052
      %6054 = vmatmul.bf16.gmra.mxu0 %v4824
      %v6055 = vpop.f32.mrf.mxu0
      %v6056 = vadd.f32 %v5727, %v6055
      %v6057 = vpop.f32.mrf.mxu0
      %v6058 = vadd.f32 %v5729, %v6057
      %6059 = vmatmul.bf16.gmra.mxu0 %v4828
      %v6060 = vpop.f32.mrf.mxu0
      %v6061 = vadd.f32 %v5732, %v6060
      %v6062 = vpop.f32.mrf.mxu0
      %v6063 = vadd.f32 %v5734, %v6062
      %6064 = vmatmul.bf16.gmra.mxu0 %v4832
      %v6065 = vpop.f32.mrf.mxu0
      %v6066 = vadd.f32 %v5737, %v6065
      %v6067 = vpop.f32.mrf.mxu0
      %v6068 = vadd.f32 %v5739, %v6067
      %6069 = vmatmul.bf16.gmra.mxu0 %v4836
      %v6070 = vpop.f32.mrf.mxu0
      %v6071 = vadd.f32 %v5742, %v6070
      %v6072 = vpop.f32.mrf.mxu0
      %v6073 = vadd.f32 %v5744, %v6072
      %6074 = vmatmul.bf16.gmra.mxu0 %v4840
      %v6075 = vpop.f32.mrf.mxu0
      %v6076 = vadd.f32 %v5747, %v6075
      %v6077 = vpop.f32.mrf.mxu0
      %v6078 = vadd.f32 %v5749, %v6077
      %6079 = vmatmul.bf16.gmra.mxu0 %v4844
      %v6080 = vpop.f32.mrf.mxu0
      %v6081 = vadd.f32 %v5752, %v6080
      %v6082 = vpop.f32.mrf.mxu0
      %v6083 = vadd.f32 %v5754, %v6082
      %6084 = vmatmul.bf16.gmra.mxu0 %v4848
      %v6085 = vpop.f32.mrf.mxu0
      %v6086 = vadd.f32 %v5757, %v6085
      %v6087 = vpop.f32.mrf.mxu0
      %v6088 = vadd.f32 %v5759, %v6087
      %6089 = vmatmul.bf16.gmra.mxu0 %v4852
      %v6090 = vpop.f32.mrf.mxu0
      %v6091 = vadd.f32 %v5762, %v6090
      %v6092 = vpop.f32.mrf.mxu0
      %v6093 = vadd.f32 %v5764, %v6092
      %6094 = vmatmul.bf16.gmra.mxu0 %v4856
      %v6095 = vpop.f32.mrf.mxu0
      %v6096 = vadd.f32 %v5767, %v6095
      %v6097 = vpop.f32.mrf.mxu0
      %v6098 = vadd.f32 %v5769, %v6097
      %6099 = vmatmul.bf16.gmra.mxu0 %v4860
      %v6100 = vpop.f32.mrf.mxu0
      %v6101 = vadd.f32 %v5772, %v6100
      %v6102 = vpop.f32.mrf.mxu0
      %v6103 = vadd.f32 %v5774, %v6102
      %6104 = vdwg.mxu0
      %6105 = vmatpush.bf16.msra.mxu0 %v2813
      %6106 = vmatpush.bf16.msra.mxu0 %v2812
      %6107 = vmatpush.bf16.msra.mxu0 %v2811
      %6108 = vmatpush.bf16.msra.mxu0 %v2810
      %6109 = vmatpush.bf16.msra.mxu0 %v2809
      %6110 = vmatpush.bf16.msra.mxu0 %v2808
      %6111 = vmatpush.bf16.msra.mxu0 %v2807
      %6112 = vmatpush.bf16.msra.mxu0 %v2806
      %6113 = vmatmul.bf16.gmra.mxu0 %v4609
      %v6114 = vpop.f32.mrf.mxu0
      %v6115 = vadd.f32 %v5786, %v6114
      %v6116 = vpop.f32.mrf.mxu0
      %v6117 = vadd.f32 %v5788, %v6116
      %6118 = vmatmul.bf16.gmra.mxu0 %v4613
      %v6119 = vpop.f32.mrf.mxu0
      %v6120 = vadd.f32 %v5791, %v6119
      %v6121 = vpop.f32.mrf.mxu0
      %v6122 = vadd.f32 %v5793, %v6121
      %6123 = vmatmul.bf16.gmra.mxu0 %v4617
      %v6124 = vpop.f32.mrf.mxu0
      %v6125 = vadd.f32 %v5796, %v6124
      %v6126 = vpop.f32.mrf.mxu0
      %v6127 = vadd.f32 %v5798, %v6126
      %6128 = vmatmul.bf16.gmra.mxu0 %v4621
      %v6129 = vpop.f32.mrf.mxu0
      %v6130 = vadd.f32 %v5801, %v6129
      %v6131 = vpop.f32.mrf.mxu0
      %v6132 = vadd.f32 %v5803, %v6131
      %6133 = vmatmul.bf16.gmra.mxu0 %v4625
      %v6134 = vpop.f32.mrf.mxu0
      %v6135 = vadd.f32 %v5806, %v6134
      %v6136 = vpop.f32.mrf.mxu0
      %v6137 = vadd.f32 %v5808, %v6136
      %6138 = vmatmul.bf16.gmra.mxu0 %v4629
      %v6139 = vpop.f32.mrf.mxu0
      %v6140 = vadd.f32 %v5811, %v6139
      %v6141 = vpop.f32.mrf.mxu0
      %v6142 = vadd.f32 %v5813, %v6141
      %6143 = vmatmul.bf16.gmra.mxu0 %v4633
      %v6144 = vpop.f32.mrf.mxu0
      %v6145 = vadd.f32 %v5816, %v6144
      %v6146 = vpop.f32.mrf.mxu0
      %v6147 = vadd.f32 %v5818, %v6146
      %6148 = vmatmul.bf16.gmra.mxu0 %v4637
      %v6149 = vpop.f32.mrf.mxu0
      %v6150 = vadd.f32 %v5821, %v6149
      %v6151 = vpop.f32.mrf.mxu0
      %v6152 = vadd.f32 %v5823, %v6151
      %6153 = vmatmul.bf16.gmra.mxu0 %v4641
      %v6154 = vpop.f32.mrf.mxu0
      %v6155 = vadd.f32 %v5826, %v6154
      %v6156 = vpop.f32.mrf.mxu0
      %v6157 = vadd.f32 %v5828, %v6156
      %6158 = vmatmul.bf16.gmra.mxu0 %v4645
      %v6159 = vpop.f32.mrf.mxu0
      %v6160 = vadd.f32 %v5831, %v6159
      %v6161 = vpop.f32.mrf.mxu0
      %v6162 = vadd.f32 %v5833, %v6161
      %6163 = vmatmul.bf16.gmra.mxu0 %v4649
      %v6164 = vpop.f32.mrf.mxu0
      %v6165 = vadd.f32 %v5836, %v6164
      %v6166 = vpop.f32.mrf.mxu0
      %v6167 = vadd.f32 %v5838, %v6166
      %6168 = vmatmul.bf16.gmra.mxu0 %v4653
      %v6169 = vpop.f32.mrf.mxu0
      %v6170 = vadd.f32 %v5841, %v6169
      %v6171 = vpop.f32.mrf.mxu0
      %v6172 = vadd.f32 %v5843, %v6171
      %6173 = vmatmul.bf16.gmra.mxu0 %v4657
      %v6174 = vpop.f32.mrf.mxu0
      %v6175 = vadd.f32 %v5846, %v6174
      %v6176 = vpop.f32.mrf.mxu0
      %v6177 = vadd.f32 %v5848, %v6176
      %6178 = vmatmul.bf16.gmra.mxu0 %v4661
      %v6179 = vpop.f32.mrf.mxu0
      %v6180 = vadd.f32 %v5851, %v6179
      %v6181 = vpop.f32.mrf.mxu0
      %v6182 = vadd.f32 %v5853, %v6181
      %6183 = vmatmul.bf16.gmra.mxu0 %v4665
      %v6184 = vpop.f32.mrf.mxu0
      %v6185 = vadd.f32 %v5856, %v6184
      %v6186 = vpop.f32.mrf.mxu0
      %v6187 = vadd.f32 %v5858, %v6186
      %6188 = vmatmul.bf16.gmra.mxu0 %v4669
      %v6189 = vpop.f32.mrf.mxu0
      %v6190 = vadd.f32 %v5861, %v6189
      %v6191 = vpop.f32.mrf.mxu0
      %v6192 = vadd.f32 %v5863, %v6191
      %6193 = vmatmul.bf16.gmra.mxu0 %v4673
      %v6194 = vpop.f32.mrf.mxu0
      %v6195 = vadd.f32 %v5866, %v6194
      %v6196 = vpop.f32.mrf.mxu0
      %v6197 = vadd.f32 %v5868, %v6196
      %6198 = vmatmul.bf16.gmra.mxu0 %v4677
      %v6199 = vpop.f32.mrf.mxu0
      %v6200 = vadd.f32 %v5871, %v6199
      %v6201 = vpop.f32.mrf.mxu0
      %v6202 = vadd.f32 %v5873, %v6201
      %6203 = vmatmul.bf16.gmra.mxu0 %v4681
      %v6204 = vpop.f32.mrf.mxu0
      %v6205 = vadd.f32 %v5876, %v6204
      %v6206 = vpop.f32.mrf.mxu0
      %v6207 = vadd.f32 %v5878, %v6206
      %6208 = vmatmul.bf16.gmra.mxu0 %v4685
      %v6209 = vpop.f32.mrf.mxu0
      %v6210 = vadd.f32 %v5881, %v6209
      %v6211 = vpop.f32.mrf.mxu0
      %v6212 = vadd.f32 %v5883, %v6211
      %6213 = vmatmul.bf16.gmra.mxu0 %v4689
      %v6214 = vpop.f32.mrf.mxu0
      %v6215 = vadd.f32 %v5886, %v6214
      %v6216 = vpop.f32.mrf.mxu0
      %v6217 = vadd.f32 %v5888, %v6216
      %6218 = vmatmul.bf16.gmra.mxu0 %v4693
      %v6219 = vpop.f32.mrf.mxu0
      %v6220 = vadd.f32 %v5891, %v6219
      %v6221 = vpop.f32.mrf.mxu0
      %v6222 = vadd.f32 %v5893, %v6221
      %6223 = vmatmul.bf16.gmra.mxu0 %v4697
      %v6224 = vpop.f32.mrf.mxu0
      %v6225 = vadd.f32 %v5896, %v6224
      %v6226 = vpop.f32.mrf.mxu0
      %v6227 = vadd.f32 %v5898, %v6226
      %6228 = vmatmul.bf16.gmra.mxu0 %v4701
      %v6229 = vpop.f32.mrf.mxu0
      %v6230 = vadd.f32 %v5901, %v6229
      %v6231 = vpop.f32.mrf.mxu0
      %v6232 = vadd.f32 %v5903, %v6231
      %6233 = vmatmul.bf16.gmra.mxu0 %v4705
      %v6234 = vpop.f32.mrf.mxu0
      %v6235 = vadd.f32 %v5906, %v6234
      %v6236 = vpop.f32.mrf.mxu0
      %v6237 = vadd.f32 %v5908, %v6236
      %6238 = vmatmul.bf16.gmra.mxu0 %v4709
      %v6239 = vpop.f32.mrf.mxu0
      %v6240 = vadd.f32 %v5911, %v6239
      %v6241 = vpop.f32.mrf.mxu0
      %v6242 = vadd.f32 %v5913, %v6241
      %6243 = vmatmul.bf16.gmra.mxu0 %v4713
      %v6244 = vpop.f32.mrf.mxu0
      %v6245 = vadd.f32 %v5916, %v6244
      %v6246 = vpop.f32.mrf.mxu0
      %v6247 = vadd.f32 %v5918, %v6246
      %6248 = vmatmul.bf16.gmra.mxu0 %v4717
      %v6249 = vpop.f32.mrf.mxu0
      %v6250 = vadd.f32 %v5921, %v6249
      %v6251 = vpop.f32.mrf.mxu0
      %v6252 = vadd.f32 %v5923, %v6251
      %6253 = vmatmul.bf16.gmra.mxu0 %v4721
      %v6254 = vpop.f32.mrf.mxu0
      %v6255 = vadd.f32 %v5926, %v6254
      %v6256 = vpop.f32.mrf.mxu0
      %v6257 = vadd.f32 %v5928, %v6256
      %6258 = vmatmul.bf16.gmra.mxu0 %v4725
      %v6259 = vpop.f32.mrf.mxu0
      %v6260 = vadd.f32 %v5931, %v6259
      %v6261 = vpop.f32.mrf.mxu0
      %v6262 = vadd.f32 %v5933, %v6261
      %6263 = vmatmul.bf16.gmra.mxu0 %v4729
      %v6264 = vpop.f32.mrf.mxu0
      %v6265 = vadd.f32 %v5936, %v6264
      %v6266 = vpop.f32.mrf.mxu0
      %v6267 = vadd.f32 %v5938, %v6266
      %6268 = vmatmul.bf16.gmra.mxu0 %v4733
      %v6269 = vpop.f32.mrf.mxu0
      %v6270 = vadd.f32 %v5941, %v6269
      %v6271 = vpop.f32.mrf.mxu0
      %v6272 = vadd.f32 %v5943, %v6271
      %6273 = vmatmul.bf16.gmra.mxu0 %v4737
      %v6274 = vpop.f32.mrf.mxu0
      %v6275 = vadd.f32 %v5946, %v6274
      %v6276 = vpop.f32.mrf.mxu0
      %v6277 = vadd.f32 %v5948, %v6276
      %6278 = vmatmul.bf16.gmra.mxu0 %v4741
      %v6279 = vpop.f32.mrf.mxu0
      %v6280 = vadd.f32 %v5951, %v6279
      %v6281 = vpop.f32.mrf.mxu0
      %v6282 = vadd.f32 %v5953, %v6281
      %6283 = vmatmul.bf16.gmra.mxu0 %v4745
      %v6284 = vpop.f32.mrf.mxu0
      %v6285 = vadd.f32 %v5956, %v6284
      %v6286 = vpop.f32.mrf.mxu0
      %v6287 = vadd.f32 %v5958, %v6286
      %6288 = vmatmul.bf16.gmra.mxu0 %v4749
      %v6289 = vpop.f32.mrf.mxu0
      %v6290 = vadd.f32 %v5961, %v6289
      %v6291 = vpop.f32.mrf.mxu0
      %v6292 = vadd.f32 %v5963, %v6291
      %6293 = vmatmul.bf16.gmra.mxu0 %v4753
      %v6294 = vpop.f32.mrf.mxu0
      %v6295 = vadd.f32 %v5966, %v6294
      %v6296 = vpop.f32.mrf.mxu0
      %v6297 = vadd.f32 %v5968, %v6296
      %6298 = vmatmul.bf16.gmra.mxu0 %v4757
      %v6299 = vpop.f32.mrf.mxu0
      %v6300 = vadd.f32 %v5971, %v6299
      %v6301 = vpop.f32.mrf.mxu0
      %v6302 = vadd.f32 %v5973, %v6301
      %6303 = vmatmul.bf16.gmra.mxu0 %v4761
      %v6304 = vpop.f32.mrf.mxu0
      %v6305 = vadd.f32 %v5976, %v6304
      %v6306 = vpop.f32.mrf.mxu0
      %v6307 = vadd.f32 %v5978, %v6306
      %6308 = vmatmul.bf16.gmra.mxu0 %v4765
      %v6309 = vpop.f32.mrf.mxu0
      %v6310 = vadd.f32 %v5981, %v6309
      %v6311 = vpop.f32.mrf.mxu0
      %v6312 = vadd.f32 %v5983, %v6311
      %6313 = vmatmul.bf16.gmra.mxu0 %v4769
      %v6314 = vpop.f32.mrf.mxu0
      %v6315 = vadd.f32 %v5986, %v6314
      %v6316 = vpop.f32.mrf.mxu0
      %v6317 = vadd.f32 %v5988, %v6316
      %6318 = vmatmul.bf16.gmra.mxu0 %v4773
      %v6319 = vpop.f32.mrf.mxu0
      %v6320 = vadd.f32 %v5991, %v6319
      %v6321 = vpop.f32.mrf.mxu0
      %v6322 = vadd.f32 %v5993, %v6321
      %6323 = vmatmul.bf16.gmra.mxu0 %v4777
      %v6324 = vpop.f32.mrf.mxu0
      %v6325 = vadd.f32 %v5996, %v6324
      %v6326 = vpop.f32.mrf.mxu0
      %v6327 = vadd.f32 %v5998, %v6326
      %6328 = vmatmul.bf16.gmra.mxu0 %v4781
      %v6329 = vpop.f32.mrf.mxu0
      %v6330 = vadd.f32 %v6001, %v6329
      %v6331 = vpop.f32.mrf.mxu0
      %v6332 = vadd.f32 %v6003, %v6331
      %6333 = vmatmul.bf16.gmra.mxu0 %v4785
      %v6334 = vpop.f32.mrf.mxu0
      %v6335 = vadd.f32 %v6006, %v6334
      %v6336 = vpop.f32.mrf.mxu0
      %v6337 = vadd.f32 %v6008, %v6336
      %6338 = vmatmul.bf16.gmra.mxu0 %v4789
      %v6339 = vpop.f32.mrf.mxu0
      %v6340 = vadd.f32 %v6011, %v6339
      %v6341 = vpop.f32.mrf.mxu0
      %v6342 = vadd.f32 %v6013, %v6341
      %6343 = vmatmul.bf16.gmra.mxu0 %v4793
      %v6344 = vpop.f32.mrf.mxu0
      %v6345 = vadd.f32 %v6016, %v6344
      %v6346 = vpop.f32.mrf.mxu0
      %v6347 = vadd.f32 %v6018, %v6346
      %6348 = vmatmul.bf16.gmra.mxu0 %v4797
      %v6349 = vpop.f32.mrf.mxu0
      %v6350 = vadd.f32 %v6021, %v6349
      %v6351 = vpop.f32.mrf.mxu0
      %v6352 = vadd.f32 %v6023, %v6351
      %6353 = vmatmul.bf16.gmra.mxu0 %v4801
      %v6354 = vpop.f32.mrf.mxu0
      %v6355 = vadd.f32 %v6026, %v6354
      %v6356 = vpop.f32.mrf.mxu0
      %v6357 = vadd.f32 %v6028, %v6356
      %6358 = vmatmul.bf16.gmra.mxu0 %v4805
      %v6359 = vpop.f32.mrf.mxu0
      %v6360 = vadd.f32 %v6031, %v6359
      %v6361 = vpop.f32.mrf.mxu0
      %v6362 = vadd.f32 %v6033, %v6361
      %6363 = vmatmul.bf16.gmra.mxu0 %v4809
      %v6364 = vpop.f32.mrf.mxu0
      %v6365 = vadd.f32 %v6036, %v6364
      %v6366 = vpop.f32.mrf.mxu0
      %v6367 = vadd.f32 %v6038, %v6366
      %6368 = vmatmul.bf16.gmra.mxu0 %v4813
      %v6369 = vpop.f32.mrf.mxu0
      %v6370 = vadd.f32 %v6041, %v6369
      %v6371 = vpop.f32.mrf.mxu0
      %v6372 = vadd.f32 %v6043, %v6371
      %6373 = vmatmul.bf16.gmra.mxu0 %v4817
      %v6374 = vpop.f32.mrf.mxu0
      %v6375 = vadd.f32 %v6046, %v6374
      %v6376 = vpop.f32.mrf.mxu0
      %v6377 = vadd.f32 %v6048, %v6376
      %6378 = vmatmul.bf16.gmra.mxu0 %v4821
      %v6379 = vpop.f32.mrf.mxu0
      %v6380 = vadd.f32 %v6051, %v6379
      %v6381 = vpop.f32.mrf.mxu0
      %v6382 = vadd.f32 %v6053, %v6381
      %6383 = vmatmul.bf16.gmra.mxu0 %v4825
      %v6384 = vpop.f32.mrf.mxu0
      %v6385 = vadd.f32 %v6056, %v6384
      %v6386 = vpop.f32.mrf.mxu0
      %v6387 = vadd.f32 %v6058, %v6386
      %6388 = vmatmul.bf16.gmra.mxu0 %v4829
      %v6389 = vpop.f32.mrf.mxu0
      %v6390 = vadd.f32 %v6061, %v6389
      %v6391 = vpop.f32.mrf.mxu0
      %v6392 = vadd.f32 %v6063, %v6391
      %6393 = vmatmul.bf16.gmra.mxu0 %v4833
      %v6394 = vpop.f32.mrf.mxu0
      %v6395 = vadd.f32 %v6066, %v6394
      %v6396 = vpop.f32.mrf.mxu0
      %v6397 = vadd.f32 %v6068, %v6396
      %6398 = vmatmul.bf16.gmra.mxu0 %v4837
      %v6399 = vpop.f32.mrf.mxu0
      %v6400 = vadd.f32 %v6071, %v6399
      %v6401 = vpop.f32.mrf.mxu0
      %v6402 = vadd.f32 %v6073, %v6401
      %6403 = vmatmul.bf16.gmra.mxu0 %v4841
      %v6404 = vpop.f32.mrf.mxu0
      %v6405 = vadd.f32 %v6076, %v6404
      %v6406 = vpop.f32.mrf.mxu0
      %v6407 = vadd.f32 %v6078, %v6406
      %6408 = vmatmul.bf16.gmra.mxu0 %v4845
      %v6409 = vpop.f32.mrf.mxu0
      %v6410 = vadd.f32 %v6081, %v6409
      %v6411 = vpop.f32.mrf.mxu0
      %v6412 = vadd.f32 %v6083, %v6411
      %6413 = vmatmul.bf16.gmra.mxu0 %v4849
      %v6414 = vpop.f32.mrf.mxu0
      %v6415 = vadd.f32 %v6086, %v6414
      %v6416 = vpop.f32.mrf.mxu0
      %v6417 = vadd.f32 %v6088, %v6416
      %6418 = vmatmul.bf16.gmra.mxu0 %v4853
      %v6419 = vpop.f32.mrf.mxu0
      %v6420 = vadd.f32 %v6091, %v6419
      %v6421 = vpop.f32.mrf.mxu0
      %v6422 = vadd.f32 %v6093, %v6421
      %6423 = vmatmul.bf16.gmra.mxu0 %v4857
      %v6424 = vpop.f32.mrf.mxu0
      %v6425 = vadd.f32 %v6096, %v6424
      %v6426 = vpop.f32.mrf.mxu0
      %v6427 = vadd.f32 %v6098, %v6426
      %6428 = vmatmul.bf16.gmra.mxu0 %v4861
      %v6429 = vpop.f32.mrf.mxu0
      %v6430 = vadd.f32 %v6101, %v6429
      %v6431 = vpop.f32.mrf.mxu0
      %v6432 = vadd.f32 %v6103, %v6431
      %6433 = vdwg.mxu0
      %v6434 = vmax.f32 %v6115, 0.0
      %v6435 = vmax.f32 %v6117, 0.0
      %v6436 = vmax.f32 %v6120, 0.0
      %v6437 = vmax.f32 %v6122, 0.0
      %v6438 = vmax.f32 %v6125, 0.0
      %v6439 = vmax.f32 %v6127, 0.0
      %v6440 = vmax.f32 %v6130, 0.0
      %v6441 = vmax.f32 %v6132, 0.0
      %v6442 = vmax.f32 %v6135, 0.0
      %v6443 = vmax.f32 %v6137, 0.0
      %v6444 = vmax.f32 %v6140, 0.0
      %v6445 = vmax.f32 %v6142, 0.0
      %v6446 = vmax.f32 %v6145, 0.0
      %v6447 = vmax.f32 %v6147, 0.0
      %v6448 = vmax.f32 %v6150, 0.0
      %v6449 = vmax.f32 %v6152, 0.0
      %v6450 = vmax.f32 %v6155, 0.0
      %v6451 = vmax.f32 %v6157, 0.0
      %v6452 = vmax.f32 %v6160, 0.0
      %v6453 = vmax.f32 %v6162, 0.0
      %v6454 = vmax.f32 %v6165, 0.0
      %v6455 = vmax.f32 %v6167, 0.0
      %v6456 = vmax.f32 %v6170, 0.0
      %v6457 = vmax.f32 %v6172, 0.0
      %v6458 = vmax.f32 %v6175, 0.0
      %v6459 = vmax.f32 %v6177, 0.0
      %v6460 = vmax.f32 %v6180, 0.0
      %v6461 = vmax.f32 %v6182, 0.0
      %v6462 = vmax.f32 %v6185, 0.0
      %v6463 = vmax.f32 %v6187, 0.0
      %v6464 = vmax.f32 %v6190, 0.0
      %v6465 = vmax.f32 %v6192, 0.0
      %v6466 = vmax.f32 %v6195, 0.0
      %v6467 = vmax.f32 %v6197, 0.0
      %v6468 = vmax.f32 %v6200, 0.0
      %v6469 = vmax.f32 %v6202, 0.0
      %v6470 = vmax.f32 %v6205, 0.0
      %v6471 = vmax.f32 %v6207, 0.0
      %v6472 = vmax.f32 %v6210, 0.0
      %v6473 = vmax.f32 %v6212, 0.0
      %v6474 = vmax.f32 %v6215, 0.0
      %v6475 = vmax.f32 %v6217, 0.0
      %v6476 = vmax.f32 %v6220, 0.0
      %v6477 = vmax.f32 %v6222, 0.0
      %v6478 = vmax.f32 %v6225, 0.0
      %v6479 = vmax.f32 %v6227, 0.0
      %v6480 = vmax.f32 %v6230, 0.0
      %v6481 = vmax.f32 %v6232, 0.0
      %v6482 = vmax.f32 %v6235, 0.0
      %v6483 = vmax.f32 %v6237, 0.0
      %v6484 = vmax.f32 %v6240, 0.0
      %v6485 = vmax.f32 %v6242, 0.0
      %v6486 = vmax.f32 %v6245, 0.0
      %v6487 = vmax.f32 %v6247, 0.0
      %v6488 = vmax.f32 %v6250, 0.0
      %v6489 = vmax.f32 %v6252, 0.0
      %v6490 = vmax.f32 %v6255, 0.0
      %v6491 = vmax.f32 %v6257, 0.0
      %v6492 = vmax.f32 %v6260, 0.0
      %v6493 = vmax.f32 %v6262, 0.0
      %v6494 = vmax.f32 %v6265, 0.0
      %v6495 = vmax.f32 %v6267, 0.0
      %v6496 = vmax.f32 %v6270, 0.0
      %v6497 = vmax.f32 %v6272, 0.0
      %v6498 = vmax.f32 %v6275, 0.0
      %v6499 = vmax.f32 %v6277, 0.0
      %v6500 = vmax.f32 %v6280, 0.0
      %v6501 = vmax.f32 %v6282, 0.0
      %v6502 = vmax.f32 %v6285, 0.0
      %v6503 = vmax.f32 %v6287, 0.0
      %v6504 = vmax.f32 %v6290, 0.0
      %v6505 = vmax.f32 %v6292, 0.0
      %v6506 = vmax.f32 %v6295, 0.0
      %v6507 = vmax.f32 %v6297, 0.0
      %v6508 = vmax.f32 %v6300, 0.0
      %v6509 = vmax.f32 %v6302, 0.0
      %v6510 = vmax.f32 %v6305, 0.0
      %v6511 = vmax.f32 %v6307, 0.0
      %v6512 = vmax.f32 %v6310, 0.0
      %v6513 = vmax.f32 %v6312, 0.0
      %v6514 = vmax.f32 %v6315, 0.0
      %v6515 = vmax.f32 %v6317, 0.0
      %v6516 = vmax.f32 %v6320, 0.0
      %v6517 = vmax.f32 %v6322, 0.0
      %v6518 = vmax.f32 %v6325, 0.0
      %v6519 = vmax.f32 %v6327, 0.0
      %v6520 = vmax.f32 %v6330, 0.0
      %v6521 = vmax.f32 %v6332, 0.0
      %v6522 = vmax.f32 %v6335, 0.0
      %v6523 = vmax.f32 %v6337, 0.0
      %v6524 = vmax.f32 %v6340, 0.0
      %v6525 = vmax.f32 %v6342, 0.0
      %v6526 = vmax.f32 %v6345, 0.0
      %v6527 = vmax.f32 %v6347, 0.0
      %v6528 = vmax.f32 %v6350, 0.0
      %v6529 = vmax.f32 %v6352, 0.0
      %v6530 = vmax.f32 %v6355, 0.0
      %v6531 = vmax.f32 %v6357, 0.0
      %v6532 = vmax.f32 %v6360, 0.0
      %v6533 = vmax.f32 %v6362, 0.0
      %v6534 = vmax.f32 %v6365, 0.0
      %v6535 = vmax.f32 %v6367, 0.0
      %v6536 = vmax.f32 %v6370, 0.0
      %v6537 = vmax.f32 %v6372, 0.0
      %v6538 = vmax.f32 %v6375, 0.0
      %v6539 = vmax.f32 %v6377, 0.0
      %v6540 = vmax.f32 %v6380, 0.0
      %v6541 = vmax.f32 %v6382, 0.0
      %v6542 = vmax.f32 %v6385, 0.0
      %v6543 = vmax.f32 %v6387, 0.0
      %v6544 = vmax.f32 %v6390, 0.0
      %v6545 = vmax.f32 %v6392, 0.0
      %v6546 = vmax.f32 %v6395, 0.0
      %v6547 = vmax.f32 %v6397, 0.0
      %v6548 = vmax.f32 %v6400, 0.0
      %v6549 = vmax.f32 %v6402, 0.0
      %v6550 = vmax.f32 %v6405, 0.0
      %v6551 = vmax.f32 %v6407, 0.0
      %v6552 = vmax.f32 %v6410, 0.0
      %v6553 = vmax.f32 %v6412, 0.0
      %v6554 = vmax.f32 %v6415, 0.0
      %v6555 = vmax.f32 %v6417, 0.0
      %v6556 = vmax.f32 %v6420, 0.0
      %v6557 = vmax.f32 %v6422, 0.0
      %v6558 = vmax.f32 %v6425, 0.0
      %v6559 = vmax.f32 %v6427, 0.0
      %v6560 = vmax.f32 %v6430, 0.0
      %v6561 = vmax.f32 %v6432, 0.0
      %v6562 = vpack.c.bf16 %v6435, %v6434
      %v6563 = vpack.c.bf16 %v6437, %v6436
      %v6564 = vpack.c.bf16 %v6439, %v6438
      %v6565 = vpack.c.bf16 %v6441, %v6440
      %v6566 = vpack.c.bf16 %v6443, %v6442
      %v6567 = vpack.c.bf16 %v6445, %v6444
      %v6568 = vpack.c.bf16 %v6447, %v6446
      %v6569 = vpack.c.bf16 %v6449, %v6448
      %v6570 = vpack.c.bf16 %v6451, %v6450
      %v6571 = vpack.c.bf16 %v6453, %v6452
      %v6572 = vpack.c.bf16 %v6455, %v6454
      %v6573 = vpack.c.bf16 %v6457, %v6456
      %v6574 = vpack.c.bf16 %v6459, %v6458
      %v6575 = vpack.c.bf16 %v6461, %v6460
      %v6576 = vpack.c.bf16 %v6463, %v6462
      %v6577 = vpack.c.bf16 %v6465, %v6464
      %v6578 = vpack.c.bf16 %v6467, %v6466
      %v6579 = vpack.c.bf16 %v6469, %v6468
      %v6580 = vpack.c.bf16 %v6471, %v6470
      %v6581 = vpack.c.bf16 %v6473, %v6472
      %v6582 = vpack.c.bf16 %v6475, %v6474
      %v6583 = vpack.c.bf16 %v6477, %v6476
      %v6584 = vpack.c.bf16 %v6479, %v6478
      %v6585 = vpack.c.bf16 %v6481, %v6480
      %v6586 = vpack.c.bf16 %v6483, %v6482
      %v6587 = vpack.c.bf16 %v6485, %v6484
      %v6588 = vpack.c.bf16 %v6487, %v6486
      %v6589 = vpack.c.bf16 %v6489, %v6488
      %v6590 = vpack.c.bf16 %v6491, %v6490
      %v6591 = vpack.c.bf16 %v6493, %v6492
      %v6592 = vpack.c.bf16 %v6495, %v6494
      %v6593 = vpack.c.bf16 %v6497, %v6496
      %v6594 = vpack.c.bf16 %v6499, %v6498
      %v6595 = vpack.c.bf16 %v6501, %v6500
      %v6596 = vpack.c.bf16 %v6503, %v6502
      %v6597 = vpack.c.bf16 %v6505, %v6504
      %v6598 = vpack.c.bf16 %v6507, %v6506
      %v6599 = vpack.c.bf16 %v6509, %v6508
      %v6600 = vpack.c.bf16 %v6511, %v6510
      %v6601 = vpack.c.bf16 %v6513, %v6512
      %v6602 = vpack.c.bf16 %v6515, %v6514
      %v6603 = vpack.c.bf16 %v6517, %v6516
      %v6604 = vpack.c.bf16 %v6519, %v6518
      %v6605 = vpack.c.bf16 %v6521, %v6520
      %v6606 = vpack.c.bf16 %v6523, %v6522
      %v6607 = vpack.c.bf16 %v6525, %v6524
      %v6608 = vpack.c.bf16 %v6527, %v6526
      %v6609 = vpack.c.bf16 %v6529, %v6528
      %v6610 = vpack.c.bf16 %v6531, %v6530
      %v6611 = vpack.c.bf16 %v6533, %v6532
      %v6612 = vpack.c.bf16 %v6535, %v6534
      %v6613 = vpack.c.bf16 %v6537, %v6536
      %v6614 = vpack.c.bf16 %v6539, %v6538
      %v6615 = vpack.c.bf16 %v6541, %v6540
      %v6616 = vpack.c.bf16 %v6543, %v6542
      %v6617 = vpack.c.bf16 %v6545, %v6544
      %v6618 = vpack.c.bf16 %v6547, %v6546
      %v6619 = vpack.c.bf16 %v6549, %v6548
      %v6620 = vpack.c.bf16 %v6551, %v6550
      %v6621 = vpack.c.bf16 %v6553, %v6552
      %v6622 = vpack.c.bf16 %v6555, %v6554
      %v6623 = vpack.c.bf16 %v6557, %v6556
      %v6624 = vpack.c.bf16 %v6559, %v6558
      %v6625 = vpack.c.bf16 %v6561, %v6560
      %v6626 = vld [vmem:[%s9] sm:$0xff]
      %v6627 = vld [vmem:[%s9 + $0x8] sm:$0xff]
      %v6628 = vld [vmem:[%s9 + $0x10] sm:$0xff]
      %v6629 = vld [vmem:[%s9 + $0x18] sm:$0xff]
      %v6630 = vld [vmem:[%s9 + $0x20] sm:$0xff]
      %v6631 = vld [vmem:[%s9 + $0x28] sm:$0xff]
      %v6632 = vld [vmem:[%s9 + $0x30] sm:$0xff]
      %v6633 = vld [vmem:[%s9 + $0x38] sm:$0xff]
      %v6634 = vld [vmem:[%s9 + $0x40] sm:$0xff]
      %v6635 = vld [vmem:[%s9 + $0x48] sm:$0xff]
      %v6636 = vld [vmem:[%s9 + $0x50] sm:$0xff]
      %v6637 = vld [vmem:[%s9 + $0x58] sm:$0xff]
      %v6638 = vld [vmem:[%s9 + $0x60] sm:$0xff]
      %v6639 = vld [vmem:[%s9 + $0x68] sm:$0xff]
      %v6640 = vld [vmem:[%s9 + $0x70] sm:$0xff]
      %v6641 = vld [vmem:[%s9 + $0x78] sm:$0xff]
      %v6642 = vld [vmem:[%s10] sm:$0xff]
      %v6643 = vld [vmem:[%s10 + $0x8] sm:$0xff]
      %v6644 = vld [vmem:[%s10 + $0x10] sm:$0xff]
      %v6645 = vld [vmem:[%s10 + $0x18] sm:$0xff]
      %6647 = vset.pattern.permute.xlu0 0
      %6648 = vperm.xlu0 %6647, %v6642
      %v6649 = vpop.permute.xlu0 %6648
      %6652 = vset.pattern.permute.xlu0 0
      %6653 = vperm.xlu0 %6652, %v6643
      %v6654 = vpop.permute.xlu0 %6653
      %6657 = vset.pattern.permute.xlu0 0
      %6658 = vperm.xlu0 %6657, %v6644
      %v6659 = vpop.permute.xlu0 %6658
      %6662 = vset.pattern.permute.xlu0 0
      %6663 = vperm.xlu0 %6662, %v6645
      %v6664 = vpop.permute.xlu0 %6663
      %v6682 = vunpack.c.l.b16 %v6626
      %v6683 = vunpack.c.h.b16 %v6626
      %v6684 = vunpack.c.l.b16 %v6627
      %v6685 = vunpack.c.h.b16 %v6627
      %v6686 = vunpack.c.l.b16 %v6628
      %v6687 = vunpack.c.h.b16 %v6628
      %v6688 = vunpack.c.l.b16 %v6629
      %v6689 = vunpack.c.h.b16 %v6629
      %v6690 = vunpack.c.l.b16 %v6630
      %v6691 = vunpack.c.h.b16 %v6630
      %v6692 = vunpack.c.l.b16 %v6631
      %v6693 = vunpack.c.h.b16 %v6631
      %v6694 = vunpack.c.l.b16 %v6632
      %v6695 = vunpack.c.h.b16 %v6632
      %v6696 = vunpack.c.l.b16 %v6633
      %v6697 = vunpack.c.h.b16 %v6633
      %v6698 = vunpack.c.l.b16 %v6634
      %v6699 = vunpack.c.h.b16 %v6634
      %v6700 = vunpack.c.l.b16 %v6635
      %v6701 = vunpack.c.h.b16 %v6635
      %v6702 = vunpack.c.l.b16 %v6636
      %v6703 = vunpack.c.h.b16 %v6636
      %v6704 = vunpack.c.l.b16 %v6637
      %v6705 = vunpack.c.h.b16 %v6637
      %v6706 = vunpack.c.l.b16 %v6638
      %v6707 = vunpack.c.h.b16 %v6638
      %v6708 = vunpack.c.l.b16 %v6639
      %v6709 = vunpack.c.h.b16 %v6639
      %v6710 = vunpack.c.l.b16 %v6640
      %v6711 = vunpack.c.h.b16 %v6640
      %v6712 = vunpack.c.l.b16 %v6641
      %v6713 = vunpack.c.h.b16 %v6641
      %v6714 = vpack.c.b16 %v6690, %v6682
      %v6715 = vpack.c.b16 %v6691, %v6683
      %v6716 = vpack.c.b16 %v6692, %v6684
      %v6717 = vpack.c.b16 %v6693, %v6685
      %v6718 = vpack.c.b16 %v6694, %v6686
      %v6719 = vpack.c.b16 %v6695, %v6687
      %v6720 = vpack.c.b16 %v6696, %v6688
      %v6721 = vpack.c.b16 %v6697, %v6689
      %v6722 = vpack.c.b16 %v6706, %v6698
      %v6723 = vpack.c.b16 %v6707, %v6699
      %v6724 = vpack.c.b16 %v6708, %v6700
      %v6725 = vpack.c.b16 %v6709, %v6701
      %v6726 = vpack.c.b16 %v6710, %v6702
      %v6727 = vpack.c.b16 %v6711, %v6703
      %v6728 = vpack.c.b16 %v6712, %v6704
      %v6729 = vpack.c.b16 %v6713, %v6705
      %6746 = vmatpush.bf16.msra.mxu0 %v6569
      %6747 = vmatpush.bf16.msra.mxu0 %v6568
      %6748 = vmatpush.bf16.msra.mxu0 %v6567
      %6749 = vmatpush.bf16.msra.mxu0 %v6566
      %6750 = vmatpush.bf16.msra.mxu0 %v6565
      %6751 = vmatpush.bf16.msra.mxu0 %v6564
      %6752 = vmatpush.bf16.msra.mxu0 %v6563
      %6753 = vmatpush.bf16.msra.mxu0 %v6562
      %6754 = vmatmul.bf16.gmra.mxu0 %v6714
      %v6755 = vpop.f32.mrf.mxu0
      %v6756 = vadd.f32 %v6649, %v6755
      %v6757 = vpop.f32.mrf.mxu0
      %v6758 = vadd.f32 %v6654, %v6757
      %6759 = vmatmul.bf16.gmra.mxu0 %v6722
      %v6760 = vpop.f32.mrf.mxu0
      %v6761 = vadd.f32 %v6659, %v6760
      %v6762 = vpop.f32.mrf.mxu0
      %v6763 = vadd.f32 %v6664, %v6762
      %6764 = vdwg.mxu0
      %6765 = vmatpush.bf16.msra.mxu0 %v6577
      %6766 = vmatpush.bf16.msra.mxu0 %v6576
      %6767 = vmatpush.bf16.msra.mxu0 %v6575
      %6768 = vmatpush.bf16.msra.mxu0 %v6574
      %6769 = vmatpush.bf16.msra.mxu0 %v6573
      %6770 = vmatpush.bf16.msra.mxu0 %v6572
      %6771 = vmatpush.bf16.msra.mxu0 %v6571
      %6772 = vmatpush.bf16.msra.mxu0 %v6570
      %6773 = vmatmul.bf16.gmra.mxu0 %v6715
      %v6774 = vpop.f32.mrf.mxu0
      %v6775 = vadd.f32 %v6756, %v6774
      %v6776 = vpop.f32.mrf.mxu0
      %v6777 = vadd.f32 %v6758, %v6776
      %6778 = vmatmul.bf16.gmra.mxu0 %v6723
      %v6779 = vpop.f32.mrf.mxu0
      %v6780 = vadd.f32 %v6761, %v6779
      %v6781 = vpop.f32.mrf.mxu0
      %v6782 = vadd.f32 %v6763, %v6781
      %6783 = vdwg.mxu0
      %6784 = vmatpush.bf16.msra.mxu0 %v6585
      %6785 = vmatpush.bf16.msra.mxu0 %v6584
      %6786 = vmatpush.bf16.msra.mxu0 %v6583
      %6787 = vmatpush.bf16.msra.mxu0 %v6582
      %6788 = vmatpush.bf16.msra.mxu0 %v6581
      %6789 = vmatpush.bf16.msra.mxu0 %v6580
      %6790 = vmatpush.bf16.msra.mxu0 %v6579
      %6791 = vmatpush.bf16.msra.mxu0 %v6578
      %6792 = vmatmul.bf16.gmra.mxu0 %v6716
      %v6793 = vpop.f32.mrf.mxu0
      %v6794 = vadd.f32 %v6775, %v6793
      %v6795 = vpop.f32.mrf.mxu0
      %v6796 = vadd.f32 %v6777, %v6795
      %6797 = vmatmul.bf16.gmra.mxu0 %v6724
      %v6798 = vpop.f32.mrf.mxu0
      %v6799 = vadd.f32 %v6780, %v6798
      %v6800 = vpop.f32.mrf.mxu0
      %v6801 = vadd.f32 %v6782, %v6800
      %6802 = vdwg.mxu0
      %6803 = vmatpush.bf16.msra.mxu0 %v6593
      %6804 = vmatpush.bf16.msra.mxu0 %v6592
      %6805 = vmatpush.bf16.msra.mxu0 %v6591
      %6806 = vmatpush.bf16.msra.mxu0 %v6590
      %6807 = vmatpush.bf16.msra.mxu0 %v6589
      %6808 = vmatpush.bf16.msra.mxu0 %v6588
      %6809 = vmatpush.bf16.msra.mxu0 %v6587
      %6810 = vmatpush.bf16.msra.mxu0 %v6586
      %6811 = vmatmul.bf16.gmra.mxu0 %v6717
      %v6812 = vpop.f32.mrf.mxu0
      %v6813 = vadd.f32 %v6794, %v6812
      %v6814 = vpop.f32.mrf.mxu0
      %v6815 = vadd.f32 %v6796, %v6814
      %6816 = vmatmul.bf16.gmra.mxu0 %v6725
      %v6817 = vpop.f32.mrf.mxu0
      %v6818 = vadd.f32 %v6799, %v6817
      %v6819 = vpop.f32.mrf.mxu0
      %v6820 = vadd.f32 %v6801, %v6819
      %6821 = vdwg.mxu0
      %6822 = vmatpush.bf16.msra.mxu0 %v6601
      %6823 = vmatpush.bf16.msra.mxu0 %v6600
      %6824 = vmatpush.bf16.msra.mxu0 %v6599
      %6825 = vmatpush.bf16.msra.mxu0 %v6598
      %6826 = vmatpush.bf16.msra.mxu0 %v6597
      %6827 = vmatpush.bf16.msra.mxu0 %v6596
      %6828 = vmatpush.bf16.msra.mxu0 %v6595
      %6829 = vmatpush.bf16.msra.mxu0 %v6594
      %6830 = vmatmul.bf16.gmra.mxu0 %v6718
      %v6831 = vpop.f32.mrf.mxu0
      %v6832 = vadd.f32 %v6813, %v6831
      %v6833 = vpop.f32.mrf.mxu0
      %v6834 = vadd.f32 %v6815, %v6833
      %6835 = vmatmul.bf16.gmra.mxu0 %v6726
      %v6836 = vpop.f32.mrf.mxu0
      %v6837 = vadd.f32 %v6818, %v6836
      %v6838 = vpop.f32.mrf.mxu0
      %v6839 = vadd.f32 %v6820, %v6838
      %6840 = vdwg.mxu0
      %6841 = vmatpush.bf16.msra.mxu0 %v6609
      %6842 = vmatpush.bf16.msra.mxu0 %v6608
      %6843 = vmatpush.bf16.msra.mxu0 %v6607
      %6844 = vmatpush.bf16.msra.mxu0 %v6606
      %6845 = vmatpush.bf16.msra.mxu0 %v6605
      %6846 = vmatpush.bf16.msra.mxu0 %v6604
      %6847 = vmatpush.bf16.msra.mxu0 %v6603
      %6848 = vmatpush.bf16.msra.mxu0 %v6602
      %6849 = vmatmul.bf16.gmra.mxu0 %v6719
      %v6850 = vpop.f32.mrf.mxu0
      %v6851 = vadd.f32 %v6832, %v6850
      %v6852 = vpop.f32.mrf.mxu0
      %v6853 = vadd.f32 %v6834, %v6852
      %6854 = vmatmul.bf16.gmra.mxu0 %v6727
      %v6855 = vpop.f32.mrf.mxu0
      %v6856 = vadd.f32 %v6837, %v6855
      %v6857 = vpop.f32.mrf.mxu0
      %v6858 = vadd.f32 %v6839, %v6857
      %6859 = vdwg.mxu0
      %6860 = vmatpush.bf16.msra.mxu0 %v6617
      %6861 = vmatpush.bf16.msra.mxu0 %v6616
      %6862 = vmatpush.bf16.msra.mxu0 %v6615
      %6863 = vmatpush.bf16.msra.mxu0 %v6614
      %6864 = vmatpush.bf16.msra.mxu0 %v6613
      %6865 = vmatpush.bf16.msra.mxu0 %v6612
      %6866 = vmatpush.bf16.msra.mxu0 %v6611
      %6867 = vmatpush.bf16.msra.mxu0 %v6610
      %6868 = vmatmul.bf16.gmra.mxu0 %v6720
      %v6869 = vpop.f32.mrf.mxu0
      %v6870 = vadd.f32 %v6851, %v6869
      %v6871 = vpop.f32.mrf.mxu0
      %v6872 = vadd.f32 %v6853, %v6871
      %6873 = vmatmul.bf16.gmra.mxu0 %v6728
      %v6874 = vpop.f32.mrf.mxu0
      %v6875 = vadd.f32 %v6856, %v6874
      %v6876 = vpop.f32.mrf.mxu0
      %v6877 = vadd.f32 %v6858, %v6876
      %6878 = vdwg.mxu0
      %6879 = vmatpush.bf16.msra.mxu0 %v6625
      %6880 = vmatpush.bf16.msra.mxu0 %v6624
      %6881 = vmatpush.bf16.msra.mxu0 %v6623
      %6882 = vmatpush.bf16.msra.mxu0 %v6622
      %6883 = vmatpush.bf16.msra.mxu0 %v6621
      %6884 = vmatpush.bf16.msra.mxu0 %v6620
      %6885 = vmatpush.bf16.msra.mxu0 %v6619
      %6886 = vmatpush.bf16.msra.mxu0 %v6618
      %6887 = vmatmul.bf16.gmra.mxu0 %v6721
      %v6888 = vpop.f32.mrf.mxu0
      %v6889 = vadd.f32 %v6870, %v6888
      %v6890 = vpop.f32.mrf.mxu0
      %v6891 = vadd.f32 %v6872, %v6890
      %6892 = vmatmul.bf16.gmra.mxu0 %v6729
      %v6893 = vpop.f32.mrf.mxu0
      %v6894 = vadd.f32 %v6875, %v6893
      %v6895 = vpop.f32.mrf.mxu0
      %v6896 = vadd.f32 %v6877, %v6895
      %6897 = vdwg.mxu0
      %v6898 = vld [vmem:[#allocation2] sm:$0xff]
      %v6899 = vld [vmem:[#allocation2 + $0x8] sm:$0xff]
      %v6900 = vld [vmem:[#allocation2 + $0x10] sm:$0xff]
      %v6901 = vld [vmem:[#allocation2 + $0x18] sm:$0xff]
      %vm6902 = vcmask 130048
      %v6903 = vsel %vm6902, %v6889, -inf
      %6904 = vmax.xlane.f32.xlu0 %v6903
      %v6905 = vpop.xlane.xlu0 %6904
      %v6906 = vsel %vm6902, %v6891, -inf
      %6907 = vmax.xlane.f32.xlu0 %v6906
      %v6908 = vpop.xlane.xlu0 %6907
      %v6909 = vsel %vm6902, %v6894, -inf
      %6910 = vmax.xlane.f32.xlu0 %v6909
      %v6911 = vpop.xlane.xlu0 %6910
      %v6912 = vsel %vm6902, %v6896, -inf
      %6913 = vmax.xlane.f32.xlu0 %v6912
      %v6914 = vpop.xlane.xlu0 %6913
      %v6915 = vmax.f32 %v6898, %v6905
      %v6916 = vmax.f32 %v6899, %v6908
      %v6917 = vmax.f32 %v6900, %v6911
      %v6918 = vmax.f32 %v6901, %v6914
      %vm6919 = vcmask 7168
      %6920 = vst.msk [vmem:[#allocation2] sm:$0xff] %vm6919, %v6915
      %6921 = vst.msk [vmem:[#allocation2 + $0x8] sm:$0xff] %vm6919, %v6916
      %6922 = vst.msk [vmem:[#allocation2 + $0x10] sm:$0xff] %vm6919, %v6917
      %6923 = vst.msk [vmem:[#allocation2 + $0x18] sm:$0xff] %vm6919, %v6918
      // Predicated region
      $region69: #{forward.6} parent=63 // pred_check
        %p6924 = pneg %p438
      $region70: #{forward.6} parent=63 // pred_check_branch
        %6926 = sbr.rel (%p6924) target = $region72
      $region71: #{forward.6} parent=63 // pred_region
        %v6927 = vld [vmem:[#allocation2] sm:$0xff]
        %v6928 = vld [vmem:[#allocation2 + $0x8] sm:$0xff]
        %v6929 = vld [vmem:[#allocation2 + $0x10] sm:$0xff]
        %v6930 = vld [vmem:[#allocation2 + $0x18] sm:$0xff]
        %6931 = vst.msk [vmem:[%s437] sm:$0xff] %vm6919, %v6927
        %6932 = vst.msk [vmem:[%s437 + $0x8] sm:$0xff] %vm6919, %v6928
        %6933 = vst.msk [vmem:[%s437 + $0x10] sm:$0xff] %vm6919, %v6929
        %6934 = vst.msk [vmem:[%s437 + $0x18] sm:$0xff] %vm6919, %v6930
      $region72: #{forward.6} parent=63 // pred_fallthru
        _
      %p6935 = scmp.lt.s32.totalorder %s26, 1
      %s6936 = scalar_select %p6935, %s26, 1
      %s6937 = smul.addr %s6936, 4
      %s6938 = smul.addr %s6937, 8
      %s6939 = scalar_lea.vmem %s11, %s6938
      // Predicated region
      $region73: #{forward.6} parent=63 // pred_check
        %p6940 = pneg %p297
      $region74: #{forward.6} parent=63 // pred_check_branch
        %6942 = sbr.rel (%p6940) target = $region76
      $region75: #{forward.6} parent=63 // pred_region
        _
      $region76: #{forward.6} parent=63 // pred_fallthru
        _
    $region64: #{forward.6} parent=5 // pred_fallthru
      _
    %p6943 = scmp.le.s32.totalorder 2, %s17
    // Predicated region
    $region77: #{forward.6} parent=5 // pred_check
      %p6944 = pneg %p6943
    $region78: #{forward.6} parent=5 // pred_check_branch
      %6946 = sbr.rel (%p6944) target = $region80
    $region79: #{forward.6} parent=5 // pred_region
      %s6947 = ssub.s32 %s17, 2
      // Predicated region
      $region81: #{forward.6} parent=79 // pred_check
        %p6948 = pneg %p303
      $region82: #{forward.6} parent=79 // pred_check_branch
        %6950 = sbr.rel (%p6948) target = $region84
      $region83: #{forward.6} parent=79 // pred_region
        %p6951 = scmp.lt.s32.totalorder %s28, 1
        %s6952 = scalar_select %p6951, %s28, 1
        %s6953 = smul.addr %s6952, 4
        %s6954 = smul.addr %s6953, 8
        %s6955 = scalar_lea.vmem %s11, %s6954
      $region84: #{forward.6} parent=79 // pred_fallthru
        _
    $region80: #{forward.6} parent=5 // pred_fallthru
      _
  $region6: #{forward.6} parent=0 // loop_footer
    %s21 = sadd.s32 1, %s17
  $region7: #{forward.6} parent=0 // loop_footer_branch
    %16 = sbr.rel target = $region3
  $region8: #{forward.6} parent=0 // loop_exit
    _

</llo_original>
